<compile_context>
chip_gen: v7x
topology: tpu7x:2x2x1
jax: 0.10.0
libtpu: 0.0.40
codegen_flags: <defaults>
</compile_context>

<pallas_src>
import jax
import jax.numpy as jnp
import numpy as np
from jax import lax
from jax.experimental import pallas as pl
from jax.experimental.pallas import tpu as pltpu

EPS = 1e-5


def residual_block_kernel(x_ref, w1_ref, w2_ref, pavg_ref, mneg_ref, mpos_ref,
                          g1_ref, b1_ref, g2_ref, b2_ref, out_ref):
    f32 = jnp.float32
    x = x_ref[...]              # (R, L) f32, R = N*H rows, L = W*C lanes
    pavg = pavg_ref[...]        # (L, L) f32: per-channel average + lane tiling
    m_neg = mneg_ref[...]       # (R, L) f32 0/1: rows with h > 0     (dy = -1)
    m_pos = mpos_ref[...]       # (R, L) f32 0/1: rows with h < H - 1 (dy = +1)

    def shift_up(a):            # b[r] = a[r + 1]; wrapped rows are masked out
        return jnp.concatenate([a[1:, :], a[:1, :]], axis=0)

    def shift_down(a):          # b[r] = a[r - 1]; wrapped rows are masked out
        return jnp.concatenate([a[-1:, :], a[:-1, :]], axis=0)

    def conv3x3(a, w_ref):
        # w_ref[k]: (L, L) bf16 block-banded matrix for dy = k - 1.
        ab = a.astype(jnp.bfloat16)
        ad = shift_down(a).astype(jnp.bfloat16)
        au = shift_up(a).astype(jnp.bfloat16)
        c0 = jnp.dot(ab, w_ref[1], preferred_element_type=f32)
        cm = jnp.dot(ad, w_ref[0], preferred_element_type=f32)
        cp = jnp.dot(au, w_ref[2], preferred_element_type=f32)
        return c0 + m_neg * cm + m_pos * cp

    def batchnorm(acc, gamma, beta):
        # Two-pass batch statistics over (N, H, W), per channel, tiled to lanes.
        mean = jnp.sum(jnp.dot(acc, pavg, preferred_element_type=f32),
                       axis=0, keepdims=True)          # (1, L)
        d = acc - mean
        var = jnp.sum(jnp.dot(d * d, pavg, preferred_element_type=f32),
                      axis=0, keepdims=True)           # (1, L)
        scale = gamma * lax.rsqrt(var + EPS)           # folded scale/shift FMA
        return d * scale + beta

    acc1 = conv3x3(x, w1_ref)
    y1 = jnp.maximum(batchnorm(acc1, g1_ref[...], b1_ref[...]), 0.0)
    acc2 = conv3x3(y1, w2_ref)
    y2 = batchnorm(acc2, g2_ref[...], b2_ref[...])
    out_ref[...] = jnp.maximum(y2 + x, 0.0)            # residual (exact f32) + relu


def _banded_conv_weights(w_hwio, W):
    """(3,3,Cin,Cout) conv weights -> (3, W*Cin, W*Cout) block-banded matrices.

    mats[ky][wi*Cin + ci, wo*Cout + co] = w[ky, wi-wo+1, ci, co] for |wi-wo|<=1;
    missing band rows implement the zero padding along W exactly.
    """
    w = np.asarray(w_hwio, np.float32)
    c_in, c_out = w.shape[2], w.shape[3]
    mats = np.zeros((3, W * c_in, W * c_out), np.float32)
    for ky in range(3):
        for kx in range(3):
            dx = kx - 1
            for wo in range(W):
                wi = wo + dx
                if 0 <= wi < W:
                    mats[ky, wi * c_in:(wi + 1) * c_in,
                         wo * c_out:(wo + 1) * c_out] = w[ky, kx]
    return jnp.asarray(mats)


def residual_block_pallas(x_nhwc, w1_hwio, w2_hwio, g1, b1, g2, b2):
    """x_nhwc: (N,H,W,C) f32; w*_hwio: (3,3,Cin,Cout) f32; g/b: (C,) f32."""
    N, H, W, C = x_nhwc.shape
    R, L = N * H, W * C
    M = N * H * W

    # Lane-dense 2-D views / constants built wrapper-side (layout plumbing).
    x2d = x_nhwc.reshape(R, L).astype(jnp.float32)
    w1b = _banded_conv_weights(w1_hwio, W).astype(jnp.bfloat16)   # (3, L, L)
    w2b = _banded_conv_weights(w2_hwio, W).astype(jnp.bfloat16)

    # 0/1 averaging matrix: colsum @ pavg == per-channel mean tiled over lanes.
    pavg = jnp.asarray(
        np.kron(np.ones((W, W), np.float32), np.eye(C, dtype=np.float32)) / M)

    hrow = np.arange(R) % H
    m_neg = jnp.asarray(np.broadcast_to((hrow > 0)[:, None],
                                        (R, L)).astype(np.float32))
    m_pos = jnp.asarray(np.broadcast_to((hrow < H - 1)[:, None],
                                        (R, L)).astype(np.float32))

    g1t = jnp.tile(g1.reshape(1, C), (1, W)).astype(jnp.float32)   # (1, L)
    b1t = jnp.tile(b1.reshape(1, C), (1, W)).astype(jnp.float32)
    g2t = jnp.tile(g2.reshape(1, C), (1, W)).astype(jnp.float32)
    b2t = jnp.tile(b2.reshape(1, C), (1, W)).astype(jnp.float32)

    def full(shape):
        return pl.BlockSpec(shape, lambda i, n=len(shape): (0,) * n)

    out2d = pl.pallas_call(
        residual_block_kernel,
        out_shape=jax.ShapeDtypeStruct((R, L), jnp.float32),
        grid=(1,),
        in_specs=[full((R, L)), full((3, L, L)), full((3, L, L)), full((L, L)),
                  full((R, L)), full((R, L)),
                  full((1, L)), full((1, L)), full((1, L)), full((1, L))],
        out_specs=full((R, L)),
        compiler_params=pltpu.CompilerParams(
            dimension_semantics=("arbitrary",),
            vmem_limit_bytes=32 * 1024 * 1024),
    )(x2d, w1b, w2b, pavg, m_neg, m_pos, g1t, b1t, g2t, b2t)

    return out2d.reshape(N, H, W, C)


def reference_jax(x_nhwc, w1_hwio, w2_hwio, g1, b1, g2, b2):
    """Pure-JAX f32 reference mirroring the PyTorch forward (training-mode BN)."""
    dn = lax.conv_dimension_numbers(x_nhwc.shape, w1_hwio.shape,
                                    ("NHWC", "HWIO", "NHWC"))

    def bn(y, g, b):
        m = jnp.mean(y, axis=(0, 1, 2))
        v = jnp.mean((y - m) ** 2, axis=(0, 1, 2))
        return (y - m) * lax.rsqrt(v + EPS) * g + b

    out = lax.conv_general_dilated(x_nhwc, w1_hwio, (1, 1), "SAME",
                                   dimension_numbers=dn)
    out = jax.nn.relu(bn(out, g1, b1))
    out = lax.conv_general_dilated(out, w2_hwio, (1, 1), "SAME",
                                   dimension_numbers=dn)
    out = bn(out, g2, b2)
    return jax.nn.relu(out + x_nhwc)


if __name__ == "__main__":
    key = jax.random.PRNGKey(0)
    N, C, H, W = 2, 32, 16, 16   # in_channels == out_channels, stride == 1

    k = jax.random.split(key, 7)
    # PyTorch-style NCHW input, moved to the kernel's NHWC layout.
    x_nchw = jax.random.normal(k[0], (N, C, H, W), jnp.float32)
    x_nhwc = jnp.transpose(x_nchw, (0, 2, 3, 1))

    # Conv weights, PyTorch layout (Cout, Cin, 3, 3), kaiming-ish scale.
    scale = (2.0 / (C * 9)) ** 0.5
    w1_oihw = jax.random.normal(k[1], (C, C, 3, 3), jnp.float32) * scale
    w2_oihw = jax.random.normal(k[2], (C, C, 3, 3), jnp.float32) * scale
    w1_hwio = jnp.transpose(w1_oihw, (2, 3, 1, 0))   # (3,3,Cin,Cout)
    w2_hwio = jnp.transpose(w2_oihw, (2, 3, 1, 0))

    # BatchNorm affine params (deterministic, non-trivial).
    g1 = 1.0 + 0.1 * jax.random.normal(k[3], (C,), jnp.float32)
    b1 = 0.1 * jax.random.normal(k[4], (C,), jnp.float32)
    g2 = 1.0 + 0.1 * jax.random.normal(k[5], (C,), jnp.float32)
    b2 = 0.1 * jax.random.normal(k[6], (C,), jnp.float32)

    out = residual_block_pallas(x_nhwc, w1_hwio, w2_hwio, g1, b1, g2, b2)
    out = jax.block_until_ready(out)

    ref = reference_jax(x_nhwc, w1_hwio, w2_hwio, g1, b1, g2, b2)
    assert out.shape == (N, H, W, C)
    err = jnp.max(jnp.abs(out - ref))
    # bf16 MXU operands (per perf review) bound the error vs the f32 reference;
    # expected max abs error is ~1e-2 after two BN-normalized convs.
    assert jnp.allclose(out, ref, atol=5e-2, rtol=5e-2), f"max abs err {err}"

    print("KERNEL_OK")
</pallas_src>

<mosaic_0001>
module attributes {stable_mosaic.version = 11 : i64} {
  func.func @residual_block_kernel(%arg0: i32, %arg1: memref<32x512xf32, #tpu.memory_space<vmem>>, %arg2: memref<3x512x512xbf16, #tpu.memory_space<vmem>>, %arg3: memref<3x512x512xbf16, #tpu.memory_space<vmem>>, %arg4: memref<512x512xf32, #tpu.memory_space<vmem>>, %arg5: memref<32x512xf32, #tpu.memory_space<vmem>>, %arg6: memref<32x512xf32, #tpu.memory_space<vmem>>, %arg7: memref<1x512xf32, #tpu.memory_space<vmem>>, %arg8: memref<1x512xf32, #tpu.memory_space<vmem>>, %arg9: memref<1x512xf32, #tpu.memory_space<vmem>>, %arg10: memref<1x512xf32, #tpu.memory_space<vmem>>, %arg11: memref<32x512xf32, #tpu.memory_space<vmem>>) attributes {dimension_semantics = [#tpu.dimension_semantics<arbitrary>], iteration_bounds = array<i64: 1>, scalar_prefetch = 0 : i64, scratch_operands = 0 : i64, tpu.core_type = #tpu.core_type<tc>, window_params = [{pipeline_mode = #tpu.pipeline_mode<synchronous>, transform_indices = @transform_0, window_bounds = array<i64: 32, 512>}, {pipeline_mode = #tpu.pipeline_mode<synchronous>, transform_indices = @transform_1, window_bounds = array<i64: 3, 512, 512>}, {pipeline_mode = #tpu.pipeline_mode<synchronous>, transform_indices = @transform_2, window_bounds = array<i64: 3, 512, 512>}, {pipeline_mode = #tpu.pipeline_mode<synchronous>, transform_indices = @transform_3, window_bounds = array<i64: 512, 512>}, {pipeline_mode = #tpu.pipeline_mode<synchronous>, transform_indices = @transform_4, window_bounds = array<i64: 32, 512>}, {pipeline_mode = #tpu.pipeline_mode<synchronous>, transform_indices = @transform_5, window_bounds = array<i64: 32, 512>}, {pipeline_mode = #tpu.pipeline_mode<synchronous>, transform_indices = @transform_6, window_bounds = array<i64: 1, 512>}, {pipeline_mode = #tpu.pipeline_mode<synchronous>, transform_indices = @transform_7, window_bounds = array<i64: 1, 512>}, {pipeline_mode = #tpu.pipeline_mode<synchronous>, transform_indices = @transform_8, window_bounds = array<i64: 1, 512>}, {pipeline_mode = #tpu.pipeline_mode<synchronous>, transform_indices = @transform_9, window_bounds = array<i64: 1, 512>}, {pipeline_mode = #tpu.pipeline_mode<synchronous>, transform_indices = @transform_10, window_bounds = array<i64: 32, 512>}]} {
    %c0 = arith.constant 0 : index
    %c0_0 = arith.constant 0 : index
    %0 = vector.load %arg1[%c0, %c0_0] : memref<32x512xf32, #tpu.memory_space<vmem>>, vector<32x512xf32>
    %c0_1 = arith.constant 0 : index
    %c0_2 = arith.constant 0 : index
    %1 = vector.load %arg4[%c0_1, %c0_2] : memref<512x512xf32, #tpu.memory_space<vmem>>, vector<512x512xf32>
    %c0_3 = arith.constant 0 : index
    %c0_4 = arith.constant 0 : index
    %2 = vector.load %arg5[%c0_3, %c0_4] : memref<32x512xf32, #tpu.memory_space<vmem>>, vector<32x512xf32>
    %c0_5 = arith.constant 0 : index
    %c0_6 = arith.constant 0 : index
    %3 = vector.load %arg6[%c0_5, %c0_6] : memref<32x512xf32, #tpu.memory_space<vmem>>, vector<32x512xf32>
    %4 = arith.truncf %0 : vector<32x512xf32> to vector<32x512xbf16>
    %5 = vector.extract_strided_slice %0 {offsets = [31, 0], sizes = [1, 512], strides = [1, 1]} : vector<32x512xf32> to vector<1x512xf32>
    %6 = vector.extract_strided_slice %0 {offsets = [0, 0], sizes = [31, 512], strides = [1, 1]} : vector<32x512xf32> to vector<31x512xf32>
    %7 = tpu.concatenate %5, %6 in 0 : vector<1x512xf32>, vector<31x512xf32> -> vector<32x512xf32>
    %8 = arith.truncf %7 : vector<32x512xf32> to vector<32x512xbf16>
    %9 = vector.extract_strided_slice %0 {offsets = [1, 0], sizes = [31, 512], strides = [1, 1]} : vector<32x512xf32> to vector<31x512xf32>
    %10 = vector.extract_strided_slice %0 {offsets = [0, 0], sizes = [1, 512], strides = [1, 1]} : vector<32x512xf32> to vector<1x512xf32>
    %11 = tpu.concatenate %9, %10 in 0 : vector<31x512xf32>, vector<1x512xf32> -> vector<32x512xf32>
    %12 = arith.truncf %11 : vector<32x512xf32> to vector<32x512xbf16>
    %c1 = arith.constant 1 : index
    %c0_7 = arith.constant 0 : index
    %c0_8 = arith.constant 0 : index
    %13 = vector.load %arg2[%c1, %c0_7, %c0_8] : memref<3x512x512xbf16, #tpu.memory_space<vmem>>, vector<1x512x512xbf16>
    %14 = vector.shape_cast %13 : vector<1x512x512xbf16> to vector<512x512xbf16>
    %cst = arith.constant dense<0.000000e+00> : vector<32x512xf32>
    %15 = tpu.matmul %4, %14, %cst {dimension_numbers = #tpu.dot_dimension_numbers<[1], [0], [0], [1], [0, 0, 1, 1], [], []>} : vector<32x512xbf16>, vector<512x512xbf16>, vector<32x512xf32> -> vector<32x512xf32>
    %c0_9 = arith.constant 0 : index
    %c0_10 = arith.constant 0 : index
    %c0_11 = arith.constant 0 : index
    %16 = vector.load %arg2[%c0_9, %c0_10, %c0_11] : memref<3x512x512xbf16, #tpu.memory_space<vmem>>, vector<1x512x512xbf16>
    %17 = vector.shape_cast %16 : vector<1x512x512xbf16> to vector<512x512xbf16>
    %cst_12 = arith.constant dense<0.000000e+00> : vector<32x512xf32>
    %18 = tpu.matmul %8, %17, %cst_12 {dimension_numbers = #tpu.dot_dimension_numbers<[1], [0], [0], [1], [0, 0, 1, 1], [], []>} : vector<32x512xbf16>, vector<512x512xbf16>, vector<32x512xf32> -> vector<32x512xf32>
    %c2 = arith.constant 2 : index
    %c0_13 = arith.constant 0 : index
    %c0_14 = arith.constant 0 : index
    %19 = vector.load %arg2[%c2, %c0_13, %c0_14] : memref<3x512x512xbf16, #tpu.memory_space<vmem>>, vector<1x512x512xbf16>
    %20 = vector.shape_cast %19 : vector<1x512x512xbf16> to vector<512x512xbf16>
    %cst_15 = arith.constant dense<0.000000e+00> : vector<32x512xf32>
    %21 = tpu.matmul %12, %20, %cst_15 {dimension_numbers = #tpu.dot_dimension_numbers<[1], [0], [0], [1], [0, 0, 1, 1], [], []>} : vector<32x512xbf16>, vector<512x512xbf16>, vector<32x512xf32> -> vector<32x512xf32>
    %22 = arith.mulf %2, %18 : vector<32x512xf32>
    %23 = arith.addf %15, %22 : vector<32x512xf32>
    %24 = arith.mulf %3, %21 : vector<32x512xf32>
    %25 = arith.addf %23, %24 : vector<32x512xf32>
    %c0_16 = arith.constant 0 : index
    %c0_17 = arith.constant 0 : index
    %26 = vector.load %arg7[%c0_16, %c0_17] : memref<1x512xf32, #tpu.memory_space<vmem>>, vector<1x512xf32>
    %c0_18 = arith.constant 0 : index
    %c0_19 = arith.constant 0 : index
    %27 = vector.load %arg8[%c0_18, %c0_19] : memref<1x512xf32, #tpu.memory_space<vmem>>, vector<1x512xf32>
    %cst_20 = arith.constant dense<0.000000e+00> : vector<32x512xf32>
    %28 = tpu.matmul %25, %1, %cst_20 {dimension_numbers = #tpu.dot_dimension_numbers<[1], [0], [0], [1], [0, 0, 1, 1], [], []>} : vector<32x512xf32>, vector<512x512xf32>, vector<32x512xf32> -> vector<32x512xf32>
    %cst_21 = arith.constant dense<0.000000e+00> : vector<512xf32>
    %29 = vector.multi_reduction <add>, %28, %cst_21 [0] : vector<32x512xf32> to vector<512xf32>
    %30 = vector.shape_cast %29 : vector<512xf32> to vector<1x512xf32>
    %31 = vector.broadcast %30 : vector<1x512xf32> to vector<32x512xf32>
    %32 = arith.subf %25, %31 : vector<32x512xf32>
    %33 = arith.mulf %32, %32 : vector<32x512xf32>
    %cst_22 = arith.constant dense<0.000000e+00> : vector<32x512xf32>
    %34 = tpu.matmul %33, %1, %cst_22 {dimension_numbers = #tpu.dot_dimension_numbers<[1], [0], [0], [1], [0, 0, 1, 1], [], []>} : vector<32x512xf32>, vector<512x512xf32>, vector<32x512xf32> -> vector<32x512xf32>
    %cst_23 = arith.constant dense<0.000000e+00> : vector<512xf32>
    %35 = vector.multi_reduction <add>, %34, %cst_23 [0] : vector<32x512xf32> to vector<512xf32>
    %36 = vector.shape_cast %35 : vector<512xf32> to vector<1x512xf32>
    %cst_24 = arith.constant 9.99999974E-6 : f32
    %37 = vector.broadcast %cst_24 : f32 to vector<1x512xf32>
    %38 = arith.addf %36, %37 : vector<1x512xf32>
    %39 = math.rsqrt %38 : vector<1x512xf32>
    %40 = arith.mulf %26, %39 : vector<1x512xf32>
    %41 = vector.broadcast %40 : vector<1x512xf32> to vector<32x512xf32>
    %42 = arith.mulf %32, %41 : vector<32x512xf32>
    %43 = vector.broadcast %27 : vector<1x512xf32> to vector<32x512xf32>
    %44 = arith.addf %42, %43 : vector<32x512xf32>
    %cst_25 = arith.constant 0.000000e+00 : f32
    %45 = vector.broadcast %cst_25 : f32 to vector<32x512xf32>
    %46 = arith.maximumf %44, %45 : vector<32x512xf32>
    %47 = arith.truncf %46 : vector<32x512xf32> to vector<32x512xbf16>
    %48 = vector.extract_strided_slice %46 {offsets = [31, 0], sizes = [1, 512], strides = [1, 1]} : vector<32x512xf32> to vector<1x512xf32>
    %49 = vector.extract_strided_slice %46 {offsets = [0, 0], sizes = [31, 512], strides = [1, 1]} : vector<32x512xf32> to vector<31x512xf32>
    %50 = tpu.concatenate %48, %49 in 0 : vector<1x512xf32>, vector<31x512xf32> -> vector<32x512xf32>
    %51 = arith.truncf %50 : vector<32x512xf32> to vector<32x512xbf16>
    %52 = vector.extract_strided_slice %46 {offsets = [1, 0], sizes = [31, 512], strides = [1, 1]} : vector<32x512xf32> to vector<31x512xf32>
    %53 = vector.extract_strided_slice %46 {offsets = [0, 0], sizes = [1, 512], strides = [1, 1]} : vector<32x512xf32> to vector<1x512xf32>
    %54 = tpu.concatenate %52, %53 in 0 : vector<31x512xf32>, vector<1x512xf32> -> vector<32x512xf32>
    %55 = arith.truncf %54 : vector<32x512xf32> to vector<32x512xbf16>
    %c1_26 = arith.constant 1 : index
    %c0_27 = arith.constant 0 : index
    %c0_28 = arith.constant 0 : index
    %56 = vector.load %arg3[%c1_26, %c0_27, %c0_28] : memref<3x512x512xbf16, #tpu.memory_space<vmem>>, vector<1x512x512xbf16>
    %57 = vector.shape_cast %56 : vector<1x512x512xbf16> to vector<512x512xbf16>
    %cst_29 = arith.constant dense<0.000000e+00> : vector<32x512xf32>
    %58 = tpu.matmul %47, %57, %cst_29 {dimension_numbers = #tpu.dot_dimension_numbers<[1], [0], [0], [1], [0, 0, 1, 1], [], []>} : vector<32x512xbf16>, vector<512x512xbf16>, vector<32x512xf32> -> vector<32x512xf32>
    %c0_30 = arith.constant 0 : index
    %c0_31 = arith.constant 0 : index
    %c0_32 = arith.constant 0 : index
    %59 = vector.load %arg3[%c0_30, %c0_31, %c0_32] : memref<3x512x512xbf16, #tpu.memory_space<vmem>>, vector<1x512x512xbf16>
    %60 = vector.shape_cast %59 : vector<1x512x512xbf16> to vector<512x512xbf16>
    %cst_33 = arith.constant dense<0.000000e+00> : vector<32x512xf32>
    %61 = tpu.matmul %51, %60, %cst_33 {dimension_numbers = #tpu.dot_dimension_numbers<[1], [0], [0], [1], [0, 0, 1, 1], [], []>} : vector<32x512xbf16>, vector<512x512xbf16>, vector<32x512xf32> -> vector<32x512xf32>
    %c2_34 = arith.constant 2 : index
    %c0_35 = arith.constant 0 : index
    %c0_36 = arith.constant 0 : index
    %62 = vector.load %arg3[%c2_34, %c0_35, %c0_36] : memref<3x512x512xbf16, #tpu.memory_space<vmem>>, vector<1x512x512xbf16>
    %63 = vector.shape_cast %62 : vector<1x512x512xbf16> to vector<512x512xbf16>
    %cst_37 = arith.constant dense<0.000000e+00> : vector<32x512xf32>
    %64 = tpu.matmul %55, %63, %cst_37 {dimension_numbers = #tpu.dot_dimension_numbers<[1], [0], [0], [1], [0, 0, 1, 1], [], []>} : vector<32x512xbf16>, vector<512x512xbf16>, vector<32x512xf32> -> vector<32x512xf32>
    %65 = arith.mulf %2, %61 : vector<32x512xf32>
    %66 = arith.addf %58, %65 : vector<32x512xf32>
    %67 = arith.mulf %3, %64 : vector<32x512xf32>
    %68 = arith.addf %66, %67 : vector<32x512xf32>
    %c0_38 = arith.constant 0 : index
    %c0_39 = arith.constant 0 : index
    %69 = vector.load %arg9[%c0_38, %c0_39] : memref<1x512xf32, #tpu.memory_space<vmem>>, vector<1x512xf32>
    %c0_40 = arith.constant 0 : index
    %c0_41 = arith.constant 0 : index
    %70 = vector.load %arg10[%c0_40, %c0_41] : memref<1x512xf32, #tpu.memory_space<vmem>>, vector<1x512xf32>
    %cst_42 = arith.constant dense<0.000000e+00> : vector<32x512xf32>
    %71 = tpu.matmul %68, %1, %cst_42 {dimension_numbers = #tpu.dot_dimension_numbers<[1], [0], [0], [1], [0, 0, 1, 1], [], []>} : vector<32x512xf32>, vector<512x512xf32>, vector<32x512xf32> -> vector<32x512xf32>
    %cst_43 = arith.constant dense<0.000000e+00> : vector<512xf32>
    %72 = vector.multi_reduction <add>, %71, %cst_43 [0] : vector<32x512xf32> to vector<512xf32>
    %73 = vector.shape_cast %72 : vector<512xf32> to vector<1x512xf32>
    %74 = vector.broadcast %73 : vector<1x512xf32> to vector<32x512xf32>
    %75 = arith.subf %68, %74 : vector<32x512xf32>
    %76 = arith.mulf %75, %75 : vector<32x512xf32>
    %cst_44 = arith.constant dense<0.000000e+00> : vector<32x512xf32>
    %77 = tpu.matmul %76, %1, %cst_44 {dimension_numbers = #tpu.dot_dimension_numbers<[1], [0], [0], [1], [0, 0, 1, 1], [], []>} : vector<32x512xf32>, vector<512x512xf32>, vector<32x512xf32> -> vector<32x512xf32>
    %cst_45 = arith.constant dense<0.000000e+00> : vector<512xf32>
    %78 = vector.multi_reduction <add>, %77, %cst_45 [0] : vector<32x512xf32> to vector<512xf32>
    %79 = vector.shape_cast %78 : vector<512xf32> to vector<1x512xf32>
    %cst_46 = arith.constant 9.99999974E-6 : f32
    %80 = vector.broadcast %cst_46 : f32 to vector<1x512xf32>
    %81 = arith.addf %79, %80 : vector<1x512xf32>
    %82 = math.rsqrt %81 : vector<1x512xf32>
    %83 = arith.mulf %69, %82 : vector<1x512xf32>
    %84 = vector.broadcast %83 : vector<1x512xf32> to vector<32x512xf32>
    %85 = arith.mulf %75, %84 : vector<32x512xf32>
    %86 = vector.broadcast %70 : vector<1x512xf32> to vector<32x512xf32>
    %87 = arith.addf %85, %86 : vector<32x512xf32>
    %88 = arith.addf %87, %0 : vector<32x512xf32>
    %cst_47 = arith.constant 0.000000e+00 : f32
    %89 = vector.broadcast %cst_47 : f32 to vector<32x512xf32>
    %90 = arith.maximumf %88, %89 : vector<32x512xf32>
    %c0_48 = arith.constant 0 : index
    %c0_49 = arith.constant 0 : index
    %91 = vector.load %arg11[%c0_48, %c0_49] : memref<32x512xf32, #tpu.memory_space<vmem>>, vector<32x512xf32>
    tpu.vector_store %arg11[%c0_48, %c0_49], %90 {strides = array<i32>} : memref<32x512xf32, #tpu.memory_space<vmem>>, vector<32x512xf32>,
    return
  }
  func.func @transform_0(%arg0: i32) -> (i32, i32) {
    %c0_i32 = arith.constant 0 : i32
    %c0_i32_0 = arith.constant 0 : i32
    %c0_i32_1 = arith.constant 0 : i32
    return %c0_i32, %c0_i32_0 : i32, i32
  }
  func.func @transform_1(%arg0: i32) -> (i32, i32, i32) {
    %c0_i32 = arith.constant 0 : i32
    %c0_i32_0 = arith.constant 0 : i32
    %c0_i32_1 = arith.constant 0 : i32
    %c0_i32_2 = arith.constant 0 : i32
    return %c0_i32, %c0_i32_0, %c0_i32_1 : i32, i32, i32
  }
  func.func @transform_2(%arg0: i32) -> (i32, i32, i32) {
    %c0_i32 = arith.constant 0 : i32
    %c0_i32_0 = arith.constant 0 : i32
    %c0_i32_1 = arith.constant 0 : i32
    %c0_i32_2 = arith.constant 0 : i32
    return %c0_i32, %c0_i32_0, %c0_i32_1 : i32, i32, i32
  }
  func.func @transform_3(%arg0: i32) -> (i32, i32) {
    %c0_i32 = arith.constant 0 : i32
    %c0_i32_0 = arith.constant 0 : i32
    %c0_i32_1 = arith.constant 0 : i32
    return %c0_i32, %c0_i32_0 : i32, i32
  }
  func.func @transform_4(%arg0: i32) -> (i32, i32) {
    %c0_i32 = arith.constant 0 : i32
    %c0_i32_0 = arith.constant 0 : i32
    %c0_i32_1 = arith.constant 0 : i32
    return %c0_i32, %c0_i32_0 : i32, i32
  }
  func.func @transform_5(%arg0: i32) -> (i32, i32) {
    %c0_i32 = arith.constant 0 : i32
    %c0_i32_0 = arith.constant 0 : i32
    %c0_i32_1 = arith.constant 0 : i32
    return %c0_i32, %c0_i32_0 : i32, i32
  }
  func.func @transform_6(%arg0: i32) -> (i32, i32) {
    %c0_i32 = arith.constant 0 : i32
    %c0_i32_0 = arith.constant 0 : i32
    %c0_i32_1 = arith.constant 0 : i32
    return %c0_i32, %c0_i32_0 : i32, i32
  }
  func.func @transform_7(%arg0: i32) -> (i32, i32) {
    %c0_i32 = arith.constant 0 : i32
    %c0_i32_0 = arith.constant 0 : i32
    %c0_i32_1 = arith.constant 0 : i32
    return %c0_i32, %c0_i32_0 : i32, i32
  }
  func.func @transform_8(%arg0: i32) -> (i32, i32) {
    %c0_i32 = arith.constant 0 : i32
    %c0_i32_0 = arith.constant 0 : i32
    %c0_i32_1 = arith.constant 0 : i32
    return %c0_i32, %c0_i32_0 : i32, i32
  }
  func.func @transform_9(%arg0: i32) -> (i32, i32) {
    %c0_i32 = arith.constant 0 : i32
    %c0_i32_0 = arith.constant 0 : i32
    %c0_i32_1 = arith.constant 0 : i32
    return %c0_i32, %c0_i32_0 : i32, i32
  }
  func.func @transform_10(%arg0: i32) -> (i32, i32) {
    %c0_i32 = arith.constant 0 : i32
    %c0_i32_0 = arith.constant 0 : i32
    %c0_i32_1 = arith.constant 0 : i32
    return %c0_i32, %c0_i32_0 : i32, i32
  }
}

</mosaic_0001>

<llo_original>
// kernel: tpu_custom_call.1
$region0: #{tpu_custom_call.1}
  #allocation0 [shape = 'u32[]', space=smem, size = 0x4, offset = 0x4, fixed_abs, tag = 'smem constant byte address 0x4 - core index']
  #allocation1 [shape = 'u32[144,128]{1,0:T(1,128)}', space=vmem, size = 0x12000, scoped, tag = 'internal scratch']
  %s0 = inlined_call_operand.hbm [shape: f32[32,512], index: 0, kind: input, shape index: {}]
  %s1 = inlined_call_operand.hbm [shape: bf16[3,512,512], index: 1, kind: input, shape index: {}]
  %s2 = inlined_call_operand.hbm [shape: bf16[3,512,512], index: 2, kind: input, shape index: {}]
  %s3 = inlined_call_operand.hbm [shape: f32[512,512], index: 3, kind: input, shape index: {}]
  %s4 = inlined_call_operand.hbm [shape: f32[32,512], index: 4, kind: input, shape index: {}]
  %s5 = inlined_call_operand.hbm [shape: f32[32,512], index: 5, kind: input, shape index: {}]
  %s6 = inlined_call_operand.hbm [shape: f32[1,512], index: 6, kind: input, shape index: {}]
  %s7 = inlined_call_operand.hbm [shape: f32[1,512], index: 7, kind: input, shape index: {}]
  %s8 = inlined_call_operand.hbm [shape: f32[1,512], index: 8, kind: input, shape index: {}]
  %s9 = inlined_call_operand.hbm [shape: f32[1,512], index: 9, kind: input, shape index: {}]
  %s10 = inlined_call_operand.hbm [shape: f32[32,512], index: 10, kind: output, shape index: {}]
  %s11 = sld [smem:[#allocation0]]
  $region90: #{tpu_custom_call.1} parent=0
    _
  %s13 = ssub.s32 1, %s11
  %s14 = scalar_select 0, %s13, %s11
  $region1: #{tpu_custom_call.1} parent=0
    #allocation2 [shape = 'u8[65536]{0}', space=vmem, size = 0x10000, scoped, tag = 'input window, operand 0, single buffered']
    #allocation3 [shape = 's32[1]{0}', space=sflag, size = 0x4, scoped, tag = 'scoped memory for tpu_custom_call.1']
    #allocation4 [shape = 's32[1]{0}', space=sflag, size = 0x4, scoped, tag = 'scoped memory for tpu_custom_call.1']
    #allocation5 [shape = 'u8[1572864]{0}', space=vmem, size = 0x180000, scoped, tag = 'input window, operand 1, single buffered']
    #allocation6 [shape = 's32[1]{0}', space=sflag, size = 0x4, scoped, tag = 'scoped memory for tpu_custom_call.1']
    #allocation7 [shape = 'u8[1572864]{0}', space=vmem, size = 0x180000, scoped, tag = 'input window, operand 2, single buffered']
    #allocation8 [shape = 'u8[1048576]{0}', space=vmem, size = 0x100000, scoped, tag = 'input window, operand 3, single buffered']
    #allocation9 [shape = 's32[1]{0}', space=sflag, size = 0x4, scoped, tag = 'scoped memory for tpu_custom_call.1']
    #allocation10 [shape = 'u8[65536]{0}', space=vmem, size = 0x10000, scoped, tag = 'input window, operand 4, single buffered']
    #allocation11 [shape = 'u8[65536]{0}', space=vmem, size = 0x10000, scoped, tag = 'input window, operand 5, single buffered']
    #allocation12 [shape = 's32[1]{0}', space=sflag, size = 0x4, scoped, tag = 'scoped memory for tpu_custom_call.1']
    #allocation13 [shape = 'u8[2048]{0}', space=vmem, size = 0x800, scoped, tag = 'input window, operand 6, single buffered']
    #allocation14 [shape = 'u8[2048]{0}', space=vmem, size = 0x800, scoped, tag = 'input window, operand 7, single buffered']
    #allocation15 [shape = 's32[1]{0}', space=sflag, size = 0x4, scoped, tag = 'scoped memory for tpu_custom_call.1']
    #allocation16 [shape = 'u8[2048]{0}', space=vmem, size = 0x800, scoped, tag = 'input window, operand 8, single buffered']
    #allocation17 [shape = 'u8[2048]{0}', space=vmem, size = 0x800, scoped, tag = 'input window, operand 9, single buffered']
    #allocation18 [shape = 's32[1]{0}', space=sflag, size = 0x4, scoped, tag = 'scoped memory for tpu_custom_call.1']
    #allocation19 [shape = 'u8[65536]{0}', space=vmem, size = 0x10000, scoped, tag = 'output window, operand 0, single buffered']
    %15 = vsyncpa [#allocation3], 0
    %16 = vsyncpa [#allocation6], 0
    %17 = vsyncpa [#allocation9], 0
    %18 = vsyncpa [#allocation12], 0
    %19 = vsyncpa [#allocation15], 0
    %20 = vsyncpa [#allocation18], 0
    %21 = vsyncpa [#allocation4], 0
    // Predicated region
    $region2: #{tpu_custom_call.1} parent=1 // pred_check
      _
    $region3: #{tpu_custom_call.1} parent=1 // pred_check_branch
      %23 = sbr.rel (0) target = $region5
    $region4: #{tpu_custom_call.1} parent=1 // pred_region
      %s25 = ssub.s32 2048, 2048
      %26 = vsyncadd [#allocation3], %s25
      %s27 = sshll.u32 [#allocation2], 4
      %s28 = int_to_ptr.vmem [resolvable:$true] %s27
      %33 = dma.hbm_to_vmem [thread:$0]  %s0, 2048, %s28, [#allocation3], 512, 512, 32
    $region5: #{tpu_custom_call.1} parent=1 // pred_fallthru
      _
    // Predicated region
    $region6: #{tpu_custom_call.1} parent=1 // pred_check
      _
    $region7: #{tpu_custom_call.1} parent=1 // pred_check_branch
      %35 = sbr.rel (0) target = $region9
    $region8: #{tpu_custom_call.1} parent=1 // pred_region
      %s37 = ssub.s32 49152, 49152
      %38 = vsyncadd [#allocation6], %s37
      %s39 = sshll.u32 [#allocation5], 4
      %s40 = int_to_ptr.vmem [resolvable:$true] %s39
      %45 = dma.hbm_to_vmem [thread:$0]  %s1, 49152, %s40, [#allocation6], 256, 256, 16
    $region9: #{tpu_custom_call.1} parent=1 // pred_fallthru
      _
    // Predicated region
    $region10: #{tpu_custom_call.1} parent=1 // pred_check
      _
    $region11: #{tpu_custom_call.1} parent=1 // pred_check_branch
      %47 = sbr.rel (0) target = $region13
    $region12: #{tpu_custom_call.1} parent=1 // pred_region
      %s49 = ssub.s32 49152, 49152
      %50 = vsyncadd [#allocation6], %s49
      %s51 = sshll.u32 [#allocation7], 4
      %s52 = int_to_ptr.vmem [resolvable:$true] %s51
      %57 = dma.hbm_to_vmem [thread:$0]  %s2, 49152, %s52, [#allocation6], 256, 256, 16
    $region13: #{tpu_custom_call.1} parent=1 // pred_fallthru
      _
    // Predicated region
    $region14: #{tpu_custom_call.1} parent=1 // pred_check
      _
    $region15: #{tpu_custom_call.1} parent=1 // pred_check_branch
      %59 = sbr.rel (0) target = $region17
    $region16: #{tpu_custom_call.1} parent=1 // pred_region
      %s61 = ssub.s32 32768, 32768
      %62 = vsyncadd [#allocation9], %s61
      %s63 = sshll.u32 [#allocation8], 4
      %s64 = int_to_ptr.vmem [resolvable:$true] %s63
      %69 = dma.hbm_to_vmem [thread:$0]  %s3, 32768, %s64, [#allocation9], 512, 512, 32
    $region17: #{tpu_custom_call.1} parent=1 // pred_fallthru
      _
    // Predicated region
    $region18: #{tpu_custom_call.1} parent=1 // pred_check
      _
    $region19: #{tpu_custom_call.1} parent=1 // pred_check_branch
      %71 = sbr.rel (0) target = $region21
    $region20: #{tpu_custom_call.1} parent=1 // pred_region
      %s73 = ssub.s32 2048, 2048
      %74 = vsyncadd [#allocation9], %s73
      %s75 = sshll.u32 [#allocation10], 4
      %s76 = int_to_ptr.vmem [resolvable:$true] %s75
      %81 = dma.hbm_to_vmem [thread:$0]  %s4, 2048, %s76, [#allocation9], 512, 512, 32
    $region21: #{tpu_custom_call.1} parent=1 // pred_fallthru
      _
    // Predicated region
    $region22: #{tpu_custom_call.1} parent=1 // pred_check
      _
    $region23: #{tpu_custom_call.1} parent=1 // pred_check_branch
      %83 = sbr.rel (0) target = $region25
    $region24: #{tpu_custom_call.1} parent=1 // pred_region
      %s85 = ssub.s32 2048, 2048
      %86 = vsyncadd [#allocation12], %s85
      %s87 = sshll.u32 [#allocation11], 4
      %s88 = int_to_ptr.vmem [resolvable:$true] %s87
      %93 = dma.hbm_to_vmem [thread:$0]  %s5, 2048, %s88, [#allocation12], 512, 512, 32
    $region25: #{tpu_custom_call.1} parent=1 // pred_fallthru
      _
    // Predicated region
    $region26: #{tpu_custom_call.1} parent=1 // pred_check
      _
    $region27: #{tpu_custom_call.1} parent=1 // pred_check_branch
      %95 = sbr.rel (0) target = $region29
    $region28: #{tpu_custom_call.1} parent=1 // pred_region
      %s97 = ssub.s32 64, 64
      %98 = vsyncadd [#allocation12], %s97
      %s100 = sshll.u32 [#allocation13], 4
      %s101 = int_to_ptr.vmem [resolvable:$true] %s100
      %103 = dma.hbm_to_vmem [thread:$0]  %s6, 64, %s101, [#allocation12]
    $region29: #{tpu_custom_call.1} parent=1 // pred_fallthru
      _
    // Predicated region
    $region30: #{tpu_custom_call.1} parent=1 // pred_check
      _
    $region31: #{tpu_custom_call.1} parent=1 // pred_check_branch
      %105 = sbr.rel (0) target = $region33
    $region32: #{tpu_custom_call.1} parent=1 // pred_region
      %s107 = ssub.s32 64, 64
      %108 = vsyncadd [#allocation15], %s107
      %s110 = sshll.u32 [#allocation14], 4
      %s111 = int_to_ptr.vmem [resolvable:$true] %s110
      %113 = dma.hbm_to_vmem [thread:$0]  %s7, 64, %s111, [#allocation15]
    $region33: #{tpu_custom_call.1} parent=1 // pred_fallthru
      _
    // Predicated region
    $region34: #{tpu_custom_call.1} parent=1 // pred_check
      _
    $region35: #{tpu_custom_call.1} parent=1 // pred_check_branch
      %115 = sbr.rel (0) target = $region37
    $region36: #{tpu_custom_call.1} parent=1 // pred_region
      %s117 = ssub.s32 64, 64
      %118 = vsyncadd [#allocation15], %s117
      %s120 = sshll.u32 [#allocation16], 4
      %s121 = int_to_ptr.vmem [resolvable:$true] %s120
      %123 = dma.hbm_to_vmem [thread:$0]  %s8, 64, %s121, [#allocation15]
    $region37: #{tpu_custom_call.1} parent=1 // pred_fallthru
      _
    // Predicated region
    $region38: #{tpu_custom_call.1} parent=1 // pred_check
      _
    $region39: #{tpu_custom_call.1} parent=1 // pred_check_branch
      %125 = sbr.rel (0) target = $region41
    $region40: #{tpu_custom_call.1} parent=1 // pred_region
      %s127 = ssub.s32 64, 64
      %128 = vsyncadd [#allocation18], %s127
      %s130 = sshll.u32 [#allocation17], 4
      %s131 = int_to_ptr.vmem [resolvable:$true] %s130
      %133 = dma.hbm_to_vmem [thread:$0]  %s9, 64, %s131, [#allocation18]
    $region41: #{tpu_custom_call.1} parent=1 // pred_fallthru
      _
    // Predicated region
    $region42: #{tpu_custom_call.1} parent=1 // pred_check
      _
    $region43: #{tpu_custom_call.1} parent=1 // pred_check_branch
      %135 = sbr.rel (0) target = $region45
    $region44: #{tpu_custom_call.1} parent=1 // pred_region
      %136 = dma.done [#allocation3], 2048
    $region45: #{tpu_custom_call.1} parent=1 // pred_fallthru
      _
    // Predicated region
    $region46: #{tpu_custom_call.1} parent=1 // pred_check
      _
    $region47: #{tpu_custom_call.1} parent=1 // pred_check_branch
      %138 = sbr.rel (0) target = $region49
    $region48: #{tpu_custom_call.1} parent=1 // pred_region
      %139 = dma.done [#allocation6], 49152
    $region49: #{tpu_custom_call.1} parent=1 // pred_fallthru
      _
    // Predicated region
    $region50: #{tpu_custom_call.1} parent=1 // pred_check
      _
    $region51: #{tpu_custom_call.1} parent=1 // pred_check_branch
      %141 = sbr.rel (0) target = $region53
    $region52: #{tpu_custom_call.1} parent=1 // pred_region
      %142 = dma.done [#allocation6], 49152
    $region53: #{tpu_custom_call.1} parent=1 // pred_fallthru
      _
    // Predicated region
    $region54: #{tpu_custom_call.1} parent=1 // pred_check
      _
    $region55: #{tpu_custom_call.1} parent=1 // pred_check_branch
      %144 = sbr.rel (0) target = $region57
    $region56: #{tpu_custom_call.1} parent=1 // pred_region
      %145 = dma.done [#allocation9], 32768
    $region57: #{tpu_custom_call.1} parent=1 // pred_fallthru
      _
    // Predicated region
    $region58: #{tpu_custom_call.1} parent=1 // pred_check
      _
    $region59: #{tpu_custom_call.1} parent=1 // pred_check_branch
      %147 = sbr.rel (0) target = $region61
    $region60: #{tpu_custom_call.1} parent=1 // pred_region
      %148 = dma.done [#allocation9], 2048
    $region61: #{tpu_custom_call.1} parent=1 // pred_fallthru
      _
    // Predicated region
    $region62: #{tpu_custom_call.1} parent=1 // pred_check
      _
    $region63: #{tpu_custom_call.1} parent=1 // pred_check_branch
      %150 = sbr.rel (0) target = $region65
    $region64: #{tpu_custom_call.1} parent=1 // pred_region
      %151 = dma.done [#allocation12], 2048
    $region65: #{tpu_custom_call.1} parent=1 // pred_fallthru
      _
    // Predicated region
    $region66: #{tpu_custom_call.1} parent=1 // pred_check
      _
    $region67: #{tpu_custom_call.1} parent=1 // pred_check_branch
      %153 = sbr.rel (0) target = $region69
    $region68: #{tpu_custom_call.1} parent=1 // pred_region
      %154 = dma.done [#allocation12], 64
    $region69: #{tpu_custom_call.1} parent=1 // pred_fallthru
      _
    // Predicated region
    $region70: #{tpu_custom_call.1} parent=1 // pred_check
      _
    $region71: #{tpu_custom_call.1} parent=1 // pred_check_branch
      %156 = sbr.rel (0) target = $region73
    $region72: #{tpu_custom_call.1} parent=1 // pred_region
      %157 = dma.done [#allocation15], 64
    $region73: #{tpu_custom_call.1} parent=1 // pred_fallthru
      _
    // Predicated region
    $region74: #{tpu_custom_call.1} parent=1 // pred_check
      _
    $region75: #{tpu_custom_call.1} parent=1 // pred_check_branch
      %159 = sbr.rel (0) target = $region77
    $region76: #{tpu_custom_call.1} parent=1 // pred_region
      %160 = dma.done [#allocation15], 64
    $region77: #{tpu_custom_call.1} parent=1 // pred_fallthru
      _
    // Predicated region
    $region78: #{tpu_custom_call.1} parent=1 // pred_check
      _
    $region79: #{tpu_custom_call.1} parent=1 // pred_check_branch
      %162 = sbr.rel (0) target = $region81
    $region80: #{tpu_custom_call.1} parent=1 // pred_region
      %163 = dma.done [#allocation18], 64
    $region81: #{tpu_custom_call.1} parent=1 // pred_fallthru
      _
    %v164 = vld [vmem:[#allocation2] sm:$0xff]
    %v165 = vld [vmem:[#allocation2 + $0x8] sm:$0xff]
    %v166 = vld [vmem:[#allocation2 + $0x10] sm:$0xff]
    %v167 = vld [vmem:[#allocation2 + $0x18] sm:$0xff]
    %v168 = vld [vmem:[#allocation2 + $0x20] sm:$0xff]
    %v169 = vld [vmem:[#allocation2 + $0x28] sm:$0xff]
    %v170 = vld [vmem:[#allocation2 + $0x30] sm:$0xff]
    %v171 = vld [vmem:[#allocation2 + $0x38] sm:$0xff]
    %v172 = vld [vmem:[#allocation2 + $0x40] sm:$0xff]
    %v173 = vld [vmem:[#allocation2 + $0x48] sm:$0xff]
    %v174 = vld [vmem:[#allocation2 + $0x50] sm:$0xff]
    %v175 = vld [vmem:[#allocation2 + $0x58] sm:$0xff]
    %v176 = vld [vmem:[#allocation2 + $0x60] sm:$0xff]
    %v177 = vld [vmem:[#allocation2 + $0x68] sm:$0xff]
    %v178 = vld [vmem:[#allocation2 + $0x70] sm:$0xff]
    %v179 = vld [vmem:[#allocation2 + $0x78] sm:$0xff]
    %v180 = vld [vmem:[#allocation8] sm:$0xff]
    %v181 = vld [vmem:[#allocation8 + $0x8] sm:$0xff]
    %v182 = vld [vmem:[#allocation8 + $0x10] sm:$0xff]
    %v183 = vld [vmem:[#allocation8 + $0x18] sm:$0xff]
    %v184 = vld [vmem:[#allocation8 + $0x20] sm:$0xff]
    %v185 = vld [vmem:[#allocation8 + $0x28] sm:$0xff]
    %v186 = vld [vmem:[#allocation8 + $0x30] sm:$0xff]
    %v187 = vld [vmem:[#allocation8 + $0x38] sm:$0xff]
    %v188 = vld [vmem:[#allocation8 + $0x40] sm:$0xff]
    %v189 = vld [vmem:[#allocation8 + $0x48] sm:$0xff]
    %v190 = vld [vmem:[#allocation8 + $0x50] sm:$0xff]
    %v191 = vld [vmem:[#allocation8 + $0x58] sm:$0xff]
    %v192 = vld [vmem:[#allocation8 + $0x60] sm:$0xff]
    %v193 = vld [vmem:[#allocation8 + $0x68] sm:$0xff]
    %v194 = vld [vmem:[#allocation8 + $0x70] sm:$0xff]
    %v195 = vld [vmem:[#allocation8 + $0x78] sm:$0xff]
    %v196 = vld [vmem:[#allocation8 + $0x80] sm:$0xff]
    %v197 = vld [vmem:[#allocation8 + $0x88] sm:$0xff]
    %v198 = vld [vmem:[#allocation8 + $0x90] sm:$0xff]
    %v199 = vld [vmem:[#allocation8 + $0x98] sm:$0xff]
    %v200 = vld [vmem:[#allocation8 + $0xa0] sm:$0xff]
    %v201 = vld [vmem:[#allocation8 + $0xa8] sm:$0xff]
    %v202 = vld [vmem:[#allocation8 + $0xb0] sm:$0xff]
    %v203 = vld [vmem:[#allocation8 + $0xb8] sm:$0xff]
    %v204 = vld [vmem:[#allocation8 + $0xc0] sm:$0xff]
    %v205 = vld [vmem:[#allocation8 + $0xc8] sm:$0xff]
    %v206 = vld [vmem:[#allocation8 + $0xd0] sm:$0xff]
    %v207 = vld [vmem:[#allocation8 + $0xd8] sm:$0xff]
    %v208 = vld [vmem:[#allocation8 + $0xe0] sm:$0xff]
    %v209 = vld [vmem:[#allocation8 + $0xe8] sm:$0xff]
    %v210 = vld [vmem:[#allocation8 + $0xf0] sm:$0xff]
    %v211 = vld [vmem:[#allocation8 + $0xf8] sm:$0xff]
    %v212 = vld [vmem:[#allocation8 + $0x100] sm:$0xff]
    %v213 = vld [vmem:[#allocation8 + $0x108] sm:$0xff]
    %v214 = vld [vmem:[#allocation8 + $0x110] sm:$0xff]
    %v215 = vld [vmem:[#allocation8 + $0x118] sm:$0xff]
    %v216 = vld [vmem:[#allocation8 + $0x120] sm:$0xff]
    %v217 = vld [vmem:[#allocation8 + $0x128] sm:$0xff]
    %v218 = vld [vmem:[#allocation8 + $0x130] sm:$0xff]
    %v219 = vld [vmem:[#allocation8 + $0x138] sm:$0xff]
    %v220 = vld [vmem:[#allocation8 + $0x140] sm:$0xff]
    %v221 = vld [vmem:[#allocation8 + $0x148] sm:$0xff]
    %v222 = vld [vmem:[#allocation8 + $0x150] sm:$0xff]
    %v223 = vld [vmem:[#allocation8 + $0x158] sm:$0xff]
    %v224 = vld [vmem:[#allocation8 + $0x160] sm:$0xff]
    %v225 = vld [vmem:[#allocation8 + $0x168] sm:$0xff]
    %v226 = vld [vmem:[#allocation8 + $0x170] sm:$0xff]
    %v227 = vld [vmem:[#allocation8 + $0x178] sm:$0xff]
    %v228 = vld [vmem:[#allocation8 + $0x180] sm:$0xff]
    %v229 = vld [vmem:[#allocation8 + $0x188] sm:$0xff]
    %v230 = vld [vmem:[#allocation8 + $0x190] sm:$0xff]
    %v231 = vld [vmem:[#allocation8 + $0x198] sm:$0xff]
    %v232 = vld [vmem:[#allocation8 + $0x1a0] sm:$0xff]
    %v233 = vld [vmem:[#allocation8 + $0x1a8] sm:$0xff]
    %v234 = vld [vmem:[#allocation8 + $0x1b0] sm:$0xff]
    %v235 = vld [vmem:[#allocation8 + $0x1b8] sm:$0xff]
    %v236 = vld [vmem:[#allocation8 + $0x1c0] sm:$0xff]
    %v237 = vld [vmem:[#allocation8 + $0x1c8] sm:$0xff]
    %v238 = vld [vmem:[#allocation8 + $0x1d0] sm:$0xff]
    %v239 = vld [vmem:[#allocation8 + $0x1d8] sm:$0xff]
    %v240 = vld [vmem:[#allocation8 + $0x1e0] sm:$0xff]
    %v241 = vld [vmem:[#allocation8 + $0x1e8] sm:$0xff]
    %v242 = vld [vmem:[#allocation8 + $0x1f0] sm:$0xff]
    %v243 = vld [vmem:[#allocation8 + $0x1f8] sm:$0xff]
    %v244 = vld [vmem:[#allocation8 + $0x200] sm:$0xff]
    %v245 = vld [vmem:[#allocation8 + $0x208] sm:$0xff]
    %v246 = vld [vmem:[#allocation8 + $0x210] sm:$0xff]
    %v247 = vld [vmem:[#allocation8 + $0x218] sm:$0xff]
    %v248 = vld [vmem:[#allocation8 + $0x220] sm:$0xff]
    %v249 = vld [vmem:[#allocation8 + $0x228] sm:$0xff]
    %v250 = vld [vmem:[#allocation8 + $0x230] sm:$0xff]
    %v251 = vld [vmem:[#allocation8 + $0x238] sm:$0xff]
    %v252 = vld [vmem:[#allocation8 + $0x240] sm:$0xff]
    %v253 = vld [vmem:[#allocation8 + $0x248] sm:$0xff]
    %v254 = vld [vmem:[#allocation8 + $0x250] sm:$0xff]
    %v255 = vld [vmem:[#allocation8 + $0x258] sm:$0xff]
    %v256 = vld [vmem:[#allocation8 + $0x260] sm:$0xff]
    %v257 = vld [vmem:[#allocation8 + $0x268] sm:$0xff]
    %v258 = vld [vmem:[#allocation8 + $0x270] sm:$0xff]
    %v259 = vld [vmem:[#allocation8 + $0x278] sm:$0xff]
    %v260 = vld [vmem:[#allocation8 + $0x280] sm:$0xff]
    %v261 = vld [vmem:[#allocation8 + $0x288] sm:$0xff]
    %v262 = vld [vmem:[#allocation8 + $0x290] sm:$0xff]
    %v263 = vld [vmem:[#allocation8 + $0x298] sm:$0xff]
    %v264 = vld [vmem:[#allocation8 + $0x2a0] sm:$0xff]
    %v265 = vld [vmem:[#allocation8 + $0x2a8] sm:$0xff]
    %v266 = vld [vmem:[#allocation8 + $0x2b0] sm:$0xff]
    %v267 = vld [vmem:[#allocation8 + $0x2b8] sm:$0xff]
    %v268 = vld [vmem:[#allocation8 + $0x2c0] sm:$0xff]
    %v269 = vld [vmem:[#allocation8 + $0x2c8] sm:$0xff]
    %v270 = vld [vmem:[#allocation8 + $0x2d0] sm:$0xff]
    %v271 = vld [vmem:[#allocation8 + $0x2d8] sm:$0xff]
    %v272 = vld [vmem:[#allocation8 + $0x2e0] sm:$0xff]
    %v273 = vld [vmem:[#allocation8 + $0x2e8] sm:$0xff]
    %v274 = vld [vmem:[#allocation8 + $0x2f0] sm:$0xff]
    %v275 = vld [vmem:[#allocation8 + $0x2f8] sm:$0xff]
    %v276 = vld [vmem:[#allocation8 + $0x300] sm:$0xff]
    %v277 = vld [vmem:[#allocation8 + $0x308] sm:$0xff]
    %v278 = vld [vmem:[#allocation8 + $0x310] sm:$0xff]
    %v279 = vld [vmem:[#allocation8 + $0x318] sm:$0xff]
    %v280 = vld [vmem:[#allocation8 + $0x320] sm:$0xff]
    %v281 = vld [vmem:[#allocation8 + $0x328] sm:$0xff]
    %v282 = vld [vmem:[#allocation8 + $0x330] sm:$0xff]
    %v283 = vld [vmem:[#allocation8 + $0x338] sm:$0xff]
    %v284 = vld [vmem:[#allocation8 + $0x340] sm:$0xff]
    %v285 = vld [vmem:[#allocation8 + $0x348] sm:$0xff]
    %v286 = vld [vmem:[#allocation8 + $0x350] sm:$0xff]
    %v287 = vld [vmem:[#allocation8 + $0x358] sm:$0xff]
    %v288 = vld [vmem:[#allocation8 + $0x360] sm:$0xff]
    %v289 = vld [vmem:[#allocation8 + $0x368] sm:$0xff]
    %v290 = vld [vmem:[#allocation8 + $0x370] sm:$0xff]
    %v291 = vld [vmem:[#allocation8 + $0x378] sm:$0xff]
    %v292 = vld [vmem:[#allocation8 + $0x380] sm:$0xff]
    %v293 = vld [vmem:[#allocation8 + $0x388] sm:$0xff]
    %v294 = vld [vmem:[#allocation8 + $0x390] sm:$0xff]
    %v295 = vld [vmem:[#allocation8 + $0x398] sm:$0xff]
    %v296 = vld [vmem:[#allocation8 + $0x3a0] sm:$0xff]
    %v297 = vld [vmem:[#allocation8 + $0x3a8] sm:$0xff]
    %v298 = vld [vmem:[#allocation8 + $0x3b0] sm:$0xff]
    %v299 = vld [vmem:[#allocation8 + $0x3b8] sm:$0xff]
    %v300 = vld [vmem:[#allocation8 + $0x3c0] sm:$0xff]
    %v301 = vld [vmem:[#allocation8 + $0x3c8] sm:$0xff]
    %v302 = vld [vmem:[#allocation8 + $0x3d0] sm:$0xff]
    %v303 = vld [vmem:[#allocation8 + $0x3d8] sm:$0xff]
    %v304 = vld [vmem:[#allocation8 + $0x3e0] sm:$0xff]
    %v305 = vld [vmem:[#allocation8 + $0x3e8] sm:$0xff]
    %v306 = vld [vmem:[#allocation8 + $0x3f0] sm:$0xff]
    %v307 = vld [vmem:[#allocation8 + $0x3f8] sm:$0xff]
    %v308 = vld [vmem:[#allocation8 + $0x400] sm:$0xff]
    %v309 = vld [vmem:[#allocation8 + $0x408] sm:$0xff]
    %v310 = vld [vmem:[#allocation8 + $0x410] sm:$0xff]
    %v311 = vld [vmem:[#allocation8 + $0x418] sm:$0xff]
    %v312 = vld [vmem:[#allocation8 + $0x420] sm:$0xff]
    %v313 = vld [vmem:[#allocation8 + $0x428] sm:$0xff]
    %v314 = vld [vmem:[#allocation8 + $0x430] sm:$0xff]
    %v315 = vld [vmem:[#allocation8 + $0x438] sm:$0xff]
    %v316 = vld [vmem:[#allocation8 + $0x440] sm:$0xff]
    %v317 = vld [vmem:[#allocation8 + $0x448] sm:$0xff]
    %v318 = vld [vmem:[#allocation8 + $0x450] sm:$0xff]
    %v319 = vld [vmem:[#allocation8 + $0x458] sm:$0xff]
    %v320 = vld [vmem:[#allocation8 + $0x460] sm:$0xff]
    %v321 = vld [vmem:[#allocation8 + $0x468] sm:$0xff]
    %v322 = vld [vmem:[#allocation8 + $0x470] sm:$0xff]
    %v323 = vld [vmem:[#allocation8 + $0x478] sm:$0xff]
    %v324 = vld [vmem:[#allocation8 + $0x480] sm:$0xff]
    %v325 = vld [vmem:[#allocation8 + $0x488] sm:$0xff]
    %v326 = vld [vmem:[#allocation8 + $0x490] sm:$0xff]
    %v327 = vld [vmem:[#allocation8 + $0x498] sm:$0xff]
    %v328 = vld [vmem:[#allocation8 + $0x4a0] sm:$0xff]
    %v329 = vld [vmem:[#allocation8 + $0x4a8] sm:$0xff]
    %v330 = vld [vmem:[#allocation8 + $0x4b0] sm:$0xff]
    %v331 = vld [vmem:[#allocation8 + $0x4b8] sm:$0xff]
    %v332 = vld [vmem:[#allocation8 + $0x4c0] sm:$0xff]
    %v333 = vld [vmem:[#allocation8 + $0x4c8] sm:$0xff]
    %v334 = vld [vmem:[#allocation8 + $0x4d0] sm:$0xff]
    %v335 = vld [vmem:[#allocation8 + $0x4d8] sm:$0xff]
    %v336 = vld [vmem:[#allocation8 + $0x4e0] sm:$0xff]
    %v337 = vld [vmem:[#allocation8 + $0x4e8] sm:$0xff]
    %v338 = vld [vmem:[#allocation8 + $0x4f0] sm:$0xff]
    %v339 = vld [vmem:[#allocation8 + $0x4f8] sm:$0xff]
    %v340 = vld [vmem:[#allocation8 + $0x500] sm:$0xff]
    %v341 = vld [vmem:[#allocation8 + $0x508] sm:$0xff]
    %v342 = vld [vmem:[#allocation8 + $0x510] sm:$0xff]
    %v343 = vld [vmem:[#allocation8 + $0x518] sm:$0xff]
    %v344 = vld [vmem:[#allocation8 + $0x520] sm:$0xff]
    %v345 = vld [vmem:[#allocation8 + $0x528] sm:$0xff]
    %v346 = vld [vmem:[#allocation8 + $0x530] sm:$0xff]
    %v347 = vld [vmem:[#allocation8 + $0x538] sm:$0xff]
    %v348 = vld [vmem:[#allocation8 + $0x540] sm:$0xff]
    %v349 = vld [vmem:[#allocation8 + $0x548] sm:$0xff]
    %v350 = vld [vmem:[#allocation8 + $0x550] sm:$0xff]
    %v351 = vld [vmem:[#allocation8 + $0x558] sm:$0xff]
    %v352 = vld [vmem:[#allocation8 + $0x560] sm:$0xff]
    %v353 = vld [vmem:[#allocation8 + $0x568] sm:$0xff]
    %v354 = vld [vmem:[#allocation8 + $0x570] sm:$0xff]
    %v355 = vld [vmem:[#allocation8 + $0x578] sm:$0xff]
    %v356 = vld [vmem:[#allocation8 + $0x580] sm:$0xff]
    %v357 = vld [vmem:[#allocation8 + $0x588] sm:$0xff]
    %v358 = vld [vmem:[#allocation8 + $0x590] sm:$0xff]
    %v359 = vld [vmem:[#allocation8 + $0x598] sm:$0xff]
    %v360 = vld [vmem:[#allocation8 + $0x5a0] sm:$0xff]
    %v361 = vld [vmem:[#allocation8 + $0x5a8] sm:$0xff]
    %v362 = vld [vmem:[#allocation8 + $0x5b0] sm:$0xff]
    %v363 = vld [vmem:[#allocation8 + $0x5b8] sm:$0xff]
    %v364 = vld [vmem:[#allocation8 + $0x5c0] sm:$0xff]
    %v365 = vld [vmem:[#allocation8 + $0x5c8] sm:$0xff]
    %v366 = vld [vmem:[#allocation8 + $0x5d0] sm:$0xff]
    %v367 = vld [vmem:[#allocation8 + $0x5d8] sm:$0xff]
    %v368 = vld [vmem:[#allocation8 + $0x5e0] sm:$0xff]
    %v369 = vld [vmem:[#allocation8 + $0x5e8] sm:$0xff]
    %v370 = vld [vmem:[#allocation8 + $0x5f0] sm:$0xff]
    %v371 = vld [vmem:[#allocation8 + $0x5f8] sm:$0xff]
    %v372 = vld [vmem:[#allocation8 + $0x600] sm:$0xff]
    %v373 = vld [vmem:[#allocation8 + $0x608] sm:$0xff]
    %v374 = vld [vmem:[#allocation8 + $0x610] sm:$0xff]
    %v375 = vld [vmem:[#allocation8 + $0x618] sm:$0xff]
    %v376 = vld [vmem:[#allocation8 + $0x620] sm:$0xff]
    %v377 = vld [vmem:[#allocation8 + $0x628] sm:$0xff]
    %v378 = vld [vmem:[#allocation8 + $0x630] sm:$0xff]
    %v379 = vld [vmem:[#allocation8 + $0x638] sm:$0xff]
    %v380 = vld [vmem:[#allocation8 + $0x640] sm:$0xff]
    %v381 = vld [vmem:[#allocation8 + $0x648] sm:$0xff]
    %v382 = vld [vmem:[#allocation8 + $0x650] sm:$0xff]
    %v383 = vld [vmem:[#allocation8 + $0x658] sm:$0xff]
    %v384 = vld [vmem:[#allocation8 + $0x660] sm:$0xff]
    %v385 = vld [vmem:[#allocation8 + $0x668] sm:$0xff]
    %v386 = vld [vmem:[#allocation8 + $0x670] sm:$0xff]
    %v387 = vld [vmem:[#allocation8 + $0x678] sm:$0xff]
    %v388 = vld [vmem:[#allocation8 + $0x680] sm:$0xff]
    %v389 = vld [vmem:[#allocation8 + $0x688] sm:$0xff]
    %v390 = vld [vmem:[#allocation8 + $0x690] sm:$0xff]
    %v391 = vld [vmem:[#allocation8 + $0x698] sm:$0xff]
    %v392 = vld [vmem:[#allocation8 + $0x6a0] sm:$0xff]
    %v393 = vld [vmem:[#allocation8 + $0x6a8] sm:$0xff]
    %v394 = vld [vmem:[#allocation8 + $0x6b0] sm:$0xff]
    %v395 = vld [vmem:[#allocation8 + $0x6b8] sm:$0xff]
    %v396 = vld [vmem:[#allocation8 + $0x6c0] sm:$0xff]
    %v397 = vld [vmem:[#allocation8 + $0x6c8] sm:$0xff]
    %v398 = vld [vmem:[#allocation8 + $0x6d0] sm:$0xff]
    %v399 = vld [vmem:[#allocation8 + $0x6d8] sm:$0xff]
    %v400 = vld [vmem:[#allocation8 + $0x6e0] sm:$0xff]
    %v401 = vld [vmem:[#allocation8 + $0x6e8] sm:$0xff]
    %v402 = vld [vmem:[#allocation8 + $0x6f0] sm:$0xff]
    %v403 = vld [vmem:[#allocation8 + $0x6f8] sm:$0xff]
    %v404 = vld [vmem:[#allocation8 + $0x700] sm:$0xff]
    %v405 = vld [vmem:[#allocation8 + $0x708] sm:$0xff]
    %v406 = vld [vmem:[#allocation8 + $0x710] sm:$0xff]
    %v407 = vld [vmem:[#allocation8 + $0x718] sm:$0xff]
    %v408 = vld [vmem:[#allocation8 + $0x720] sm:$0xff]
    %v409 = vld [vmem:[#allocation8 + $0x728] sm:$0xff]
    %v410 = vld [vmem:[#allocation8 + $0x730] sm:$0xff]
    %v411 = vld [vmem:[#allocation8 + $0x738] sm:$0xff]
    %v412 = vld [vmem:[#allocation8 + $0x740] sm:$0xff]
    %v413 = vld [vmem:[#allocation8 + $0x748] sm:$0xff]
    %v414 = vld [vmem:[#allocation8 + $0x750] sm:$0xff]
    %v415 = vld [vmem:[#allocation8 + $0x758] sm:$0xff]
    %v416 = vld [vmem:[#allocation8 + $0x760] sm:$0xff]
    %v417 = vld [vmem:[#allocation8 + $0x768] sm:$0xff]
    %v418 = vld [vmem:[#allocation8 + $0x770] sm:$0xff]
    %v419 = vld [vmem:[#allocation8 + $0x778] sm:$0xff]
    %v420 = vld [vmem:[#allocation8 + $0x780] sm:$0xff]
    %v421 = vld [vmem:[#allocation8 + $0x788] sm:$0xff]
    %v422 = vld [vmem:[#allocation8 + $0x790] sm:$0xff]
    %v423 = vld [vmem:[#allocation8 + $0x798] sm:$0xff]
    %v424 = vld [vmem:[#allocation8 + $0x7a0] sm:$0xff]
    %v425 = vld [vmem:[#allocation8 + $0x7a8] sm:$0xff]
    %v426 = vld [vmem:[#allocation8 + $0x7b0] sm:$0xff]
    %v427 = vld [vmem:[#allocation8 + $0x7b8] sm:$0xff]
    %v428 = vld [vmem:[#allocation8 + $0x7c0] sm:$0xff]
    %v429 = vld [vmem:[#allocation8 + $0x7c8] sm:$0xff]
    %v430 = vld [vmem:[#allocation8 + $0x7d0] sm:$0xff]
    %v431 = vld [vmem:[#allocation8 + $0x7d8] sm:$0xff]
    %v432 = vld [vmem:[#allocation8 + $0x7e0] sm:$0xff]
    %v433 = vld [vmem:[#allocation8 + $0x7e8] sm:$0xff]
    %v434 = vld [vmem:[#allocation8 + $0x7f0] sm:$0xff]
    %v435 = vld [vmem:[#allocation8 + $0x7f8] sm:$0xff]
    %v436 = vld [vmem:[#allocation10] sm:$0xff]
    %v437 = vld [vmem:[#allocation10 + $0x8] sm:$0xff]
    %v438 = vld [vmem:[#allocation10 + $0x10] sm:$0xff]
    %v439 = vld [vmem:[#allocation10 + $0x18] sm:$0xff]
    %v440 = vld [vmem:[#allocation10 + $0x20] sm:$0xff]
    %v441 = vld [vmem:[#allocation10 + $0x28] sm:$0xff]
    %v442 = vld [vmem:[#allocation10 + $0x30] sm:$0xff]
    %v443 = vld [vmem:[#allocation10 + $0x38] sm:$0xff]
    %v444 = vld [vmem:[#allocation10 + $0x40] sm:$0xff]
    %v445 = vld [vmem:[#allocation10 + $0x48] sm:$0xff]
    %v446 = vld [vmem:[#allocation10 + $0x50] sm:$0xff]
    %v447 = vld [vmem:[#allocation10 + $0x58] sm:$0xff]
    %v448 = vld [vmem:[#allocation10 + $0x60] sm:$0xff]
    %v449 = vld [vmem:[#allocation10 + $0x68] sm:$0xff]
    %v450 = vld [vmem:[#allocation10 + $0x70] sm:$0xff]
    %v451 = vld [vmem:[#allocation10 + $0x78] sm:$0xff]
    %v452 = vld [vmem:[#allocation11] sm:$0xff]
    %v453 = vld [vmem:[#allocation11 + $0x8] sm:$0xff]
    %v454 = vld [vmem:[#allocation11 + $0x10] sm:$0xff]
    %v455 = vld [vmem:[#allocation11 + $0x18] sm:$0xff]
    %v456 = vld [vmem:[#allocation11 + $0x20] sm:$0xff]
    %v457 = vld [vmem:[#allocation11 + $0x28] sm:$0xff]
    %v458 = vld [vmem:[#allocation11 + $0x30] sm:$0xff]
    %v459 = vld [vmem:[#allocation11 + $0x38] sm:$0xff]
    %v460 = vld [vmem:[#allocation11 + $0x40] sm:$0xff]
    %v461 = vld [vmem:[#allocation11 + $0x48] sm:$0xff]
    %v462 = vld [vmem:[#allocation11 + $0x50] sm:$0xff]
    %v463 = vld [vmem:[#allocation11 + $0x58] sm:$0xff]
    %v464 = vld [vmem:[#allocation11 + $0x60] sm:$0xff]
    %v465 = vld [vmem:[#allocation11 + $0x68] sm:$0xff]
    %v466 = vld [vmem:[#allocation11 + $0x70] sm:$0xff]
    %v467 = vld [vmem:[#allocation11 + $0x78] sm:$0xff]
    %v468 = vpack.c.bf16 %v168, %v164
    %v469 = vpack.c.bf16 %v169, %v165
    %v470 = vpack.c.bf16 %v170, %v166
    %v471 = vpack.c.bf16 %v171, %v167
    %v472 = vpack.c.bf16 %v176, %v172
    %v473 = vpack.c.bf16 %v177, %v173
    %v474 = vpack.c.bf16 %v178, %v174
    %v475 = vpack.c.bf16 %v179, %v175
    %v480 = vrot.slane %v176, 7
    %v481 = vrot.slane %v177, 7
    %v482 = vrot.slane %v178, 7
    %v483 = vrot.slane %v179, 7
    %vm500 = vcmask 1040384
    %v501 = vrot.slane %v164, 7
    %v502 = vrot.slane %v165, 7
    %v503 = vrot.slane %v166, 7
    %v504 = vrot.slane %v167, 7
    %v505 = vrot.slane %v168, 7
    %v506 = vsel %vm500, %v501, %v505
    %v507 = vrot.slane %v169, 7
    %v508 = vsel %vm500, %v502, %v507
    %v509 = vrot.slane %v170, 7
    %v510 = vsel %vm500, %v503, %v509
    %v511 = vrot.slane %v171, 7
    %v512 = vsel %vm500, %v504, %v511
    %v513 = vrot.slane %v172, 7
    %v514 = vsel %vm500, %v505, %v513
    %v515 = vrot.slane %v173, 7
    %v516 = vsel %vm500, %v507, %v515
    %v517 = vrot.slane %v174, 7
    %v518 = vsel %vm500, %v509, %v517
    %v519 = vrot.slane %v175, 7
    %v520 = vsel %vm500, %v511, %v519
    %v521 = vsel %vm500, %v513, %v480
    %v522 = vsel %vm500, %v515, %v481
    %v523 = vsel %vm500, %v517, %v482
    %v524 = vsel %vm500, %v519, %v483
    %v541 = vsel %vm500, %v480, %v501
    %v542 = vsel %vm500, %v481, %v502
    %v543 = vsel %vm500, %v482, %v503
    %v544 = vsel %vm500, %v483, %v504
    %v545 = vpack.c.bf16 %v506, %v541
    %v546 = vpack.c.bf16 %v508, %v542
    %v547 = vpack.c.bf16 %v510, %v543
    %v548 = vpack.c.bf16 %v512, %v544
    %v549 = vpack.c.bf16 %v521, %v514
    %v550 = vpack.c.bf16 %v522, %v516
    %v551 = vpack.c.bf16 %v523, %v518
    %v552 = vpack.c.bf16 %v524, %v520
    %vm553 = vcmask 1046528
    %v554 = vrot.slane %v164, 1
    %v555 = vrot.slane %v168, 1
    %v556 = vsel %vm553, %v554, %v555
    %v557 = vrot.slane %v165, 1
    %v558 = vrot.slane %v169, 1
    %v559 = vsel %vm553, %v557, %v558
    %v560 = vrot.slane %v166, 1
    %v561 = vrot.slane %v170, 1
    %v562 = vsel %vm553, %v560, %v561
    %v563 = vrot.slane %v167, 1
    %v564 = vrot.slane %v171, 1
    %v565 = vsel %vm553, %v563, %v564
    %v566 = vrot.slane %v172, 1
    %v567 = vsel %vm553, %v555, %v566
    %v568 = vrot.slane %v173, 1
    %v569 = vsel %vm553, %v558, %v568
    %v570 = vrot.slane %v174, 1
    %v571 = vsel %vm553, %v561, %v570
    %v572 = vrot.slane %v175, 1
    %v573 = vsel %vm553, %v564, %v572
    %v574 = vrot.slane %v176, 1
    %v575 = vsel %vm553, %v566, %v574
    %v576 = vrot.slane %v177, 1
    %v577 = vsel %vm553, %v568, %v576
    %v578 = vrot.slane %v178, 1
    %v579 = vsel %vm553, %v570, %v578
    %v580 = vrot.slane %v179, 1
    %v581 = vsel %vm553, %v572, %v580
    %v602 = vsel %vm553, %v574, %v554
    %v603 = vsel %vm553, %v576, %v557
    %v604 = vsel %vm553, %v578, %v560
    %v605 = vsel %vm553, %v580, %v563
    %v606 = vpack.c.bf16 %v567, %v556
    %v607 = vpack.c.bf16 %v569, %v559
    %v608 = vpack.c.bf16 %v571, %v562
    %v609 = vpack.c.bf16 %v573, %v565
    %v610 = vpack.c.bf16 %v602, %v575
    %v611 = vpack.c.bf16 %v603, %v577
    %v612 = vpack.c.bf16 %v604, %v579
    %v613 = vpack.c.bf16 %v605, %v581
    %s614 = scalar_lea.vmem [#allocation5], 1024
    %v615 = vld [vmem:[%s614] sm:$0xff]
    %v616 = vld [vmem:[%s614 + $0x8] sm:$0xff]
    %v617 = vld [vmem:[%s614 + $0x10] sm:$0xff]
    %v618 = vld [vmem:[%s614 + $0x18] sm:$0xff]
    %v619 = vld [vmem:[%s614 + $0x20] sm:$0xff]
    %v620 = vld [vmem:[%s614 + $0x28] sm:$0xff]
    %v621 = vld [vmem:[%s614 + $0x30] sm:$0xff]
    %v622 = vld [vmem:[%s614 + $0x38] sm:$0xff]
    %v623 = vld [vmem:[%s614 + $0x40] sm:$0xff]
    %v624 = vld [vmem:[%s614 + $0x48] sm:$0xff]
    %v625 = vld [vmem:[%s614 + $0x50] sm:$0xff]
    %v626 = vld [vmem:[%s614 + $0x58] sm:$0xff]
    %v627 = vld [vmem:[%s614 + $0x60] sm:$0xff]
    %v628 = vld [vmem:[%s614 + $0x68] sm:$0xff]
    %v629 = vld [vmem:[%s614 + $0x70] sm:$0xff]
    %v630 = vld [vmem:[%s614 + $0x78] sm:$0xff]
    %v631 = vld [vmem:[%s614 + $0x80] sm:$0xff]
    %v632 = vld [vmem:[%s614 + $0x88] sm:$0xff]
    %v633 = vld [vmem:[%s614 + $0x90] sm:$0xff]
    %v634 = vld [vmem:[%s614 + $0x98] sm:$0xff]
    %v635 = vld [vmem:[%s614 + $0xa0] sm:$0xff]
    %v636 = vld [vmem:[%s614 + $0xa8] sm:$0xff]
    %v637 = vld [vmem:[%s614 + $0xb0] sm:$0xff]
    %v638 = vld [vmem:[%s614 + $0xb8] sm:$0xff]
    %v639 = vld [vmem:[%s614 + $0xc0] sm:$0xff]
    %v640 = vld [vmem:[%s614 + $0xc8] sm:$0xff]
    %v641 = vld [vmem:[%s614 + $0xd0] sm:$0xff]
    %v642 = vld [vmem:[%s614 + $0xd8] sm:$0xff]
    %v643 = vld [vmem:[%s614 + $0xe0] sm:$0xff]
    %v644 = vld [vmem:[%s614 + $0xe8] sm:$0xff]
    %v645 = vld [vmem:[%s614 + $0xf0] sm:$0xff]
    %v646 = vld [vmem:[%s614 + $0xf8] sm:$0xff]
    %v647 = vld [vmem:[%s614 + $0x100] sm:$0xff]
    %v648 = vld [vmem:[%s614 + $0x108] sm:$0xff]
    %v649 = vld [vmem:[%s614 + $0x110] sm:$0xff]
    %v650 = vld [vmem:[%s614 + $0x118] sm:$0xff]
    %v651 = vld [vmem:[%s614 + $0x120] sm:$0xff]
    %v652 = vld [vmem:[%s614 + $0x128] sm:$0xff]
    %v653 = vld [vmem:[%s614 + $0x130] sm:$0xff]
    %v654 = vld [vmem:[%s614 + $0x138] sm:$0xff]
    %v655 = vld [vmem:[%s614 + $0x140] sm:$0xff]
    %v656 = vld [vmem:[%s614 + $0x148] sm:$0xff]
    %v657 = vld [vmem:[%s614 + $0x150] sm:$0xff]
    %v658 = vld [vmem:[%s614 + $0x158] sm:$0xff]
    %v659 = vld [vmem:[%s614 + $0x160] sm:$0xff]
    %v660 = vld [vmem:[%s614 + $0x168] sm:$0xff]
    %v661 = vld [vmem:[%s614 + $0x170] sm:$0xff]
    %v662 = vld [vmem:[%s614 + $0x178] sm:$0xff]
    %v663 = vld [vmem:[%s614 + $0x180] sm:$0xff]
    %v664 = vld [vmem:[%s614 + $0x188] sm:$0xff]
    %v665 = vld [vmem:[%s614 + $0x190] sm:$0xff]
    %v666 = vld [vmem:[%s614 + $0x198] sm:$0xff]
    %v667 = vld [vmem:[%s614 + $0x1a0] sm:$0xff]
    %v668 = vld [vmem:[%s614 + $0x1a8] sm:$0xff]
    %v669 = vld [vmem:[%s614 + $0x1b0] sm:$0xff]
    %v670 = vld [vmem:[%s614 + $0x1b8] sm:$0xff]
    %v671 = vld [vmem:[%s614 + $0x1c0] sm:$0xff]
    %v672 = vld [vmem:[%s614 + $0x1c8] sm:$0xff]
    %v673 = vld [vmem:[%s614 + $0x1d0] sm:$0xff]
    %v674 = vld [vmem:[%s614 + $0x1d8] sm:$0xff]
    %v675 = vld [vmem:[%s614 + $0x1e0] sm:$0xff]
    %v676 = vld [vmem:[%s614 + $0x1e8] sm:$0xff]
    %v677 = vld [vmem:[%s614 + $0x1f0] sm:$0xff]
    %v678 = vld [vmem:[%s614 + $0x1f8] sm:$0xff]
    %v679 = vld [vmem:[%s614 + $0x200] sm:$0xff]
    %v680 = vld [vmem:[%s614 + $0x208] sm:$0xff]
    %v681 = vld [vmem:[%s614 + $0x210] sm:$0xff]
    %v682 = vld [vmem:[%s614 + $0x218] sm:$0xff]
    %v683 = vld [vmem:[%s614 + $0x220] sm:$0xff]
    %v684 = vld [vmem:[%s614 + $0x228] sm:$0xff]
    %v685 = vld [vmem:[%s614 + $0x230] sm:$0xff]
    %v686 = vld [vmem:[%s614 + $0x238] sm:$0xff]
    %v687 = vld [vmem:[%s614 + $0x240] sm:$0xff]
    %v688 = vld [vmem:[%s614 + $0x248] sm:$0xff]
    %v689 = vld [vmem:[%s614 + $0x250] sm:$0xff]
    %v690 = vld [vmem:[%s614 + $0x258] sm:$0xff]
    %v691 = vld [vmem:[%s614 + $0x260] sm:$0xff]
    %v692 = vld [vmem:[%s614 + $0x268] sm:$0xff]
    %v693 = vld [vmem:[%s614 + $0x270] sm:$0xff]
    %v694 = vld [vmem:[%s614 + $0x278] sm:$0xff]
    %v695 = vld [vmem:[%s614 + $0x280] sm:$0xff]
    %v696 = vld [vmem:[%s614 + $0x288] sm:$0xff]
    %v697 = vld [vmem:[%s614 + $0x290] sm:$0xff]
    %v698 = vld [vmem:[%s614 + $0x298] sm:$0xff]
    %v699 = vld [vmem:[%s614 + $0x2a0] sm:$0xff]
    %v700 = vld [vmem:[%s614 + $0x2a8] sm:$0xff]
    %v701 = vld [vmem:[%s614 + $0x2b0] sm:$0xff]
    %v702 = vld [vmem:[%s614 + $0x2b8] sm:$0xff]
    %v703 = vld [vmem:[%s614 + $0x2c0] sm:$0xff]
    %v704 = vld [vmem:[%s614 + $0x2c8] sm:$0xff]
    %v705 = vld [vmem:[%s614 + $0x2d0] sm:$0xff]
    %v706 = vld [vmem:[%s614 + $0x2d8] sm:$0xff]
    %v707 = vld [vmem:[%s614 + $0x2e0] sm:$0xff]
    %v708 = vld [vmem:[%s614 + $0x2e8] sm:$0xff]
    %v709 = vld [vmem:[%s614 + $0x2f0] sm:$0xff]
    %v710 = vld [vmem:[%s614 + $0x2f8] sm:$0xff]
    %v711 = vld [vmem:[%s614 + $0x300] sm:$0xff]
    %v712 = vld [vmem:[%s614 + $0x308] sm:$0xff]
    %v713 = vld [vmem:[%s614 + $0x310] sm:$0xff]
    %v714 = vld [vmem:[%s614 + $0x318] sm:$0xff]
    %v715 = vld [vmem:[%s614 + $0x320] sm:$0xff]
    %v716 = vld [vmem:[%s614 + $0x328] sm:$0xff]
    %v717 = vld [vmem:[%s614 + $0x330] sm:$0xff]
    %v718 = vld [vmem:[%s614 + $0x338] sm:$0xff]
    %v719 = vld [vmem:[%s614 + $0x340] sm:$0xff]
    %v720 = vld [vmem:[%s614 + $0x348] sm:$0xff]
    %v721 = vld [vmem:[%s614 + $0x350] sm:$0xff]
    %v722 = vld [vmem:[%s614 + $0x358] sm:$0xff]
    %v723 = vld [vmem:[%s614 + $0x360] sm:$0xff]
    %v724 = vld [vmem:[%s614 + $0x368] sm:$0xff]
    %v725 = vld [vmem:[%s614 + $0x370] sm:$0xff]
    %v726 = vld [vmem:[%s614 + $0x378] sm:$0xff]
    %v727 = vld [vmem:[%s614 + $0x380] sm:$0xff]
    %v728 = vld [vmem:[%s614 + $0x388] sm:$0xff]
    %v729 = vld [vmem:[%s614 + $0x390] sm:$0xff]
    %v730 = vld [vmem:[%s614 + $0x398] sm:$0xff]
    %v731 = vld [vmem:[%s614 + $0x3a0] sm:$0xff]
    %v732 = vld [vmem:[%s614 + $0x3a8] sm:$0xff]
    %v733 = vld [vmem:[%s614 + $0x3b0] sm:$0xff]
    %v734 = vld [vmem:[%s614 + $0x3b8] sm:$0xff]
    %v735 = vld [vmem:[%s614 + $0x3c0] sm:$0xff]
    %v736 = vld [vmem:[%s614 + $0x3c8] sm:$0xff]
    %v737 = vld [vmem:[%s614 + $0x3d0] sm:$0xff]
    %v738 = vld [vmem:[%s614 + $0x3d8] sm:$0xff]
    %v739 = vld [vmem:[%s614 + $0x3e0] sm:$0xff]
    %v740 = vld [vmem:[%s614 + $0x3e8] sm:$0xff]
    %v741 = vld [vmem:[%s614 + $0x3f0] sm:$0xff]
    %v742 = vld [vmem:[%s614 + $0x3f8] sm:$0xff]
    %v743 = vld [vmem:[#allocation5] sm:$0xff]
    %v744 = vld [vmem:[#allocation5 + $0x8] sm:$0xff]
    %v745 = vld [vmem:[#allocation5 + $0x10] sm:$0xff]
    %v746 = vld [vmem:[#allocation5 + $0x18] sm:$0xff]
    %v747 = vld [vmem:[#allocation5 + $0x20] sm:$0xff]
    %v748 = vld [vmem:[#allocation5 + $0x28] sm:$0xff]
    %v749 = vld [vmem:[#allocation5 + $0x30] sm:$0xff]
    %v750 = vld [vmem:[#allocation5 + $0x38] sm:$0xff]
    %v751 = vld [vmem:[#allocation5 + $0x40] sm:$0xff]
    %v752 = vld [vmem:[#allocation5 + $0x48] sm:$0xff]
    %v753 = vld [vmem:[#allocation5 + $0x50] sm:$0xff]
    %v754 = vld [vmem:[#allocation5 + $0x58] sm:$0xff]
    %v755 = vld [vmem:[#allocation5 + $0x60] sm:$0xff]
    %v756 = vld [vmem:[#allocation5 + $0x68] sm:$0xff]
    %v757 = vld [vmem:[#allocation5 + $0x70] sm:$0xff]
    %v758 = vld [vmem:[#allocation5 + $0x78] sm:$0xff]
    %v759 = vld [vmem:[#allocation5 + $0x80] sm:$0xff]
    %v760 = vld [vmem:[#allocation5 + $0x88] sm:$0xff]
    %v761 = vld [vmem:[#allocation5 + $0x90] sm:$0xff]
    %v762 = vld [vmem:[#allocation5 + $0x98] sm:$0xff]
    %v763 = vld [vmem:[#allocation5 + $0xa0] sm:$0xff]
    %v764 = vld [vmem:[#allocation5 + $0xa8] sm:$0xff]
    %v765 = vld [vmem:[#allocation5 + $0xb0] sm:$0xff]
    %v766 = vld [vmem:[#allocation5 + $0xb8] sm:$0xff]
    %v767 = vld [vmem:[#allocation5 + $0xc0] sm:$0xff]
    %v768 = vld [vmem:[#allocation5 + $0xc8] sm:$0xff]
    %v769 = vld [vmem:[#allocation5 + $0xd0] sm:$0xff]
    %v770 = vld [vmem:[#allocation5 + $0xd8] sm:$0xff]
    %v771 = vld [vmem:[#allocation5 + $0xe0] sm:$0xff]
    %v772 = vld [vmem:[#allocation5 + $0xe8] sm:$0xff]
    %v773 = vld [vmem:[#allocation5 + $0xf0] sm:$0xff]
    %v774 = vld [vmem:[#allocation5 + $0xf8] sm:$0xff]
    %v775 = vld [vmem:[#allocation5 + $0x100] sm:$0xff]
    %v776 = vld [vmem:[#allocation5 + $0x108] sm:$0xff]
    %v777 = vld [vmem:[#allocation5 + $0x110] sm:$0xff]
    %v778 = vld [vmem:[#allocation5 + $0x118] sm:$0xff]
    %v779 = vld [vmem:[#allocation5 + $0x120] sm:$0xff]
    %v780 = vld [vmem:[#allocation5 + $0x128] sm:$0xff]
    %v781 = vld [vmem:[#allocation5 + $0x130] sm:$0xff]
    %v782 = vld [vmem:[#allocation5 + $0x138] sm:$0xff]
    %v783 = vld [vmem:[#allocation5 + $0x140] sm:$0xff]
    %v784 = vld [vmem:[#allocation5 + $0x148] sm:$0xff]
    %v785 = vld [vmem:[#allocation5 + $0x150] sm:$0xff]
    %v786 = vld [vmem:[#allocation5 + $0x158] sm:$0xff]
    %v787 = vld [vmem:[#allocation5 + $0x160] sm:$0xff]
    %v788 = vld [vmem:[#allocation5 + $0x168] sm:$0xff]
    %v789 = vld [vmem:[#allocation5 + $0x170] sm:$0xff]
    %v790 = vld [vmem:[#allocation5 + $0x178] sm:$0xff]
    %v791 = vld [vmem:[#allocation5 + $0x180] sm:$0xff]
    %v792 = vld [vmem:[#allocation5 + $0x188] sm:$0xff]
    %v793 = vld [vmem:[#allocation5 + $0x190] sm:$0xff]
    %v794 = vld [vmem:[#allocation5 + $0x198] sm:$0xff]
    %v795 = vld [vmem:[#allocation5 + $0x1a0] sm:$0xff]
    %v796 = vld [vmem:[#allocation5 + $0x1a8] sm:$0xff]
    %v797 = vld [vmem:[#allocation5 + $0x1b0] sm:$0xff]
    %v798 = vld [vmem:[#allocation5 + $0x1b8] sm:$0xff]
    %v799 = vld [vmem:[#allocation5 + $0x1c0] sm:$0xff]
    %v800 = vld [vmem:[#allocation5 + $0x1c8] sm:$0xff]
    %v801 = vld [vmem:[#allocation5 + $0x1d0] sm:$0xff]
    %v802 = vld [vmem:[#allocation5 + $0x1d8] sm:$0xff]
    %v803 = vld [vmem:[#allocation5 + $0x1e0] sm:$0xff]
    %v804 = vld [vmem:[#allocation5 + $0x1e8] sm:$0xff]
    %v805 = vld [vmem:[#allocation5 + $0x1f0] sm:$0xff]
    %v806 = vld [vmem:[#allocation5 + $0x1f8] sm:$0xff]
    %v807 = vld [vmem:[#allocation5 + $0x200] sm:$0xff]
    %v808 = vld [vmem:[#allocation5 + $0x208] sm:$0xff]
    %v809 = vld [vmem:[#allocation5 + $0x210] sm:$0xff]
    %v810 = vld [vmem:[#allocation5 + $0x218] sm:$0xff]
    %v811 = vld [vmem:[#allocation5 + $0x220] sm:$0xff]
    %v812 = vld [vmem:[#allocation5 + $0x228] sm:$0xff]
    %v813 = vld [vmem:[#allocation5 + $0x230] sm:$0xff]
    %v814 = vld [vmem:[#allocation5 + $0x238] sm:$0xff]
    %v815 = vld [vmem:[#allocation5 + $0x240] sm:$0xff]
    %v816 = vld [vmem:[#allocation5 + $0x248] sm:$0xff]
    %v817 = vld [vmem:[#allocation5 + $0x250] sm:$0xff]
    %v818 = vld [vmem:[#allocation5 + $0x258] sm:$0xff]
    %v819 = vld [vmem:[#allocation5 + $0x260] sm:$0xff]
    %v820 = vld [vmem:[#allocation5 + $0x268] sm:$0xff]
    %v821 = vld [vmem:[#allocation5 + $0x270] sm:$0xff]
    %v822 = vld [vmem:[#allocation5 + $0x278] sm:$0xff]
    %v823 = vld [vmem:[#allocation5 + $0x280] sm:$0xff]
    %v824 = vld [vmem:[#allocation5 + $0x288] sm:$0xff]
    %v825 = vld [vmem:[#allocation5 + $0x290] sm:$0xff]
    %v826 = vld [vmem:[#allocation5 + $0x298] sm:$0xff]
    %v827 = vld [vmem:[#allocation5 + $0x2a0] sm:$0xff]
    %v828 = vld [vmem:[#allocation5 + $0x2a8] sm:$0xff]
    %v829 = vld [vmem:[#allocation5 + $0x2b0] sm:$0xff]
    %v830 = vld [vmem:[#allocation5 + $0x2b8] sm:$0xff]
    %v831 = vld [vmem:[#allocation5 + $0x2c0] sm:$0xff]
    %v832 = vld [vmem:[#allocation5 + $0x2c8] sm:$0xff]
    %v833 = vld [vmem:[#allocation5 + $0x2d0] sm:$0xff]
    %v834 = vld [vmem:[#allocation5 + $0x2d8] sm:$0xff]
    %v835 = vld [vmem:[#allocation5 + $0x2e0] sm:$0xff]
    %v836 = vld [vmem:[#allocation5 + $0x2e8] sm:$0xff]
    %v837 = vld [vmem:[#allocation5 + $0x2f0] sm:$0xff]
    %v838 = vld [vmem:[#allocation5 + $0x2f8] sm:$0xff]
    %v839 = vld [vmem:[#allocation5 + $0x300] sm:$0xff]
    %v840 = vld [vmem:[#allocation5 + $0x308] sm:$0xff]
    %v841 = vld [vmem:[#allocation5 + $0x310] sm:$0xff]
    %v842 = vld [vmem:[#allocation5 + $0x318] sm:$0xff]
    %v843 = vld [vmem:[#allocation5 + $0x320] sm:$0xff]
    %v844 = vld [vmem:[#allocation5 + $0x328] sm:$0xff]
    %v845 = vld [vmem:[#allocation5 + $0x330] sm:$0xff]
    %v846 = vld [vmem:[#allocation5 + $0x338] sm:$0xff]
    %v847 = vld [vmem:[#allocation5 + $0x340] sm:$0xff]
    %v848 = vld [vmem:[#allocation5 + $0x348] sm:$0xff]
    %v849 = vld [vmem:[#allocation5 + $0x350] sm:$0xff]
    %v850 = vld [vmem:[#allocation5 + $0x358] sm:$0xff]
    %v851 = vld [vmem:[#allocation5 + $0x360] sm:$0xff]
    %v852 = vld [vmem:[#allocation5 + $0x368] sm:$0xff]
    %v853 = vld [vmem:[#allocation5 + $0x370] sm:$0xff]
    %v854 = vld [vmem:[#allocation5 + $0x378] sm:$0xff]
    %v855 = vld [vmem:[#allocation5 + $0x380] sm:$0xff]
    %v856 = vld [vmem:[#allocation5 + $0x388] sm:$0xff]
    %v857 = vld [vmem:[#allocation5 + $0x390] sm:$0xff]
    %v858 = vld [vmem:[#allocation5 + $0x398] sm:$0xff]
    %v859 = vld [vmem:[#allocation5 + $0x3a0] sm:$0xff]
    %v860 = vld [vmem:[#allocation5 + $0x3a8] sm:$0xff]
    %v861 = vld [vmem:[#allocation5 + $0x3b0] sm:$0xff]
    %v862 = vld [vmem:[#allocation5 + $0x3b8] sm:$0xff]
    %v863 = vld [vmem:[#allocation5 + $0x3c0] sm:$0xff]
    %v864 = vld [vmem:[#allocation5 + $0x3c8] sm:$0xff]
    %v865 = vld [vmem:[#allocation5 + $0x3d0] sm:$0xff]
    %v866 = vld [vmem:[#allocation5 + $0x3d8] sm:$0xff]
    %v867 = vld [vmem:[#allocation5 + $0x3e0] sm:$0xff]
    %v868 = vld [vmem:[#allocation5 + $0x3e8] sm:$0xff]
    %v869 = vld [vmem:[#allocation5 + $0x3f0] sm:$0xff]
    %v870 = vld [vmem:[#allocation5 + $0x3f8] sm:$0xff]
    %v999 = vunpack.c.l.b16 %v743
    %v1000 = vunpack.c.h.b16 %v743
    %v1001 = vunpack.c.l.b16 %v744
    %v1002 = vunpack.c.h.b16 %v744
    %v1003 = vunpack.c.l.b16 %v745
    %v1004 = vunpack.c.h.b16 %v745
    %v1005 = vunpack.c.l.b16 %v746
    %v1006 = vunpack.c.h.b16 %v746
    %v1007 = vunpack.c.l.b16 %v747
    %v1008 = vunpack.c.h.b16 %v747
    %v1009 = vunpack.c.l.b16 %v748
    %v1010 = vunpack.c.h.b16 %v748
    %v1011 = vunpack.c.l.b16 %v749
    %v1012 = vunpack.c.h.b16 %v749
    %v1013 = vunpack.c.l.b16 %v750
    %v1014 = vunpack.c.h.b16 %v750
    %v1015 = vunpack.c.l.b16 %v751
    %v1016 = vunpack.c.h.b16 %v751
    %v1017 = vunpack.c.l.b16 %v752
    %v1018 = vunpack.c.h.b16 %v752
    %v1019 = vunpack.c.l.b16 %v753
    %v1020 = vunpack.c.h.b16 %v753
    %v1021 = vunpack.c.l.b16 %v754
    %v1022 = vunpack.c.h.b16 %v754
    %v1023 = vunpack.c.l.b16 %v755
    %v1024 = vunpack.c.h.b16 %v755
    %v1025 = vunpack.c.l.b16 %v756
    %v1026 = vunpack.c.h.b16 %v756
    %v1027 = vunpack.c.l.b16 %v757
    %v1028 = vunpack.c.h.b16 %v757
    %v1029 = vunpack.c.l.b16 %v758
    %v1030 = vunpack.c.h.b16 %v758
    %v1031 = vunpack.c.l.b16 %v759
    %v1032 = vunpack.c.h.b16 %v759
    %v1033 = vunpack.c.l.b16 %v760
    %v1034 = vunpack.c.h.b16 %v760
    %v1035 = vunpack.c.l.b16 %v761
    %v1036 = vunpack.c.h.b16 %v761
    %v1037 = vunpack.c.l.b16 %v762
    %v1038 = vunpack.c.h.b16 %v762
    %v1039 = vunpack.c.l.b16 %v763
    %v1040 = vunpack.c.h.b16 %v763
    %v1041 = vunpack.c.l.b16 %v764
    %v1042 = vunpack.c.h.b16 %v764
    %v1043 = vunpack.c.l.b16 %v765
    %v1044 = vunpack.c.h.b16 %v765
    %v1045 = vunpack.c.l.b16 %v766
    %v1046 = vunpack.c.h.b16 %v766
    %v1047 = vunpack.c.l.b16 %v767
    %v1048 = vunpack.c.h.b16 %v767
    %v1049 = vunpack.c.l.b16 %v768
    %v1050 = vunpack.c.h.b16 %v768
    %v1051 = vunpack.c.l.b16 %v769
    %v1052 = vunpack.c.h.b16 %v769
    %v1053 = vunpack.c.l.b16 %v770
    %v1054 = vunpack.c.h.b16 %v770
    %v1055 = vunpack.c.l.b16 %v771
    %v1056 = vunpack.c.h.b16 %v771
    %v1057 = vunpack.c.l.b16 %v772
    %v1058 = vunpack.c.h.b16 %v772
    %v1059 = vunpack.c.l.b16 %v773
    %v1060 = vunpack.c.h.b16 %v773
    %v1061 = vunpack.c.l.b16 %v774
    %v1062 = vunpack.c.h.b16 %v774
    %v1063 = vunpack.c.l.b16 %v775
    %v1064 = vunpack.c.h.b16 %v775
    %v1065 = vunpack.c.l.b16 %v776
    %v1066 = vunpack.c.h.b16 %v776
    %v1067 = vunpack.c.l.b16 %v777
    %v1068 = vunpack.c.h.b16 %v777
    %v1069 = vunpack.c.l.b16 %v778
    %v1070 = vunpack.c.h.b16 %v778
    %v1071 = vunpack.c.l.b16 %v779
    %v1072 = vunpack.c.h.b16 %v779
    %v1073 = vunpack.c.l.b16 %v780
    %v1074 = vunpack.c.h.b16 %v780
    %v1075 = vunpack.c.l.b16 %v781
    %v1076 = vunpack.c.h.b16 %v781
    %v1077 = vunpack.c.l.b16 %v782
    %v1078 = vunpack.c.h.b16 %v782
    %v1079 = vunpack.c.l.b16 %v783
    %v1080 = vunpack.c.h.b16 %v783
    %v1081 = vunpack.c.l.b16 %v784
    %v1082 = vunpack.c.h.b16 %v784
    %v1083 = vunpack.c.l.b16 %v785
    %v1084 = vunpack.c.h.b16 %v785
    %v1085 = vunpack.c.l.b16 %v786
    %v1086 = vunpack.c.h.b16 %v786
    %v1087 = vunpack.c.l.b16 %v787
    %v1088 = vunpack.c.h.b16 %v787
    %v1089 = vunpack.c.l.b16 %v788
    %v1090 = vunpack.c.h.b16 %v788
    %v1091 = vunpack.c.l.b16 %v789
    %v1092 = vunpack.c.h.b16 %v789
    %v1093 = vunpack.c.l.b16 %v790
    %v1094 = vunpack.c.h.b16 %v790
    %v1095 = vunpack.c.l.b16 %v791
    %v1096 = vunpack.c.h.b16 %v791
    %v1097 = vunpack.c.l.b16 %v792
    %v1098 = vunpack.c.h.b16 %v792
    %v1099 = vunpack.c.l.b16 %v793
    %v1100 = vunpack.c.h.b16 %v793
    %v1101 = vunpack.c.l.b16 %v794
    %v1102 = vunpack.c.h.b16 %v794
    %v1103 = vunpack.c.l.b16 %v795
    %v1104 = vunpack.c.h.b16 %v795
    %v1105 = vunpack.c.l.b16 %v796
    %v1106 = vunpack.c.h.b16 %v796
    %v1107 = vunpack.c.l.b16 %v797
    %v1108 = vunpack.c.h.b16 %v797
    %v1109 = vunpack.c.l.b16 %v798
    %v1110 = vunpack.c.h.b16 %v798
    %v1111 = vunpack.c.l.b16 %v799
    %v1112 = vunpack.c.h.b16 %v799
    %v1113 = vunpack.c.l.b16 %v800
    %v1114 = vunpack.c.h.b16 %v800
    %v1115 = vunpack.c.l.b16 %v801
    %v1116 = vunpack.c.h.b16 %v801
    %v1117 = vunpack.c.l.b16 %v802
    %v1118 = vunpack.c.h.b16 %v802
    %v1119 = vunpack.c.l.b16 %v803
    %v1120 = vunpack.c.h.b16 %v803
    %v1121 = vunpack.c.l.b16 %v804
    %v1122 = vunpack.c.h.b16 %v804
    %v1123 = vunpack.c.l.b16 %v805
    %v1124 = vunpack.c.h.b16 %v805
    %v1125 = vunpack.c.l.b16 %v806
    %v1126 = vunpack.c.h.b16 %v806
    %v1127 = vunpack.c.l.b16 %v807
    %v1128 = vunpack.c.h.b16 %v807
    %v1129 = vunpack.c.l.b16 %v808
    %v1130 = vunpack.c.h.b16 %v808
    %v1131 = vunpack.c.l.b16 %v809
    %v1132 = vunpack.c.h.b16 %v809
    %v1133 = vunpack.c.l.b16 %v810
    %v1134 = vunpack.c.h.b16 %v810
    %v1135 = vunpack.c.l.b16 %v811
    %v1136 = vunpack.c.h.b16 %v811
    %v1137 = vunpack.c.l.b16 %v812
    %v1138 = vunpack.c.h.b16 %v812
    %v1139 = vunpack.c.l.b16 %v813
    %v1140 = vunpack.c.h.b16 %v813
    %v1141 = vunpack.c.l.b16 %v814
    %v1142 = vunpack.c.h.b16 %v814
    %v1143 = vunpack.c.l.b16 %v815
    %v1144 = vunpack.c.h.b16 %v815
    %v1145 = vunpack.c.l.b16 %v816
    %v1146 = vunpack.c.h.b16 %v816
    %v1147 = vunpack.c.l.b16 %v817
    %v1148 = vunpack.c.h.b16 %v817
    %v1149 = vunpack.c.l.b16 %v818
    %v1150 = vunpack.c.h.b16 %v818
    %v1151 = vunpack.c.l.b16 %v819
    %v1152 = vunpack.c.h.b16 %v819
    %v1153 = vunpack.c.l.b16 %v820
    %v1154 = vunpack.c.h.b16 %v820
    %v1155 = vunpack.c.l.b16 %v821
    %v1156 = vunpack.c.h.b16 %v821
    %v1157 = vunpack.c.l.b16 %v822
    %v1158 = vunpack.c.h.b16 %v822
    %v1159 = vunpack.c.l.b16 %v823
    %v1160 = vunpack.c.h.b16 %v823
    %v1161 = vunpack.c.l.b16 %v824
    %v1162 = vunpack.c.h.b16 %v824
    %v1163 = vunpack.c.l.b16 %v825
    %v1164 = vunpack.c.h.b16 %v825
    %v1165 = vunpack.c.l.b16 %v826
    %v1166 = vunpack.c.h.b16 %v826
    %v1167 = vunpack.c.l.b16 %v827
    %v1168 = vunpack.c.h.b16 %v827
    %v1169 = vunpack.c.l.b16 %v828
    %v1170 = vunpack.c.h.b16 %v828
    %v1171 = vunpack.c.l.b16 %v829
    %v1172 = vunpack.c.h.b16 %v829
    %v1173 = vunpack.c.l.b16 %v830
    %v1174 = vunpack.c.h.b16 %v830
    %v1175 = vunpack.c.l.b16 %v831
    %v1176 = vunpack.c.h.b16 %v831
    %v1177 = vunpack.c.l.b16 %v832
    %v1178 = vunpack.c.h.b16 %v832
    %v1179 = vunpack.c.l.b16 %v833
    %v1180 = vunpack.c.h.b16 %v833
    %v1181 = vunpack.c.l.b16 %v834
    %v1182 = vunpack.c.h.b16 %v834
    %v1183 = vunpack.c.l.b16 %v835
    %v1184 = vunpack.c.h.b16 %v835
    %v1185 = vunpack.c.l.b16 %v836
    %v1186 = vunpack.c.h.b16 %v836
    %v1187 = vunpack.c.l.b16 %v837
    %v1188 = vunpack.c.h.b16 %v837
    %v1189 = vunpack.c.l.b16 %v838
    %v1190 = vunpack.c.h.b16 %v838
    %v1191 = vunpack.c.l.b16 %v839
    %v1192 = vunpack.c.h.b16 %v839
    %v1193 = vunpack.c.l.b16 %v840
    %v1194 = vunpack.c.h.b16 %v840
    %v1195 = vunpack.c.l.b16 %v841
    %v1196 = vunpack.c.h.b16 %v841
    %v1197 = vunpack.c.l.b16 %v842
    %v1198 = vunpack.c.h.b16 %v842
    %v1199 = vunpack.c.l.b16 %v843
    %v1200 = vunpack.c.h.b16 %v843
    %v1201 = vunpack.c.l.b16 %v844
    %v1202 = vunpack.c.h.b16 %v844
    %v1203 = vunpack.c.l.b16 %v845
    %v1204 = vunpack.c.h.b16 %v845
    %v1205 = vunpack.c.l.b16 %v846
    %v1206 = vunpack.c.h.b16 %v846
    %v1207 = vunpack.c.l.b16 %v847
    %v1208 = vunpack.c.h.b16 %v847
    %v1209 = vunpack.c.l.b16 %v848
    %v1210 = vunpack.c.h.b16 %v848
    %v1211 = vunpack.c.l.b16 %v849
    %v1212 = vunpack.c.h.b16 %v849
    %v1213 = vunpack.c.l.b16 %v850
    %v1214 = vunpack.c.h.b16 %v850
    %v1215 = vunpack.c.l.b16 %v851
    %v1216 = vunpack.c.h.b16 %v851
    %v1217 = vunpack.c.l.b16 %v852
    %v1218 = vunpack.c.h.b16 %v852
    %v1219 = vunpack.c.l.b16 %v853
    %v1220 = vunpack.c.h.b16 %v853
    %v1221 = vunpack.c.l.b16 %v854
    %v1222 = vunpack.c.h.b16 %v854
    %v1223 = vunpack.c.l.b16 %v855
    %v1224 = vunpack.c.h.b16 %v855
    %v1225 = vunpack.c.l.b16 %v856
    %v1226 = vunpack.c.h.b16 %v856
    %v1227 = vunpack.c.l.b16 %v857
    %v1228 = vunpack.c.h.b16 %v857
    %v1229 = vunpack.c.l.b16 %v858
    %v1230 = vunpack.c.h.b16 %v858
    %v1231 = vunpack.c.l.b16 %v859
    %v1232 = vunpack.c.h.b16 %v859
    %v1233 = vunpack.c.l.b16 %v860
    %v1234 = vunpack.c.h.b16 %v860
    %v1235 = vunpack.c.l.b16 %v861
    %v1236 = vunpack.c.h.b16 %v861
    %v1237 = vunpack.c.l.b16 %v862
    %v1238 = vunpack.c.h.b16 %v862
    %v1239 = vunpack.c.l.b16 %v863
    %v1240 = vunpack.c.h.b16 %v863
    %v1241 = vunpack.c.l.b16 %v864
    %v1242 = vunpack.c.h.b16 %v864
    %v1243 = vunpack.c.l.b16 %v865
    %v1244 = vunpack.c.h.b16 %v865
    %v1245 = vunpack.c.l.b16 %v866
    %v1246 = vunpack.c.h.b16 %v866
    %v1247 = vunpack.c.l.b16 %v867
    %v1248 = vunpack.c.h.b16 %v867
    %v1249 = vunpack.c.l.b16 %v868
    %v1250 = vunpack.c.h.b16 %v868
    %v1251 = vunpack.c.l.b16 %v869
    %v1252 = vunpack.c.h.b16 %v869
    %v1253 = vunpack.c.l.b16 %v870
    %v1254 = vunpack.c.h.b16 %v870
    %v1255 = vpack.c.b16 %v1003, %v999
    %v1256 = vpack.c.b16 %v1004, %v1000
    %v1257 = vpack.c.b16 %v1005, %v1001
    %v1258 = vpack.c.b16 %v1006, %v1002
    %v1259 = vpack.c.b16 %v1011, %v1007
    %v1260 = vpack.c.b16 %v1012, %v1008
    %v1261 = vpack.c.b16 %v1013, %v1009
    %v1262 = vpack.c.b16 %v1014, %v1010
    %v1263 = vpack.c.b16 %v1019, %v1015
    %v1264 = vpack.c.b16 %v1020, %v1016
    %v1265 = vpack.c.b16 %v1021, %v1017
    %v1266 = vpack.c.b16 %v1022, %v1018
    %v1267 = vpack.c.b16 %v1027, %v1023
    %v1268 = vpack.c.b16 %v1028, %v1024
    %v1269 = vpack.c.b16 %v1029, %v1025
    %v1270 = vpack.c.b16 %v1030, %v1026
    %v1271 = vpack.c.b16 %v1035, %v1031
    %v1272 = vpack.c.b16 %v1036, %v1032
    %v1273 = vpack.c.b16 %v1037, %v1033
    %v1274 = vpack.c.b16 %v1038, %v1034
    %v1275 = vpack.c.b16 %v1043, %v1039
    %v1276 = vpack.c.b16 %v1044, %v1040
    %v1277 = vpack.c.b16 %v1045, %v1041
    %v1278 = vpack.c.b16 %v1046, %v1042
    %v1279 = vpack.c.b16 %v1051, %v1047
    %v1280 = vpack.c.b16 %v1052, %v1048
    %v1281 = vpack.c.b16 %v1053, %v1049
    %v1282 = vpack.c.b16 %v1054, %v1050
    %v1283 = vpack.c.b16 %v1059, %v1055
    %v1284 = vpack.c.b16 %v1060, %v1056
    %v1285 = vpack.c.b16 %v1061, %v1057
    %v1286 = vpack.c.b16 %v1062, %v1058
    %v1287 = vpack.c.b16 %v1067, %v1063
    %v1288 = vpack.c.b16 %v1068, %v1064
    %v1289 = vpack.c.b16 %v1069, %v1065
    %v1290 = vpack.c.b16 %v1070, %v1066
    %v1291 = vpack.c.b16 %v1075, %v1071
    %v1292 = vpack.c.b16 %v1076, %v1072
    %v1293 = vpack.c.b16 %v1077, %v1073
    %v1294 = vpack.c.b16 %v1078, %v1074
    %v1295 = vpack.c.b16 %v1083, %v1079
    %v1296 = vpack.c.b16 %v1084, %v1080
    %v1297 = vpack.c.b16 %v1085, %v1081
    %v1298 = vpack.c.b16 %v1086, %v1082
    %v1299 = vpack.c.b16 %v1091, %v1087
    %v1300 = vpack.c.b16 %v1092, %v1088
    %v1301 = vpack.c.b16 %v1093, %v1089
    %v1302 = vpack.c.b16 %v1094, %v1090
    %v1303 = vpack.c.b16 %v1099, %v1095
    %v1304 = vpack.c.b16 %v1100, %v1096
    %v1305 = vpack.c.b16 %v1101, %v1097
    %v1306 = vpack.c.b16 %v1102, %v1098
    %v1307 = vpack.c.b16 %v1107, %v1103
    %v1308 = vpack.c.b16 %v1108, %v1104
    %v1309 = vpack.c.b16 %v1109, %v1105
    %v1310 = vpack.c.b16 %v1110, %v1106
    %v1311 = vpack.c.b16 %v1115, %v1111
    %v1312 = vpack.c.b16 %v1116, %v1112
    %v1313 = vpack.c.b16 %v1117, %v1113
    %v1314 = vpack.c.b16 %v1118, %v1114
    %v1315 = vpack.c.b16 %v1123, %v1119
    %v1316 = vpack.c.b16 %v1124, %v1120
    %v1317 = vpack.c.b16 %v1125, %v1121
    %v1318 = vpack.c.b16 %v1126, %v1122
    %v1319 = vpack.c.b16 %v1131, %v1127
    %v1320 = vpack.c.b16 %v1132, %v1128
    %v1321 = vpack.c.b16 %v1133, %v1129
    %v1322 = vpack.c.b16 %v1134, %v1130
    %v1323 = vpack.c.b16 %v1139, %v1135
    %v1324 = vpack.c.b16 %v1140, %v1136
    %v1325 = vpack.c.b16 %v1141, %v1137
    %v1326 = vpack.c.b16 %v1142, %v1138
    %v1327 = vpack.c.b16 %v1147, %v1143
    %v1328 = vpack.c.b16 %v1148, %v1144
    %v1329 = vpack.c.b16 %v1149, %v1145
    %v1330 = vpack.c.b16 %v1150, %v1146
    %v1331 = vpack.c.b16 %v1155, %v1151
    %v1332 = vpack.c.b16 %v1156, %v1152
    %v1333 = vpack.c.b16 %v1157, %v1153
    %v1334 = vpack.c.b16 %v1158, %v1154
    %v1335 = vpack.c.b16 %v1163, %v1159
    %v1336 = vpack.c.b16 %v1164, %v1160
    %v1337 = vpack.c.b16 %v1165, %v1161
    %v1338 = vpack.c.b16 %v1166, %v1162
    %v1339 = vpack.c.b16 %v1171, %v1167
    %v1340 = vpack.c.b16 %v1172, %v1168
    %v1341 = vpack.c.b16 %v1173, %v1169
    %v1342 = vpack.c.b16 %v1174, %v1170
    %v1343 = vpack.c.b16 %v1179, %v1175
    %v1344 = vpack.c.b16 %v1180, %v1176
    %v1345 = vpack.c.b16 %v1181, %v1177
    %v1346 = vpack.c.b16 %v1182, %v1178
    %v1347 = vpack.c.b16 %v1187, %v1183
    %v1348 = vpack.c.b16 %v1188, %v1184
    %v1349 = vpack.c.b16 %v1189, %v1185
    %v1350 = vpack.c.b16 %v1190, %v1186
    %v1351 = vpack.c.b16 %v1195, %v1191
    %v1352 = vpack.c.b16 %v1196, %v1192
    %v1353 = vpack.c.b16 %v1197, %v1193
    %v1354 = vpack.c.b16 %v1198, %v1194
    %v1355 = vpack.c.b16 %v1203, %v1199
    %v1356 = vpack.c.b16 %v1204, %v1200
    %v1357 = vpack.c.b16 %v1205, %v1201
    %v1358 = vpack.c.b16 %v1206, %v1202
    %v1359 = vpack.c.b16 %v1211, %v1207
    %v1360 = vpack.c.b16 %v1212, %v1208
    %v1361 = vpack.c.b16 %v1213, %v1209
    %v1362 = vpack.c.b16 %v1214, %v1210
    %v1363 = vpack.c.b16 %v1219, %v1215
    %v1364 = vpack.c.b16 %v1220, %v1216
    %v1365 = vpack.c.b16 %v1221, %v1217
    %v1366 = vpack.c.b16 %v1222, %v1218
    %v1367 = vpack.c.b16 %v1227, %v1223
    %v1368 = vpack.c.b16 %v1228, %v1224
    %v1369 = vpack.c.b16 %v1229, %v1225
    %v1370 = vpack.c.b16 %v1230, %v1226
    %v1371 = vpack.c.b16 %v1235, %v1231
    %v1372 = vpack.c.b16 %v1236, %v1232
    %v1373 = vpack.c.b16 %v1237, %v1233
    %v1374 = vpack.c.b16 %v1238, %v1234
    %v1375 = vpack.c.b16 %v1243, %v1239
    %v1376 = vpack.c.b16 %v1244, %v1240
    %v1377 = vpack.c.b16 %v1245, %v1241
    %v1378 = vpack.c.b16 %v1246, %v1242
    %v1379 = vpack.c.b16 %v1251, %v1247
    %v1380 = vpack.c.b16 %v1252, %v1248
    %v1381 = vpack.c.b16 %v1253, %v1249
    %v1382 = vpack.c.b16 %v1254, %v1250
    %1511 = vmatprep.subr.bf16.mxu0 %v1256
    %1512 = vmatpush1.bf16.msra.mxu0 %v1255
    %1513 = vmatprep.subr.bf16.mxu0 %v1260
    %1514 = vmatpush1.bf16.msra.mxu0 %v1259
    %1515 = vmatprep.subr.bf16.mxu0 %v1264
    %1516 = vmatpush1.bf16.msra.mxu0 %v1263
    %1517 = vmatprep.subr.bf16.mxu0 %v1268
    %1518 = vmatpush1.bf16.msra.mxu0 %v1267
    %1519 = vmatprep.subr.bf16.mxu0 %v1272
    %1520 = vmatpush1.bf16.msra.mxu0 %v1271
    %1521 = vmatprep.subr.bf16.mxu0 %v1276
    %1522 = vmatpush1.bf16.msra.mxu0 %v1275
    %1523 = vmatprep.subr.bf16.mxu0 %v1280
    %1524 = vmatpush1.bf16.msra.mxu0 %v1279
    %1525 = vmatprep.subr.bf16.mxu0 %v1284
    %1526 = vmatpush1.bf16.msra.mxu0 %v1283
    %1527 = vmatprep.subr.bf16.mxu0 %v1288
    %1528 = vmatpush1.bf16.msra.mxu0 %v1287
    %1529 = vmatprep.subr.bf16.mxu0 %v1292
    %1530 = vmatpush1.bf16.msra.mxu0 %v1291
    %1531 = vmatprep.subr.bf16.mxu0 %v1296
    %1532 = vmatpush1.bf16.msra.mxu0 %v1295
    %1533 = vmatprep.subr.bf16.mxu0 %v1300
    %1534 = vmatpush1.bf16.msra.mxu0 %v1299
    %1535 = vmatprep.subr.bf16.mxu0 %v1304
    %1536 = vmatpush1.bf16.msra.mxu0 %v1303
    %1537 = vmatprep.subr.bf16.mxu0 %v1308
    %1538 = vmatpush1.bf16.msra.mxu0 %v1307
    %1539 = vmatprep.subr.bf16.mxu0 %v1312
    %1540 = vmatpush1.bf16.msra.mxu0 %v1311
    %1541 = vmatprep.subr.bf16.mxu0 %v1316
    %1542 = vmatpush1.bf16.msra.mxu0 %v1315
    %1543 = vmatprep.mubr.bf16.mxu0 %v546
    %1544 = vmatmul.mubr.bf16.gmra.mrb[0].mxu0 %v545
    %v1545 = vpop.f32.mrb[0].mxu0
    %v1546 = vadd.f32 0.0, %v1545
    %v1547 = vpop.f32.mrb[0].mxu0
    %v1548 = vadd.f32 0.0, %v1547
    %v1549 = vpop.f32.mrb[0].mxu0
    %v1550 = vadd.f32 0.0, %v1549
    %v1551 = vpop.f32.mrb[0].mxu0
    %v1552 = vadd.f32 0.0, %v1551
    %1553 = vmatprep.mubr.bf16.mxu0 %v550
    %1554 = vmatmul.mubr.bf16.gmra.mrb[0].mxu0 %v549
    %v1555 = vpop.f32.mrb[0].mxu0
    %v1556 = vadd.f32 0.0, %v1555
    %v1557 = vpop.f32.mrb[0].mxu0
    %v1558 = vadd.f32 0.0, %v1557
    %v1559 = vpop.f32.mrb[0].mxu0
    %v1560 = vadd.f32 0.0, %v1559
    %v1561 = vpop.f32.mrb[0].mxu0
    %v1562 = vadd.f32 0.0, %v1561
    %1563 = vdwg.mxu0
    %1564 = vmatprep.subr.bf16.mxu0 %v1320
    %1565 = vmatpush1.bf16.msra.mxu0 %v1319
    %1566 = vmatprep.subr.bf16.mxu0 %v1324
    %1567 = vmatpush1.bf16.msra.mxu0 %v1323
    %1568 = vmatprep.subr.bf16.mxu0 %v1328
    %1569 = vmatpush1.bf16.msra.mxu0 %v1327
    %1570 = vmatprep.subr.bf16.mxu0 %v1332
    %1571 = vmatpush1.bf16.msra.mxu0 %v1331
    %1572 = vmatprep.subr.bf16.mxu0 %v1336
    %1573 = vmatpush1.bf16.msra.mxu0 %v1335
    %1574 = vmatprep.subr.bf16.mxu0 %v1340
    %1575 = vmatpush1.bf16.msra.mxu0 %v1339
    %1576 = vmatprep.subr.bf16.mxu0 %v1344
    %1577 = vmatpush1.bf16.msra.mxu0 %v1343
    %1578 = vmatprep.subr.bf16.mxu0 %v1348
    %1579 = vmatpush1.bf16.msra.mxu0 %v1347
    %1580 = vmatprep.subr.bf16.mxu0 %v1352
    %1581 = vmatpush1.bf16.msra.mxu0 %v1351
    %1582 = vmatprep.subr.bf16.mxu0 %v1356
    %1583 = vmatpush1.bf16.msra.mxu0 %v1355
    %1584 = vmatprep.subr.bf16.mxu0 %v1360
    %1585 = vmatpush1.bf16.msra.mxu0 %v1359
    %1586 = vmatprep.subr.bf16.mxu0 %v1364
    %1587 = vmatpush1.bf16.msra.mxu0 %v1363
    %1588 = vmatprep.subr.bf16.mxu0 %v1368
    %1589 = vmatpush1.bf16.msra.mxu0 %v1367
    %1590 = vmatprep.subr.bf16.mxu0 %v1372
    %1591 = vmatpush1.bf16.msra.mxu0 %v1371
    %1592 = vmatprep.subr.bf16.mxu0 %v1376
    %1593 = vmatpush1.bf16.msra.mxu0 %v1375
    %1594 = vmatprep.subr.bf16.mxu0 %v1380
    %1595 = vmatpush1.bf16.msra.mxu0 %v1379
    %1596 = vmatprep.mubr.bf16.mxu0 %v548
    %1597 = vmatmul.mubr.bf16.gmra.mrb[0].mxu0 %v547
    %v1598 = vpop.f32.mrb[0].mxu0
    %v1599 = vadd.f32 %v1546, %v1598
    %v1600 = vpop.f32.mrb[0].mxu0
    %v1601 = vadd.f32 %v1548, %v1600
    %v1602 = vpop.f32.mrb[0].mxu0
    %v1603 = vadd.f32 %v1550, %v1602
    %v1604 = vpop.f32.mrb[0].mxu0
    %v1605 = vadd.f32 %v1552, %v1604
    %1606 = vmatprep.mubr.bf16.mxu0 %v552
    %1607 = vmatmul.mubr.bf16.gmra.mrb[0].mxu0 %v551
    %v1608 = vpop.f32.mrb[0].mxu0
    %v1609 = vadd.f32 %v1556, %v1608
    %v1610 = vpop.f32.mrb[0].mxu0
    %v1611 = vadd.f32 %v1558, %v1610
    %v1612 = vpop.f32.mrb[0].mxu0
    %v1613 = vadd.f32 %v1560, %v1612
    %v1614 = vpop.f32.mrb[0].mxu0
    %v1615 = vadd.f32 %v1562, %v1614
    %1616 = vdwg.mxu0
    %1617 = vmatprep.subr.bf16.mxu0 %v1258
    %1618 = vmatpush1.bf16.msra.mxu0 %v1257
    %1619 = vmatprep.subr.bf16.mxu0 %v1262
    %1620 = vmatpush1.bf16.msra.mxu0 %v1261
    %1621 = vmatprep.subr.bf16.mxu0 %v1266
    %1622 = vmatpush1.bf16.msra.mxu0 %v1265
    %1623 = vmatprep.subr.bf16.mxu0 %v1270
    %1624 = vmatpush1.bf16.msra.mxu0 %v1269
    %1625 = vmatprep.subr.bf16.mxu0 %v1274
    %1626 = vmatpush1.bf16.msra.mxu0 %v1273
    %1627 = vmatprep.subr.bf16.mxu0 %v1278
    %1628 = vmatpush1.bf16.msra.mxu0 %v1277
    %1629 = vmatprep.subr.bf16.mxu0 %v1282
    %1630 = vmatpush1.bf16.msra.mxu0 %v1281
    %1631 = vmatprep.subr.bf16.mxu0 %v1286
    %1632 = vmatpush1.bf16.msra.mxu0 %v1285
    %1633 = vmatprep.subr.bf16.mxu0 %v1290
    %1634 = vmatpush1.bf16.msra.mxu0 %v1289
    %1635 = vmatprep.subr.bf16.mxu0 %v1294
    %1636 = vmatpush1.bf16.msra.mxu0 %v1293
    %1637 = vmatprep.subr.bf16.mxu0 %v1298
    %1638 = vmatpush1.bf16.msra.mxu0 %v1297
    %1639 = vmatprep.subr.bf16.mxu0 %v1302
    %1640 = vmatpush1.bf16.msra.mxu0 %v1301
    %1641 = vmatprep.subr.bf16.mxu0 %v1306
    %1642 = vmatpush1.bf16.msra.mxu0 %v1305
    %1643 = vmatprep.subr.bf16.mxu0 %v1310
    %1644 = vmatpush1.bf16.msra.mxu0 %v1309
    %1645 = vmatprep.subr.bf16.mxu0 %v1314
    %1646 = vmatpush1.bf16.msra.mxu0 %v1313
    %1647 = vmatprep.subr.bf16.mxu0 %v1318
    %1648 = vmatpush1.bf16.msra.mxu0 %v1317
    %1649 = vmatprep.mubr.bf16.mxu0 %v546
    %1650 = vmatmul.mubr.bf16.gmra.mrb[0].mxu0 %v545
    %v1651 = vpop.f32.mrb[0].mxu0
    %v1652 = vadd.f32 0.0, %v1651
    %v1653 = vpop.f32.mrb[0].mxu0
    %v1654 = vadd.f32 0.0, %v1653
    %v1655 = vpop.f32.mrb[0].mxu0
    %v1656 = vadd.f32 0.0, %v1655
    %v1657 = vpop.f32.mrb[0].mxu0
    %v1658 = vadd.f32 0.0, %v1657
    %1659 = vmatprep.mubr.bf16.mxu0 %v550
    %1660 = vmatmul.mubr.bf16.gmra.mrb[0].mxu0 %v549
    %v1661 = vpop.f32.mrb[0].mxu0
    %v1662 = vadd.f32 0.0, %v1661
    %v1663 = vpop.f32.mrb[0].mxu0
    %v1664 = vadd.f32 0.0, %v1663
    %v1665 = vpop.f32.mrb[0].mxu0
    %v1666 = vadd.f32 0.0, %v1665
    %v1667 = vpop.f32.mrb[0].mxu0
    %v1668 = vadd.f32 0.0, %v1667
    %1669 = vdwg.mxu0
    %1670 = vmatprep.subr.bf16.mxu0 %v1322
    %1671 = vmatpush1.bf16.msra.mxu0 %v1321
    %1672 = vmatprep.subr.bf16.mxu0 %v1326
    %1673 = vmatpush1.bf16.msra.mxu0 %v1325
    %1674 = vmatprep.subr.bf16.mxu0 %v1330
    %1675 = vmatpush1.bf16.msra.mxu0 %v1329
    %1676 = vmatprep.subr.bf16.mxu0 %v1334
    %1677 = vmatpush1.bf16.msra.mxu0 %v1333
    %1678 = vmatprep.subr.bf16.mxu0 %v1338
    %1679 = vmatpush1.bf16.msra.mxu0 %v1337
    %1680 = vmatprep.subr.bf16.mxu0 %v1342
    %1681 = vmatpush1.bf16.msra.mxu0 %v1341
    %1682 = vmatprep.subr.bf16.mxu0 %v1346
    %1683 = vmatpush1.bf16.msra.mxu0 %v1345
    %1684 = vmatprep.subr.bf16.mxu0 %v1350
    %1685 = vmatpush1.bf16.msra.mxu0 %v1349
    %1686 = vmatprep.subr.bf16.mxu0 %v1354
    %1687 = vmatpush1.bf16.msra.mxu0 %v1353
    %1688 = vmatprep.subr.bf16.mxu0 %v1358
    %1689 = vmatpush1.bf16.msra.mxu0 %v1357
    %1690 = vmatprep.subr.bf16.mxu0 %v1362
    %1691 = vmatpush1.bf16.msra.mxu0 %v1361
    %1692 = vmatprep.subr.bf16.mxu0 %v1366
    %1693 = vmatpush1.bf16.msra.mxu0 %v1365
    %1694 = vmatprep.subr.bf16.mxu0 %v1370
    %1695 = vmatpush1.bf16.msra.mxu0 %v1369
    %1696 = vmatprep.subr.bf16.mxu0 %v1374
    %1697 = vmatpush1.bf16.msra.mxu0 %v1373
    %1698 = vmatprep.subr.bf16.mxu0 %v1378
    %1699 = vmatpush1.bf16.msra.mxu0 %v1377
    %1700 = vmatprep.subr.bf16.mxu0 %v1382
    %1701 = vmatpush1.bf16.msra.mxu0 %v1381
    %1702 = vmatprep.mubr.bf16.mxu0 %v548
    %1703 = vmatmul.mubr.bf16.gmra.mrb[0].mxu0 %v547
    %v1704 = vpop.f32.mrb[0].mxu0
    %v1705 = vadd.f32 %v1652, %v1704
    %v1706 = vpop.f32.mrb[0].mxu0
    %v1707 = vadd.f32 %v1654, %v1706
    %v1708 = vpop.f32.mrb[0].mxu0
    %v1709 = vadd.f32 %v1656, %v1708
    %v1710 = vpop.f32.mrb[0].mxu0
    %v1711 = vadd.f32 %v1658, %v1710
    %1712 = vmatprep.mubr.bf16.mxu0 %v552
    %1713 = vmatmul.mubr.bf16.gmra.mrb[0].mxu0 %v551
    %v1714 = vpop.f32.mrb[0].mxu0
    %v1715 = vadd.f32 %v1662, %v1714
    %v1716 = vpop.f32.mrb[0].mxu0
    %v1717 = vadd.f32 %v1664, %v1716
    %v1718 = vpop.f32.mrb[0].mxu0
    %v1719 = vadd.f32 %v1666, %v1718
    %v1720 = vpop.f32.mrb[0].mxu0
    %v1721 = vadd.f32 %v1668, %v1720
    %1722 = vdwg.mxu0
    %s1723 = scalar_lea.vmem [#allocation5], 2048
    %v1724 = vld [vmem:[%s1723] sm:$0xff]
    %v1725 = vld [vmem:[%s1723 + $0x8] sm:$0xff]
    %v1726 = vld [vmem:[%s1723 + $0x10] sm:$0xff]
    %v1727 = vld [vmem:[%s1723 + $0x18] sm:$0xff]
    %v1728 = vld [vmem:[%s1723 + $0x20] sm:$0xff]
    %v1729 = vld [vmem:[%s1723 + $0x28] sm:$0xff]
    %v1730 = vld [vmem:[%s1723 + $0x30] sm:$0xff]
    %v1731 = vld [vmem:[%s1723 + $0x38] sm:$0xff]
    %v1732 = vld [vmem:[%s1723 + $0x40] sm:$0xff]
    %v1733 = vld [vmem:[%s1723 + $0x48] sm:$0xff]
    %v1734 = vld [vmem:[%s1723 + $0x50] sm:$0xff]
    %v1735 = vld [vmem:[%s1723 + $0x58] sm:$0xff]
    %v1736 = vld [vmem:[%s1723 + $0x60] sm:$0xff]
    %v1737 = vld [vmem:[%s1723 + $0x68] sm:$0xff]
    %v1738 = vld [vmem:[%s1723 + $0x70] sm:$0xff]
    %v1739 = vld [vmem:[%s1723 + $0x78] sm:$0xff]
    %v1740 = vld [vmem:[%s1723 + $0x80] sm:$0xff]
    %v1741 = vld [vmem:[%s1723 + $0x88] sm:$0xff]
    %v1742 = vld [vmem:[%s1723 + $0x90] sm:$0xff]
    %v1743 = vld [vmem:[%s1723 + $0x98] sm:$0xff]
    %v1744 = vld [vmem:[%s1723 + $0xa0] sm:$0xff]
    %v1745 = vld [vmem:[%s1723 + $0xa8] sm:$0xff]
    %v1746 = vld [vmem:[%s1723 + $0xb0] sm:$0xff]
    %v1747 = vld [vmem:[%s1723 + $0xb8] sm:$0xff]
    %v1748 = vld [vmem:[%s1723 + $0xc0] sm:$0xff]
    %v1749 = vld [vmem:[%s1723 + $0xc8] sm:$0xff]
    %v1750 = vld [vmem:[%s1723 + $0xd0] sm:$0xff]
    %v1751 = vld [vmem:[%s1723 + $0xd8] sm:$0xff]
    %v1752 = vld [vmem:[%s1723 + $0xe0] sm:$0xff]
    %v1753 = vld [vmem:[%s1723 + $0xe8] sm:$0xff]
    %v1754 = vld [vmem:[%s1723 + $0xf0] sm:$0xff]
    %v1755 = vld [vmem:[%s1723 + $0xf8] sm:$0xff]
    %v1756 = vld [vmem:[%s1723 + $0x100] sm:$0xff]
    %v1757 = vld [vmem:[%s1723 + $0x108] sm:$0xff]
    %v1758 = vld [vmem:[%s1723 + $0x110] sm:$0xff]
    %v1759 = vld [vmem:[%s1723 + $0x118] sm:$0xff]
    %v1760 = vld [vmem:[%s1723 + $0x120] sm:$0xff]
    %v1761 = vld [vmem:[%s1723 + $0x128] sm:$0xff]
    %v1762 = vld [vmem:[%s1723 + $0x130] sm:$0xff]
    %v1763 = vld [vmem:[%s1723 + $0x138] sm:$0xff]
    %v1764 = vld [vmem:[%s1723 + $0x140] sm:$0xff]
    %v1765 = vld [vmem:[%s1723 + $0x148] sm:$0xff]
    %v1766 = vld [vmem:[%s1723 + $0x150] sm:$0xff]
    %v1767 = vld [vmem:[%s1723 + $0x158] sm:$0xff]
    %v1768 = vld [vmem:[%s1723 + $0x160] sm:$0xff]
    %v1769 = vld [vmem:[%s1723 + $0x168] sm:$0xff]
    %v1770 = vld [vmem:[%s1723 + $0x170] sm:$0xff]
    %v1771 = vld [vmem:[%s1723 + $0x178] sm:$0xff]
    %v1772 = vld [vmem:[%s1723 + $0x180] sm:$0xff]
    %v1773 = vld [vmem:[%s1723 + $0x188] sm:$0xff]
    %v1774 = vld [vmem:[%s1723 + $0x190] sm:$0xff]
    %v1775 = vld [vmem:[%s1723 + $0x198] sm:$0xff]
    %v1776 = vld [vmem:[%s1723 + $0x1a0] sm:$0xff]
    %v1777 = vld [vmem:[%s1723 + $0x1a8] sm:$0xff]
    %v1778 = vld [vmem:[%s1723 + $0x1b0] sm:$0xff]
    %v1779 = vld [vmem:[%s1723 + $0x1b8] sm:$0xff]
    %v1780 = vld [vmem:[%s1723 + $0x1c0] sm:$0xff]
    %v1781 = vld [vmem:[%s1723 + $0x1c8] sm:$0xff]
    %v1782 = vld [vmem:[%s1723 + $0x1d0] sm:$0xff]
    %v1783 = vld [vmem:[%s1723 + $0x1d8] sm:$0xff]
    %v1784 = vld [vmem:[%s1723 + $0x1e0] sm:$0xff]
    %v1785 = vld [vmem:[%s1723 + $0x1e8] sm:$0xff]
    %v1786 = vld [vmem:[%s1723 + $0x1f0] sm:$0xff]
    %v1787 = vld [vmem:[%s1723 + $0x1f8] sm:$0xff]
    %v1788 = vld [vmem:[%s1723 + $0x200] sm:$0xff]
    %v1789 = vld [vmem:[%s1723 + $0x208] sm:$0xff]
    %v1790 = vld [vmem:[%s1723 + $0x210] sm:$0xff]
    %v1791 = vld [vmem:[%s1723 + $0x218] sm:$0xff]
    %v1792 = vld [vmem:[%s1723 + $0x220] sm:$0xff]
    %v1793 = vld [vmem:[%s1723 + $0x228] sm:$0xff]
    %v1794 = vld [vmem:[%s1723 + $0x230] sm:$0xff]
    %v1795 = vld [vmem:[%s1723 + $0x238] sm:$0xff]
    %v1796 = vld [vmem:[%s1723 + $0x240] sm:$0xff]
    %v1797 = vld [vmem:[%s1723 + $0x248] sm:$0xff]
    %v1798 = vld [vmem:[%s1723 + $0x250] sm:$0xff]
    %v1799 = vld [vmem:[%s1723 + $0x258] sm:$0xff]
    %v1800 = vld [vmem:[%s1723 + $0x260] sm:$0xff]
    %v1801 = vld [vmem:[%s1723 + $0x268] sm:$0xff]
    %v1802 = vld [vmem:[%s1723 + $0x270] sm:$0xff]
    %v1803 = vld [vmem:[%s1723 + $0x278] sm:$0xff]
    %v1804 = vld [vmem:[%s1723 + $0x280] sm:$0xff]
    %v1805 = vld [vmem:[%s1723 + $0x288] sm:$0xff]
    %v1806 = vld [vmem:[%s1723 + $0x290] sm:$0xff]
    %v1807 = vld [vmem:[%s1723 + $0x298] sm:$0xff]
    %v1808 = vld [vmem:[%s1723 + $0x2a0] sm:$0xff]
    %v1809 = vld [vmem:[%s1723 + $0x2a8] sm:$0xff]
    %v1810 = vld [vmem:[%s1723 + $0x2b0] sm:$0xff]
    %v1811 = vld [vmem:[%s1723 + $0x2b8] sm:$0xff]
    %v1812 = vld [vmem:[%s1723 + $0x2c0] sm:$0xff]
    %v1813 = vld [vmem:[%s1723 + $0x2c8] sm:$0xff]
    %v1814 = vld [vmem:[%s1723 + $0x2d0] sm:$0xff]
    %v1815 = vld [vmem:[%s1723 + $0x2d8] sm:$0xff]
    %v1816 = vld [vmem:[%s1723 + $0x2e0] sm:$0xff]
    %v1817 = vld [vmem:[%s1723 + $0x2e8] sm:$0xff]
    %v1818 = vld [vmem:[%s1723 + $0x2f0] sm:$0xff]
    %v1819 = vld [vmem:[%s1723 + $0x2f8] sm:$0xff]
    %v1820 = vld [vmem:[%s1723 + $0x300] sm:$0xff]
    %v1821 = vld [vmem:[%s1723 + $0x308] sm:$0xff]
    %v1822 = vld [vmem:[%s1723 + $0x310] sm:$0xff]
    %v1823 = vld [vmem:[%s1723 + $0x318] sm:$0xff]
    %v1824 = vld [vmem:[%s1723 + $0x320] sm:$0xff]
    %v1825 = vld [vmem:[%s1723 + $0x328] sm:$0xff]
    %v1826 = vld [vmem:[%s1723 + $0x330] sm:$0xff]
    %v1827 = vld [vmem:[%s1723 + $0x338] sm:$0xff]
    %v1828 = vld [vmem:[%s1723 + $0x340] sm:$0xff]
    %v1829 = vld [vmem:[%s1723 + $0x348] sm:$0xff]
    %v1830 = vld [vmem:[%s1723 + $0x350] sm:$0xff]
    %v1831 = vld [vmem:[%s1723 + $0x358] sm:$0xff]
    %v1832 = vld [vmem:[%s1723 + $0x360] sm:$0xff]
    %v1833 = vld [vmem:[%s1723 + $0x368] sm:$0xff]
    %v1834 = vld [vmem:[%s1723 + $0x370] sm:$0xff]
    %v1835 = vld [vmem:[%s1723 + $0x378] sm:$0xff]
    %v1836 = vld [vmem:[%s1723 + $0x380] sm:$0xff]
    %v1837 = vld [vmem:[%s1723 + $0x388] sm:$0xff]
    %v1838 = vld [vmem:[%s1723 + $0x390] sm:$0xff]
    %v1839 = vld [vmem:[%s1723 + $0x398] sm:$0xff]
    %v1840 = vld [vmem:[%s1723 + $0x3a0] sm:$0xff]
    %v1841 = vld [vmem:[%s1723 + $0x3a8] sm:$0xff]
    %v1842 = vld [vmem:[%s1723 + $0x3b0] sm:$0xff]
    %v1843 = vld [vmem:[%s1723 + $0x3b8] sm:$0xff]
    %v1844 = vld [vmem:[%s1723 + $0x3c0] sm:$0xff]
    %v1845 = vld [vmem:[%s1723 + $0x3c8] sm:$0xff]
    %v1846 = vld [vmem:[%s1723 + $0x3d0] sm:$0xff]
    %v1847 = vld [vmem:[%s1723 + $0x3d8] sm:$0xff]
    %v1848 = vld [vmem:[%s1723 + $0x3e0] sm:$0xff]
    %v1849 = vld [vmem:[%s1723 + $0x3e8] sm:$0xff]
    %v1850 = vld [vmem:[%s1723 + $0x3f0] sm:$0xff]
    %v1851 = vld [vmem:[%s1723 + $0x3f8] sm:$0xff]
    %v1980 = vunpack.c.l.b16 %v1724
    %v1981 = vunpack.c.h.b16 %v1724
    %v1982 = vunpack.c.l.b16 %v1725
    %v1983 = vunpack.c.h.b16 %v1725
    %v1984 = vunpack.c.l.b16 %v1726
    %v1985 = vunpack.c.h.b16 %v1726
    %v1986 = vunpack.c.l.b16 %v1727
    %v1987 = vunpack.c.h.b16 %v1727
    %v1988 = vunpack.c.l.b16 %v1728
    %v1989 = vunpack.c.h.b16 %v1728
    %v1990 = vunpack.c.l.b16 %v1729
    %v1991 = vunpack.c.h.b16 %v1729
    %v1992 = vunpack.c.l.b16 %v1730
    %v1993 = vunpack.c.h.b16 %v1730
    %v1994 = vunpack.c.l.b16 %v1731
    %v1995 = vunpack.c.h.b16 %v1731
    %v1996 = vunpack.c.l.b16 %v1732
    %v1997 = vunpack.c.h.b16 %v1732
    %v1998 = vunpack.c.l.b16 %v1733
    %v1999 = vunpack.c.h.b16 %v1733
    %v2000 = vunpack.c.l.b16 %v1734
    %v2001 = vunpack.c.h.b16 %v1734
    %v2002 = vunpack.c.l.b16 %v1735
    %v2003 = vunpack.c.h.b16 %v1735
    %v2004 = vunpack.c.l.b16 %v1736
    %v2005 = vunpack.c.h.b16 %v1736
    %v2006 = vunpack.c.l.b16 %v1737
    %v2007 = vunpack.c.h.b16 %v1737
    %v2008 = vunpack.c.l.b16 %v1738
    %v2009 = vunpack.c.h.b16 %v1738
    %v2010 = vunpack.c.l.b16 %v1739
    %v2011 = vunpack.c.h.b16 %v1739
    %v2012 = vunpack.c.l.b16 %v1740
    %v2013 = vunpack.c.h.b16 %v1740
    %v2014 = vunpack.c.l.b16 %v1741
    %v2015 = vunpack.c.h.b16 %v1741
    %v2016 = vunpack.c.l.b16 %v1742
    %v2017 = vunpack.c.h.b16 %v1742
    %v2018 = vunpack.c.l.b16 %v1743
    %v2019 = vunpack.c.h.b16 %v1743
    %v2020 = vunpack.c.l.b16 %v1744
    %v2021 = vunpack.c.h.b16 %v1744
    %v2022 = vunpack.c.l.b16 %v1745
    %v2023 = vunpack.c.h.b16 %v1745
    %v2024 = vunpack.c.l.b16 %v1746
    %v2025 = vunpack.c.h.b16 %v1746
    %v2026 = vunpack.c.l.b16 %v1747
    %v2027 = vunpack.c.h.b16 %v1747
    %v2028 = vunpack.c.l.b16 %v1748
    %v2029 = vunpack.c.h.b16 %v1748
    %v2030 = vunpack.c.l.b16 %v1749
    %v2031 = vunpack.c.h.b16 %v1749
    %v2032 = vunpack.c.l.b16 %v1750
    %v2033 = vunpack.c.h.b16 %v1750
    %v2034 = vunpack.c.l.b16 %v1751
    %v2035 = vunpack.c.h.b16 %v1751
    %v2036 = vunpack.c.l.b16 %v1752
    %v2037 = vunpack.c.h.b16 %v1752
    %v2038 = vunpack.c.l.b16 %v1753
    %v2039 = vunpack.c.h.b16 %v1753
    %v2040 = vunpack.c.l.b16 %v1754
    %v2041 = vunpack.c.h.b16 %v1754
    %v2042 = vunpack.c.l.b16 %v1755
    %v2043 = vunpack.c.h.b16 %v1755
    %v2044 = vunpack.c.l.b16 %v1756
    %v2045 = vunpack.c.h.b16 %v1756
    %v2046 = vunpack.c.l.b16 %v1757
    %v2047 = vunpack.c.h.b16 %v1757
    %v2048 = vunpack.c.l.b16 %v1758
    %v2049 = vunpack.c.h.b16 %v1758
    %v2050 = vunpack.c.l.b16 %v1759
    %v2051 = vunpack.c.h.b16 %v1759
    %v2052 = vunpack.c.l.b16 %v1760
    %v2053 = vunpack.c.h.b16 %v1760
    %v2054 = vunpack.c.l.b16 %v1761
    %v2055 = vunpack.c.h.b16 %v1761
    %v2056 = vunpack.c.l.b16 %v1762
    %v2057 = vunpack.c.h.b16 %v1762
    %v2058 = vunpack.c.l.b16 %v1763
    %v2059 = vunpack.c.h.b16 %v1763
    %v2060 = vunpack.c.l.b16 %v1764
    %v2061 = vunpack.c.h.b16 %v1764
    %v2062 = vunpack.c.l.b16 %v1765
    %v2063 = vunpack.c.h.b16 %v1765
    %v2064 = vunpack.c.l.b16 %v1766
    %v2065 = vunpack.c.h.b16 %v1766
    %v2066 = vunpack.c.l.b16 %v1767
    %v2067 = vunpack.c.h.b16 %v1767
    %v2068 = vunpack.c.l.b16 %v1768
    %v2069 = vunpack.c.h.b16 %v1768
    %v2070 = vunpack.c.l.b16 %v1769
    %v2071 = vunpack.c.h.b16 %v1769
    %v2072 = vunpack.c.l.b16 %v1770
    %v2073 = vunpack.c.h.b16 %v1770
    %v2074 = vunpack.c.l.b16 %v1771
    %v2075 = vunpack.c.h.b16 %v1771
    %v2076 = vunpack.c.l.b16 %v1772
    %v2077 = vunpack.c.h.b16 %v1772
    %v2078 = vunpack.c.l.b16 %v1773
    %v2079 = vunpack.c.h.b16 %v1773
    %v2080 = vunpack.c.l.b16 %v1774
    %v2081 = vunpack.c.h.b16 %v1774
    %v2082 = vunpack.c.l.b16 %v1775
    %v2083 = vunpack.c.h.b16 %v1775
    %v2084 = vunpack.c.l.b16 %v1776
    %v2085 = vunpack.c.h.b16 %v1776
    %v2086 = vunpack.c.l.b16 %v1777
    %v2087 = vunpack.c.h.b16 %v1777
    %v2088 = vunpack.c.l.b16 %v1778
    %v2089 = vunpack.c.h.b16 %v1778
    %v2090 = vunpack.c.l.b16 %v1779
    %v2091 = vunpack.c.h.b16 %v1779
    %v2092 = vunpack.c.l.b16 %v1780
    %v2093 = vunpack.c.h.b16 %v1780
    %v2094 = vunpack.c.l.b16 %v1781
    %v2095 = vunpack.c.h.b16 %v1781
    %v2096 = vunpack.c.l.b16 %v1782
    %v2097 = vunpack.c.h.b16 %v1782
    %v2098 = vunpack.c.l.b16 %v1783
    %v2099 = vunpack.c.h.b16 %v1783
    %v2100 = vunpack.c.l.b16 %v1784
    %v2101 = vunpack.c.h.b16 %v1784
    %v2102 = vunpack.c.l.b16 %v1785
    %v2103 = vunpack.c.h.b16 %v1785
    %v2104 = vunpack.c.l.b16 %v1786
    %v2105 = vunpack.c.h.b16 %v1786
    %v2106 = vunpack.c.l.b16 %v1787
    %v2107 = vunpack.c.h.b16 %v1787
    %v2108 = vunpack.c.l.b16 %v1788
    %v2109 = vunpack.c.h.b16 %v1788
    %v2110 = vunpack.c.l.b16 %v1789
    %v2111 = vunpack.c.h.b16 %v1789
    %v2112 = vunpack.c.l.b16 %v1790
    %v2113 = vunpack.c.h.b16 %v1790
    %v2114 = vunpack.c.l.b16 %v1791
    %v2115 = vunpack.c.h.b16 %v1791
    %v2116 = vunpack.c.l.b16 %v1792
    %v2117 = vunpack.c.h.b16 %v1792
    %v2118 = vunpack.c.l.b16 %v1793
    %v2119 = vunpack.c.h.b16 %v1793
    %v2120 = vunpack.c.l.b16 %v1794
    %v2121 = vunpack.c.h.b16 %v1794
    %v2122 = vunpack.c.l.b16 %v1795
    %v2123 = vunpack.c.h.b16 %v1795
    %v2124 = vunpack.c.l.b16 %v1796
    %v2125 = vunpack.c.h.b16 %v1796
    %v2126 = vunpack.c.l.b16 %v1797
    %v2127 = vunpack.c.h.b16 %v1797
    %v2128 = vunpack.c.l.b16 %v1798
    %v2129 = vunpack.c.h.b16 %v1798
    %v2130 = vunpack.c.l.b16 %v1799
    %v2131 = vunpack.c.h.b16 %v1799
    %v2132 = vunpack.c.l.b16 %v1800
    %v2133 = vunpack.c.h.b16 %v1800
    %v2134 = vunpack.c.l.b16 %v1801
    %v2135 = vunpack.c.h.b16 %v1801
    %v2136 = vunpack.c.l.b16 %v1802
    %v2137 = vunpack.c.h.b16 %v1802
    %v2138 = vunpack.c.l.b16 %v1803
    %v2139 = vunpack.c.h.b16 %v1803
    %v2140 = vunpack.c.l.b16 %v1804
    %v2141 = vunpack.c.h.b16 %v1804
    %v2142 = vunpack.c.l.b16 %v1805
    %v2143 = vunpack.c.h.b16 %v1805
    %v2144 = vunpack.c.l.b16 %v1806
    %v2145 = vunpack.c.h.b16 %v1806
    %v2146 = vunpack.c.l.b16 %v1807
    %v2147 = vunpack.c.h.b16 %v1807
    %v2148 = vunpack.c.l.b16 %v1808
    %v2149 = vunpack.c.h.b16 %v1808
    %v2150 = vunpack.c.l.b16 %v1809
    %v2151 = vunpack.c.h.b16 %v1809
    %v2152 = vunpack.c.l.b16 %v1810
    %v2153 = vunpack.c.h.b16 %v1810
    %v2154 = vunpack.c.l.b16 %v1811
    %v2155 = vunpack.c.h.b16 %v1811
    %v2156 = vunpack.c.l.b16 %v1812
    %v2157 = vunpack.c.h.b16 %v1812
    %v2158 = vunpack.c.l.b16 %v1813
    %v2159 = vunpack.c.h.b16 %v1813
    %v2160 = vunpack.c.l.b16 %v1814
    %v2161 = vunpack.c.h.b16 %v1814
    %v2162 = vunpack.c.l.b16 %v1815
    %v2163 = vunpack.c.h.b16 %v1815
    %v2164 = vunpack.c.l.b16 %v1816
    %v2165 = vunpack.c.h.b16 %v1816
    %v2166 = vunpack.c.l.b16 %v1817
    %v2167 = vunpack.c.h.b16 %v1817
    %v2168 = vunpack.c.l.b16 %v1818
    %v2169 = vunpack.c.h.b16 %v1818
    %v2170 = vunpack.c.l.b16 %v1819
    %v2171 = vunpack.c.h.b16 %v1819
    %v2172 = vunpack.c.l.b16 %v1820
    %v2173 = vunpack.c.h.b16 %v1820
    %v2174 = vunpack.c.l.b16 %v1821
    %v2175 = vunpack.c.h.b16 %v1821
    %v2176 = vunpack.c.l.b16 %v1822
    %v2177 = vunpack.c.h.b16 %v1822
    %v2178 = vunpack.c.l.b16 %v1823
    %v2179 = vunpack.c.h.b16 %v1823
    %v2180 = vunpack.c.l.b16 %v1824
    %v2181 = vunpack.c.h.b16 %v1824
    %v2182 = vunpack.c.l.b16 %v1825
    %v2183 = vunpack.c.h.b16 %v1825
    %v2184 = vunpack.c.l.b16 %v1826
    %v2185 = vunpack.c.h.b16 %v1826
    %v2186 = vunpack.c.l.b16 %v1827
    %v2187 = vunpack.c.h.b16 %v1827
    %v2188 = vunpack.c.l.b16 %v1828
    %v2189 = vunpack.c.h.b16 %v1828
    %v2190 = vunpack.c.l.b16 %v1829
    %v2191 = vunpack.c.h.b16 %v1829
    %v2192 = vunpack.c.l.b16 %v1830
    %v2193 = vunpack.c.h.b16 %v1830
    %v2194 = vunpack.c.l.b16 %v1831
    %v2195 = vunpack.c.h.b16 %v1831
    %v2196 = vunpack.c.l.b16 %v1832
    %v2197 = vunpack.c.h.b16 %v1832
    %v2198 = vunpack.c.l.b16 %v1833
    %v2199 = vunpack.c.h.b16 %v1833
    %v2200 = vunpack.c.l.b16 %v1834
    %v2201 = vunpack.c.h.b16 %v1834
    %v2202 = vunpack.c.l.b16 %v1835
    %v2203 = vunpack.c.h.b16 %v1835
    %v2204 = vunpack.c.l.b16 %v1836
    %v2205 = vunpack.c.h.b16 %v1836
    %v2206 = vunpack.c.l.b16 %v1837
    %v2207 = vunpack.c.h.b16 %v1837
    %v2208 = vunpack.c.l.b16 %v1838
    %v2209 = vunpack.c.h.b16 %v1838
    %v2210 = vunpack.c.l.b16 %v1839
    %v2211 = vunpack.c.h.b16 %v1839
    %v2212 = vunpack.c.l.b16 %v1840
    %v2213 = vunpack.c.h.b16 %v1840
    %v2214 = vunpack.c.l.b16 %v1841
    %v2215 = vunpack.c.h.b16 %v1841
    %v2216 = vunpack.c.l.b16 %v1842
    %v2217 = vunpack.c.h.b16 %v1842
    %v2218 = vunpack.c.l.b16 %v1843
    %v2219 = vunpack.c.h.b16 %v1843
    %v2220 = vunpack.c.l.b16 %v1844
    %v2221 = vunpack.c.h.b16 %v1844
    %v2222 = vunpack.c.l.b16 %v1845
    %v2223 = vunpack.c.h.b16 %v1845
    %v2224 = vunpack.c.l.b16 %v1846
    %v2225 = vunpack.c.h.b16 %v1846
    %v2226 = vunpack.c.l.b16 %v1847
    %v2227 = vunpack.c.h.b16 %v1847
    %v2228 = vunpack.c.l.b16 %v1848
    %v2229 = vunpack.c.h.b16 %v1848
    %v2230 = vunpack.c.l.b16 %v1849
    %v2231 = vunpack.c.h.b16 %v1849
    %v2232 = vunpack.c.l.b16 %v1850
    %v2233 = vunpack.c.h.b16 %v1850
    %v2234 = vunpack.c.l.b16 %v1851
    %v2235 = vunpack.c.h.b16 %v1851
    %v2236 = vpack.c.b16 %v1984, %v1980
    %v2237 = vpack.c.b16 %v1985, %v1981
    %v2238 = vpack.c.b16 %v1986, %v1982
    %v2239 = vpack.c.b16 %v1987, %v1983
    %v2240 = vpack.c.b16 %v1992, %v1988
    %v2241 = vpack.c.b16 %v1993, %v1989
    %v2242 = vpack.c.b16 %v1994, %v1990
    %v2243 = vpack.c.b16 %v1995, %v1991
    %v2244 = vpack.c.b16 %v2000, %v1996
    %v2245 = vpack.c.b16 %v2001, %v1997
    %v2246 = vpack.c.b16 %v2002, %v1998
    %v2247 = vpack.c.b16 %v2003, %v1999
    %v2248 = vpack.c.b16 %v2008, %v2004
    %v2249 = vpack.c.b16 %v2009, %v2005
    %v2250 = vpack.c.b16 %v2010, %v2006
    %v2251 = vpack.c.b16 %v2011, %v2007
    %v2252 = vpack.c.b16 %v2016, %v2012
    %v2253 = vpack.c.b16 %v2017, %v2013
    %v2254 = vpack.c.b16 %v2018, %v2014
    %v2255 = vpack.c.b16 %v2019, %v2015
    %v2256 = vpack.c.b16 %v2024, %v2020
    %v2257 = vpack.c.b16 %v2025, %v2021
    %v2258 = vpack.c.b16 %v2026, %v2022
    %v2259 = vpack.c.b16 %v2027, %v2023
    %v2260 = vpack.c.b16 %v2032, %v2028
    %v2261 = vpack.c.b16 %v2033, %v2029
    %v2262 = vpack.c.b16 %v2034, %v2030
    %v2263 = vpack.c.b16 %v2035, %v2031
    %v2264 = vpack.c.b16 %v2040, %v2036
    %v2265 = vpack.c.b16 %v2041, %v2037
    %v2266 = vpack.c.b16 %v2042, %v2038
    %v2267 = vpack.c.b16 %v2043, %v2039
    %v2268 = vpack.c.b16 %v2048, %v2044
    %v2269 = vpack.c.b16 %v2049, %v2045
    %v2270 = vpack.c.b16 %v2050, %v2046
    %v2271 = vpack.c.b16 %v2051, %v2047
    %v2272 = vpack.c.b16 %v2056, %v2052
    %v2273 = vpack.c.b16 %v2057, %v2053
    %v2274 = vpack.c.b16 %v2058, %v2054
    %v2275 = vpack.c.b16 %v2059, %v2055
    %v2276 = vpack.c.b16 %v2064, %v2060
    %v2277 = vpack.c.b16 %v2065, %v2061
    %v2278 = vpack.c.b16 %v2066, %v2062
    %v2279 = vpack.c.b16 %v2067, %v2063
    %v2280 = vpack.c.b16 %v2072, %v2068
    %v2281 = vpack.c.b16 %v2073, %v2069
    %v2282 = vpack.c.b16 %v2074, %v2070
    %v2283 = vpack.c.b16 %v2075, %v2071
    %v2284 = vpack.c.b16 %v2080, %v2076
    %v2285 = vpack.c.b16 %v2081, %v2077
    %v2286 = vpack.c.b16 %v2082, %v2078
    %v2287 = vpack.c.b16 %v2083, %v2079
    %v2288 = vpack.c.b16 %v2088, %v2084
    %v2289 = vpack.c.b16 %v2089, %v2085
    %v2290 = vpack.c.b16 %v2090, %v2086
    %v2291 = vpack.c.b16 %v2091, %v2087
    %v2292 = vpack.c.b16 %v2096, %v2092
    %v2293 = vpack.c.b16 %v2097, %v2093
    %v2294 = vpack.c.b16 %v2098, %v2094
    %v2295 = vpack.c.b16 %v2099, %v2095
    %v2296 = vpack.c.b16 %v2104, %v2100
    %v2297 = vpack.c.b16 %v2105, %v2101
    %v2298 = vpack.c.b16 %v2106, %v2102
    %v2299 = vpack.c.b16 %v2107, %v2103
    %v2300 = vpack.c.b16 %v2112, %v2108
    %v2301 = vpack.c.b16 %v2113, %v2109
    %v2302 = vpack.c.b16 %v2114, %v2110
    %v2303 = vpack.c.b16 %v2115, %v2111
    %v2304 = vpack.c.b16 %v2120, %v2116
    %v2305 = vpack.c.b16 %v2121, %v2117
    %v2306 = vpack.c.b16 %v2122, %v2118
    %v2307 = vpack.c.b16 %v2123, %v2119
    %v2308 = vpack.c.b16 %v2128, %v2124
    %v2309 = vpack.c.b16 %v2129, %v2125
    %v2310 = vpack.c.b16 %v2130, %v2126
    %v2311 = vpack.c.b16 %v2131, %v2127
    %v2312 = vpack.c.b16 %v2136, %v2132
    %v2313 = vpack.c.b16 %v2137, %v2133
    %v2314 = vpack.c.b16 %v2138, %v2134
    %v2315 = vpack.c.b16 %v2139, %v2135
    %v2316 = vpack.c.b16 %v2144, %v2140
    %v2317 = vpack.c.b16 %v2145, %v2141
    %v2318 = vpack.c.b16 %v2146, %v2142
    %v2319 = vpack.c.b16 %v2147, %v2143
    %v2320 = vpack.c.b16 %v2152, %v2148
    %v2321 = vpack.c.b16 %v2153, %v2149
    %v2322 = vpack.c.b16 %v2154, %v2150
    %v2323 = vpack.c.b16 %v2155, %v2151
    %v2324 = vpack.c.b16 %v2160, %v2156
    %v2325 = vpack.c.b16 %v2161, %v2157
    %v2326 = vpack.c.b16 %v2162, %v2158
    %v2327 = vpack.c.b16 %v2163, %v2159
    %v2328 = vpack.c.b16 %v2168, %v2164
    %v2329 = vpack.c.b16 %v2169, %v2165
    %v2330 = vpack.c.b16 %v2170, %v2166
    %v2331 = vpack.c.b16 %v2171, %v2167
    %v2332 = vpack.c.b16 %v2176, %v2172
    %v2333 = vpack.c.b16 %v2177, %v2173
    %v2334 = vpack.c.b16 %v2178, %v2174
    %v2335 = vpack.c.b16 %v2179, %v2175
    %v2336 = vpack.c.b16 %v2184, %v2180
    %v2337 = vpack.c.b16 %v2185, %v2181
    %v2338 = vpack.c.b16 %v2186, %v2182
    %v2339 = vpack.c.b16 %v2187, %v2183
    %v2340 = vpack.c.b16 %v2192, %v2188
    %v2341 = vpack.c.b16 %v2193, %v2189
    %v2342 = vpack.c.b16 %v2194, %v2190
    %v2343 = vpack.c.b16 %v2195, %v2191
    %v2344 = vpack.c.b16 %v2200, %v2196
    %v2345 = vpack.c.b16 %v2201, %v2197
    %v2346 = vpack.c.b16 %v2202, %v2198
    %v2347 = vpack.c.b16 %v2203, %v2199
    %v2348 = vpack.c.b16 %v2208, %v2204
    %v2349 = vpack.c.b16 %v2209, %v2205
    %v2350 = vpack.c.b16 %v2210, %v2206
    %v2351 = vpack.c.b16 %v2211, %v2207
    %v2352 = vpack.c.b16 %v2216, %v2212
    %v2353 = vpack.c.b16 %v2217, %v2213
    %v2354 = vpack.c.b16 %v2218, %v2214
    %v2355 = vpack.c.b16 %v2219, %v2215
    %v2356 = vpack.c.b16 %v2224, %v2220
    %v2357 = vpack.c.b16 %v2225, %v2221
    %v2358 = vpack.c.b16 %v2226, %v2222
    %v2359 = vpack.c.b16 %v2227, %v2223
    %v2360 = vpack.c.b16 %v2232, %v2228
    %v2361 = vpack.c.b16 %v2233, %v2229
    %v2362 = vpack.c.b16 %v2234, %v2230
    %v2363 = vpack.c.b16 %v2235, %v2231
    %2492 = vmatprep.subr.bf16.mxu0 %v2237
    %2493 = vmatpush1.bf16.msra.mxu0 %v2236
    %2494 = vmatprep.subr.bf16.mxu0 %v2241
    %2495 = vmatpush1.bf16.msra.mxu0 %v2240
    %2496 = vmatprep.subr.bf16.mxu0 %v2245
    %2497 = vmatpush1.bf16.msra.mxu0 %v2244
    %2498 = vmatprep.subr.bf16.mxu0 %v2249
    %2499 = vmatpush1.bf16.msra.mxu0 %v2248
    %2500 = vmatprep.subr.bf16.mxu0 %v2253
    %2501 = vmatpush1.bf16.msra.mxu0 %v2252
    %2502 = vmatprep.subr.bf16.mxu0 %v2257
    %2503 = vmatpush1.bf16.msra.mxu0 %v2256
    %2504 = vmatprep.subr.bf16.mxu0 %v2261
    %2505 = vmatpush1.bf16.msra.mxu0 %v2260
    %2506 = vmatprep.subr.bf16.mxu0 %v2265
    %2507 = vmatpush1.bf16.msra.mxu0 %v2264
    %2508 = vmatprep.subr.bf16.mxu0 %v2269
    %2509 = vmatpush1.bf16.msra.mxu0 %v2268
    %2510 = vmatprep.subr.bf16.mxu0 %v2273
    %2511 = vmatpush1.bf16.msra.mxu0 %v2272
    %2512 = vmatprep.subr.bf16.mxu0 %v2277
    %2513 = vmatpush1.bf16.msra.mxu0 %v2276
    %2514 = vmatprep.subr.bf16.mxu0 %v2281
    %2515 = vmatpush1.bf16.msra.mxu0 %v2280
    %2516 = vmatprep.subr.bf16.mxu0 %v2285
    %2517 = vmatpush1.bf16.msra.mxu0 %v2284
    %2518 = vmatprep.subr.bf16.mxu0 %v2289
    %2519 = vmatpush1.bf16.msra.mxu0 %v2288
    %2520 = vmatprep.subr.bf16.mxu0 %v2293
    %2521 = vmatpush1.bf16.msra.mxu0 %v2292
    %2522 = vmatprep.subr.bf16.mxu0 %v2297
    %2523 = vmatpush1.bf16.msra.mxu0 %v2296
    %2524 = vmatprep.mubr.bf16.mxu0 %v607
    %2525 = vmatmul.mubr.bf16.gmra.mrb[0].mxu0 %v606
    %v2526 = vpop.f32.mrb[0].mxu0
    %v2527 = vadd.f32 0.0, %v2526
    %v2528 = vpop.f32.mrb[0].mxu0
    %v2529 = vadd.f32 0.0, %v2528
    %v2530 = vpop.f32.mrb[0].mxu0
    %v2531 = vadd.f32 0.0, %v2530
    %v2532 = vpop.f32.mrb[0].mxu0
    %v2533 = vadd.f32 0.0, %v2532
    %2534 = vmatprep.mubr.bf16.mxu0 %v611
    %2535 = vmatmul.mubr.bf16.gmra.mrb[0].mxu0 %v610
    %v2536 = vpop.f32.mrb[0].mxu0
    %v2537 = vadd.f32 0.0, %v2536
    %v2538 = vpop.f32.mrb[0].mxu0
    %v2539 = vadd.f32 0.0, %v2538
    %v2540 = vpop.f32.mrb[0].mxu0
    %v2541 = vadd.f32 0.0, %v2540
    %v2542 = vpop.f32.mrb[0].mxu0
    %v2543 = vadd.f32 0.0, %v2542
    %2544 = vdwg.mxu0
    %2545 = vmatprep.subr.bf16.mxu0 %v2301
    %2546 = vmatpush1.bf16.msra.mxu0 %v2300
    %2547 = vmatprep.subr.bf16.mxu0 %v2305
    %2548 = vmatpush1.bf16.msra.mxu0 %v2304
    %2549 = vmatprep.subr.bf16.mxu0 %v2309
    %2550 = vmatpush1.bf16.msra.mxu0 %v2308
    %2551 = vmatprep.subr.bf16.mxu0 %v2313
    %2552 = vmatpush1.bf16.msra.mxu0 %v2312
    %2553 = vmatprep.subr.bf16.mxu0 %v2317
    %2554 = vmatpush1.bf16.msra.mxu0 %v2316
    %2555 = vmatprep.subr.bf16.mxu0 %v2321
    %2556 = vmatpush1.bf16.msra.mxu0 %v2320
    %2557 = vmatprep.subr.bf16.mxu0 %v2325
    %2558 = vmatpush1.bf16.msra.mxu0 %v2324
    %2559 = vmatprep.subr.bf16.mxu0 %v2329
    %2560 = vmatpush1.bf16.msra.mxu0 %v2328
    %2561 = vmatprep.subr.bf16.mxu0 %v2333
    %2562 = vmatpush1.bf16.msra.mxu0 %v2332
    %2563 = vmatprep.subr.bf16.mxu0 %v2337
    %2564 = vmatpush1.bf16.msra.mxu0 %v2336
    %2565 = vmatprep.subr.bf16.mxu0 %v2341
    %2566 = vmatpush1.bf16.msra.mxu0 %v2340
    %2567 = vmatprep.subr.bf16.mxu0 %v2345
    %2568 = vmatpush1.bf16.msra.mxu0 %v2344
    %2569 = vmatprep.subr.bf16.mxu0 %v2349
    %2570 = vmatpush1.bf16.msra.mxu0 %v2348
    %2571 = vmatprep.subr.bf16.mxu0 %v2353
    %2572 = vmatpush1.bf16.msra.mxu0 %v2352
    %2573 = vmatprep.subr.bf16.mxu0 %v2357
    %2574 = vmatpush1.bf16.msra.mxu0 %v2356
    %2575 = vmatprep.subr.bf16.mxu0 %v2361
    %2576 = vmatpush1.bf16.msra.mxu0 %v2360
    %2577 = vmatprep.mubr.bf16.mxu0 %v609
    %2578 = vmatmul.mubr.bf16.gmra.mrb[0].mxu0 %v608
    %v2579 = vpop.f32.mrb[0].mxu0
    %v2580 = vadd.f32 %v2527, %v2579
    %v2581 = vpop.f32.mrb[0].mxu0
    %v2582 = vadd.f32 %v2529, %v2581
    %v2583 = vpop.f32.mrb[0].mxu0
    %v2584 = vadd.f32 %v2531, %v2583
    %v2585 = vpop.f32.mrb[0].mxu0
    %v2586 = vadd.f32 %v2533, %v2585
    %2587 = vmatprep.mubr.bf16.mxu0 %v613
    %2588 = vmatmul.mubr.bf16.gmra.mrb[0].mxu0 %v612
    %v2589 = vpop.f32.mrb[0].mxu0
    %v2590 = vadd.f32 %v2537, %v2589
    %v2591 = vpop.f32.mrb[0].mxu0
    %v2592 = vadd.f32 %v2539, %v2591
    %v2593 = vpop.f32.mrb[0].mxu0
    %v2594 = vadd.f32 %v2541, %v2593
    %v2595 = vpop.f32.mrb[0].mxu0
    %v2596 = vadd.f32 %v2543, %v2595
    %2597 = vdwg.mxu0
    %2598 = vmatprep.subr.bf16.mxu0 %v2239
    %2599 = vmatpush1.bf16.msra.mxu0 %v2238
    %2600 = vmatprep.subr.bf16.mxu0 %v2243
    %2601 = vmatpush1.bf16.msra.mxu0 %v2242
    %2602 = vmatprep.subr.bf16.mxu0 %v2247
    %2603 = vmatpush1.bf16.msra.mxu0 %v2246
    %2604 = vmatprep.subr.bf16.mxu0 %v2251
    %2605 = vmatpush1.bf16.msra.mxu0 %v2250
    %2606 = vmatprep.subr.bf16.mxu0 %v2255
    %2607 = vmatpush1.bf16.msra.mxu0 %v2254
    %2608 = vmatprep.subr.bf16.mxu0 %v2259
    %2609 = vmatpush1.bf16.msra.mxu0 %v2258
    %2610 = vmatprep.subr.bf16.mxu0 %v2263
    %2611 = vmatpush1.bf16.msra.mxu0 %v2262
    %2612 = vmatprep.subr.bf16.mxu0 %v2267
    %2613 = vmatpush1.bf16.msra.mxu0 %v2266
    %2614 = vmatprep.subr.bf16.mxu0 %v2271
    %2615 = vmatpush1.bf16.msra.mxu0 %v2270
    %2616 = vmatprep.subr.bf16.mxu0 %v2275
    %2617 = vmatpush1.bf16.msra.mxu0 %v2274
    %2618 = vmatprep.subr.bf16.mxu0 %v2279
    %2619 = vmatpush1.bf16.msra.mxu0 %v2278
    %2620 = vmatprep.subr.bf16.mxu0 %v2283
    %2621 = vmatpush1.bf16.msra.mxu0 %v2282
    %2622 = vmatprep.subr.bf16.mxu0 %v2287
    %2623 = vmatpush1.bf16.msra.mxu0 %v2286
    %2624 = vmatprep.subr.bf16.mxu0 %v2291
    %2625 = vmatpush1.bf16.msra.mxu0 %v2290
    %2626 = vmatprep.subr.bf16.mxu0 %v2295
    %2627 = vmatpush1.bf16.msra.mxu0 %v2294
    %2628 = vmatprep.subr.bf16.mxu0 %v2299
    %2629 = vmatpush1.bf16.msra.mxu0 %v2298
    %2630 = vmatprep.mubr.bf16.mxu0 %v607
    %2631 = vmatmul.mubr.bf16.gmra.mrb[0].mxu0 %v606
    %v2632 = vpop.f32.mrb[0].mxu0
    %v2633 = vadd.f32 0.0, %v2632
    %v2634 = vpop.f32.mrb[0].mxu0
    %v2635 = vadd.f32 0.0, %v2634
    %v2636 = vpop.f32.mrb[0].mxu0
    %v2637 = vadd.f32 0.0, %v2636
    %v2638 = vpop.f32.mrb[0].mxu0
    %v2639 = vadd.f32 0.0, %v2638
    %2640 = vmatprep.mubr.bf16.mxu0 %v611
    %2641 = vmatmul.mubr.bf16.gmra.mrb[0].mxu0 %v610
    %v2642 = vpop.f32.mrb[0].mxu0
    %v2643 = vadd.f32 0.0, %v2642
    %v2644 = vpop.f32.mrb[0].mxu0
    %v2645 = vadd.f32 0.0, %v2644
    %v2646 = vpop.f32.mrb[0].mxu0
    %v2647 = vadd.f32 0.0, %v2646
    %v2648 = vpop.f32.mrb[0].mxu0
    %v2649 = vadd.f32 0.0, %v2648
    %2650 = vdwg.mxu0
    %2651 = vmatprep.subr.bf16.mxu0 %v2303
    %2652 = vmatpush1.bf16.msra.mxu0 %v2302
    %2653 = vmatprep.subr.bf16.mxu0 %v2307
    %2654 = vmatpush1.bf16.msra.mxu0 %v2306
    %2655 = vmatprep.subr.bf16.mxu0 %v2311
    %2656 = vmatpush1.bf16.msra.mxu0 %v2310
    %2657 = vmatprep.subr.bf16.mxu0 %v2315
    %2658 = vmatpush1.bf16.msra.mxu0 %v2314
    %2659 = vmatprep.subr.bf16.mxu0 %v2319
    %2660 = vmatpush1.bf16.msra.mxu0 %v2318
    %2661 = vmatprep.subr.bf16.mxu0 %v2323
    %2662 = vmatpush1.bf16.msra.mxu0 %v2322
    %2663 = vmatprep.subr.bf16.mxu0 %v2327
    %2664 = vmatpush1.bf16.msra.mxu0 %v2326
    %2665 = vmatprep.subr.bf16.mxu0 %v2331
    %2666 = vmatpush1.bf16.msra.mxu0 %v2330
    %2667 = vmatprep.subr.bf16.mxu0 %v2335
    %2668 = vmatpush1.bf16.msra.mxu0 %v2334
    %2669 = vmatprep.subr.bf16.mxu0 %v2339
    %2670 = vmatpush1.bf16.msra.mxu0 %v2338
    %2671 = vmatprep.subr.bf16.mxu0 %v2343
    %2672 = vmatpush1.bf16.msra.mxu0 %v2342
    %2673 = vmatprep.subr.bf16.mxu0 %v2347
    %2674 = vmatpush1.bf16.msra.mxu0 %v2346
    %2675 = vmatprep.subr.bf16.mxu0 %v2351
    %2676 = vmatpush1.bf16.msra.mxu0 %v2350
    %2677 = vmatprep.subr.bf16.mxu0 %v2355
    %2678 = vmatpush1.bf16.msra.mxu0 %v2354
    %2679 = vmatprep.subr.bf16.mxu0 %v2359
    %2680 = vmatpush1.bf16.msra.mxu0 %v2358
    %2681 = vmatprep.subr.bf16.mxu0 %v2363
    %2682 = vmatpush1.bf16.msra.mxu0 %v2362
    %2683 = vmatprep.mubr.bf16.mxu0 %v609
    %2684 = vmatmul.mubr.bf16.gmra.mrb[0].mxu0 %v608
    %v2685 = vpop.f32.mrb[0].mxu0
    %v2686 = vadd.f32 %v2633, %v2685
    %v2687 = vpop.f32.mrb[0].mxu0
    %v2688 = vadd.f32 %v2635, %v2687
    %v2689 = vpop.f32.mrb[0].mxu0
    %v2690 = vadd.f32 %v2637, %v2689
    %v2691 = vpop.f32.mrb[0].mxu0
    %v2692 = vadd.f32 %v2639, %v2691
    %2693 = vmatprep.mubr.bf16.mxu0 %v613
    %2694 = vmatmul.mubr.bf16.gmra.mrb[0].mxu0 %v612
    %v2695 = vpop.f32.mrb[0].mxu0
    %v2696 = vadd.f32 %v2643, %v2695
    %v2697 = vpop.f32.mrb[0].mxu0
    %v2698 = vadd.f32 %v2645, %v2697
    %v2699 = vpop.f32.mrb[0].mxu0
    %v2700 = vadd.f32 %v2647, %v2699
    %v2701 = vpop.f32.mrb[0].mxu0
    %v2702 = vadd.f32 %v2649, %v2701
    %2703 = vdwg.mxu0
    %v2704 = vmul.f32 %v436, %v1599
    %v2705 = vmul.f32 %v437, %v1601
    %v2706 = vmul.f32 %v438, %v1705
    %v2707 = vmul.f32 %v439, %v1707
    %v2708 = vmul.f32 %v440, %v1603
    %v2709 = vmul.f32 %v441, %v1605
    %v2710 = vmul.f32 %v442, %v1709
    %v2711 = vmul.f32 %v443, %v1711
    %v2712 = vmul.f32 %v444, %v1609
    %v2713 = vmul.f32 %v445, %v1611
    %v2714 = vmul.f32 %v446, %v1715
    %v2715 = vmul.f32 %v447, %v1717
    %v2716 = vmul.f32 %v448, %v1613
    %v2717 = vmul.f32 %v449, %v1615
    %v2718 = vmul.f32 %v450, %v1719
    %v2719 = vmul.f32 %v451, %v1721
    %v2848 = vunpack.c.l.b16 %v615
    %v2849 = vunpack.c.h.b16 %v615
    %v2850 = vunpack.c.l.b16 %v616
    %v2851 = vunpack.c.h.b16 %v616
    %v2852 = vunpack.c.l.b16 %v617
    %v2853 = vunpack.c.h.b16 %v617
    %v2854 = vunpack.c.l.b16 %v618
    %v2855 = vunpack.c.h.b16 %v618
    %v2856 = vunpack.c.l.b16 %v619
    %v2857 = vunpack.c.h.b16 %v619
    %v2858 = vunpack.c.l.b16 %v620
    %v2859 = vunpack.c.h.b16 %v620
    %v2860 = vunpack.c.l.b16 %v621
    %v2861 = vunpack.c.h.b16 %v621
    %v2862 = vunpack.c.l.b16 %v622
    %v2863 = vunpack.c.h.b16 %v622
    %v2864 = vunpack.c.l.b16 %v623
    %v2865 = vunpack.c.h.b16 %v623
    %v2866 = vunpack.c.l.b16 %v624
    %v2867 = vunpack.c.h.b16 %v624
    %v2868 = vunpack.c.l.b16 %v625
    %v2869 = vunpack.c.h.b16 %v625
    %v2870 = vunpack.c.l.b16 %v626
    %v2871 = vunpack.c.h.b16 %v626
    %v2872 = vunpack.c.l.b16 %v627
    %v2873 = vunpack.c.h.b16 %v627
    %v2874 = vunpack.c.l.b16 %v628
    %v2875 = vunpack.c.h.b16 %v628
    %v2876 = vunpack.c.l.b16 %v629
    %v2877 = vunpack.c.h.b16 %v629
    %v2878 = vunpack.c.l.b16 %v630
    %v2879 = vunpack.c.h.b16 %v630
    %v2880 = vunpack.c.l.b16 %v631
    %v2881 = vunpack.c.h.b16 %v631
    %v2882 = vunpack.c.l.b16 %v632
    %v2883 = vunpack.c.h.b16 %v632
    %v2884 = vunpack.c.l.b16 %v633
    %v2885 = vunpack.c.h.b16 %v633
    %v2886 = vunpack.c.l.b16 %v634
    %v2887 = vunpack.c.h.b16 %v634
    %v2888 = vunpack.c.l.b16 %v635
    %v2889 = vunpack.c.h.b16 %v635
    %v2890 = vunpack.c.l.b16 %v636
    %v2891 = vunpack.c.h.b16 %v636
    %v2892 = vunpack.c.l.b16 %v637
    %v2893 = vunpack.c.h.b16 %v637
    %v2894 = vunpack.c.l.b16 %v638
    %v2895 = vunpack.c.h.b16 %v638
    %v2896 = vunpack.c.l.b16 %v639
    %v2897 = vunpack.c.h.b16 %v639
    %v2898 = vunpack.c.l.b16 %v640
    %v2899 = vunpack.c.h.b16 %v640
    %v2900 = vunpack.c.l.b16 %v641
    %v2901 = vunpack.c.h.b16 %v641
    %v2902 = vunpack.c.l.b16 %v642
    %v2903 = vunpack.c.h.b16 %v642
    %v2904 = vunpack.c.l.b16 %v643
    %v2905 = vunpack.c.h.b16 %v643
    %v2906 = vunpack.c.l.b16 %v644
    %v2907 = vunpack.c.h.b16 %v644
    %v2908 = vunpack.c.l.b16 %v645
    %v2909 = vunpack.c.h.b16 %v645
    %v2910 = vunpack.c.l.b16 %v646
    %v2911 = vunpack.c.h.b16 %v646
    %v2912 = vunpack.c.l.b16 %v647
    %v2913 = vunpack.c.h.b16 %v647
    %v2914 = vunpack.c.l.b16 %v648
    %v2915 = vunpack.c.h.b16 %v648
    %v2916 = vunpack.c.l.b16 %v649
    %v2917 = vunpack.c.h.b16 %v649
    %v2918 = vunpack.c.l.b16 %v650
    %v2919 = vunpack.c.h.b16 %v650
    %v2920 = vunpack.c.l.b16 %v651
    %v2921 = vunpack.c.h.b16 %v651
    %v2922 = vunpack.c.l.b16 %v652
    %v2923 = vunpack.c.h.b16 %v652
    %v2924 = vunpack.c.l.b16 %v653
    %v2925 = vunpack.c.h.b16 %v653
    %v2926 = vunpack.c.l.b16 %v654
    %v2927 = vunpack.c.h.b16 %v654
    %v2928 = vunpack.c.l.b16 %v655
    %v2929 = vunpack.c.h.b16 %v655
    %v2930 = vunpack.c.l.b16 %v656
    %v2931 = vunpack.c.h.b16 %v656
    %v2932 = vunpack.c.l.b16 %v657
    %v2933 = vunpack.c.h.b16 %v657
    %v2934 = vunpack.c.l.b16 %v658
    %v2935 = vunpack.c.h.b16 %v658
    %v2936 = vunpack.c.l.b16 %v659
    %v2937 = vunpack.c.h.b16 %v659
    %v2938 = vunpack.c.l.b16 %v660
    %v2939 = vunpack.c.h.b16 %v660
    %v2940 = vunpack.c.l.b16 %v661
    %v2941 = vunpack.c.h.b16 %v661
    %v2942 = vunpack.c.l.b16 %v662
    %v2943 = vunpack.c.h.b16 %v662
    %v2944 = vunpack.c.l.b16 %v663
    %v2945 = vunpack.c.h.b16 %v663
    %v2946 = vunpack.c.l.b16 %v664
    %v2947 = vunpack.c.h.b16 %v664
    %v2948 = vunpack.c.l.b16 %v665
    %v2949 = vunpack.c.h.b16 %v665
    %v2950 = vunpack.c.l.b16 %v666
    %v2951 = vunpack.c.h.b16 %v666
    %v2952 = vunpack.c.l.b16 %v667
    %v2953 = vunpack.c.h.b16 %v667
    %v2954 = vunpack.c.l.b16 %v668
    %v2955 = vunpack.c.h.b16 %v668
    %v2956 = vunpack.c.l.b16 %v669
    %v2957 = vunpack.c.h.b16 %v669
    %v2958 = vunpack.c.l.b16 %v670
    %v2959 = vunpack.c.h.b16 %v670
    %v2960 = vunpack.c.l.b16 %v671
    %v2961 = vunpack.c.h.b16 %v671
    %v2962 = vunpack.c.l.b16 %v672
    %v2963 = vunpack.c.h.b16 %v672
    %v2964 = vunpack.c.l.b16 %v673
    %v2965 = vunpack.c.h.b16 %v673
    %v2966 = vunpack.c.l.b16 %v674
    %v2967 = vunpack.c.h.b16 %v674
    %v2968 = vunpack.c.l.b16 %v675
    %v2969 = vunpack.c.h.b16 %v675
    %v2970 = vunpack.c.l.b16 %v676
    %v2971 = vunpack.c.h.b16 %v676
    %v2972 = vunpack.c.l.b16 %v677
    %v2973 = vunpack.c.h.b16 %v677
    %v2974 = vunpack.c.l.b16 %v678
    %v2975 = vunpack.c.h.b16 %v678
    %v2976 = vunpack.c.l.b16 %v679
    %v2977 = vunpack.c.h.b16 %v679
    %v2978 = vunpack.c.l.b16 %v680
    %v2979 = vunpack.c.h.b16 %v680
    %v2980 = vunpack.c.l.b16 %v681
    %v2981 = vunpack.c.h.b16 %v681
    %v2982 = vunpack.c.l.b16 %v682
    %v2983 = vunpack.c.h.b16 %v682
    %v2984 = vunpack.c.l.b16 %v683
    %v2985 = vunpack.c.h.b16 %v683
    %v2986 = vunpack.c.l.b16 %v684
    %v2987 = vunpack.c.h.b16 %v684
    %v2988 = vunpack.c.l.b16 %v685
    %v2989 = vunpack.c.h.b16 %v685
    %v2990 = vunpack.c.l.b16 %v686
    %v2991 = vunpack.c.h.b16 %v686
    %v2992 = vunpack.c.l.b16 %v687
    %v2993 = vunpack.c.h.b16 %v687
    %v2994 = vunpack.c.l.b16 %v688
    %v2995 = vunpack.c.h.b16 %v688
    %v2996 = vunpack.c.l.b16 %v689
    %v2997 = vunpack.c.h.b16 %v689
    %v2998 = vunpack.c.l.b16 %v690
    %v2999 = vunpack.c.h.b16 %v690
    %v3000 = vunpack.c.l.b16 %v691
    %v3001 = vunpack.c.h.b16 %v691
    %v3002 = vunpack.c.l.b16 %v692
    %v3003 = vunpack.c.h.b16 %v692
    %v3004 = vunpack.c.l.b16 %v693
    %v3005 = vunpack.c.h.b16 %v693
    %v3006 = vunpack.c.l.b16 %v694
    %v3007 = vunpack.c.h.b16 %v694
    %v3008 = vunpack.c.l.b16 %v695
    %v3009 = vunpack.c.h.b16 %v695
    %v3010 = vunpack.c.l.b16 %v696
    %v3011 = vunpack.c.h.b16 %v696
    %v3012 = vunpack.c.l.b16 %v697
    %v3013 = vunpack.c.h.b16 %v697
    %v3014 = vunpack.c.l.b16 %v698
    %v3015 = vunpack.c.h.b16 %v698
    %v3016 = vunpack.c.l.b16 %v699
    %v3017 = vunpack.c.h.b16 %v699
    %v3018 = vunpack.c.l.b16 %v700
    %v3019 = vunpack.c.h.b16 %v700
    %v3020 = vunpack.c.l.b16 %v701
    %v3021 = vunpack.c.h.b16 %v701
    %v3022 = vunpack.c.l.b16 %v702
    %v3023 = vunpack.c.h.b16 %v702
    %v3024 = vunpack.c.l.b16 %v703
    %v3025 = vunpack.c.h.b16 %v703
    %v3026 = vunpack.c.l.b16 %v704
    %v3027 = vunpack.c.h.b16 %v704
    %v3028 = vunpack.c.l.b16 %v705
    %v3029 = vunpack.c.h.b16 %v705
    %v3030 = vunpack.c.l.b16 %v706
    %v3031 = vunpack.c.h.b16 %v706
    %v3032 = vunpack.c.l.b16 %v707
    %v3033 = vunpack.c.h.b16 %v707
    %v3034 = vunpack.c.l.b16 %v708
    %v3035 = vunpack.c.h.b16 %v708
    %v3036 = vunpack.c.l.b16 %v709
    %v3037 = vunpack.c.h.b16 %v709
    %v3038 = vunpack.c.l.b16 %v710
    %v3039 = vunpack.c.h.b16 %v710
    %v3040 = vunpack.c.l.b16 %v711
    %v3041 = vunpack.c.h.b16 %v711
    %v3042 = vunpack.c.l.b16 %v712
    %v3043 = vunpack.c.h.b16 %v712
    %v3044 = vunpack.c.l.b16 %v713
    %v3045 = vunpack.c.h.b16 %v713
    %v3046 = vunpack.c.l.b16 %v714
    %v3047 = vunpack.c.h.b16 %v714
    %v3048 = vunpack.c.l.b16 %v715
    %v3049 = vunpack.c.h.b16 %v715
    %v3050 = vunpack.c.l.b16 %v716
    %v3051 = vunpack.c.h.b16 %v716
    %v3052 = vunpack.c.l.b16 %v717
    %v3053 = vunpack.c.h.b16 %v717
    %v3054 = vunpack.c.l.b16 %v718
    %v3055 = vunpack.c.h.b16 %v718
    %v3056 = vunpack.c.l.b16 %v719
    %v3057 = vunpack.c.h.b16 %v719
    %v3058 = vunpack.c.l.b16 %v720
    %v3059 = vunpack.c.h.b16 %v720
    %v3060 = vunpack.c.l.b16 %v721
    %v3061 = vunpack.c.h.b16 %v721
    %v3062 = vunpack.c.l.b16 %v722
    %v3063 = vunpack.c.h.b16 %v722
    %v3064 = vunpack.c.l.b16 %v723
    %v3065 = vunpack.c.h.b16 %v723
    %v3066 = vunpack.c.l.b16 %v724
    %v3067 = vunpack.c.h.b16 %v724
    %v3068 = vunpack.c.l.b16 %v725
    %v3069 = vunpack.c.h.b16 %v725
    %v3070 = vunpack.c.l.b16 %v726
    %v3071 = vunpack.c.h.b16 %v726
    %v3072 = vunpack.c.l.b16 %v727
    %v3073 = vunpack.c.h.b16 %v727
    %v3074 = vunpack.c.l.b16 %v728
    %v3075 = vunpack.c.h.b16 %v728
    %v3076 = vunpack.c.l.b16 %v729
    %v3077 = vunpack.c.h.b16 %v729
    %v3078 = vunpack.c.l.b16 %v730
    %v3079 = vunpack.c.h.b16 %v730
    %v3080 = vunpack.c.l.b16 %v731
    %v3081 = vunpack.c.h.b16 %v731
    %v3082 = vunpack.c.l.b16 %v732
    %v3083 = vunpack.c.h.b16 %v732
    %v3084 = vunpack.c.l.b16 %v733
    %v3085 = vunpack.c.h.b16 %v733
    %v3086 = vunpack.c.l.b16 %v734
    %v3087 = vunpack.c.h.b16 %v734
    %v3088 = vunpack.c.l.b16 %v735
    %v3089 = vunpack.c.h.b16 %v735
    %v3090 = vunpack.c.l.b16 %v736
    %v3091 = vunpack.c.h.b16 %v736
    %v3092 = vunpack.c.l.b16 %v737
    %v3093 = vunpack.c.h.b16 %v737
    %v3094 = vunpack.c.l.b16 %v738
    %v3095 = vunpack.c.h.b16 %v738
    %v3096 = vunpack.c.l.b16 %v739
    %v3097 = vunpack.c.h.b16 %v739
    %v3098 = vunpack.c.l.b16 %v740
    %v3099 = vunpack.c.h.b16 %v740
    %v3100 = vunpack.c.l.b16 %v741
    %v3101 = vunpack.c.h.b16 %v741
    %v3102 = vunpack.c.l.b16 %v742
    %v3103 = vunpack.c.h.b16 %v742
    %v3104 = vpack.c.b16 %v2852, %v2848
    %v3105 = vpack.c.b16 %v2853, %v2849
    %v3106 = vpack.c.b16 %v2854, %v2850
    %v3107 = vpack.c.b16 %v2855, %v2851
    %v3108 = vpack.c.b16 %v2860, %v2856
    %v3109 = vpack.c.b16 %v2861, %v2857
    %v3110 = vpack.c.b16 %v2862, %v2858
    %v3111 = vpack.c.b16 %v2863, %v2859
    %v3112 = vpack.c.b16 %v2868, %v2864
    %v3113 = vpack.c.b16 %v2869, %v2865
    %v3114 = vpack.c.b16 %v2870, %v2866
    %v3115 = vpack.c.b16 %v2871, %v2867
    %v3116 = vpack.c.b16 %v2876, %v2872
    %v3117 = vpack.c.b16 %v2877, %v2873
    %v3118 = vpack.c.b16 %v2878, %v2874
    %v3119 = vpack.c.b16 %v2879, %v2875
    %v3120 = vpack.c.b16 %v2884, %v2880
    %v3121 = vpack.c.b16 %v2885, %v2881
    %v3122 = vpack.c.b16 %v2886, %v2882
    %v3123 = vpack.c.b16 %v2887, %v2883
    %v3124 = vpack.c.b16 %v2892, %v2888
    %v3125 = vpack.c.b16 %v2893, %v2889
    %v3126 = vpack.c.b16 %v2894, %v2890
    %v3127 = vpack.c.b16 %v2895, %v2891
    %v3128 = vpack.c.b16 %v2900, %v2896
    %v3129 = vpack.c.b16 %v2901, %v2897
    %v3130 = vpack.c.b16 %v2902, %v2898
    %v3131 = vpack.c.b16 %v2903, %v2899
    %v3132 = vpack.c.b16 %v2908, %v2904
    %v3133 = vpack.c.b16 %v2909, %v2905
    %v3134 = vpack.c.b16 %v2910, %v2906
    %v3135 = vpack.c.b16 %v2911, %v2907
    %v3136 = vpack.c.b16 %v2916, %v2912
    %v3137 = vpack.c.b16 %v2917, %v2913
    %v3138 = vpack.c.b16 %v2918, %v2914
    %v3139 = vpack.c.b16 %v2919, %v2915
    %v3140 = vpack.c.b16 %v2924, %v2920
    %v3141 = vpack.c.b16 %v2925, %v2921
    %v3142 = vpack.c.b16 %v2926, %v2922
    %v3143 = vpack.c.b16 %v2927, %v2923
    %v3144 = vpack.c.b16 %v2932, %v2928
    %v3145 = vpack.c.b16 %v2933, %v2929
    %v3146 = vpack.c.b16 %v2934, %v2930
    %v3147 = vpack.c.b16 %v2935, %v2931
    %v3148 = vpack.c.b16 %v2940, %v2936
    %v3149 = vpack.c.b16 %v2941, %v2937
    %v3150 = vpack.c.b16 %v2942, %v2938
    %v3151 = vpack.c.b16 %v2943, %v2939
    %v3152 = vpack.c.b16 %v2948, %v2944
    %v3153 = vpack.c.b16 %v2949, %v2945
    %v3154 = vpack.c.b16 %v2950, %v2946
    %v3155 = vpack.c.b16 %v2951, %v2947
    %v3156 = vpack.c.b16 %v2956, %v2952
    %v3157 = vpack.c.b16 %v2957, %v2953
    %v3158 = vpack.c.b16 %v2958, %v2954
    %v3159 = vpack.c.b16 %v2959, %v2955
    %v3160 = vpack.c.b16 %v2964, %v2960
    %v3161 = vpack.c.b16 %v2965, %v2961
    %v3162 = vpack.c.b16 %v2966, %v2962
    %v3163 = vpack.c.b16 %v2967, %v2963
    %v3164 = vpack.c.b16 %v2972, %v2968
    %v3165 = vpack.c.b16 %v2973, %v2969
    %v3166 = vpack.c.b16 %v2974, %v2970
    %v3167 = vpack.c.b16 %v2975, %v2971
    %v3168 = vpack.c.b16 %v2980, %v2976
    %v3169 = vpack.c.b16 %v2981, %v2977
    %v3170 = vpack.c.b16 %v2982, %v2978
    %v3171 = vpack.c.b16 %v2983, %v2979
    %v3172 = vpack.c.b16 %v2988, %v2984
    %v3173 = vpack.c.b16 %v2989, %v2985
    %v3174 = vpack.c.b16 %v2990, %v2986
    %v3175 = vpack.c.b16 %v2991, %v2987
    %v3176 = vpack.c.b16 %v2996, %v2992
    %v3177 = vpack.c.b16 %v2997, %v2993
    %v3178 = vpack.c.b16 %v2998, %v2994
    %v3179 = vpack.c.b16 %v2999, %v2995
    %v3180 = vpack.c.b16 %v3004, %v3000
    %v3181 = vpack.c.b16 %v3005, %v3001
    %v3182 = vpack.c.b16 %v3006, %v3002
    %v3183 = vpack.c.b16 %v3007, %v3003
    %v3184 = vpack.c.b16 %v3012, %v3008
    %v3185 = vpack.c.b16 %v3013, %v3009
    %v3186 = vpack.c.b16 %v3014, %v3010
    %v3187 = vpack.c.b16 %v3015, %v3011
    %v3188 = vpack.c.b16 %v3020, %v3016
    %v3189 = vpack.c.b16 %v3021, %v3017
    %v3190 = vpack.c.b16 %v3022, %v3018
    %v3191 = vpack.c.b16 %v3023, %v3019
    %v3192 = vpack.c.b16 %v3028, %v3024
    %v3193 = vpack.c.b16 %v3029, %v3025
    %v3194 = vpack.c.b16 %v3030, %v3026
    %v3195 = vpack.c.b16 %v3031, %v3027
    %v3196 = vpack.c.b16 %v3036, %v3032
    %v3197 = vpack.c.b16 %v3037, %v3033
    %v3198 = vpack.c.b16 %v3038, %v3034
    %v3199 = vpack.c.b16 %v3039, %v3035
    %v3200 = vpack.c.b16 %v3044, %v3040
    %v3201 = vpack.c.b16 %v3045, %v3041
    %v3202 = vpack.c.b16 %v3046, %v3042
    %v3203 = vpack.c.b16 %v3047, %v3043
    %v3204 = vpack.c.b16 %v3052, %v3048
    %v3205 = vpack.c.b16 %v3053, %v3049
    %v3206 = vpack.c.b16 %v3054, %v3050
    %v3207 = vpack.c.b16 %v3055, %v3051
    %v3208 = vpack.c.b16 %v3060, %v3056
    %v3209 = vpack.c.b16 %v3061, %v3057
    %v3210 = vpack.c.b16 %v3062, %v3058
    %v3211 = vpack.c.b16 %v3063, %v3059
    %v3212 = vpack.c.b16 %v3068, %v3064
    %v3213 = vpack.c.b16 %v3069, %v3065
    %v3214 = vpack.c.b16 %v3070, %v3066
    %v3215 = vpack.c.b16 %v3071, %v3067
    %v3216 = vpack.c.b16 %v3076, %v3072
    %v3217 = vpack.c.b16 %v3077, %v3073
    %v3218 = vpack.c.b16 %v3078, %v3074
    %v3219 = vpack.c.b16 %v3079, %v3075
    %v3220 = vpack.c.b16 %v3084, %v3080
    %v3221 = vpack.c.b16 %v3085, %v3081
    %v3222 = vpack.c.b16 %v3086, %v3082
    %v3223 = vpack.c.b16 %v3087, %v3083
    %v3224 = vpack.c.b16 %v3092, %v3088
    %v3225 = vpack.c.b16 %v3093, %v3089
    %v3226 = vpack.c.b16 %v3094, %v3090
    %v3227 = vpack.c.b16 %v3095, %v3091
    %v3228 = vpack.c.b16 %v3100, %v3096
    %v3229 = vpack.c.b16 %v3101, %v3097
    %v3230 = vpack.c.b16 %v3102, %v3098
    %v3231 = vpack.c.b16 %v3103, %v3099
    %3360 = vmatprep.subr.bf16.mxu0 %v3105
    %3361 = vmatpush1.bf16.msra.mxu0 %v3104
    %3362 = vmatprep.subr.bf16.mxu0 %v3109
    %3363 = vmatpush1.bf16.msra.mxu0 %v3108
    %3364 = vmatprep.subr.bf16.mxu0 %v3113
    %3365 = vmatpush1.bf16.msra.mxu0 %v3112
    %3366 = vmatprep.subr.bf16.mxu0 %v3117
    %3367 = vmatpush1.bf16.msra.mxu0 %v3116
    %3368 = vmatprep.subr.bf16.mxu0 %v3121
    %3369 = vmatpush1.bf16.msra.mxu0 %v3120
    %3370 = vmatprep.subr.bf16.mxu0 %v3125
    %3371 = vmatpush1.bf16.msra.mxu0 %v3124
    %3372 = vmatprep.subr.bf16.mxu0 %v3129
    %3373 = vmatpush1.bf16.msra.mxu0 %v3128
    %3374 = vmatprep.subr.bf16.mxu0 %v3133
    %3375 = vmatpush1.bf16.msra.mxu0 %v3132
    %3376 = vmatprep.subr.bf16.mxu0 %v3137
    %3377 = vmatpush1.bf16.msra.mxu0 %v3136
    %3378 = vmatprep.subr.bf16.mxu0 %v3141
    %3379 = vmatpush1.bf16.msra.mxu0 %v3140
    %3380 = vmatprep.subr.bf16.mxu0 %v3145
    %3381 = vmatpush1.bf16.msra.mxu0 %v3144
    %3382 = vmatprep.subr.bf16.mxu0 %v3149
    %3383 = vmatpush1.bf16.msra.mxu0 %v3148
    %3384 = vmatprep.subr.bf16.mxu0 %v3153
    %3385 = vmatpush1.bf16.msra.mxu0 %v3152
    %3386 = vmatprep.subr.bf16.mxu0 %v3157
    %3387 = vmatpush1.bf16.msra.mxu0 %v3156
    %3388 = vmatprep.subr.bf16.mxu0 %v3161
    %3389 = vmatpush1.bf16.msra.mxu0 %v3160
    %3390 = vmatprep.subr.bf16.mxu0 %v3165
    %3391 = vmatpush1.bf16.msra.mxu0 %v3164
    %3392 = vmatprep.mubr.bf16.mxu0 %v469
    %3393 = vmatmul.mubr.bf16.gmra.mrb[0].mxu0 %v468
    %v3394 = vpop.f32.mrb[0].mxu0
    %v3395 = vadd.f32 %v2704, %v3394
    %v3396 = vpop.f32.mrb[0].mxu0
    %v3397 = vadd.f32 %v2705, %v3396
    %v3398 = vpop.f32.mrb[0].mxu0
    %v3399 = vadd.f32 %v2708, %v3398
    %v3400 = vpop.f32.mrb[0].mxu0
    %v3401 = vadd.f32 %v2709, %v3400
    %3402 = vmatprep.mubr.bf16.mxu0 %v473
    %3403 = vmatmul.mubr.bf16.gmra.mrb[0].mxu0 %v472
    %v3404 = vpop.f32.mrb[0].mxu0
    %v3405 = vadd.f32 %v2712, %v3404
    %v3406 = vpop.f32.mrb[0].mxu0
    %v3407 = vadd.f32 %v2713, %v3406
    %v3408 = vpop.f32.mrb[0].mxu0
    %v3409 = vadd.f32 %v2716, %v3408
    %v3410 = vpop.f32.mrb[0].mxu0
    %v3411 = vadd.f32 %v2717, %v3410
    %3412 = vdwg.mxu0
    %3413 = vmatprep.subr.bf16.mxu0 %v3169
    %3414 = vmatpush1.bf16.msra.mxu0 %v3168
    %3415 = vmatprep.subr.bf16.mxu0 %v3173
    %3416 = vmatpush1.bf16.msra.mxu0 %v3172
    %3417 = vmatprep.subr.bf16.mxu0 %v3177
    %3418 = vmatpush1.bf16.msra.mxu0 %v3176
    %3419 = vmatprep.subr.bf16.mxu0 %v3181
    %3420 = vmatpush1.bf16.msra.mxu0 %v3180
    %3421 = vmatprep.subr.bf16.mxu0 %v3185
    %3422 = vmatpush1.bf16.msra.mxu0 %v3184
    %3423 = vmatprep.subr.bf16.mxu0 %v3189
    %3424 = vmatpush1.bf16.msra.mxu0 %v3188
    %3425 = vmatprep.subr.bf16.mxu0 %v3193
    %3426 = vmatpush1.bf16.msra.mxu0 %v3192
    %3427 = vmatprep.subr.bf16.mxu0 %v3197
    %3428 = vmatpush1.bf16.msra.mxu0 %v3196
    %3429 = vmatprep.subr.bf16.mxu0 %v3201
    %3430 = vmatpush1.bf16.msra.mxu0 %v3200
    %3431 = vmatprep.subr.bf16.mxu0 %v3205
    %3432 = vmatpush1.bf16.msra.mxu0 %v3204
    %3433 = vmatprep.subr.bf16.mxu0 %v3209
    %3434 = vmatpush1.bf16.msra.mxu0 %v3208
    %3435 = vmatprep.subr.bf16.mxu0 %v3213
    %3436 = vmatpush1.bf16.msra.mxu0 %v3212
    %3437 = vmatprep.subr.bf16.mxu0 %v3217
    %3438 = vmatpush1.bf16.msra.mxu0 %v3216
    %3439 = vmatprep.subr.bf16.mxu0 %v3221
    %3440 = vmatpush1.bf16.msra.mxu0 %v3220
    %3441 = vmatprep.subr.bf16.mxu0 %v3225
    %3442 = vmatpush1.bf16.msra.mxu0 %v3224
    %3443 = vmatprep.subr.bf16.mxu0 %v3229
    %3444 = vmatpush1.bf16.msra.mxu0 %v3228
    %3445 = vmatprep.mubr.bf16.mxu0 %v471
    %3446 = vmatmul.mubr.bf16.gmra.mrb[0].mxu0 %v470
    %v3447 = vpop.f32.mrb[0].mxu0
    %v3448 = vadd.f32 %v3395, %v3447
    %v3449 = vpop.f32.mrb[0].mxu0
    %v3450 = vadd.f32 %v3397, %v3449
    %v3451 = vpop.f32.mrb[0].mxu0
    %v3452 = vadd.f32 %v3399, %v3451
    %v3453 = vpop.f32.mrb[0].mxu0
    %v3454 = vadd.f32 %v3401, %v3453
    %3455 = vmatprep.mubr.bf16.mxu0 %v475
    %3456 = vmatmul.mubr.bf16.gmra.mrb[0].mxu0 %v474
    %v3457 = vpop.f32.mrb[0].mxu0
    %v3458 = vadd.f32 %v3405, %v3457
    %v3459 = vpop.f32.mrb[0].mxu0
    %v3460 = vadd.f32 %v3407, %v3459
    %v3461 = vpop.f32.mrb[0].mxu0
    %v3462 = vadd.f32 %v3409, %v3461
    %v3463 = vpop.f32.mrb[0].mxu0
    %v3464 = vadd.f32 %v3411, %v3463
    %3465 = vdwg.mxu0
    %3466 = vmatprep.subr.bf16.mxu0 %v3107
    %3467 = vmatpush1.bf16.msra.mxu0 %v3106
    %3468 = vmatprep.subr.bf16.mxu0 %v3111
    %3469 = vmatpush1.bf16.msra.mxu0 %v3110
    %3470 = vmatprep.subr.bf16.mxu0 %v3115
    %3471 = vmatpush1.bf16.msra.mxu0 %v3114
    %3472 = vmatprep.subr.bf16.mxu0 %v3119
    %3473 = vmatpush1.bf16.msra.mxu0 %v3118
    %3474 = vmatprep.subr.bf16.mxu0 %v3123
    %3475 = vmatpush1.bf16.msra.mxu0 %v3122
    %3476 = vmatprep.subr.bf16.mxu0 %v3127
    %3477 = vmatpush1.bf16.msra.mxu0 %v3126
    %3478 = vmatprep.subr.bf16.mxu0 %v3131
    %3479 = vmatpush1.bf16.msra.mxu0 %v3130
    %3480 = vmatprep.subr.bf16.mxu0 %v3135
    %3481 = vmatpush1.bf16.msra.mxu0 %v3134
    %3482 = vmatprep.subr.bf16.mxu0 %v3139
    %3483 = vmatpush1.bf16.msra.mxu0 %v3138
    %3484 = vmatprep.subr.bf16.mxu0 %v3143
    %3485 = vmatpush1.bf16.msra.mxu0 %v3142
    %3486 = vmatprep.subr.bf16.mxu0 %v3147
    %3487 = vmatpush1.bf16.msra.mxu0 %v3146
    %3488 = vmatprep.subr.bf16.mxu0 %v3151
    %3489 = vmatpush1.bf16.msra.mxu0 %v3150
    %3490 = vmatprep.subr.bf16.mxu0 %v3155
    %3491 = vmatpush1.bf16.msra.mxu0 %v3154
    %3492 = vmatprep.subr.bf16.mxu0 %v3159
    %3493 = vmatpush1.bf16.msra.mxu0 %v3158
    %3494 = vmatprep.subr.bf16.mxu0 %v3163
    %3495 = vmatpush1.bf16.msra.mxu0 %v3162
    %3496 = vmatprep.subr.bf16.mxu0 %v3167
    %3497 = vmatpush1.bf16.msra.mxu0 %v3166
    %3498 = vmatprep.mubr.bf16.mxu0 %v469
    %3499 = vmatmul.mubr.bf16.gmra.mrb[0].mxu0 %v468
    %v3500 = vpop.f32.mrb[0].mxu0
    %v3501 = vadd.f32 %v2706, %v3500
    %v3502 = vpop.f32.mrb[0].mxu0
    %v3503 = vadd.f32 %v2707, %v3502
    %v3504 = vpop.f32.mrb[0].mxu0
    %v3505 = vadd.f32 %v2710, %v3504
    %v3506 = vpop.f32.mrb[0].mxu0
    %v3507 = vadd.f32 %v2711, %v3506
    %3508 = vmatprep.mubr.bf16.mxu0 %v473
    %3509 = vmatmul.mubr.bf16.gmra.mrb[0].mxu0 %v472
    %v3510 = vpop.f32.mrb[0].mxu0
    %v3511 = vadd.f32 %v2714, %v3510
    %v3512 = vpop.f32.mrb[0].mxu0
    %v3513 = vadd.f32 %v2715, %v3512
    %v3514 = vpop.f32.mrb[0].mxu0
    %v3515 = vadd.f32 %v2718, %v3514
    %v3516 = vpop.f32.mrb[0].mxu0
    %v3517 = vadd.f32 %v2719, %v3516
    %3518 = vdwg.mxu0
    %3519 = vmatprep.subr.bf16.mxu0 %v3171
    %3520 = vmatpush1.bf16.msra.mxu0 %v3170
    %3521 = vmatprep.subr.bf16.mxu0 %v3175
    %3522 = vmatpush1.bf16.msra.mxu0 %v3174
    %3523 = vmatprep.subr.bf16.mxu0 %v3179
    %3524 = vmatpush1.bf16.msra.mxu0 %v3178
    %3525 = vmatprep.subr.bf16.mxu0 %v3183
    %3526 = vmatpush1.bf16.msra.mxu0 %v3182
    %3527 = vmatprep.subr.bf16.mxu0 %v3187
    %3528 = vmatpush1.bf16.msra.mxu0 %v3186
    %3529 = vmatprep.subr.bf16.mxu0 %v3191
    %3530 = vmatpush1.bf16.msra.mxu0 %v3190
    %3531 = vmatprep.subr.bf16.mxu0 %v3195
    %3532 = vmatpush1.bf16.msra.mxu0 %v3194
    %3533 = vmatprep.subr.bf16.mxu0 %v3199
    %3534 = vmatpush1.bf16.msra.mxu0 %v3198
    %3535 = vmatprep.subr.bf16.mxu0 %v3203
    %3536 = vmatpush1.bf16.msra.mxu0 %v3202
    %3537 = vmatprep.subr.bf16.mxu0 %v3207
    %3538 = vmatpush1.bf16.msra.mxu0 %v3206
    %3539 = vmatprep.subr.bf16.mxu0 %v3211
    %3540 = vmatpush1.bf16.msra.mxu0 %v3210
    %3541 = vmatprep.subr.bf16.mxu0 %v3215
    %3542 = vmatpush1.bf16.msra.mxu0 %v3214
    %3543 = vmatprep.subr.bf16.mxu0 %v3219
    %3544 = vmatpush1.bf16.msra.mxu0 %v3218
    %3545 = vmatprep.subr.bf16.mxu0 %v3223
    %3546 = vmatpush1.bf16.msra.mxu0 %v3222
    %3547 = vmatprep.subr.bf16.mxu0 %v3227
    %3548 = vmatpush1.bf16.msra.mxu0 %v3226
    %3549 = vmatprep.subr.bf16.mxu0 %v3231
    %3550 = vmatpush1.bf16.msra.mxu0 %v3230
    %3551 = vmatprep.mubr.bf16.mxu0 %v471
    %3552 = vmatmul.mubr.bf16.gmra.mrb[0].mxu0 %v470
    %v3553 = vpop.f32.mrb[0].mxu0
    %v3554 = vadd.f32 %v3501, %v3553
    %v3555 = vpop.f32.mrb[0].mxu0
    %v3556 = vadd.f32 %v3503, %v3555
    %v3557 = vpop.f32.mrb[0].mxu0
    %v3558 = vadd.f32 %v3505, %v3557
    %v3559 = vpop.f32.mrb[0].mxu0
    %v3560 = vadd.f32 %v3507, %v3559
    %3561 = vmatprep.mubr.bf16.mxu0 %v475
    %3562 = vmatmul.mubr.bf16.gmra.mrb[0].mxu0 %v474
    %v3563 = vpop.f32.mrb[0].mxu0
    %v3564 = vadd.f32 %v3511, %v3563
    %v3565 = vpop.f32.mrb[0].mxu0
    %v3566 = vadd.f32 %v3513, %v3565
    %v3567 = vpop.f32.mrb[0].mxu0
    %v3568 = vadd.f32 %v3515, %v3567
    %v3569 = vpop.f32.mrb[0].mxu0
    %v3570 = vadd.f32 %v3517, %v3569
    %3571 = vdwg.mxu0
    %v3572 = vmul.f32 %v452, %v2580
    %v3573 = vmul.f32 %v453, %v2582
    %v3574 = vmul.f32 %v454, %v2686
    %v3575 = vmul.f32 %v455, %v2688
    %v3576 = vmul.f32 %v456, %v2584
    %v3577 = vmul.f32 %v457, %v2586
    %v3578 = vmul.f32 %v458, %v2690
    %v3579 = vmul.f32 %v459, %v2692
    %v3580 = vmul.f32 %v460, %v2590
    %v3581 = vmul.f32 %v461, %v2592
    %v3582 = vmul.f32 %v462, %v2696
    %v3583 = vmul.f32 %v463, %v2698
    %v3584 = vmul.f32 %v464, %v2594
    %v3585 = vmul.f32 %v465, %v2596
    %v3586 = vmul.f32 %v466, %v2700
    %v3587 = vmul.f32 %v467, %v2702
    %v3588 = vadd.f32 %v3448, %v3572
    %v3589 = vadd.f32 %v3450, %v3573
    %v3590 = vadd.f32 %v3554, %v3574
    %v3591 = vadd.f32 %v3556, %v3575
    %v3592 = vadd.f32 %v3452, %v3576
    %v3593 = vadd.f32 %v3454, %v3577
    %v3594 = vadd.f32 %v3558, %v3578
    %v3595 = vadd.f32 %v3560, %v3579
    %v3596 = vadd.f32 %v3458, %v3580
    %v3597 = vadd.f32 %v3460, %v3581
    %v3598 = vadd.f32 %v3564, %v3582
    %v3599 = vadd.f32 %v3566, %v3583
    %v3600 = vadd.f32 %v3462, %v3584
    %v3601 = vadd.f32 %v3464, %v3585
    %v3602 = vadd.f32 %v3568, %v3586
    %v3603 = vadd.f32 %v3570, %v3587
    %v3604 = vld [vmem:[#allocation13] sm:$0xf]
    %v3605 = vld [vmem:[#allocation14] sm:$0xf]
    %3606 = vmatprep.subr.mxu0 %v181
    %3607 = vmatpush1.msra.mxu0 %v180
    %3608 = vmatprep.subr.mxu0 %v185
    %3609 = vmatpush1.msra.mxu0 %v184
    %3610 = vmatprep.subr.mxu0 %v189
    %3611 = vmatpush1.msra.mxu0 %v188
    %3612 = vmatprep.subr.mxu0 %v193
    %3613 = vmatpush1.msra.mxu0 %v192
    %3614 = vmatprep.subr.mxu0 %v197
    %3615 = vmatpush1.msra.mxu0 %v196
    %3616 = vmatprep.subr.mxu0 %v201
    %3617 = vmatpush1.msra.mxu0 %v200
    %3618 = vmatprep.subr.mxu0 %v205
    %3619 = vmatpush1.msra.mxu0 %v204
    %3620 = vmatprep.subr.mxu0 %v209
    %3621 = vmatpush1.msra.mxu0 %v208
    %3622 = vmatprep.subr.mxu0 %v213
    %3623 = vmatpush1.msra.mxu0 %v212
    %3624 = vmatprep.subr.mxu0 %v217
    %3625 = vmatpush1.msra.mxu0 %v216
    %3626 = vmatprep.subr.mxu0 %v221
    %3627 = vmatpush1.msra.mxu0 %v220
    %3628 = vmatprep.subr.mxu0 %v225
    %3629 = vmatpush1.msra.mxu0 %v224
    %3630 = vmatprep.subr.mxu0 %v229
    %3631 = vmatpush1.msra.mxu0 %v228
    %3632 = vmatprep.subr.mxu0 %v233
    %3633 = vmatpush1.msra.mxu0 %v232
    %3634 = vmatprep.subr.mxu0 %v237
    %3635 = vmatpush1.msra.mxu0 %v236
    %3636 = vmatprep.subr.mxu0 %v241
    %3637 = vmatpush1.msra.mxu0 %v240
    %3638 = vmatprep.subr.mxu0 %v245
    %3639 = vmatpush1.msra.mxu0 %v244
    %3640 = vmatprep.subr.mxu0 %v249
    %3641 = vmatpush1.msra.mxu0 %v248
    %3642 = vmatprep.subr.mxu0 %v253
    %3643 = vmatpush1.msra.mxu0 %v252
    %3644 = vmatprep.subr.mxu0 %v257
    %3645 = vmatpush1.msra.mxu0 %v256
    %3646 = vmatprep.subr.mxu0 %v261
    %3647 = vmatpush1.msra.mxu0 %v260
    %3648 = vmatprep.subr.mxu0 %v265
    %3649 = vmatpush1.msra.mxu0 %v264
    %3650 = vmatprep.subr.mxu0 %v269
    %3651 = vmatpush1.msra.mxu0 %v268
    %3652 = vmatprep.subr.mxu0 %v273
    %3653 = vmatpush1.msra.mxu0 %v272
    %3654 = vmatprep.subr.mxu0 %v277
    %3655 = vmatpush1.msra.mxu0 %v276
    %3656 = vmatprep.subr.mxu0 %v281
    %3657 = vmatpush1.msra.mxu0 %v280
    %3658 = vmatprep.subr.mxu0 %v285
    %3659 = vmatpush1.msra.mxu0 %v284
    %3660 = vmatprep.subr.mxu0 %v289
    %3661 = vmatpush1.msra.mxu0 %v288
    %3662 = vmatprep.subr.mxu0 %v293
    %3663 = vmatpush1.msra.mxu0 %v292
    %3664 = vmatprep.subr.mxu0 %v297
    %3665 = vmatpush1.msra.mxu0 %v296
    %3666 = vmatprep.subr.mxu0 %v301
    %3667 = vmatpush1.msra.mxu0 %v300
    %3668 = vmatprep.subr.mxu0 %v305
    %3669 = vmatpush1.msra.mxu0 %v304
    %3670 = vmatprep.mubr.f32.mxu0 %v3589
    %3671 = vmatmul.mubr.f32.gmra.mrb[0].mxu0 %v3588
    %v3672 = vpop.f32.mrb[0].mxu0
    %v3673 = vadd.f32 0.0, %v3672
    %v3674 = vpop.f32.mrb[0].mxu0
    %v3675 = vadd.f32 0.0, %v3674
    %3676 = vmatprep.mubr.f32.mxu0 %v3593
    %3677 = vmatmul.mubr.f32.gmra.mrb[0].mxu0 %v3592
    %v3678 = vpop.f32.mrb[0].mxu0
    %v3679 = vadd.f32 0.0, %v3678
    %v3680 = vpop.f32.mrb[0].mxu0
    %v3681 = vadd.f32 0.0, %v3680
    %3682 = vmatprep.mubr.f32.mxu0 %v3597
    %3683 = vmatmul.mubr.f32.gmra.mrb[0].mxu0 %v3596
    %v3684 = vpop.f32.mrb[0].mxu0
    %v3685 = vadd.f32 0.0, %v3684
    %v3686 = vpop.f32.mrb[0].mxu0
    %v3687 = vadd.f32 0.0, %v3686
    %3688 = vmatprep.mubr.f32.mxu0 %v3601
    %3689 = vmatmul.mubr.f32.gmra.mrb[0].mxu0 %v3600
    %v3690 = vpop.f32.mrb[0].mxu0
    %v3691 = vadd.f32 0.0, %v3690
    %v3692 = vpop.f32.mrb[0].mxu0
    %v3693 = vadd.f32 0.0, %v3692
    %3694 = vdwg.mxu0
    %3695 = vmatprep.subr.mxu0 %v309
    %3696 = vmatpush1.msra.mxu0 %v308
    %3697 = vmatprep.subr.mxu0 %v313
    %3698 = vmatpush1.msra.mxu0 %v312
    %3699 = vmatprep.subr.mxu0 %v317
    %3700 = vmatpush1.msra.mxu0 %v316
    %3701 = vmatprep.subr.mxu0 %v321
    %3702 = vmatpush1.msra.mxu0 %v320
    %3703 = vmatprep.subr.mxu0 %v325
    %3704 = vmatpush1.msra.mxu0 %v324
    %3705 = vmatprep.subr.mxu0 %v329
    %3706 = vmatpush1.msra.mxu0 %v328
    %3707 = vmatprep.subr.mxu0 %v333
    %3708 = vmatpush1.msra.mxu0 %v332
    %3709 = vmatprep.subr.mxu0 %v337
    %3710 = vmatpush1.msra.mxu0 %v336
    %3711 = vmatprep.subr.mxu0 %v341
    %3712 = vmatpush1.msra.mxu0 %v340
    %3713 = vmatprep.subr.mxu0 %v345
    %3714 = vmatpush1.msra.mxu0 %v344
    %3715 = vmatprep.subr.mxu0 %v349
    %3716 = vmatpush1.msra.mxu0 %v348
    %3717 = vmatprep.subr.mxu0 %v353
    %3718 = vmatpush1.msra.mxu0 %v352
    %3719 = vmatprep.subr.mxu0 %v357
    %3720 = vmatpush1.msra.mxu0 %v356
    %3721 = vmatprep.subr.mxu0 %v361
    %3722 = vmatpush1.msra.mxu0 %v360
    %3723 = vmatprep.subr.mxu0 %v365
    %3724 = vmatpush1.msra.mxu0 %v364
    %3725 = vmatprep.subr.mxu0 %v369
    %3726 = vmatpush1.msra.mxu0 %v368
    %3727 = vmatprep.subr.mxu0 %v373
    %3728 = vmatpush1.msra.mxu0 %v372
    %3729 = vmatprep.subr.mxu0 %v377
    %3730 = vmatpush1.msra.mxu0 %v376
    %3731 = vmatprep.subr.mxu0 %v381
    %3732 = vmatpush1.msra.mxu0 %v380
    %3733 = vmatprep.subr.mxu0 %v385
    %3734 = vmatpush1.msra.mxu0 %v384
    %3735 = vmatprep.subr.mxu0 %v389
    %3736 = vmatpush1.msra.mxu0 %v388
    %3737 = vmatprep.subr.mxu0 %v393
    %3738 = vmatpush1.msra.mxu0 %v392
    %3739 = vmatprep.subr.mxu0 %v397
    %3740 = vmatpush1.msra.mxu0 %v396
    %3741 = vmatprep.subr.mxu0 %v401
    %3742 = vmatpush1.msra.mxu0 %v400
    %3743 = vmatprep.subr.mxu0 %v405
    %3744 = vmatpush1.msra.mxu0 %v404
    %3745 = vmatprep.subr.mxu0 %v409
    %3746 = vmatpush1.msra.mxu0 %v408
    %3747 = vmatprep.subr.mxu0 %v413
    %3748 = vmatpush1.msra.mxu0 %v412
    %3749 = vmatprep.subr.mxu0 %v417
    %3750 = vmatpush1.msra.mxu0 %v416
    %3751 = vmatprep.subr.mxu0 %v421
    %3752 = vmatpush1.msra.mxu0 %v420
    %3753 = vmatprep.subr.mxu0 %v425
    %3754 = vmatpush1.msra.mxu0 %v424
    %3755 = vmatprep.subr.mxu0 %v429
    %3756 = vmatpush1.msra.mxu0 %v428
    %3757 = vmatprep.subr.mxu0 %v433
    %3758 = vmatpush1.msra.mxu0 %v432
    %3759 = vmatprep.mubr.f32.mxu0 %v3591
    %3760 = vmatmul.mubr.f32.gmra.mrb[0].mxu0 %v3590
    %v3761 = vpop.f32.mrb[0].mxu0
    %v3762 = vadd.f32 %v3673, %v3761
    %v3763 = vpop.f32.mrb[0].mxu0
    %v3764 = vadd.f32 %v3675, %v3763
    %3765 = vmatprep.mubr.f32.mxu0 %v3595
    %3766 = vmatmul.mubr.f32.gmra.mrb[0].mxu0 %v3594
    %v3767 = vpop.f32.mrb[0].mxu0
    %v3768 = vadd.f32 %v3679, %v3767
    %v3769 = vpop.f32.mrb[0].mxu0
    %v3770 = vadd.f32 %v3681, %v3769
    %3771 = vmatprep.mubr.f32.mxu0 %v3599
    %3772 = vmatmul.mubr.f32.gmra.mrb[0].mxu0 %v3598
    %v3773 = vpop.f32.mrb[0].mxu0
    %v3774 = vadd.f32 %v3685, %v3773
    %v3775 = vpop.f32.mrb[0].mxu0
    %v3776 = vadd.f32 %v3687, %v3775
    %3777 = vmatprep.mubr.f32.mxu0 %v3603
    %3778 = vmatmul.mubr.f32.gmra.mrb[0].mxu0 %v3602
    %v3779 = vpop.f32.mrb[0].mxu0
    %v3780 = vadd.f32 %v3691, %v3779
    %v3781 = vpop.f32.mrb[0].mxu0
    %v3782 = vadd.f32 %v3693, %v3781
    %3783 = vdwg.mxu0
    %3784 = vmatprep.subr.mxu0 %v183
    %3785 = vmatpush1.msra.mxu0 %v182
    %3786 = vmatprep.subr.mxu0 %v187
    %3787 = vmatpush1.msra.mxu0 %v186
    %3788 = vmatprep.subr.mxu0 %v191
    %3789 = vmatpush1.msra.mxu0 %v190
    %3790 = vmatprep.subr.mxu0 %v195
    %3791 = vmatpush1.msra.mxu0 %v194
    %3792 = vmatprep.subr.mxu0 %v199
    %3793 = vmatpush1.msra.mxu0 %v198
    %3794 = vmatprep.subr.mxu0 %v203
    %3795 = vmatpush1.msra.mxu0 %v202
    %3796 = vmatprep.subr.mxu0 %v207
    %3797 = vmatpush1.msra.mxu0 %v206
    %3798 = vmatprep.subr.mxu0 %v211
    %3799 = vmatpush1.msra.mxu0 %v210
    %3800 = vmatprep.subr.mxu0 %v215
    %3801 = vmatpush1.msra.mxu0 %v214
    %3802 = vmatprep.subr.mxu0 %v219
    %3803 = vmatpush1.msra.mxu0 %v218
    %3804 = vmatprep.subr.mxu0 %v223
    %3805 = vmatpush1.msra.mxu0 %v222
    %3806 = vmatprep.subr.mxu0 %v227
    %3807 = vmatpush1.msra.mxu0 %v226
    %3808 = vmatprep.subr.mxu0 %v231
    %3809 = vmatpush1.msra.mxu0 %v230
    %3810 = vmatprep.subr.mxu0 %v235
    %3811 = vmatpush1.msra.mxu0 %v234
    %3812 = vmatprep.subr.mxu0 %v239
    %3813 = vmatpush1.msra.mxu0 %v238
    %3814 = vmatprep.subr.mxu0 %v243
    %3815 = vmatpush1.msra.mxu0 %v242
    %3816 = vmatprep.subr.mxu0 %v247
    %3817 = vmatpush1.msra.mxu0 %v246
    %3818 = vmatprep.subr.mxu0 %v251
    %3819 = vmatpush1.msra.mxu0 %v250
    %3820 = vmatprep.subr.mxu0 %v255
    %3821 = vmatpush1.msra.mxu0 %v254
    %3822 = vmatprep.subr.mxu0 %v259
    %3823 = vmatpush1.msra.mxu0 %v258
    %3824 = vmatprep.subr.mxu0 %v263
    %3825 = vmatpush1.msra.mxu0 %v262
    %3826 = vmatprep.subr.mxu0 %v267
    %3827 = vmatpush1.msra.mxu0 %v266
    %3828 = vmatprep.subr.mxu0 %v271
    %3829 = vmatpush1.msra.mxu0 %v270
    %3830 = vmatprep.subr.mxu0 %v275
    %3831 = vmatpush1.msra.mxu0 %v274
    %3832 = vmatprep.subr.mxu0 %v279
    %3833 = vmatpush1.msra.mxu0 %v278
    %3834 = vmatprep.subr.mxu0 %v283
    %3835 = vmatpush1.msra.mxu0 %v282
    %3836 = vmatprep.subr.mxu0 %v287
    %3837 = vmatpush1.msra.mxu0 %v286
    %3838 = vmatprep.subr.mxu0 %v291
    %3839 = vmatpush1.msra.mxu0 %v290
    %3840 = vmatprep.subr.mxu0 %v295
    %3841 = vmatpush1.msra.mxu0 %v294
    %3842 = vmatprep.subr.mxu0 %v299
    %3843 = vmatpush1.msra.mxu0 %v298
    %3844 = vmatprep.subr.mxu0 %v303
    %3845 = vmatpush1.msra.mxu0 %v302
    %3846 = vmatprep.subr.mxu0 %v307
    %3847 = vmatpush1.msra.mxu0 %v306
    %3848 = vmatprep.mubr.f32.mxu0 %v3589
    %3849 = vmatmul.mubr.f32.gmra.mrb[0].mxu0 %v3588
    %v3850 = vpop.f32.mrb[0].mxu0
    %v3851 = vadd.f32 0.0, %v3850
    %v3852 = vpop.f32.mrb[0].mxu0
    %v3853 = vadd.f32 0.0, %v3852
    %3854 = vmatprep.mubr.f32.mxu0 %v3593
    %3855 = vmatmul.mubr.f32.gmra.mrb[0].mxu0 %v3592
    %v3856 = vpop.f32.mrb[0].mxu0
    %v3857 = vadd.f32 0.0, %v3856
    %v3858 = vpop.f32.mrb[0].mxu0
    %v3859 = vadd.f32 0.0, %v3858
    %3860 = vmatprep.mubr.f32.mxu0 %v3597
    %3861 = vmatmul.mubr.f32.gmra.mrb[0].mxu0 %v3596
    %v3862 = vpop.f32.mrb[0].mxu0
    %v3863 = vadd.f32 0.0, %v3862
    %v3864 = vpop.f32.mrb[0].mxu0
    %v3865 = vadd.f32 0.0, %v3864
    %3866 = vmatprep.mubr.f32.mxu0 %v3601
    %3867 = vmatmul.mubr.f32.gmra.mrb[0].mxu0 %v3600
    %v3868 = vpop.f32.mrb[0].mxu0
    %v3869 = vadd.f32 0.0, %v3868
    %v3870 = vpop.f32.mrb[0].mxu0
    %v3871 = vadd.f32 0.0, %v3870
    %3872 = vdwg.mxu0
    %3873 = vmatprep.subr.mxu0 %v311
    %3874 = vmatpush1.msra.mxu0 %v310
    %3875 = vmatprep.subr.mxu0 %v315
    %3876 = vmatpush1.msra.mxu0 %v314
    %3877 = vmatprep.subr.mxu0 %v319
    %3878 = vmatpush1.msra.mxu0 %v318
    %3879 = vmatprep.subr.mxu0 %v323
    %3880 = vmatpush1.msra.mxu0 %v322
    %3881 = vmatprep.subr.mxu0 %v327
    %3882 = vmatpush1.msra.mxu0 %v326
    %3883 = vmatprep.subr.mxu0 %v331
    %3884 = vmatpush1.msra.mxu0 %v330
    %3885 = vmatprep.subr.mxu0 %v335
    %3886 = vmatpush1.msra.mxu0 %v334
    %3887 = vmatprep.subr.mxu0 %v339
    %3888 = vmatpush1.msra.mxu0 %v338
    %3889 = vmatprep.subr.mxu0 %v343
    %3890 = vmatpush1.msra.mxu0 %v342
    %3891 = vmatprep.subr.mxu0 %v347
    %3892 = vmatpush1.msra.mxu0 %v346
    %3893 = vmatprep.subr.mxu0 %v351
    %3894 = vmatpush1.msra.mxu0 %v350
    %3895 = vmatprep.subr.mxu0 %v355
    %3896 = vmatpush1.msra.mxu0 %v354
    %3897 = vmatprep.subr.mxu0 %v359
    %3898 = vmatpush1.msra.mxu0 %v358
    %3899 = vmatprep.subr.mxu0 %v363
    %3900 = vmatpush1.msra.mxu0 %v362
    %3901 = vmatprep.subr.mxu0 %v367
    %3902 = vmatpush1.msra.mxu0 %v366
    %3903 = vmatprep.subr.mxu0 %v371
    %3904 = vmatpush1.msra.mxu0 %v370
    %3905 = vmatprep.subr.mxu0 %v375
    %3906 = vmatpush1.msra.mxu0 %v374
    %3907 = vmatprep.subr.mxu0 %v379
    %3908 = vmatpush1.msra.mxu0 %v378
    %3909 = vmatprep.subr.mxu0 %v383
    %3910 = vmatpush1.msra.mxu0 %v382
    %3911 = vmatprep.subr.mxu0 %v387
    %3912 = vmatpush1.msra.mxu0 %v386
    %3913 = vmatprep.subr.mxu0 %v391
    %3914 = vmatpush1.msra.mxu0 %v390
    %3915 = vmatprep.subr.mxu0 %v395
    %3916 = vmatpush1.msra.mxu0 %v394
    %3917 = vmatprep.subr.mxu0 %v399
    %3918 = vmatpush1.msra.mxu0 %v398
    %3919 = vmatprep.subr.mxu0 %v403
    %3920 = vmatpush1.msra.mxu0 %v402
    %3921 = vmatprep.subr.mxu0 %v407
    %3922 = vmatpush1.msra.mxu0 %v406
    %3923 = vmatprep.subr.mxu0 %v411
    %3924 = vmatpush1.msra.mxu0 %v410
    %3925 = vmatprep.subr.mxu0 %v415
    %3926 = vmatpush1.msra.mxu0 %v414
    %3927 = vmatprep.subr.mxu0 %v419
    %3928 = vmatpush1.msra.mxu0 %v418
    %3929 = vmatprep.subr.mxu0 %v423
    %3930 = vmatpush1.msra.mxu0 %v422
    %3931 = vmatprep.subr.mxu0 %v427
    %3932 = vmatpush1.msra.mxu0 %v426
    %3933 = vmatprep.subr.mxu0 %v431
    %3934 = vmatpush1.msra.mxu0 %v430
    %3935 = vmatprep.subr.mxu0 %v435
    %3936 = vmatpush1.msra.mxu0 %v434
    %3937 = vmatprep.mubr.f32.mxu0 %v3591
    %3938 = vmatmul.mubr.f32.gmra.mrb[0].mxu0 %v3590
    %v3939 = vpop.f32.mrb[0].mxu0
    %v3940 = vadd.f32 %v3851, %v3939
    %v3941 = vpop.f32.mrb[0].mxu0
    %v3942 = vadd.f32 %v3853, %v3941
    %3943 = vmatprep.mubr.f32.mxu0 %v3595
    %3944 = vmatmul.mubr.f32.gmra.mrb[0].mxu0 %v3594
    %v3945 = vpop.f32.mrb[0].mxu0
    %v3946 = vadd.f32 %v3857, %v3945
    %v3947 = vpop.f32.mrb[0].mxu0
    %v3948 = vadd.f32 %v3859, %v3947
    %3949 = vmatprep.mubr.f32.mxu0 %v3599
    %3950 = vmatmul.mubr.f32.gmra.mrb[0].mxu0 %v3598
    %v3951 = vpop.f32.mrb[0].mxu0
    %v3952 = vadd.f32 %v3863, %v3951
    %v3953 = vpop.f32.mrb[0].mxu0
    %v3954 = vadd.f32 %v3865, %v3953
    %3955 = vmatprep.mubr.f32.mxu0 %v3603
    %3956 = vmatmul.mubr.f32.gmra.mrb[0].mxu0 %v3602
    %v3957 = vpop.f32.mrb[0].mxu0
    %v3958 = vadd.f32 %v3869, %v3957
    %v3959 = vpop.f32.mrb[0].mxu0
    %v3960 = vadd.f32 %v3871, %v3959
    %3961 = vdwg.mxu0
    %v3962 = vadd.f32 %v3762, %v3768
    %v3963 = vadd.f32 %v3962, %v3774
    %v3964 = vadd.f32 %v3963, %v3780
    %v3965 = vrot.slane %v3964, 4
    %v3966 = vadd.f32 %v3964, %v3965
    %v3967 = vrot.slane %v3966, 2
    %v3968 = vadd.f32 %v3966, %v3967
    %v3969 = vrot.slane %v3968, 1
    %v3970 = vadd.f32 %v3968, %v3969
    %v3971 = vadd.f32 %v3764, %v3770
    %v3972 = vadd.f32 %v3971, %v3776
    %v3973 = vadd.f32 %v3972, %v3782
    %v3974 = vrot.slane %v3973, 4
    %v3975 = vadd.f32 %v3973, %v3974
    %v3976 = vrot.slane %v3975, 2
    %v3977 = vadd.f32 %v3975, %v3976
    %v3978 = vrot.slane %v3977, 1
    %v3979 = vadd.f32 %v3977, %v3978
    %v3980 = vadd.f32 %v3940, %v3946
    %v3981 = vadd.f32 %v3980, %v3952
    %v3982 = vadd.f32 %v3981, %v3958
    %v3983 = vrot.slane %v3982, 4
    %v3984 = vadd.f32 %v3982, %v3983
    %v3985 = vrot.slane %v3984, 2
    %v3986 = vadd.f32 %v3984, %v3985
    %v3987 = vrot.slane %v3986, 1
    %v3988 = vadd.f32 %v3986, %v3987
    %v3989 = vadd.f32 %v3942, %v3948
    %v3990 = vadd.f32 %v3989, %v3954
    %v3991 = vadd.f32 %v3990, %v3960
    %v3992 = vrot.slane %v3991, 4
    %v3993 = vadd.f32 %v3991, %v3992
    %v3994 = vrot.slane %v3993, 2
    %v3995 = vadd.f32 %v3993, %v3994
    %v3996 = vrot.slane %v3995, 1
    %v3997 = vadd.f32 %v3995, %v3996
    %v3998 = vsub.f32 %v3588, %v3970
    %v3999 = vsub.f32 %v3589, %v3979
    %v4000 = vsub.f32 %v3590, %v3988
    %v4001 = vsub.f32 %v3591, %v3997
    %v4002 = vsub.f32 %v3592, %v3970
    %v4003 = vsub.f32 %v3593, %v3979
    %v4004 = vsub.f32 %v3594, %v3988
    %v4005 = vsub.f32 %v3595, %v3997
    %v4006 = vsub.f32 %v3596, %v3970
    %v4007 = vsub.f32 %v3597, %v3979
    %v4008 = vsub.f32 %v3598, %v3988
    %v4009 = vsub.f32 %v3599, %v3997
    %v4010 = vsub.f32 %v3600, %v3970
    %v4011 = vsub.f32 %v3601, %v3979
    %v4012 = vsub.f32 %v3602, %v3988
    %v4013 = vsub.f32 %v3603, %v3997
    %v4014 = vmul.f32 %v3998, %v3998
    %v4015 = vmul.f32 %v3999, %v3999
    %v4016 = vmul.f32 %v4000, %v4000
    %v4017 = vmul.f32 %v4001, %v4001
    %v4018 = vmul.f32 %v4002, %v4002
    %v4019 = vmul.f32 %v4003, %v4003
    %v4020 = vmul.f32 %v4004, %v4004
    %v4021 = vmul.f32 %v4005, %v4005
    %v4022 = vmul.f32 %v4006, %v4006
    %v4023 = vmul.f32 %v4007, %v4007
    %v4024 = vmul.f32 %v4008, %v4008
    %v4025 = vmul.f32 %v4009, %v4009
    %v4026 = vmul.f32 %v4010, %v4010
    %v4027 = vmul.f32 %v4011, %v4011
    %v4028 = vmul.f32 %v4012, %v4012
    %v4029 = vmul.f32 %v4013, %v4013
    %4030 = vmatprep.subr.mxu0 %v181
    %4031 = vmatpush1.msra.mxu0 %v180
    %4032 = vmatprep.subr.mxu0 %v185
    %4033 = vmatpush1.msra.mxu0 %v184
    %4034 = vmatprep.subr.mxu0 %v189
    %4035 = vmatpush1.msra.mxu0 %v188
    %4036 = vmatprep.subr.mxu0 %v193
    %4037 = vmatpush1.msra.mxu0 %v192
    %4038 = vmatprep.subr.mxu0 %v197
    %4039 = vmatpush1.msra.mxu0 %v196
    %4040 = vmatprep.subr.mxu0 %v201
    %4041 = vmatpush1.msra.mxu0 %v200
    %4042 = vmatprep.subr.mxu0 %v205
    %4043 = vmatpush1.msra.mxu0 %v204
    %4044 = vmatprep.subr.mxu0 %v209
    %4045 = vmatpush1.msra.mxu0 %v208
    %4046 = vmatprep.subr.mxu0 %v213
    %4047 = vmatpush1.msra.mxu0 %v212
    %4048 = vmatprep.subr.mxu0 %v217
    %4049 = vmatpush1.msra.mxu0 %v216
    %4050 = vmatprep.subr.mxu0 %v221
    %4051 = vmatpush1.msra.mxu0 %v220
    %4052 = vmatprep.subr.mxu0 %v225
    %4053 = vmatpush1.msra.mxu0 %v224
    %4054 = vmatprep.subr.mxu0 %v229
    %4055 = vmatpush1.msra.mxu0 %v228
    %4056 = vmatprep.subr.mxu0 %v233
    %4057 = vmatpush1.msra.mxu0 %v232
    %4058 = vmatprep.subr.mxu0 %v237
    %4059 = vmatpush1.msra.mxu0 %v236
    %4060 = vmatprep.subr.mxu0 %v241
    %4061 = vmatpush1.msra.mxu0 %v240
    %4062 = vmatprep.subr.mxu0 %v245
    %4063 = vmatpush1.msra.mxu0 %v244
    %4064 = vmatprep.subr.mxu0 %v249
    %4065 = vmatpush1.msra.mxu0 %v248
    %4066 = vmatprep.subr.mxu0 %v253
    %4067 = vmatpush1.msra.mxu0 %v252
    %4068 = vmatprep.subr.mxu0 %v257
    %4069 = vmatpush1.msra.mxu0 %v256
    %4070 = vmatprep.subr.mxu0 %v261
    %4071 = vmatpush1.msra.mxu0 %v260
    %4072 = vmatprep.subr.mxu0 %v265
    %4073 = vmatpush1.msra.mxu0 %v264
    %4074 = vmatprep.subr.mxu0 %v269
    %4075 = vmatpush1.msra.mxu0 %v268
    %4076 = vmatprep.subr.mxu0 %v273
    %4077 = vmatpush1.msra.mxu0 %v272
    %4078 = vmatprep.subr.mxu0 %v277
    %4079 = vmatpush1.msra.mxu0 %v276
    %4080 = vmatprep.subr.mxu0 %v281
    %4081 = vmatpush1.msra.mxu0 %v280
    %4082 = vmatprep.subr.mxu0 %v285
    %4083 = vmatpush1.msra.mxu0 %v284
    %4084 = vmatprep.subr.mxu0 %v289
    %4085 = vmatpush1.msra.mxu0 %v288
    %4086 = vmatprep.subr.mxu0 %v293
    %4087 = vmatpush1.msra.mxu0 %v292
    %4088 = vmatprep.subr.mxu0 %v297
    %4089 = vmatpush1.msra.mxu0 %v296
    %4090 = vmatprep.subr.mxu0 %v301
    %4091 = vmatpush1.msra.mxu0 %v300
    %4092 = vmatprep.subr.mxu0 %v305
    %4093 = vmatpush1.msra.mxu0 %v304
    %4094 = vmatprep.mubr.f32.mxu0 %v4015
    %4095 = vmatmul.mubr.f32.gmra.mrb[0].mxu0 %v4014
    %v4096 = vpop.f32.mrb[0].mxu0
    %v4097 = vadd.f32 0.0, %v4096
    %v4098 = vpop.f32.mrb[0].mxu0
    %v4099 = vadd.f32 0.0, %v4098
    %4100 = vmatprep.mubr.f32.mxu0 %v4019
    %4101 = vmatmul.mubr.f32.gmra.mrb[0].mxu0 %v4018
    %v4102 = vpop.f32.mrb[0].mxu0
    %v4103 = vadd.f32 0.0, %v4102
    %v4104 = vpop.f32.mrb[0].mxu0
    %v4105 = vadd.f32 0.0, %v4104
    %4106 = vmatprep.mubr.f32.mxu0 %v4023
    %4107 = vmatmul.mubr.f32.gmra.mrb[0].mxu0 %v4022
    %v4108 = vpop.f32.mrb[0].mxu0
    %v4109 = vadd.f32 0.0, %v4108
    %v4110 = vpop.f32.mrb[0].mxu0
    %v4111 = vadd.f32 0.0, %v4110
    %4112 = vmatprep.mubr.f32.mxu0 %v4027
    %4113 = vmatmul.mubr.f32.gmra.mrb[0].mxu0 %v4026
    %v4114 = vpop.f32.mrb[0].mxu0
    %v4115 = vadd.f32 0.0, %v4114
    %v4116 = vpop.f32.mrb[0].mxu0
    %v4117 = vadd.f32 0.0, %v4116
    %4118 = vdwg.mxu0
    %4119 = vmatprep.subr.mxu0 %v309
    %4120 = vmatpush1.msra.mxu0 %v308
    %4121 = vmatprep.subr.mxu0 %v313
    %4122 = vmatpush1.msra.mxu0 %v312
    %4123 = vmatprep.subr.mxu0 %v317
    %4124 = vmatpush1.msra.mxu0 %v316
    %4125 = vmatprep.subr.mxu0 %v321
    %4126 = vmatpush1.msra.mxu0 %v320
    %4127 = vmatprep.subr.mxu0 %v325
    %4128 = vmatpush1.msra.mxu0 %v324
    %4129 = vmatprep.subr.mxu0 %v329
    %4130 = vmatpush1.msra.mxu0 %v328
    %4131 = vmatprep.subr.mxu0 %v333
    %4132 = vmatpush1.msra.mxu0 %v332
    %4133 = vmatprep.subr.mxu0 %v337
    %4134 = vmatpush1.msra.mxu0 %v336
    %4135 = vmatprep.subr.mxu0 %v341
    %4136 = vmatpush1.msra.mxu0 %v340
    %4137 = vmatprep.subr.mxu0 %v345
    %4138 = vmatpush1.msra.mxu0 %v344
    %4139 = vmatprep.subr.mxu0 %v349
    %4140 = vmatpush1.msra.mxu0 %v348
    %4141 = vmatprep.subr.mxu0 %v353
    %4142 = vmatpush1.msra.mxu0 %v352
    %4143 = vmatprep.subr.mxu0 %v357
    %4144 = vmatpush1.msra.mxu0 %v356
    %4145 = vmatprep.subr.mxu0 %v361
    %4146 = vmatpush1.msra.mxu0 %v360
    %4147 = vmatprep.subr.mxu0 %v365
    %4148 = vmatpush1.msra.mxu0 %v364
    %4149 = vmatprep.subr.mxu0 %v369
    %4150 = vmatpush1.msra.mxu0 %v368
    %4151 = vmatprep.subr.mxu0 %v373
    %4152 = vmatpush1.msra.mxu0 %v372
    %4153 = vmatprep.subr.mxu0 %v377
    %4154 = vmatpush1.msra.mxu0 %v376
    %4155 = vmatprep.subr.mxu0 %v381
    %4156 = vmatpush1.msra.mxu0 %v380
    %4157 = vmatprep.subr.mxu0 %v385
    %4158 = vmatpush1.msra.mxu0 %v384
    %4159 = vmatprep.subr.mxu0 %v389
    %4160 = vmatpush1.msra.mxu0 %v388
    %4161 = vmatprep.subr.mxu0 %v393
    %4162 = vmatpush1.msra.mxu0 %v392
    %4163 = vmatprep.subr.mxu0 %v397
    %4164 = vmatpush1.msra.mxu0 %v396
    %4165 = vmatprep.subr.mxu0 %v401
    %4166 = vmatpush1.msra.mxu0 %v400
    %4167 = vmatprep.subr.mxu0 %v405
    %4168 = vmatpush1.msra.mxu0 %v404
    %4169 = vmatprep.subr.mxu0 %v409
    %4170 = vmatpush1.msra.mxu0 %v408
    %4171 = vmatprep.subr.mxu0 %v413
    %4172 = vmatpush1.msra.mxu0 %v412
    %4173 = vmatprep.subr.mxu0 %v417
    %4174 = vmatpush1.msra.mxu0 %v416
    %4175 = vmatprep.subr.mxu0 %v421
    %4176 = vmatpush1.msra.mxu0 %v420
    %4177 = vmatprep.subr.mxu0 %v425
    %4178 = vmatpush1.msra.mxu0 %v424
    %4179 = vmatprep.subr.mxu0 %v429
    %4180 = vmatpush1.msra.mxu0 %v428
    %4181 = vmatprep.subr.mxu0 %v433
    %4182 = vmatpush1.msra.mxu0 %v432
    %4183 = vmatprep.mubr.f32.mxu0 %v4017
    %4184 = vmatmul.mubr.f32.gmra.mrb[0].mxu0 %v4016
    %v4185 = vpop.f32.mrb[0].mxu0
    %v4186 = vadd.f32 %v4097, %v4185
    %v4187 = vpop.f32.mrb[0].mxu0
    %v4188 = vadd.f32 %v4099, %v4187
    %4189 = vmatprep.mubr.f32.mxu0 %v4021
    %4190 = vmatmul.mubr.f32.gmra.mrb[0].mxu0 %v4020
    %v4191 = vpop.f32.mrb[0].mxu0
    %v4192 = vadd.f32 %v4103, %v4191
    %v4193 = vpop.f32.mrb[0].mxu0
    %v4194 = vadd.f32 %v4105, %v4193
    %4195 = vmatprep.mubr.f32.mxu0 %v4025
    %4196 = vmatmul.mubr.f32.gmra.mrb[0].mxu0 %v4024
    %v4197 = vpop.f32.mrb[0].mxu0
    %v4198 = vadd.f32 %v4109, %v4197
    %v4199 = vpop.f32.mrb[0].mxu0
    %v4200 = vadd.f32 %v4111, %v4199
    %4201 = vmatprep.mubr.f32.mxu0 %v4029
    %4202 = vmatmul.mubr.f32.gmra.mrb[0].mxu0 %v4028
    %v4203 = vpop.f32.mrb[0].mxu0
    %v4204 = vadd.f32 %v4115, %v4203
    %v4205 = vpop.f32.mrb[0].mxu0
    %v4206 = vadd.f32 %v4117, %v4205
    %4207 = vdwg.mxu0
    %4208 = vmatprep.subr.mxu0 %v183
    %4209 = vmatpush1.msra.mxu0 %v182
    %4210 = vmatprep.subr.mxu0 %v187
    %4211 = vmatpush1.msra.mxu0 %v186
    %4212 = vmatprep.subr.mxu0 %v191
    %4213 = vmatpush1.msra.mxu0 %v190
    %4214 = vmatprep.subr.mxu0 %v195
    %4215 = vmatpush1.msra.mxu0 %v194
    %4216 = vmatprep.subr.mxu0 %v199
    %4217 = vmatpush1.msra.mxu0 %v198
    %4218 = vmatprep.subr.mxu0 %v203
    %4219 = vmatpush1.msra.mxu0 %v202
    %4220 = vmatprep.subr.mxu0 %v207
    %4221 = vmatpush1.msra.mxu0 %v206
    %4222 = vmatprep.subr.mxu0 %v211
    %4223 = vmatpush1.msra.mxu0 %v210
    %4224 = vmatprep.subr.mxu0 %v215
    %4225 = vmatpush1.msra.mxu0 %v214
    %4226 = vmatprep.subr.mxu0 %v219
    %4227 = vmatpush1.msra.mxu0 %v218
    %4228 = vmatprep.subr.mxu0 %v223
    %4229 = vmatpush1.msra.mxu0 %v222
    %4230 = vmatprep.subr.mxu0 %v227
    %4231 = vmatpush1.msra.mxu0 %v226
    %4232 = vmatprep.subr.mxu0 %v231
    %4233 = vmatpush1.msra.mxu0 %v230
    %4234 = vmatprep.subr.mxu0 %v235
    %4235 = vmatpush1.msra.mxu0 %v234
    %4236 = vmatprep.subr.mxu0 %v239
    %4237 = vmatpush1.msra.mxu0 %v238
    %4238 = vmatprep.subr.mxu0 %v243
    %4239 = vmatpush1.msra.mxu0 %v242
    %4240 = vmatprep.subr.mxu0 %v247
    %4241 = vmatpush1.msra.mxu0 %v246
    %4242 = vmatprep.subr.mxu0 %v251
    %4243 = vmatpush1.msra.mxu0 %v250
    %4244 = vmatprep.subr.mxu0 %v255
    %4245 = vmatpush1.msra.mxu0 %v254
    %4246 = vmatprep.subr.mxu0 %v259
    %4247 = vmatpush1.msra.mxu0 %v258
    %4248 = vmatprep.subr.mxu0 %v263
    %4249 = vmatpush1.msra.mxu0 %v262
    %4250 = vmatprep.subr.mxu0 %v267
    %4251 = vmatpush1.msra.mxu0 %v266
    %4252 = vmatprep.subr.mxu0 %v271
    %4253 = vmatpush1.msra.mxu0 %v270
    %4254 = vmatprep.subr.mxu0 %v275
    %4255 = vmatpush1.msra.mxu0 %v274
    %4256 = vmatprep.subr.mxu0 %v279
    %4257 = vmatpush1.msra.mxu0 %v278
    %4258 = vmatprep.subr.mxu0 %v283
    %4259 = vmatpush1.msra.mxu0 %v282
    %4260 = vmatprep.subr.mxu0 %v287
    %4261 = vmatpush1.msra.mxu0 %v286
    %4262 = vmatprep.subr.mxu0 %v291
    %4263 = vmatpush1.msra.mxu0 %v290
    %4264 = vmatprep.subr.mxu0 %v295
    %4265 = vmatpush1.msra.mxu0 %v294
    %4266 = vmatprep.subr.mxu0 %v299
    %4267 = vmatpush1.msra.mxu0 %v298
    %4268 = vmatprep.subr.mxu0 %v303
    %4269 = vmatpush1.msra.mxu0 %v302
    %4270 = vmatprep.subr.mxu0 %v307
    %4271 = vmatpush1.msra.mxu0 %v306
    %4272 = vmatprep.mubr.f32.mxu0 %v4015
    %4273 = vmatmul.mubr.f32.gmra.mrb[0].mxu0 %v4014
    %v4274 = vpop.f32.mrb[0].mxu0
    %v4275 = vadd.f32 0.0, %v4274
    %v4276 = vpop.f32.mrb[0].mxu0
    %v4277 = vadd.f32 0.0, %v4276
    %4278 = vmatprep.mubr.f32.mxu0 %v4019
    %4279 = vmatmul.mubr.f32.gmra.mrb[0].mxu0 %v4018
    %v4280 = vpop.f32.mrb[0].mxu0
    %v4281 = vadd.f32 0.0, %v4280
    %v4282 = vpop.f32.mrb[0].mxu0
    %v4283 = vadd.f32 0.0, %v4282
    %4284 = vmatprep.mubr.f32.mxu0 %v4023
    %4285 = vmatmul.mubr.f32.gmra.mrb[0].mxu0 %v4022
    %v4286 = vpop.f32.mrb[0].mxu0
    %v4287 = vadd.f32 0.0, %v4286
    %v4288 = vpop.f32.mrb[0].mxu0
    %v4289 = vadd.f32 0.0, %v4288
    %4290 = vmatprep.mubr.f32.mxu0 %v4027
    %4291 = vmatmul.mubr.f32.gmra.mrb[0].mxu0 %v4026
    %v4292 = vpop.f32.mrb[0].mxu0
    %v4293 = vadd.f32 0.0, %v4292
    %v4294 = vpop.f32.mrb[0].mxu0
    %v4295 = vadd.f32 0.0, %v4294
    %4296 = vdwg.mxu0
    %4297 = vmatprep.subr.mxu0 %v311
    %4298 = vmatpush1.msra.mxu0 %v310
    %4299 = vmatprep.subr.mxu0 %v315
    %4300 = vmatpush1.msra.mxu0 %v314
    %4301 = vmatprep.subr.mxu0 %v319
    %4302 = vmatpush1.msra.mxu0 %v318
    %4303 = vmatprep.subr.mxu0 %v323
    %4304 = vmatpush1.msra.mxu0 %v322
    %4305 = vmatprep.subr.mxu0 %v327
    %4306 = vmatpush1.msra.mxu0 %v326
    %4307 = vmatprep.subr.mxu0 %v331
    %4308 = vmatpush1.msra.mxu0 %v330
    %4309 = vmatprep.subr.mxu0 %v335
    %4310 = vmatpush1.msra.mxu0 %v334
    %4311 = vmatprep.subr.mxu0 %v339
    %4312 = vmatpush1.msra.mxu0 %v338
    %4313 = vmatprep.subr.mxu0 %v343
    %4314 = vmatpush1.msra.mxu0 %v342
    %4315 = vmatprep.subr.mxu0 %v347
    %4316 = vmatpush1.msra.mxu0 %v346
    %4317 = vmatprep.subr.mxu0 %v351
    %4318 = vmatpush1.msra.mxu0 %v350
    %4319 = vmatprep.subr.mxu0 %v355
    %4320 = vmatpush1.msra.mxu0 %v354
    %4321 = vmatprep.subr.mxu0 %v359
    %4322 = vmatpush1.msra.mxu0 %v358
    %4323 = vmatprep.subr.mxu0 %v363
    %4324 = vmatpush1.msra.mxu0 %v362
    %4325 = vmatprep.subr.mxu0 %v367
    %4326 = vmatpush1.msra.mxu0 %v366
    %4327 = vmatprep.subr.mxu0 %v371
    %4328 = vmatpush1.msra.mxu0 %v370
    %4329 = vmatprep.subr.mxu0 %v375
    %4330 = vmatpush1.msra.mxu0 %v374
    %4331 = vmatprep.subr.mxu0 %v379
    %4332 = vmatpush1.msra.mxu0 %v378
    %4333 = vmatprep.subr.mxu0 %v383
    %4334 = vmatpush1.msra.mxu0 %v382
    %4335 = vmatprep.subr.mxu0 %v387
    %4336 = vmatpush1.msra.mxu0 %v386
    %4337 = vmatprep.subr.mxu0 %v391
    %4338 = vmatpush1.msra.mxu0 %v390
    %4339 = vmatprep.subr.mxu0 %v395
    %4340 = vmatpush1.msra.mxu0 %v394
    %4341 = vmatprep.subr.mxu0 %v399
    %4342 = vmatpush1.msra.mxu0 %v398
    %4343 = vmatprep.subr.mxu0 %v403
    %4344 = vmatpush1.msra.mxu0 %v402
    %4345 = vmatprep.subr.mxu0 %v407
    %4346 = vmatpush1.msra.mxu0 %v406
    %4347 = vmatprep.subr.mxu0 %v411
    %4348 = vmatpush1.msra.mxu0 %v410
    %4349 = vmatprep.subr.mxu0 %v415
    %4350 = vmatpush1.msra.mxu0 %v414
    %4351 = vmatprep.subr.mxu0 %v419
    %4352 = vmatpush1.msra.mxu0 %v418
    %4353 = vmatprep.subr.mxu0 %v423
    %4354 = vmatpush1.msra.mxu0 %v422
    %4355 = vmatprep.subr.mxu0 %v427
    %4356 = vmatpush1.msra.mxu0 %v426
    %4357 = vmatprep.subr.mxu0 %v431
    %4358 = vmatpush1.msra.mxu0 %v430
    %4359 = vmatprep.subr.mxu0 %v435
    %4360 = vmatpush1.msra.mxu0 %v434
    %4361 = vmatprep.mubr.f32.mxu0 %v4017
    %4362 = vmatmul.mubr.f32.gmra.mrb[0].mxu0 %v4016
    %v4363 = vpop.f32.mrb[0].mxu0
    %v4364 = vadd.f32 %v4275, %v4363
    %v4365 = vpop.f32.mrb[0].mxu0
    %v4366 = vadd.f32 %v4277, %v4365
    %4367 = vmatprep.mubr.f32.mxu0 %v4021
    %4368 = vmatmul.mubr.f32.gmra.mrb[0].mxu0 %v4020
    %v4369 = vpop.f32.mrb[0].mxu0
    %v4370 = vadd.f32 %v4281, %v4369
    %v4371 = vpop.f32.mrb[0].mxu0
    %v4372 = vadd.f32 %v4283, %v4371
    %4373 = vmatprep.mubr.f32.mxu0 %v4025
    %4374 = vmatmul.mubr.f32.gmra.mrb[0].mxu0 %v4024
    %v4375 = vpop.f32.mrb[0].mxu0
    %v4376 = vadd.f32 %v4287, %v4375
    %v4377 = vpop.f32.mrb[0].mxu0
    %v4378 = vadd.f32 %v4289, %v4377
    %4379 = vmatprep.mubr.f32.mxu0 %v4029
    %4380 = vmatmul.mubr.f32.gmra.mrb[0].mxu0 %v4028
    %v4381 = vpop.f32.mrb[0].mxu0
    %v4382 = vadd.f32 %v4293, %v4381
    %v4383 = vpop.f32.mrb[0].mxu0
    %v4384 = vadd.f32 %v4295, %v4383
    %4385 = vdwg.mxu0
    %v4386 = vadd.f32 %v4186, %v4192
    %v4387 = vadd.f32 %v4386, %v4198
    %v4388 = vadd.f32 %v4387, %v4204
    %v4389 = vrot.slane %v4388, 4
    %v4390 = vadd.f32 %v4388, %v4389
    %v4391 = vrot.slane %v4390, 2
    %v4392 = vadd.f32 %v4390, %v4391
    %v4393 = vrot.slane %v4392, 1
    %v4394 = vadd.f32 %v4392, %v4393
    %v4395 = vadd.f32 %v4188, %v4194
    %v4396 = vadd.f32 %v4395, %v4200
    %v4397 = vadd.f32 %v4396, %v4206
    %v4398 = vrot.slane %v4397, 4
    %v4399 = vadd.f32 %v4397, %v4398
    %v4400 = vrot.slane %v4399, 2
    %v4401 = vadd.f32 %v4399, %v4400
    %v4402 = vrot.slane %v4401, 1
    %v4403 = vadd.f32 %v4401, %v4402
    %v4404 = vadd.f32 %v4364, %v4370
    %v4405 = vadd.f32 %v4404, %v4376
    %v4406 = vadd.f32 %v4405, %v4382
    %v4407 = vrot.slane %v4406, 4
    %v4408 = vadd.f32 %v4406, %v4407
    %v4409 = vrot.slane %v4408, 2
    %v4410 = vadd.f32 %v4408, %v4409
    %v4411 = vrot.slane %v4410, 1
    %v4412 = vadd.f32 %v4410, %v4411
    %v4413 = vadd.f32 %v4366, %v4372
    %v4414 = vadd.f32 %v4413, %v4378
    %v4415 = vadd.f32 %v4414, %v4384
    %v4416 = vrot.slane %v4415, 4
    %v4417 = vadd.f32 %v4415, %v4416
    %v4418 = vrot.slane %v4417, 2
    %v4419 = vadd.f32 %v4417, %v4418
    %v4420 = vrot.slane %v4419, 1
    %v4421 = vadd.f32 %v4419, %v4420
    %v4422 = vadd.f32 %v4394, 1e-05
    %v4423 = vadd.f32 %v4403, 1e-05
    %v4424 = vadd.f32 %v4412, 1e-05
    %v4425 = vadd.f32 %v4421, 1e-05
    %v4426 = vrsqrt.pop %v4422
    %v4427 = vrsqrt.pop %v4423
    %v4428 = vrsqrt.pop %v4424
    %v4429 = vrsqrt.pop %v4425
    %v4434 = vcombine.low %v4426, %v4427
    %v4435 = vcombine.low %v4428, %v4429
    %v4437 = vunpack.c.l.s4 1966171168
    %v4438 = vunpack.c.0.s8 %v4437
    %v4439 = vlaneseq
    %v4440 = vshrl.u32 %v4439, 7
    %v4441 = vsub.s32 %v4438, %v4440
    %v4442 = vrot.slane %v4434, %v4441
    %v4444 = vunpack.c.l.s4 1966171168
    %v4445 = vunpack.c.0.s8 %v4444
    %v4446 = vlaneseq
    %v4447 = vshrl.u32 %v4446, 7
    %v4448 = vsub.s32 %v4445, %v4447
    %v4449 = vrot.slane %v4435, %v4448
    %v4450 = vcombine.low %v4442, %v4449
    %v4452 = vunpack.c.l.s4 1966171168
    %v4453 = vunpack.c.0.s8 %v4452
    %v4454 = vlaneseq
    %v4455 = vshrl.u32 %v4454, 7
    %v4456 = vsub.s32 %v4453, %v4455
    %v4457 = vrot.slane %v4450, %v4456
    %v4459 = vmul.f32 %v3604, %v4457
    %v4461 = vlaneseq
    %v4462 = vshrl.u32 %v4461, 7
    %v4463 = vsub.s32 0, %v4462
    %v4464 = vrot.slane %v4459, %v4463
    %v4465 = vlaneseq
    %v4466 = vshrl.u32 %v4465, 7
    %v4467 = vsub.s32 1, %v4466
    %v4468 = vrot.slane %v4459, %v4467
    %v4469 = vlaneseq
    %v4470 = vshrl.u32 %v4469, 7
    %v4471 = vsub.s32 2, %v4470
    %v4472 = vrot.slane %v4459, %v4471
    %v4473 = vlaneseq
    %v4474 = vshrl.u32 %v4473, 7
    %v4475 = vsub.s32 3, %v4474
    %v4476 = vrot.slane %v4459, %v4475
    %v4481 = vmul.f32 %v3998, %v4464
    %v4482 = vmul.f32 %v3999, %v4468
    %v4483 = vmul.f32 %v4000, %v4472
    %v4484 = vmul.f32 %v4001, %v4476
    %v4485 = vmul.f32 %v4002, %v4464
    %v4486 = vmul.f32 %v4003, %v4468
    %v4487 = vmul.f32 %v4004, %v4472
    %v4488 = vmul.f32 %v4005, %v4476
    %v4489 = vmul.f32 %v4006, %v4464
    %v4490 = vmul.f32 %v4007, %v4468
    %v4491 = vmul.f32 %v4008, %v4472
    %v4492 = vmul.f32 %v4009, %v4476
    %v4493 = vmul.f32 %v4010, %v4464
    %v4494 = vmul.f32 %v4011, %v4468
    %v4495 = vmul.f32 %v4012, %v4472
    %v4496 = vmul.f32 %v4013, %v4476
    %v4498 = vlaneseq
    %v4499 = vshrl.u32 %v4498, 7
    %v4500 = vsub.s32 0, %v4499
    %v4501 = vrot.slane %v3605, %v4500
    %v4502 = vlaneseq
    %v4503 = vshrl.u32 %v4502, 7
    %v4504 = vsub.s32 1, %v4503
    %v4505 = vrot.slane %v3605, %v4504
    %v4506 = vlaneseq
    %v4507 = vshrl.u32 %v4506, 7
    %v4508 = vsub.s32 2, %v4507
    %v4509 = vrot.slane %v3605, %v4508
    %v4510 = vlaneseq
    %v4511 = vshrl.u32 %v4510, 7
    %v4512 = vsub.s32 3, %v4511
    %v4513 = vrot.slane %v3605, %v4512
    %v4518 = vadd.f32 %v4481, %v4501
    %v4519 = vadd.f32 %v4482, %v4505
    %v4520 = vadd.f32 %v4483, %v4509
    %v4521 = vadd.f32 %v4484, %v4513
    %v4522 = vadd.f32 %v4485, %v4501
    %v4523 = vadd.f32 %v4486, %v4505
    %v4524 = vadd.f32 %v4487, %v4509
    %v4525 = vadd.f32 %v4488, %v4513
    %v4526 = vadd.f32 %v4489, %v4501
    %v4527 = vadd.f32 %v4490, %v4505
    %v4528 = vadd.f32 %v4491, %v4509
    %v4529 = vadd.f32 %v4492, %v4513
    %v4530 = vadd.f32 %v4493, %v4501
    %v4531 = vadd.f32 %v4494, %v4505
    %v4532 = vadd.f32 %v4495, %v4509
    %v4533 = vadd.f32 %v4496, %v4513
    %v4534 = vmax.f32 %v4518, 0.0
    %v4535 = vmax.f32 %v4519, 0.0
    %v4536 = vmax.f32 %v4520, 0.0
    %v4537 = vmax.f32 %v4521, 0.0
    %v4538 = vmax.f32 %v4522, 0.0
    %v4539 = vmax.f32 %v4523, 0.0
    %v4540 = vmax.f32 %v4524, 0.0
    %v4541 = vmax.f32 %v4525, 0.0
    %v4542 = vmax.f32 %v4526, 0.0
    %v4543 = vmax.f32 %v4527, 0.0
    %v4544 = vmax.f32 %v4528, 0.0
    %v4545 = vmax.f32 %v4529, 0.0
    %v4546 = vmax.f32 %v4530, 0.0
    %v4547 = vmax.f32 %v4531, 0.0
    %v4548 = vmax.f32 %v4532, 0.0
    %v4549 = vmax.f32 %v4533, 0.0
    %v4550 = vpack.c.bf16 %v4538, %v4534
    %v4551 = vpack.c.bf16 %v4539, %v4535
    %v4552 = vpack.c.bf16 %v4540, %v4536
    %v4553 = vpack.c.bf16 %v4541, %v4537
    %v4554 = vpack.c.bf16 %v4546, %v4542
    %v4555 = vpack.c.bf16 %v4547, %v4543
    %v4556 = vpack.c.bf16 %v4548, %v4544
    %v4557 = vpack.c.bf16 %v4549, %v4545
    %v4562 = vrot.slane %v4546, 7
    %v4563 = vrot.slane %v4547, 7
    %v4564 = vrot.slane %v4548, 7
    %v4565 = vrot.slane %v4549, 7
    %v4582 = vrot.slane %v4534, 7
    %v4583 = vrot.slane %v4535, 7
    %v4584 = vrot.slane %v4536, 7
    %v4585 = vrot.slane %v4537, 7
    %v4586 = vrot.slane %v4538, 7
    %v4587 = vsel %vm500, %v4582, %v4586
    %v4588 = vrot.slane %v4539, 7
    %v4589 = vsel %vm500, %v4583, %v4588
    %v4590 = vrot.slane %v4540, 7
    %v4591 = vsel %vm500, %v4584, %v4590
    %v4592 = vrot.slane %v4541, 7
    %v4593 = vsel %vm500, %v4585, %v4592
    %v4594 = vrot.slane %v4542, 7
    %v4595 = vsel %vm500, %v4586, %v4594
    %v4596 = vrot.slane %v4543, 7
    %v4597 = vsel %vm500, %v4588, %v4596
    %v4598 = vrot.slane %v4544, 7
    %v4599 = vsel %vm500, %v4590, %v4598
    %v4600 = vrot.slane %v4545, 7
    %v4601 = vsel %vm500, %v4592, %v4600
    %v4602 = vsel %vm500, %v4594, %v4562
    %v4603 = vsel %vm500, %v4596, %v4563
    %v4604 = vsel %vm500, %v4598, %v4564
    %v4605 = vsel %vm500, %v4600, %v4565
    %v4622 = vsel %vm500, %v4562, %v4582
    %v4623 = vsel %vm500, %v4563, %v4583
    %v4624 = vsel %vm500, %v4564, %v4584
    %v4625 = vsel %vm500, %v4565, %v4585
    %v4626 = vpack.c.bf16 %v4587, %v4622
    %v4627 = vpack.c.bf16 %v4589, %v4623
    %v4628 = vpack.c.bf16 %v4591, %v4624
    %v4629 = vpack.c.bf16 %v4593, %v4625
    %v4630 = vpack.c.bf16 %v4602, %v4595
    %v4631 = vpack.c.bf16 %v4603, %v4597
    %v4632 = vpack.c.bf16 %v4604, %v4599
    %v4633 = vpack.c.bf16 %v4605, %v4601
    %v4634 = vrot.slane %v4534, 1
    %v4635 = vrot.slane %v4538, 1
    %v4636 = vsel %vm553, %v4634, %v4635
    %v4637 = vrot.slane %v4535, 1
    %v4638 = vrot.slane %v4539, 1
    %v4639 = vsel %vm553, %v4637, %v4638
    %v4640 = vrot.slane %v4536, 1
    %v4641 = vrot.slane %v4540, 1
    %v4642 = vsel %vm553, %v4640, %v4641
    %v4643 = vrot.slane %v4537, 1
    %v4644 = vrot.slane %v4541, 1
    %v4645 = vsel %vm553, %v4643, %v4644
    %v4646 = vrot.slane %v4542, 1
    %v4647 = vsel %vm553, %v4635, %v4646
    %v4648 = vrot.slane %v4543, 1
    %v4649 = vsel %vm553, %v4638, %v4648
    %v4650 = vrot.slane %v4544, 1
    %v4651 = vsel %vm553, %v4641, %v4650
    %v4652 = vrot.slane %v4545, 1
    %v4653 = vsel %vm553, %v4644, %v4652
    %v4654 = vrot.slane %v4546, 1
    %v4655 = vsel %vm553, %v4646, %v4654
    %v4656 = vrot.slane %v4547, 1
    %v4657 = vsel %vm553, %v4648, %v4656
    %v4658 = vrot.slane %v4548, 1
    %v4659 = vsel %vm553, %v4650, %v4658
    %v4660 = vrot.slane %v4549, 1
    %v4661 = vsel %vm553, %v4652, %v4660
    %v4682 = vsel %vm553, %v4654, %v4634
    %v4683 = vsel %vm553, %v4656, %v4637
    %v4684 = vsel %vm553, %v4658, %v4640
    %v4685 = vsel %vm553, %v4660, %v4643
    %v4686 = vpack.c.bf16 %v4647, %v4636
    %v4687 = vpack.c.bf16 %v4649, %v4639
    %v4688 = vpack.c.bf16 %v4651, %v4642
    %v4689 = vpack.c.bf16 %v4653, %v4645
    %v4690 = vpack.c.bf16 %v4682, %v4655
    %v4691 = vpack.c.bf16 %v4683, %v4657
    %v4692 = vpack.c.bf16 %v4684, %v4659
    %v4693 = vpack.c.bf16 %v4685, %v4661
    %s4694 = scalar_lea.vmem [#allocation7], 1024
    %v4695 = vld [vmem:[%s4694] sm:$0xff]
    %v4696 = vld [vmem:[%s4694 + $0x8] sm:$0xff]
    %v4697 = vld [vmem:[%s4694 + $0x10] sm:$0xff]
    %v4698 = vld [vmem:[%s4694 + $0x18] sm:$0xff]
    %v4699 = vld [vmem:[%s4694 + $0x20] sm:$0xff]
    %v4700 = vld [vmem:[%s4694 + $0x28] sm:$0xff]
    %v4701 = vld [vmem:[%s4694 + $0x30] sm:$0xff]
    %v4702 = vld [vmem:[%s4694 + $0x38] sm:$0xff]
    %v4703 = vld [vmem:[%s4694 + $0x40] sm:$0xff]
    %v4704 = vld [vmem:[%s4694 + $0x48] sm:$0xff]
    %v4705 = vld [vmem:[%s4694 + $0x50] sm:$0xff]
    %v4706 = vld [vmem:[%s4694 + $0x58] sm:$0xff]
    %v4707 = vld [vmem:[%s4694 + $0x60] sm:$0xff]
    %v4708 = vld [vmem:[%s4694 + $0x68] sm:$0xff]
    %v4709 = vld [vmem:[%s4694 + $0x70] sm:$0xff]
    %v4710 = vld [vmem:[%s4694 + $0x78] sm:$0xff]
    %v4711 = vld [vmem:[%s4694 + $0x80] sm:$0xff]
    %v4712 = vld [vmem:[%s4694 + $0x88] sm:$0xff]
    %v4713 = vld [vmem:[%s4694 + $0x90] sm:$0xff]
    %v4714 = vld [vmem:[%s4694 + $0x98] sm:$0xff]
    %v4715 = vld [vmem:[%s4694 + $0xa0] sm:$0xff]
    %v4716 = vld [vmem:[%s4694 + $0xa8] sm:$0xff]
    %v4717 = vld [vmem:[%s4694 + $0xb0] sm:$0xff]
    %v4718 = vld [vmem:[%s4694 + $0xb8] sm:$0xff]
    %v4719 = vld [vmem:[%s4694 + $0xc0] sm:$0xff]
    %v4720 = vld [vmem:[%s4694 + $0xc8] sm:$0xff]
    %v4721 = vld [vmem:[%s4694 + $0xd0] sm:$0xff]
    %v4722 = vld [vmem:[%s4694 + $0xd8] sm:$0xff]
    %v4723 = vld [vmem:[%s4694 + $0xe0] sm:$0xff]
    %v4724 = vld [vmem:[%s4694 + $0xe8] sm:$0xff]
    %v4725 = vld [vmem:[%s4694 + $0xf0] sm:$0xff]
    %v4726 = vld [vmem:[%s4694 + $0xf8] sm:$0xff]
    %v4727 = vld [vmem:[%s4694 + $0x100] sm:$0xff]
    %v4728 = vld [vmem:[%s4694 + $0x108] sm:$0xff]
    %v4729 = vld [vmem:[%s4694 + $0x110] sm:$0xff]
    %v4730 = vld [vmem:[%s4694 + $0x118] sm:$0xff]
    %v4731 = vld [vmem:[%s4694 + $0x120] sm:$0xff]
    %v4732 = vld [vmem:[%s4694 + $0x128] sm:$0xff]
    %v4733 = vld [vmem:[%s4694 + $0x130] sm:$0xff]
    %v4734 = vld [vmem:[%s4694 + $0x138] sm:$0xff]
    %v4735 = vld [vmem:[%s4694 + $0x140] sm:$0xff]
    %v4736 = vld [vmem:[%s4694 + $0x148] sm:$0xff]
    %v4737 = vld [vmem:[%s4694 + $0x150] sm:$0xff]
    %v4738 = vld [vmem:[%s4694 + $0x158] sm:$0xff]
    %v4739 = vld [vmem:[%s4694 + $0x160] sm:$0xff]
    %v4740 = vld [vmem:[%s4694 + $0x168] sm:$0xff]
    %v4741 = vld [vmem:[%s4694 + $0x170] sm:$0xff]
    %v4742 = vld [vmem:[%s4694 + $0x178] sm:$0xff]
    %v4743 = vld [vmem:[%s4694 + $0x180] sm:$0xff]
    %v4744 = vld [vmem:[%s4694 + $0x188] sm:$0xff]
    %v4745 = vld [vmem:[%s4694 + $0x190] sm:$0xff]
    %v4746 = vld [vmem:[%s4694 + $0x198] sm:$0xff]
    %v4747 = vld [vmem:[%s4694 + $0x1a0] sm:$0xff]
    %v4748 = vld [vmem:[%s4694 + $0x1a8] sm:$0xff]
    %v4749 = vld [vmem:[%s4694 + $0x1b0] sm:$0xff]
    %v4750 = vld [vmem:[%s4694 + $0x1b8] sm:$0xff]
    %v4751 = vld [vmem:[%s4694 + $0x1c0] sm:$0xff]
    %v4752 = vld [vmem:[%s4694 + $0x1c8] sm:$0xff]
    %v4753 = vld [vmem:[%s4694 + $0x1d0] sm:$0xff]
    %v4754 = vld [vmem:[%s4694 + $0x1d8] sm:$0xff]
    %v4755 = vld [vmem:[%s4694 + $0x1e0] sm:$0xff]
    %v4756 = vld [vmem:[%s4694 + $0x1e8] sm:$0xff]
    %v4757 = vld [vmem:[%s4694 + $0x1f0] sm:$0xff]
    %v4758 = vld [vmem:[%s4694 + $0x1f8] sm:$0xff]
    %v4759 = vld [vmem:[%s4694 + $0x200] sm:$0xff]
    %v4760 = vld [vmem:[%s4694 + $0x208] sm:$0xff]
    %v4761 = vld [vmem:[%s4694 + $0x210] sm:$0xff]
    %v4762 = vld [vmem:[%s4694 + $0x218] sm:$0xff]
    %v4763 = vld [vmem:[%s4694 + $0x220] sm:$0xff]
    %v4764 = vld [vmem:[%s4694 + $0x228] sm:$0xff]
    %v4765 = vld [vmem:[%s4694 + $0x230] sm:$0xff]
    %v4766 = vld [vmem:[%s4694 + $0x238] sm:$0xff]
    %v4767 = vld [vmem:[%s4694 + $0x240] sm:$0xff]
    %v4768 = vld [vmem:[%s4694 + $0x248] sm:$0xff]
    %v4769 = vld [vmem:[%s4694 + $0x250] sm:$0xff]
    %v4770 = vld [vmem:[%s4694 + $0x258] sm:$0xff]
    %v4771 = vld [vmem:[%s4694 + $0x260] sm:$0xff]
    %v4772 = vld [vmem:[%s4694 + $0x268] sm:$0xff]
    %v4773 = vld [vmem:[%s4694 + $0x270] sm:$0xff]
    %v4774 = vld [vmem:[%s4694 + $0x278] sm:$0xff]
    %v4775 = vld [vmem:[%s4694 + $0x280] sm:$0xff]
    %v4776 = vld [vmem:[%s4694 + $0x288] sm:$0xff]
    %v4777 = vld [vmem:[%s4694 + $0x290] sm:$0xff]
    %v4778 = vld [vmem:[%s4694 + $0x298] sm:$0xff]
    %v4779 = vld [vmem:[%s4694 + $0x2a0] sm:$0xff]
    %v4780 = vld [vmem:[%s4694 + $0x2a8] sm:$0xff]
    %v4781 = vld [vmem:[%s4694 + $0x2b0] sm:$0xff]
    %v4782 = vld [vmem:[%s4694 + $0x2b8] sm:$0xff]
    %v4783 = vld [vmem:[%s4694 + $0x2c0] sm:$0xff]
    %v4784 = vld [vmem:[%s4694 + $0x2c8] sm:$0xff]
    %v4785 = vld [vmem:[%s4694 + $0x2d0] sm:$0xff]
    %v4786 = vld [vmem:[%s4694 + $0x2d8] sm:$0xff]
    %v4787 = vld [vmem:[%s4694 + $0x2e0] sm:$0xff]
    %v4788 = vld [vmem:[%s4694 + $0x2e8] sm:$0xff]
    %v4789 = vld [vmem:[%s4694 + $0x2f0] sm:$0xff]
    %v4790 = vld [vmem:[%s4694 + $0x2f8] sm:$0xff]
    %v4791 = vld [vmem:[%s4694 + $0x300] sm:$0xff]
    %v4792 = vld [vmem:[%s4694 + $0x308] sm:$0xff]
    %v4793 = vld [vmem:[%s4694 + $0x310] sm:$0xff]
    %v4794 = vld [vmem:[%s4694 + $0x318] sm:$0xff]
    %v4795 = vld [vmem:[%s4694 + $0x320] sm:$0xff]
    %v4796 = vld [vmem:[%s4694 + $0x328] sm:$0xff]
    %v4797 = vld [vmem:[%s4694 + $0x330] sm:$0xff]
    %v4798 = vld [vmem:[%s4694 + $0x338] sm:$0xff]
    %v4799 = vld [vmem:[%s4694 + $0x340] sm:$0xff]
    %v4800 = vld [vmem:[%s4694 + $0x348] sm:$0xff]
    %v4801 = vld [vmem:[%s4694 + $0x350] sm:$0xff]
    %v4802 = vld [vmem:[%s4694 + $0x358] sm:$0xff]
    %v4803 = vld [vmem:[%s4694 + $0x360] sm:$0xff]
    %v4804 = vld [vmem:[%s4694 + $0x368] sm:$0xff]
    %v4805 = vld [vmem:[%s4694 + $0x370] sm:$0xff]
    %v4806 = vld [vmem:[%s4694 + $0x378] sm:$0xff]
    %v4807 = vld [vmem:[%s4694 + $0x380] sm:$0xff]
    %v4808 = vld [vmem:[%s4694 + $0x388] sm:$0xff]
    %v4809 = vld [vmem:[%s4694 + $0x390] sm:$0xff]
    %v4810 = vld [vmem:[%s4694 + $0x398] sm:$0xff]
    %v4811 = vld [vmem:[%s4694 + $0x3a0] sm:$0xff]
    %v4812 = vld [vmem:[%s4694 + $0x3a8] sm:$0xff]
    %v4813 = vld [vmem:[%s4694 + $0x3b0] sm:$0xff]
    %v4814 = vld [vmem:[%s4694 + $0x3b8] sm:$0xff]
    %v4815 = vld [vmem:[%s4694 + $0x3c0] sm:$0xff]
    %v4816 = vld [vmem:[%s4694 + $0x3c8] sm:$0xff]
    %v4817 = vld [vmem:[%s4694 + $0x3d0] sm:$0xff]
    %v4818 = vld [vmem:[%s4694 + $0x3d8] sm:$0xff]
    %v4819 = vld [vmem:[%s4694 + $0x3e0] sm:$0xff]
    %v4820 = vld [vmem:[%s4694 + $0x3e8] sm:$0xff]
    %v4821 = vld [vmem:[%s4694 + $0x3f0] sm:$0xff]
    %v4822 = vld [vmem:[%s4694 + $0x3f8] sm:$0xff]
    %v4823 = vld [vmem:[#allocation7] sm:$0xff]
    %v4824 = vld [vmem:[#allocation7 + $0x8] sm:$0xff]
    %v4825 = vld [vmem:[#allocation7 + $0x10] sm:$0xff]
    %v4826 = vld [vmem:[#allocation7 + $0x18] sm:$0xff]
    %v4827 = vld [vmem:[#allocation7 + $0x20] sm:$0xff]
    %v4828 = vld [vmem:[#allocation7 + $0x28] sm:$0xff]
    %v4829 = vld [vmem:[#allocation7 + $0x30] sm:$0xff]
    %v4830 = vld [vmem:[#allocation7 + $0x38] sm:$0xff]
    %v4831 = vld [vmem:[#allocation7 + $0x40] sm:$0xff]
    %v4832 = vld [vmem:[#allocation7 + $0x48] sm:$0xff]
    %v4833 = vld [vmem:[#allocation7 + $0x50] sm:$0xff]
    %v4834 = vld [vmem:[#allocation7 + $0x58] sm:$0xff]
    %v4835 = vld [vmem:[#allocation7 + $0x60] sm:$0xff]
    %v4836 = vld [vmem:[#allocation7 + $0x68] sm:$0xff]
    %v4837 = vld [vmem:[#allocation7 + $0x70] sm:$0xff]
    %v4838 = vld [vmem:[#allocation7 + $0x78] sm:$0xff]
    %v4839 = vld [vmem:[#allocation7 + $0x80] sm:$0xff]
    %v4840 = vld [vmem:[#allocation7 + $0x88] sm:$0xff]
    %v4841 = vld [vmem:[#allocation7 + $0x90] sm:$0xff]
    %v4842 = vld [vmem:[#allocation7 + $0x98] sm:$0xff]
    %v4843 = vld [vmem:[#allocation7 + $0xa0] sm:$0xff]
    %v4844 = vld [vmem:[#allocation7 + $0xa8] sm:$0xff]
    %v4845 = vld [vmem:[#allocation7 + $0xb0] sm:$0xff]
    %v4846 = vld [vmem:[#allocation7 + $0xb8] sm:$0xff]
    %v4847 = vld [vmem:[#allocation7 + $0xc0] sm:$0xff]
    %v4848 = vld [vmem:[#allocation7 + $0xc8] sm:$0xff]
    %v4849 = vld [vmem:[#allocation7 + $0xd0] sm:$0xff]
    %v4850 = vld [vmem:[#allocation7 + $0xd8] sm:$0xff]
    %v4851 = vld [vmem:[#allocation7 + $0xe0] sm:$0xff]
    %v4852 = vld [vmem:[#allocation7 + $0xe8] sm:$0xff]
    %v4853 = vld [vmem:[#allocation7 + $0xf0] sm:$0xff]
    %v4854 = vld [vmem:[#allocation7 + $0xf8] sm:$0xff]
    %v4855 = vld [vmem:[#allocation7 + $0x100] sm:$0xff]
    %v4856 = vld [vmem:[#allocation7 + $0x108] sm:$0xff]
    %v4857 = vld [vmem:[#allocation7 + $0x110] sm:$0xff]
    %v4858 = vld [vmem:[#allocation7 + $0x118] sm:$0xff]
    %v4859 = vld [vmem:[#allocation7 + $0x120] sm:$0xff]
    %v4860 = vld [vmem:[#allocation7 + $0x128] sm:$0xff]
    %v4861 = vld [vmem:[#allocation7 + $0x130] sm:$0xff]
    %v4862 = vld [vmem:[#allocation7 + $0x138] sm:$0xff]
    %v4863 = vld [vmem:[#allocation7 + $0x140] sm:$0xff]
    %v4864 = vld [vmem:[#allocation7 + $0x148] sm:$0xff]
    %v4865 = vld [vmem:[#allocation7 + $0x150] sm:$0xff]
    %v4866 = vld [vmem:[#allocation7 + $0x158] sm:$0xff]
    %v4867 = vld [vmem:[#allocation7 + $0x160] sm:$0xff]
    %v4868 = vld [vmem:[#allocation7 + $0x168] sm:$0xff]
    %v4869 = vld [vmem:[#allocation7 + $0x170] sm:$0xff]
    %v4870 = vld [vmem:[#allocation7 + $0x178] sm:$0xff]
    %v4871 = vld [vmem:[#allocation7 + $0x180] sm:$0xff]
    %v4872 = vld [vmem:[#allocation7 + $0x188] sm:$0xff]
    %v4873 = vld [vmem:[#allocation7 + $0x190] sm:$0xff]
    %v4874 = vld [vmem:[#allocation7 + $0x198] sm:$0xff]
    %v4875 = vld [vmem:[#allocation7 + $0x1a0] sm:$0xff]
    %v4876 = vld [vmem:[#allocation7 + $0x1a8] sm:$0xff]
    %v4877 = vld [vmem:[#allocation7 + $0x1b0] sm:$0xff]
    %v4878 = vld [vmem:[#allocation7 + $0x1b8] sm:$0xff]
    %v4879 = vld [vmem:[#allocation7 + $0x1c0] sm:$0xff]
    %v4880 = vld [vmem:[#allocation7 + $0x1c8] sm:$0xff]
    %v4881 = vld [vmem:[#allocation7 + $0x1d0] sm:$0xff]
    %v4882 = vld [vmem:[#allocation7 + $0x1d8] sm:$0xff]
    %v4883 = vld [vmem:[#allocation7 + $0x1e0] sm:$0xff]
    %v4884 = vld [vmem:[#allocation7 + $0x1e8] sm:$0xff]
    %v4885 = vld [vmem:[#allocation7 + $0x1f0] sm:$0xff]
    %v4886 = vld [vmem:[#allocation7 + $0x1f8] sm:$0xff]
    %v4887 = vld [vmem:[#allocation7 + $0x200] sm:$0xff]
    %v4888 = vld [vmem:[#allocation7 + $0x208] sm:$0xff]
    %v4889 = vld [vmem:[#allocation7 + $0x210] sm:$0xff]
    %v4890 = vld [vmem:[#allocation7 + $0x218] sm:$0xff]
    %v4891 = vld [vmem:[#allocation7 + $0x220] sm:$0xff]
    %v4892 = vld [vmem:[#allocation7 + $0x228] sm:$0xff]
    %v4893 = vld [vmem:[#allocation7 + $0x230] sm:$0xff]
    %v4894 = vld [vmem:[#allocation7 + $0x238] sm:$0xff]
    %v4895 = vld [vmem:[#allocation7 + $0x240] sm:$0xff]
    %v4896 = vld [vmem:[#allocation7 + $0x248] sm:$0xff]
    %v4897 = vld [vmem:[#allocation7 + $0x250] sm:$0xff]
    %v4898 = vld [vmem:[#allocation7 + $0x258] sm:$0xff]
    %v4899 = vld [vmem:[#allocation7 + $0x260] sm:$0xff]
    %v4900 = vld [vmem:[#allocation7 + $0x268] sm:$0xff]
    %v4901 = vld [vmem:[#allocation7 + $0x270] sm:$0xff]
    %v4902 = vld [vmem:[#allocation7 + $0x278] sm:$0xff]
    %v4903 = vld [vmem:[#allocation7 + $0x280] sm:$0xff]
    %v4904 = vld [vmem:[#allocation7 + $0x288] sm:$0xff]
    %v4905 = vld [vmem:[#allocation7 + $0x290] sm:$0xff]
    %v4906 = vld [vmem:[#allocation7 + $0x298] sm:$0xff]
    %v4907 = vld [vmem:[#allocation7 + $0x2a0] sm:$0xff]
    %v4908 = vld [vmem:[#allocation7 + $0x2a8] sm:$0xff]
    %v4909 = vld [vmem:[#allocation7 + $0x2b0] sm:$0xff]
    %v4910 = vld [vmem:[#allocation7 + $0x2b8] sm:$0xff]
    %v4911 = vld [vmem:[#allocation7 + $0x2c0] sm:$0xff]
    %v4912 = vld [vmem:[#allocation7 + $0x2c8] sm:$0xff]
    %v4913 = vld [vmem:[#allocation7 + $0x2d0] sm:$0xff]
    %v4914 = vld [vmem:[#allocation7 + $0x2d8] sm:$0xff]
    %v4915 = vld [vmem:[#allocation7 + $0x2e0] sm:$0xff]
    %v4916 = vld [vmem:[#allocation7 + $0x2e8] sm:$0xff]
    %v4917 = vld [vmem:[#allocation7 + $0x2f0] sm:$0xff]
    %v4918 = vld [vmem:[#allocation7 + $0x2f8] sm:$0xff]
    %v4919 = vld [vmem:[#allocation7 + $0x300] sm:$0xff]
    %v4920 = vld [vmem:[#allocation7 + $0x308] sm:$0xff]
    %v4921 = vld [vmem:[#allocation7 + $0x310] sm:$0xff]
    %v4922 = vld [vmem:[#allocation7 + $0x318] sm:$0xff]
    %v4923 = vld [vmem:[#allocation7 + $0x320] sm:$0xff]
    %v4924 = vld [vmem:[#allocation7 + $0x328] sm:$0xff]
    %v4925 = vld [vmem:[#allocation7 + $0x330] sm:$0xff]
    %v4926 = vld [vmem:[#allocation7 + $0x338] sm:$0xff]
    %v4927 = vld [vmem:[#allocation7 + $0x340] sm:$0xff]
    %v4928 = vld [vmem:[#allocation7 + $0x348] sm:$0xff]
    %v4929 = vld [vmem:[#allocation7 + $0x350] sm:$0xff]
    %v4930 = vld [vmem:[#allocation7 + $0x358] sm:$0xff]
    %v4931 = vld [vmem:[#allocation7 + $0x360] sm:$0xff]
    %v4932 = vld [vmem:[#allocation7 + $0x368] sm:$0xff]
    %v4933 = vld [vmem:[#allocation7 + $0x370] sm:$0xff]
    %v4934 = vld [vmem:[#allocation7 + $0x378] sm:$0xff]
    %v4935 = vld [vmem:[#allocation7 + $0x380] sm:$0xff]
    %v4936 = vld [vmem:[#allocation7 + $0x388] sm:$0xff]
    %v4937 = vld [vmem:[#allocation7 + $0x390] sm:$0xff]
    %v4938 = vld [vmem:[#allocation7 + $0x398] sm:$0xff]
    %v4939 = vld [vmem:[#allocation7 + $0x3a0] sm:$0xff]
    %v4940 = vld [vmem:[#allocation7 + $0x3a8] sm:$0xff]
    %v4941 = vld [vmem:[#allocation7 + $0x3b0] sm:$0xff]
    %v4942 = vld [vmem:[#allocation7 + $0x3b8] sm:$0xff]
    %v4943 = vld [vmem:[#allocation7 + $0x3c0] sm:$0xff]
    %v4944 = vld [vmem:[#allocation7 + $0x3c8] sm:$0xff]
    %v4945 = vld [vmem:[#allocation7 + $0x3d0] sm:$0xff]
    %v4946 = vld [vmem:[#allocation7 + $0x3d8] sm:$0xff]
    %v4947 = vld [vmem:[#allocation7 + $0x3e0] sm:$0xff]
    %v4948 = vld [vmem:[#allocation7 + $0x3e8] sm:$0xff]
    %v4949 = vld [vmem:[#allocation7 + $0x3f0] sm:$0xff]
    %v4950 = vld [vmem:[#allocation7 + $0x3f8] sm:$0xff]
    %v5079 = vunpack.c.l.b16 %v4823
    %v5080 = vunpack.c.h.b16 %v4823
    %v5081 = vunpack.c.l.b16 %v4824
    %v5082 = vunpack.c.h.b16 %v4824
    %v5083 = vunpack.c.l.b16 %v4825
    %v5084 = vunpack.c.h.b16 %v4825
    %v5085 = vunpack.c.l.b16 %v4826
    %v5086 = vunpack.c.h.b16 %v4826
    %v5087 = vunpack.c.l.b16 %v4827
    %v5088 = vunpack.c.h.b16 %v4827
    %v5089 = vunpack.c.l.b16 %v4828
    %v5090 = vunpack.c.h.b16 %v4828
    %v5091 = vunpack.c.l.b16 %v4829
    %v5092 = vunpack.c.h.b16 %v4829
    %v5093 = vunpack.c.l.b16 %v4830
    %v5094 = vunpack.c.h.b16 %v4830
    %v5095 = vunpack.c.l.b16 %v4831
    %v5096 = vunpack.c.h.b16 %v4831
    %v5097 = vunpack.c.l.b16 %v4832
    %v5098 = vunpack.c.h.b16 %v4832
    %v5099 = vunpack.c.l.b16 %v4833
    %v5100 = vunpack.c.h.b16 %v4833
    %v5101 = vunpack.c.l.b16 %v4834
    %v5102 = vunpack.c.h.b16 %v4834
    %v5103 = vunpack.c.l.b16 %v4835
    %v5104 = vunpack.c.h.b16 %v4835
    %v5105 = vunpack.c.l.b16 %v4836
    %v5106 = vunpack.c.h.b16 %v4836
    %v5107 = vunpack.c.l.b16 %v4837
    %v5108 = vunpack.c.h.b16 %v4837
    %v5109 = vunpack.c.l.b16 %v4838
    %v5110 = vunpack.c.h.b16 %v4838
    %v5111 = vunpack.c.l.b16 %v4839
    %v5112 = vunpack.c.h.b16 %v4839
    %v5113 = vunpack.c.l.b16 %v4840
    %v5114 = vunpack.c.h.b16 %v4840
    %v5115 = vunpack.c.l.b16 %v4841
    %v5116 = vunpack.c.h.b16 %v4841
    %v5117 = vunpack.c.l.b16 %v4842
    %v5118 = vunpack.c.h.b16 %v4842
    %v5119 = vunpack.c.l.b16 %v4843
    %v5120 = vunpack.c.h.b16 %v4843
    %v5121 = vunpack.c.l.b16 %v4844
    %v5122 = vunpack.c.h.b16 %v4844
    %v5123 = vunpack.c.l.b16 %v4845
    %v5124 = vunpack.c.h.b16 %v4845
    %v5125 = vunpack.c.l.b16 %v4846
    %v5126 = vunpack.c.h.b16 %v4846
    %v5127 = vunpack.c.l.b16 %v4847
    %v5128 = vunpack.c.h.b16 %v4847
    %v5129 = vunpack.c.l.b16 %v4848
    %v5130 = vunpack.c.h.b16 %v4848
    %v5131 = vunpack.c.l.b16 %v4849
    %v5132 = vunpack.c.h.b16 %v4849
    %v5133 = vunpack.c.l.b16 %v4850
    %v5134 = vunpack.c.h.b16 %v4850
    %v5135 = vunpack.c.l.b16 %v4851
    %v5136 = vunpack.c.h.b16 %v4851
    %v5137 = vunpack.c.l.b16 %v4852
    %v5138 = vunpack.c.h.b16 %v4852
    %v5139 = vunpack.c.l.b16 %v4853
    %v5140 = vunpack.c.h.b16 %v4853
    %v5141 = vunpack.c.l.b16 %v4854
    %v5142 = vunpack.c.h.b16 %v4854
    %v5143 = vunpack.c.l.b16 %v4855
    %v5144 = vunpack.c.h.b16 %v4855
    %v5145 = vunpack.c.l.b16 %v4856
    %v5146 = vunpack.c.h.b16 %v4856
    %v5147 = vunpack.c.l.b16 %v4857
    %v5148 = vunpack.c.h.b16 %v4857
    %v5149 = vunpack.c.l.b16 %v4858
    %v5150 = vunpack.c.h.b16 %v4858
    %v5151 = vunpack.c.l.b16 %v4859
    %v5152 = vunpack.c.h.b16 %v4859
    %v5153 = vunpack.c.l.b16 %v4860
    %v5154 = vunpack.c.h.b16 %v4860
    %v5155 = vunpack.c.l.b16 %v4861
    %v5156 = vunpack.c.h.b16 %v4861
    %v5157 = vunpack.c.l.b16 %v4862
    %v5158 = vunpack.c.h.b16 %v4862
    %v5159 = vunpack.c.l.b16 %v4863
    %v5160 = vunpack.c.h.b16 %v4863
    %v5161 = vunpack.c.l.b16 %v4864
    %v5162 = vunpack.c.h.b16 %v4864
    %v5163 = vunpack.c.l.b16 %v4865
    %v5164 = vunpack.c.h.b16 %v4865
    %v5165 = vunpack.c.l.b16 %v4866
    %v5166 = vunpack.c.h.b16 %v4866
    %v5167 = vunpack.c.l.b16 %v4867
    %v5168 = vunpack.c.h.b16 %v4867
    %v5169 = vunpack.c.l.b16 %v4868
    %v5170 = vunpack.c.h.b16 %v4868
    %v5171 = vunpack.c.l.b16 %v4869
    %v5172 = vunpack.c.h.b16 %v4869
    %v5173 = vunpack.c.l.b16 %v4870
    %v5174 = vunpack.c.h.b16 %v4870
    %v5175 = vunpack.c.l.b16 %v4871
    %v5176 = vunpack.c.h.b16 %v4871
    %v5177 = vunpack.c.l.b16 %v4872
    %v5178 = vunpack.c.h.b16 %v4872
    %v5179 = vunpack.c.l.b16 %v4873
    %v5180 = vunpack.c.h.b16 %v4873
    %v5181 = vunpack.c.l.b16 %v4874
    %v5182 = vunpack.c.h.b16 %v4874
    %v5183 = vunpack.c.l.b16 %v4875
    %v5184 = vunpack.c.h.b16 %v4875
    %v5185 = vunpack.c.l.b16 %v4876
    %v5186 = vunpack.c.h.b16 %v4876
    %v5187 = vunpack.c.l.b16 %v4877
    %v5188 = vunpack.c.h.b16 %v4877
    %v5189 = vunpack.c.l.b16 %v4878
    %v5190 = vunpack.c.h.b16 %v4878
    %v5191 = vunpack.c.l.b16 %v4879
    %v5192 = vunpack.c.h.b16 %v4879
    %v5193 = vunpack.c.l.b16 %v4880
    %v5194 = vunpack.c.h.b16 %v4880
    %v5195 = vunpack.c.l.b16 %v4881
    %v5196 = vunpack.c.h.b16 %v4881
    %v5197 = vunpack.c.l.b16 %v4882
    %v5198 = vunpack.c.h.b16 %v4882
    %v5199 = vunpack.c.l.b16 %v4883
    %v5200 = vunpack.c.h.b16 %v4883
    %v5201 = vunpack.c.l.b16 %v4884
    %v5202 = vunpack.c.h.b16 %v4884
    %v5203 = vunpack.c.l.b16 %v4885
    %v5204 = vunpack.c.h.b16 %v4885
    %v5205 = vunpack.c.l.b16 %v4886
    %v5206 = vunpack.c.h.b16 %v4886
    %v5207 = vunpack.c.l.b16 %v4887
    %v5208 = vunpack.c.h.b16 %v4887
    %v5209 = vunpack.c.l.b16 %v4888
    %v5210 = vunpack.c.h.b16 %v4888
    %v5211 = vunpack.c.l.b16 %v4889
    %v5212 = vunpack.c.h.b16 %v4889
    %v5213 = vunpack.c.l.b16 %v4890
    %v5214 = vunpack.c.h.b16 %v4890
    %v5215 = vunpack.c.l.b16 %v4891
    %v5216 = vunpack.c.h.b16 %v4891
    %v5217 = vunpack.c.l.b16 %v4892
    %v5218 = vunpack.c.h.b16 %v4892
    %v5219 = vunpack.c.l.b16 %v4893
    %v5220 = vunpack.c.h.b16 %v4893
    %v5221 = vunpack.c.l.b16 %v4894
    %v5222 = vunpack.c.h.b16 %v4894
    %v5223 = vunpack.c.l.b16 %v4895
    %v5224 = vunpack.c.h.b16 %v4895
    %v5225 = vunpack.c.l.b16 %v4896
    %v5226 = vunpack.c.h.b16 %v4896
    %v5227 = vunpack.c.l.b16 %v4897
    %v5228 = vunpack.c.h.b16 %v4897
    %v5229 = vunpack.c.l.b16 %v4898
    %v5230 = vunpack.c.h.b16 %v4898
    %v5231 = vunpack.c.l.b16 %v4899
    %v5232 = vunpack.c.h.b16 %v4899
    %v5233 = vunpack.c.l.b16 %v4900
    %v5234 = vunpack.c.h.b16 %v4900
    %v5235 = vunpack.c.l.b16 %v4901
    %v5236 = vunpack.c.h.b16 %v4901
    %v5237 = vunpack.c.l.b16 %v4902
    %v5238 = vunpack.c.h.b16 %v4902
    %v5239 = vunpack.c.l.b16 %v4903
    %v5240 = vunpack.c.h.b16 %v4903
    %v5241 = vunpack.c.l.b16 %v4904
    %v5242 = vunpack.c.h.b16 %v4904
    %v5243 = vunpack.c.l.b16 %v4905
    %v5244 = vunpack.c.h.b16 %v4905
    %v5245 = vunpack.c.l.b16 %v4906
    %v5246 = vunpack.c.h.b16 %v4906
    %v5247 = vunpack.c.l.b16 %v4907
    %v5248 = vunpack.c.h.b16 %v4907
    %v5249 = vunpack.c.l.b16 %v4908
    %v5250 = vunpack.c.h.b16 %v4908
    %v5251 = vunpack.c.l.b16 %v4909
    %v5252 = vunpack.c.h.b16 %v4909
    %v5253 = vunpack.c.l.b16 %v4910
    %v5254 = vunpack.c.h.b16 %v4910
    %v5255 = vunpack.c.l.b16 %v4911
    %v5256 = vunpack.c.h.b16 %v4911
    %v5257 = vunpack.c.l.b16 %v4912
    %v5258 = vunpack.c.h.b16 %v4912
    %v5259 = vunpack.c.l.b16 %v4913
    %v5260 = vunpack.c.h.b16 %v4913
    %v5261 = vunpack.c.l.b16 %v4914
    %v5262 = vunpack.c.h.b16 %v4914
    %v5263 = vunpack.c.l.b16 %v4915
    %v5264 = vunpack.c.h.b16 %v4915
    %v5265 = vunpack.c.l.b16 %v4916
    %v5266 = vunpack.c.h.b16 %v4916
    %v5267 = vunpack.c.l.b16 %v4917
    %v5268 = vunpack.c.h.b16 %v4917
    %v5269 = vunpack.c.l.b16 %v4918
    %v5270 = vunpack.c.h.b16 %v4918
    %v5271 = vunpack.c.l.b16 %v4919
    %v5272 = vunpack.c.h.b16 %v4919
    %v5273 = vunpack.c.l.b16 %v4920
    %v5274 = vunpack.c.h.b16 %v4920
    %v5275 = vunpack.c.l.b16 %v4921
    %v5276 = vunpack.c.h.b16 %v4921
    %v5277 = vunpack.c.l.b16 %v4922
    %v5278 = vunpack.c.h.b16 %v4922
    %v5279 = vunpack.c.l.b16 %v4923
    %v5280 = vunpack.c.h.b16 %v4923
    %v5281 = vunpack.c.l.b16 %v4924
    %v5282 = vunpack.c.h.b16 %v4924
    %v5283 = vunpack.c.l.b16 %v4925
    %v5284 = vunpack.c.h.b16 %v4925
    %v5285 = vunpack.c.l.b16 %v4926
    %v5286 = vunpack.c.h.b16 %v4926
    %v5287 = vunpack.c.l.b16 %v4927
    %v5288 = vunpack.c.h.b16 %v4927
    %v5289 = vunpack.c.l.b16 %v4928
    %v5290 = vunpack.c.h.b16 %v4928
    %v5291 = vunpack.c.l.b16 %v4929
    %v5292 = vunpack.c.h.b16 %v4929
    %v5293 = vunpack.c.l.b16 %v4930
    %v5294 = vunpack.c.h.b16 %v4930
    %v5295 = vunpack.c.l.b16 %v4931
    %v5296 = vunpack.c.h.b16 %v4931
    %v5297 = vunpack.c.l.b16 %v4932
    %v5298 = vunpack.c.h.b16 %v4932
    %v5299 = vunpack.c.l.b16 %v4933
    %v5300 = vunpack.c.h.b16 %v4933
    %v5301 = vunpack.c.l.b16 %v4934
    %v5302 = vunpack.c.h.b16 %v4934
    %v5303 = vunpack.c.l.b16 %v4935
    %v5304 = vunpack.c.h.b16 %v4935
    %v5305 = vunpack.c.l.b16 %v4936
    %v5306 = vunpack.c.h.b16 %v4936
    %v5307 = vunpack.c.l.b16 %v4937
    %v5308 = vunpack.c.h.b16 %v4937
    %v5309 = vunpack.c.l.b16 %v4938
    %v5310 = vunpack.c.h.b16 %v4938
    %v5311 = vunpack.c.l.b16 %v4939
    %v5312 = vunpack.c.h.b16 %v4939
    %v5313 = vunpack.c.l.b16 %v4940
    %v5314 = vunpack.c.h.b16 %v4940
    %v5315 = vunpack.c.l.b16 %v4941
    %v5316 = vunpack.c.h.b16 %v4941
    %v5317 = vunpack.c.l.b16 %v4942
    %v5318 = vunpack.c.h.b16 %v4942
    %v5319 = vunpack.c.l.b16 %v4943
    %v5320 = vunpack.c.h.b16 %v4943
    %v5321 = vunpack.c.l.b16 %v4944
    %v5322 = vunpack.c.h.b16 %v4944
    %v5323 = vunpack.c.l.b16 %v4945
    %v5324 = vunpack.c.h.b16 %v4945
    %v5325 = vunpack.c.l.b16 %v4946
    %v5326 = vunpack.c.h.b16 %v4946
    %v5327 = vunpack.c.l.b16 %v4947
    %v5328 = vunpack.c.h.b16 %v4947
    %v5329 = vunpack.c.l.b16 %v4948
    %v5330 = vunpack.c.h.b16 %v4948
    %v5331 = vunpack.c.l.b16 %v4949
    %v5332 = vunpack.c.h.b16 %v4949
    %v5333 = vunpack.c.l.b16 %v4950
    %v5334 = vunpack.c.h.b16 %v4950
    %v5335 = vpack.c.b16 %v5083, %v5079
    %v5336 = vpack.c.b16 %v5084, %v5080
    %v5337 = vpack.c.b16 %v5085, %v5081
    %v5338 = vpack.c.b16 %v5086, %v5082
    %v5339 = vpack.c.b16 %v5091, %v5087
    %v5340 = vpack.c.b16 %v5092, %v5088
    %v5341 = vpack.c.b16 %v5093, %v5089
    %v5342 = vpack.c.b16 %v5094, %v5090
    %v5343 = vpack.c.b16 %v5099, %v5095
    %v5344 = vpack.c.b16 %v5100, %v5096
    %v5345 = vpack.c.b16 %v5101, %v5097
    %v5346 = vpack.c.b16 %v5102, %v5098
    %v5347 = vpack.c.b16 %v5107, %v5103
    %v5348 = vpack.c.b16 %v5108, %v5104
    %v5349 = vpack.c.b16 %v5109, %v5105
    %v5350 = vpack.c.b16 %v5110, %v5106
    %v5351 = vpack.c.b16 %v5115, %v5111
    %v5352 = vpack.c.b16 %v5116, %v5112
    %v5353 = vpack.c.b16 %v5117, %v5113
    %v5354 = vpack.c.b16 %v5118, %v5114
    %v5355 = vpack.c.b16 %v5123, %v5119
    %v5356 = vpack.c.b16 %v5124, %v5120
    %v5357 = vpack.c.b16 %v5125, %v5121
    %v5358 = vpack.c.b16 %v5126, %v5122
    %v5359 = vpack.c.b16 %v5131, %v5127
    %v5360 = vpack.c.b16 %v5132, %v5128
    %v5361 = vpack.c.b16 %v5133, %v5129
    %v5362 = vpack.c.b16 %v5134, %v5130
    %v5363 = vpack.c.b16 %v5139, %v5135
    %v5364 = vpack.c.b16 %v5140, %v5136
    %v5365 = vpack.c.b16 %v5141, %v5137
    %v5366 = vpack.c.b16 %v5142, %v5138
    %v5367 = vpack.c.b16 %v5147, %v5143
    %v5368 = vpack.c.b16 %v5148, %v5144
    %v5369 = vpack.c.b16 %v5149, %v5145
    %v5370 = vpack.c.b16 %v5150, %v5146
    %v5371 = vpack.c.b16 %v5155, %v5151
    %v5372 = vpack.c.b16 %v5156, %v5152
    %v5373 = vpack.c.b16 %v5157, %v5153
    %v5374 = vpack.c.b16 %v5158, %v5154
    %v5375 = vpack.c.b16 %v5163, %v5159
    %v5376 = vpack.c.b16 %v5164, %v5160
    %v5377 = vpack.c.b16 %v5165, %v5161
    %v5378 = vpack.c.b16 %v5166, %v5162
    %v5379 = vpack.c.b16 %v5171, %v5167
    %v5380 = vpack.c.b16 %v5172, %v5168
    %v5381 = vpack.c.b16 %v5173, %v5169
    %v5382 = vpack.c.b16 %v5174, %v5170
    %v5383 = vpack.c.b16 %v5179, %v5175
    %v5384 = vpack.c.b16 %v5180, %v5176
    %v5385 = vpack.c.b16 %v5181, %v5177
    %v5386 = vpack.c.b16 %v5182, %v5178
    %v5387 = vpack.c.b16 %v5187, %v5183
    %v5388 = vpack.c.b16 %v5188, %v5184
    %v5389 = vpack.c.b16 %v5189, %v5185
    %v5390 = vpack.c.b16 %v5190, %v5186
    %v5391 = vpack.c.b16 %v5195, %v5191
    %v5392 = vpack.c.b16 %v5196, %v5192
    %v5393 = vpack.c.b16 %v5197, %v5193
    %v5394 = vpack.c.b16 %v5198, %v5194
    %v5395 = vpack.c.b16 %v5203, %v5199
    %v5396 = vpack.c.b16 %v5204, %v5200
    %v5397 = vpack.c.b16 %v5205, %v5201
    %v5398 = vpack.c.b16 %v5206, %v5202
    %v5399 = vpack.c.b16 %v5211, %v5207
    %v5400 = vpack.c.b16 %v5212, %v5208
    %v5401 = vpack.c.b16 %v5213, %v5209
    %v5402 = vpack.c.b16 %v5214, %v5210
    %v5403 = vpack.c.b16 %v5219, %v5215
    %v5404 = vpack.c.b16 %v5220, %v5216
    %v5405 = vpack.c.b16 %v5221, %v5217
    %v5406 = vpack.c.b16 %v5222, %v5218
    %v5407 = vpack.c.b16 %v5227, %v5223
    %v5408 = vpack.c.b16 %v5228, %v5224
    %v5409 = vpack.c.b16 %v5229, %v5225
    %v5410 = vpack.c.b16 %v5230, %v5226
    %v5411 = vpack.c.b16 %v5235, %v5231
    %v5412 = vpack.c.b16 %v5236, %v5232
    %v5413 = vpack.c.b16 %v5237, %v5233
    %v5414 = vpack.c.b16 %v5238, %v5234
    %v5415 = vpack.c.b16 %v5243, %v5239
    %v5416 = vpack.c.b16 %v5244, %v5240
    %v5417 = vpack.c.b16 %v5245, %v5241
    %v5418 = vpack.c.b16 %v5246, %v5242
    %v5419 = vpack.c.b16 %v5251, %v5247
    %v5420 = vpack.c.b16 %v5252, %v5248
    %v5421 = vpack.c.b16 %v5253, %v5249
    %v5422 = vpack.c.b16 %v5254, %v5250
    %v5423 = vpack.c.b16 %v5259, %v5255
    %v5424 = vpack.c.b16 %v5260, %v5256
    %v5425 = vpack.c.b16 %v5261, %v5257
    %v5426 = vpack.c.b16 %v5262, %v5258
    %v5427 = vpack.c.b16 %v5267, %v5263
    %v5428 = vpack.c.b16 %v5268, %v5264
    %v5429 = vpack.c.b16 %v5269, %v5265
    %v5430 = vpack.c.b16 %v5270, %v5266
    %v5431 = vpack.c.b16 %v5275, %v5271
    %v5432 = vpack.c.b16 %v5276, %v5272
    %v5433 = vpack.c.b16 %v5277, %v5273
    %v5434 = vpack.c.b16 %v5278, %v5274
    %v5435 = vpack.c.b16 %v5283, %v5279
    %v5436 = vpack.c.b16 %v5284, %v5280
    %v5437 = vpack.c.b16 %v5285, %v5281
    %v5438 = vpack.c.b16 %v5286, %v5282
    %v5439 = vpack.c.b16 %v5291, %v5287
    %v5440 = vpack.c.b16 %v5292, %v5288
    %v5441 = vpack.c.b16 %v5293, %v5289
    %v5442 = vpack.c.b16 %v5294, %v5290
    %v5443 = vpack.c.b16 %v5299, %v5295
    %v5444 = vpack.c.b16 %v5300, %v5296
    %v5445 = vpack.c.b16 %v5301, %v5297
    %v5446 = vpack.c.b16 %v5302, %v5298
    %v5447 = vpack.c.b16 %v5307, %v5303
    %v5448 = vpack.c.b16 %v5308, %v5304
    %v5449 = vpack.c.b16 %v5309, %v5305
    %v5450 = vpack.c.b16 %v5310, %v5306
    %v5451 = vpack.c.b16 %v5315, %v5311
    %v5452 = vpack.c.b16 %v5316, %v5312
    %v5453 = vpack.c.b16 %v5317, %v5313
    %v5454 = vpack.c.b16 %v5318, %v5314
    %v5455 = vpack.c.b16 %v5323, %v5319
    %v5456 = vpack.c.b16 %v5324, %v5320
    %v5457 = vpack.c.b16 %v5325, %v5321
    %v5458 = vpack.c.b16 %v5326, %v5322
    %v5459 = vpack.c.b16 %v5331, %v5327
    %v5460 = vpack.c.b16 %v5332, %v5328
    %v5461 = vpack.c.b16 %v5333, %v5329
    %v5462 = vpack.c.b16 %v5334, %v5330
    %5591 = vmatprep.subr.bf16.mxu0 %v5336
    %5592 = vmatpush1.bf16.msra.mxu0 %v5335
    %5593 = vmatprep.subr.bf16.mxu0 %v5340
    %5594 = vmatpush1.bf16.msra.mxu0 %v5339
    %5595 = vmatprep.subr.bf16.mxu0 %v5344
    %5596 = vmatpush1.bf16.msra.mxu0 %v5343
    %5597 = vmatprep.subr.bf16.mxu0 %v5348
    %5598 = vmatpush1.bf16.msra.mxu0 %v5347
    %5599 = vmatprep.subr.bf16.mxu0 %v5352
    %5600 = vmatpush1.bf16.msra.mxu0 %v5351
    %5601 = vmatprep.subr.bf16.mxu0 %v5356
    %5602 = vmatpush1.bf16.msra.mxu0 %v5355
    %5603 = vmatprep.subr.bf16.mxu0 %v5360
    %5604 = vmatpush1.bf16.msra.mxu0 %v5359
    %5605 = vmatprep.subr.bf16.mxu0 %v5364
    %5606 = vmatpush1.bf16.msra.mxu0 %v5363
    %5607 = vmatprep.subr.bf16.mxu0 %v5368
    %5608 = vmatpush1.bf16.msra.mxu0 %v5367
    %5609 = vmatprep.subr.bf16.mxu0 %v5372
    %5610 = vmatpush1.bf16.msra.mxu0 %v5371
    %5611 = vmatprep.subr.bf16.mxu0 %v5376
    %5612 = vmatpush1.bf16.msra.mxu0 %v5375
    %5613 = vmatprep.subr.bf16.mxu0 %v5380
    %5614 = vmatpush1.bf16.msra.mxu0 %v5379
    %5615 = vmatprep.subr.bf16.mxu0 %v5384
    %5616 = vmatpush1.bf16.msra.mxu0 %v5383
    %5617 = vmatprep.subr.bf16.mxu0 %v5388
    %5618 = vmatpush1.bf16.msra.mxu0 %v5387
    %5619 = vmatprep.subr.bf16.mxu0 %v5392
    %5620 = vmatpush1.bf16.msra.mxu0 %v5391
    %5621 = vmatprep.subr.bf16.mxu0 %v5396
    %5622 = vmatpush1.bf16.msra.mxu0 %v5395
    %5623 = vmatprep.mubr.bf16.mxu0 %v4627
    %5624 = vmatmul.mubr.bf16.gmra.mrb[0].mxu0 %v4626
    %v5625 = vpop.f32.mrb[0].mxu0
    %v5626 = vadd.f32 0.0, %v5625
    %v5627 = vpop.f32.mrb[0].mxu0
    %v5628 = vadd.f32 0.0, %v5627
    %v5629 = vpop.f32.mrb[0].mxu0
    %v5630 = vadd.f32 0.0, %v5629
    %v5631 = vpop.f32.mrb[0].mxu0
    %v5632 = vadd.f32 0.0, %v5631
    %5633 = vmatprep.mubr.bf16.mxu0 %v4631
    %5634 = vmatmul.mubr.bf16.gmra.mrb[0].mxu0 %v4630
    %v5635 = vpop.f32.mrb[0].mxu0
    %v5636 = vadd.f32 0.0, %v5635
    %v5637 = vpop.f32.mrb[0].mxu0
    %v5638 = vadd.f32 0.0, %v5637
    %v5639 = vpop.f32.mrb[0].mxu0
    %v5640 = vadd.f32 0.0, %v5639
    %v5641 = vpop.f32.mrb[0].mxu0
    %v5642 = vadd.f32 0.0, %v5641
    %5643 = vdwg.mxu0
    %5644 = vmatprep.subr.bf16.mxu0 %v5400
    %5645 = vmatpush1.bf16.msra.mxu0 %v5399
    %5646 = vmatprep.subr.bf16.mxu0 %v5404
    %5647 = vmatpush1.bf16.msra.mxu0 %v5403
    %5648 = vmatprep.subr.bf16.mxu0 %v5408
    %5649 = vmatpush1.bf16.msra.mxu0 %v5407
    %5650 = vmatprep.subr.bf16.mxu0 %v5412
    %5651 = vmatpush1.bf16.msra.mxu0 %v5411
    %5652 = vmatprep.subr.bf16.mxu0 %v5416
    %5653 = vmatpush1.bf16.msra.mxu0 %v5415
    %5654 = vmatprep.subr.bf16.mxu0 %v5420
    %5655 = vmatpush1.bf16.msra.mxu0 %v5419
    %5656 = vmatprep.subr.bf16.mxu0 %v5424
    %5657 = vmatpush1.bf16.msra.mxu0 %v5423
    %5658 = vmatprep.subr.bf16.mxu0 %v5428
    %5659 = vmatpush1.bf16.msra.mxu0 %v5427
    %5660 = vmatprep.subr.bf16.mxu0 %v5432
    %5661 = vmatpush1.bf16.msra.mxu0 %v5431
    %5662 = vmatprep.subr.bf16.mxu0 %v5436
    %5663 = vmatpush1.bf16.msra.mxu0 %v5435
    %5664 = vmatprep.subr.bf16.mxu0 %v5440
    %5665 = vmatpush1.bf16.msra.mxu0 %v5439
    %5666 = vmatprep.subr.bf16.mxu0 %v5444
    %5667 = vmatpush1.bf16.msra.mxu0 %v5443
    %5668 = vmatprep.subr.bf16.mxu0 %v5448
    %5669 = vmatpush1.bf16.msra.mxu0 %v5447
    %5670 = vmatprep.subr.bf16.mxu0 %v5452
    %5671 = vmatpush1.bf16.msra.mxu0 %v5451
    %5672 = vmatprep.subr.bf16.mxu0 %v5456
    %5673 = vmatpush1.bf16.msra.mxu0 %v5455
    %5674 = vmatprep.subr.bf16.mxu0 %v5460
    %5675 = vmatpush1.bf16.msra.mxu0 %v5459
    %5676 = vmatprep.mubr.bf16.mxu0 %v4629
    %5677 = vmatmul.mubr.bf16.gmra.mrb[0].mxu0 %v4628
    %v5678 = vpop.f32.mrb[0].mxu0
    %v5679 = vadd.f32 %v5626, %v5678
    %v5680 = vpop.f32.mrb[0].mxu0
    %v5681 = vadd.f32 %v5628, %v5680
    %v5682 = vpop.f32.mrb[0].mxu0
    %v5683 = vadd.f32 %v5630, %v5682
    %v5684 = vpop.f32.mrb[0].mxu0
    %v5685 = vadd.f32 %v5632, %v5684
    %5686 = vmatprep.mubr.bf16.mxu0 %v4633
    %5687 = vmatmul.mubr.bf16.gmra.mrb[0].mxu0 %v4632
    %v5688 = vpop.f32.mrb[0].mxu0
    %v5689 = vadd.f32 %v5636, %v5688
    %v5690 = vpop.f32.mrb[0].mxu0
    %v5691 = vadd.f32 %v5638, %v5690
    %v5692 = vpop.f32.mrb[0].mxu0
    %v5693 = vadd.f32 %v5640, %v5692
    %v5694 = vpop.f32.mrb[0].mxu0
    %v5695 = vadd.f32 %v5642, %v5694
    %5696 = vdwg.mxu0
    %5697 = vmatprep.subr.bf16.mxu0 %v5338
    %5698 = vmatpush1.bf16.msra.mxu0 %v5337
    %5699 = vmatprep.subr.bf16.mxu0 %v5342
    %5700 = vmatpush1.bf16.msra.mxu0 %v5341
    %5701 = vmatprep.subr.bf16.mxu0 %v5346
    %5702 = vmatpush1.bf16.msra.mxu0 %v5345
    %5703 = vmatprep.subr.bf16.mxu0 %v5350
    %5704 = vmatpush1.bf16.msra.mxu0 %v5349
    %5705 = vmatprep.subr.bf16.mxu0 %v5354
    %5706 = vmatpush1.bf16.msra.mxu0 %v5353
    %5707 = vmatprep.subr.bf16.mxu0 %v5358
    %5708 = vmatpush1.bf16.msra.mxu0 %v5357
    %5709 = vmatprep.subr.bf16.mxu0 %v5362
    %5710 = vmatpush1.bf16.msra.mxu0 %v5361
    %5711 = vmatprep.subr.bf16.mxu0 %v5366
    %5712 = vmatpush1.bf16.msra.mxu0 %v5365
    %5713 = vmatprep.subr.bf16.mxu0 %v5370
    %5714 = vmatpush1.bf16.msra.mxu0 %v5369
    %5715 = vmatprep.subr.bf16.mxu0 %v5374
    %5716 = vmatpush1.bf16.msra.mxu0 %v5373
    %5717 = vmatprep.subr.bf16.mxu0 %v5378
    %5718 = vmatpush1.bf16.msra.mxu0 %v5377
    %5719 = vmatprep.subr.bf16.mxu0 %v5382
    %5720 = vmatpush1.bf16.msra.mxu0 %v5381
    %5721 = vmatprep.subr.bf16.mxu0 %v5386
    %5722 = vmatpush1.bf16.msra.mxu0 %v5385
    %5723 = vmatprep.subr.bf16.mxu0 %v5390
    %5724 = vmatpush1.bf16.msra.mxu0 %v5389
    %5725 = vmatprep.subr.bf16.mxu0 %v5394
    %5726 = vmatpush1.bf16.msra.mxu0 %v5393
    %5727 = vmatprep.subr.bf16.mxu0 %v5398
    %5728 = vmatpush1.bf16.msra.mxu0 %v5397
    %5729 = vmatprep.mubr.bf16.mxu0 %v4627
    %5730 = vmatmul.mubr.bf16.gmra.mrb[0].mxu0 %v4626
    %v5731 = vpop.f32.mrb[0].mxu0
    %v5732 = vadd.f32 0.0, %v5731
    %v5733 = vpop.f32.mrb[0].mxu0
    %v5734 = vadd.f32 0.0, %v5733
    %v5735 = vpop.f32.mrb[0].mxu0
    %v5736 = vadd.f32 0.0, %v5735
    %v5737 = vpop.f32.mrb[0].mxu0
    %v5738 = vadd.f32 0.0, %v5737
    %5739 = vmatprep.mubr.bf16.mxu0 %v4631
    %5740 = vmatmul.mubr.bf16.gmra.mrb[0].mxu0 %v4630
    %v5741 = vpop.f32.mrb[0].mxu0
    %v5742 = vadd.f32 0.0, %v5741
    %v5743 = vpop.f32.mrb[0].mxu0
    %v5744 = vadd.f32 0.0, %v5743
    %v5745 = vpop.f32.mrb[0].mxu0
    %v5746 = vadd.f32 0.0, %v5745
    %v5747 = vpop.f32.mrb[0].mxu0
    %v5748 = vadd.f32 0.0, %v5747
    %5749 = vdwg.mxu0
    %5750 = vmatprep.subr.bf16.mxu0 %v5402
    %5751 = vmatpush1.bf16.msra.mxu0 %v5401
    %5752 = vmatprep.subr.bf16.mxu0 %v5406
    %5753 = vmatpush1.bf16.msra.mxu0 %v5405
    %5754 = vmatprep.subr.bf16.mxu0 %v5410
    %5755 = vmatpush1.bf16.msra.mxu0 %v5409
    %5756 = vmatprep.subr.bf16.mxu0 %v5414
    %5757 = vmatpush1.bf16.msra.mxu0 %v5413
    %5758 = vmatprep.subr.bf16.mxu0 %v5418
    %5759 = vmatpush1.bf16.msra.mxu0 %v5417
    %5760 = vmatprep.subr.bf16.mxu0 %v5422
    %5761 = vmatpush1.bf16.msra.mxu0 %v5421
    %5762 = vmatprep.subr.bf16.mxu0 %v5426
    %5763 = vmatpush1.bf16.msra.mxu0 %v5425
    %5764 = vmatprep.subr.bf16.mxu0 %v5430
    %5765 = vmatpush1.bf16.msra.mxu0 %v5429
    %5766 = vmatprep.subr.bf16.mxu0 %v5434
    %5767 = vmatpush1.bf16.msra.mxu0 %v5433
    %5768 = vmatprep.subr.bf16.mxu0 %v5438
    %5769 = vmatpush1.bf16.msra.mxu0 %v5437
    %5770 = vmatprep.subr.bf16.mxu0 %v5442
    %5771 = vmatpush1.bf16.msra.mxu0 %v5441
    %5772 = vmatprep.subr.bf16.mxu0 %v5446
    %5773 = vmatpush1.bf16.msra.mxu0 %v5445
    %5774 = vmatprep.subr.bf16.mxu0 %v5450
    %5775 = vmatpush1.bf16.msra.mxu0 %v5449
    %5776 = vmatprep.subr.bf16.mxu0 %v5454
    %5777 = vmatpush1.bf16.msra.mxu0 %v5453
    %5778 = vmatprep.subr.bf16.mxu0 %v5458
    %5779 = vmatpush1.bf16.msra.mxu0 %v5457
    %5780 = vmatprep.subr.bf16.mxu0 %v5462
    %5781 = vmatpush1.bf16.msra.mxu0 %v5461
    %5782 = vmatprep.mubr.bf16.mxu0 %v4629
    %5783 = vmatmul.mubr.bf16.gmra.mrb[0].mxu0 %v4628
    %v5784 = vpop.f32.mrb[0].mxu0
    %v5785 = vadd.f32 %v5732, %v5784
    %v5786 = vpop.f32.mrb[0].mxu0
    %v5787 = vadd.f32 %v5734, %v5786
    %v5788 = vpop.f32.mrb[0].mxu0
    %v5789 = vadd.f32 %v5736, %v5788
    %v5790 = vpop.f32.mrb[0].mxu0
    %v5791 = vadd.f32 %v5738, %v5790
    %5792 = vmatprep.mubr.bf16.mxu0 %v4633
    %5793 = vmatmul.mubr.bf16.gmra.mrb[0].mxu0 %v4632
    %v5794 = vpop.f32.mrb[0].mxu0
    %v5795 = vadd.f32 %v5742, %v5794
    %v5796 = vpop.f32.mrb[0].mxu0
    %v5797 = vadd.f32 %v5744, %v5796
    %v5798 = vpop.f32.mrb[0].mxu0
    %v5799 = vadd.f32 %v5746, %v5798
    %v5800 = vpop.f32.mrb[0].mxu0
    %v5801 = vadd.f32 %v5748, %v5800
    %5802 = vdwg.mxu0
    %s5803 = scalar_lea.vmem [#allocation7], 2048
    %v5804 = vld [vmem:[%s5803] sm:$0xff]
    %v5805 = vld [vmem:[%s5803 + $0x8] sm:$0xff]
    %v5806 = vld [vmem:[%s5803 + $0x10] sm:$0xff]
    %v5807 = vld [vmem:[%s5803 + $0x18] sm:$0xff]
    %v5808 = vld [vmem:[%s5803 + $0x20] sm:$0xff]
    %v5809 = vld [vmem:[%s5803 + $0x28] sm:$0xff]
    %v5810 = vld [vmem:[%s5803 + $0x30] sm:$0xff]
    %v5811 = vld [vmem:[%s5803 + $0x38] sm:$0xff]
    %v5812 = vld [vmem:[%s5803 + $0x40] sm:$0xff]
    %v5813 = vld [vmem:[%s5803 + $0x48] sm:$0xff]
    %v5814 = vld [vmem:[%s5803 + $0x50] sm:$0xff]
    %v5815 = vld [vmem:[%s5803 + $0x58] sm:$0xff]
    %v5816 = vld [vmem:[%s5803 + $0x60] sm:$0xff]
    %v5817 = vld [vmem:[%s5803 + $0x68] sm:$0xff]
    %v5818 = vld [vmem:[%s5803 + $0x70] sm:$0xff]
    %v5819 = vld [vmem:[%s5803 + $0x78] sm:$0xff]
    %v5820 = vld [vmem:[%s5803 + $0x80] sm:$0xff]
    %v5821 = vld [vmem:[%s5803 + $0x88] sm:$0xff]
    %v5822 = vld [vmem:[%s5803 + $0x90] sm:$0xff]
    %v5823 = vld [vmem:[%s5803 + $0x98] sm:$0xff]
    %v5824 = vld [vmem:[%s5803 + $0xa0] sm:$0xff]
    %v5825 = vld [vmem:[%s5803 + $0xa8] sm:$0xff]
    %v5826 = vld [vmem:[%s5803 + $0xb0] sm:$0xff]
    %v5827 = vld [vmem:[%s5803 + $0xb8] sm:$0xff]
    %v5828 = vld [vmem:[%s5803 + $0xc0] sm:$0xff]
    %v5829 = vld [vmem:[%s5803 + $0xc8] sm:$0xff]
    %v5830 = vld [vmem:[%s5803 + $0xd0] sm:$0xff]
    %v5831 = vld [vmem:[%s5803 + $0xd8] sm:$0xff]
    %v5832 = vld [vmem:[%s5803 + $0xe0] sm:$0xff]
    %v5833 = vld [vmem:[%s5803 + $0xe8] sm:$0xff]
    %v5834 = vld [vmem:[%s5803 + $0xf0] sm:$0xff]
    %v5835 = vld [vmem:[%s5803 + $0xf8] sm:$0xff]
    %v5836 = vld [vmem:[%s5803 + $0x100] sm:$0xff]
    %v5837 = vld [vmem:[%s5803 + $0x108] sm:$0xff]
    %v5838 = vld [vmem:[%s5803 + $0x110] sm:$0xff]
    %v5839 = vld [vmem:[%s5803 + $0x118] sm:$0xff]
    %v5840 = vld [vmem:[%s5803 + $0x120] sm:$0xff]
    %v5841 = vld [vmem:[%s5803 + $0x128] sm:$0xff]
    %v5842 = vld [vmem:[%s5803 + $0x130] sm:$0xff]
    %v5843 = vld [vmem:[%s5803 + $0x138] sm:$0xff]
    %v5844 = vld [vmem:[%s5803 + $0x140] sm:$0xff]
    %v5845 = vld [vmem:[%s5803 + $0x148] sm:$0xff]
    %v5846 = vld [vmem:[%s5803 + $0x150] sm:$0xff]
    %v5847 = vld [vmem:[%s5803 + $0x158] sm:$0xff]
    %v5848 = vld [vmem:[%s5803 + $0x160] sm:$0xff]
    %v5849 = vld [vmem:[%s5803 + $0x168] sm:$0xff]
    %v5850 = vld [vmem:[%s5803 + $0x170] sm:$0xff]
    %v5851 = vld [vmem:[%s5803 + $0x178] sm:$0xff]
    %v5852 = vld [vmem:[%s5803 + $0x180] sm:$0xff]
    %v5853 = vld [vmem:[%s5803 + $0x188] sm:$0xff]
    %v5854 = vld [vmem:[%s5803 + $0x190] sm:$0xff]
    %v5855 = vld [vmem:[%s5803 + $0x198] sm:$0xff]
    %v5856 = vld [vmem:[%s5803 + $0x1a0] sm:$0xff]
    %v5857 = vld [vmem:[%s5803 + $0x1a8] sm:$0xff]
    %v5858 = vld [vmem:[%s5803 + $0x1b0] sm:$0xff]
    %v5859 = vld [vmem:[%s5803 + $0x1b8] sm:$0xff]
    %v5860 = vld [vmem:[%s5803 + $0x1c0] sm:$0xff]
    %v5861 = vld [vmem:[%s5803 + $0x1c8] sm:$0xff]
    %v5862 = vld [vmem:[%s5803 + $0x1d0] sm:$0xff]
    %v5863 = vld [vmem:[%s5803 + $0x1d8] sm:$0xff]
    %v5864 = vld [vmem:[%s5803 + $0x1e0] sm:$0xff]
    %v5865 = vld [vmem:[%s5803 + $0x1e8] sm:$0xff]
    %v5866 = vld [vmem:[%s5803 + $0x1f0] sm:$0xff]
    %v5867 = vld [vmem:[%s5803 + $0x1f8] sm:$0xff]
    %v5868 = vld [vmem:[%s5803 + $0x200] sm:$0xff]
    %v5869 = vld [vmem:[%s5803 + $0x208] sm:$0xff]
    %v5870 = vld [vmem:[%s5803 + $0x210] sm:$0xff]
    %v5871 = vld [vmem:[%s5803 + $0x218] sm:$0xff]
    %v5872 = vld [vmem:[%s5803 + $0x220] sm:$0xff]
    %v5873 = vld [vmem:[%s5803 + $0x228] sm:$0xff]
    %v5874 = vld [vmem:[%s5803 + $0x230] sm:$0xff]
    %v5875 = vld [vmem:[%s5803 + $0x238] sm:$0xff]
    %v5876 = vld [vmem:[%s5803 + $0x240] sm:$0xff]
    %v5877 = vld [vmem:[%s5803 + $0x248] sm:$0xff]
    %v5878 = vld [vmem:[%s5803 + $0x250] sm:$0xff]
    %v5879 = vld [vmem:[%s5803 + $0x258] sm:$0xff]
    %v5880 = vld [vmem:[%s5803 + $0x260] sm:$0xff]
    %v5881 = vld [vmem:[%s5803 + $0x268] sm:$0xff]
    %v5882 = vld [vmem:[%s5803 + $0x270] sm:$0xff]
    %v5883 = vld [vmem:[%s5803 + $0x278] sm:$0xff]
    %v5884 = vld [vmem:[%s5803 + $0x280] sm:$0xff]
    %v5885 = vld [vmem:[%s5803 + $0x288] sm:$0xff]
    %v5886 = vld [vmem:[%s5803 + $0x290] sm:$0xff]
    %v5887 = vld [vmem:[%s5803 + $0x298] sm:$0xff]
    %v5888 = vld [vmem:[%s5803 + $0x2a0] sm:$0xff]
    %v5889 = vld [vmem:[%s5803 + $0x2a8] sm:$0xff]
    %v5890 = vld [vmem:[%s5803 + $0x2b0] sm:$0xff]
    %v5891 = vld [vmem:[%s5803 + $0x2b8] sm:$0xff]
    %v5892 = vld [vmem:[%s5803 + $0x2c0] sm:$0xff]
    %v5893 = vld [vmem:[%s5803 + $0x2c8] sm:$0xff]
    %v5894 = vld [vmem:[%s5803 + $0x2d0] sm:$0xff]
    %v5895 = vld [vmem:[%s5803 + $0x2d8] sm:$0xff]
    %v5896 = vld [vmem:[%s5803 + $0x2e0] sm:$0xff]
    %v5897 = vld [vmem:[%s5803 + $0x2e8] sm:$0xff]
    %v5898 = vld [vmem:[%s5803 + $0x2f0] sm:$0xff]
    %v5899 = vld [vmem:[%s5803 + $0x2f8] sm:$0xff]
    %v5900 = vld [vmem:[%s5803 + $0x300] sm:$0xff]
    %v5901 = vld [vmem:[%s5803 + $0x308] sm:$0xff]
    %v5902 = vld [vmem:[%s5803 + $0x310] sm:$0xff]
    %v5903 = vld [vmem:[%s5803 + $0x318] sm:$0xff]
    %v5904 = vld [vmem:[%s5803 + $0x320] sm:$0xff]
    %v5905 = vld [vmem:[%s5803 + $0x328] sm:$0xff]
    %v5906 = vld [vmem:[%s5803 + $0x330] sm:$0xff]
    %v5907 = vld [vmem:[%s5803 + $0x338] sm:$0xff]
    %v5908 = vld [vmem:[%s5803 + $0x340] sm:$0xff]
    %v5909 = vld [vmem:[%s5803 + $0x348] sm:$0xff]
    %v5910 = vld [vmem:[%s5803 + $0x350] sm:$0xff]
    %v5911 = vld [vmem:[%s5803 + $0x358] sm:$0xff]
    %v5912 = vld [vmem:[%s5803 + $0x360] sm:$0xff]
    %v5913 = vld [vmem:[%s5803 + $0x368] sm:$0xff]
    %v5914 = vld [vmem:[%s5803 + $0x370] sm:$0xff]
    %v5915 = vld [vmem:[%s5803 + $0x378] sm:$0xff]
    %v5916 = vld [vmem:[%s5803 + $0x380] sm:$0xff]
    %v5917 = vld [vmem:[%s5803 + $0x388] sm:$0xff]
    %v5918 = vld [vmem:[%s5803 + $0x390] sm:$0xff]
    %v5919 = vld [vmem:[%s5803 + $0x398] sm:$0xff]
    %v5920 = vld [vmem:[%s5803 + $0x3a0] sm:$0xff]
    %v5921 = vld [vmem:[%s5803 + $0x3a8] sm:$0xff]
    %v5922 = vld [vmem:[%s5803 + $0x3b0] sm:$0xff]
    %v5923 = vld [vmem:[%s5803 + $0x3b8] sm:$0xff]
    %v5924 = vld [vmem:[%s5803 + $0x3c0] sm:$0xff]
    %v5925 = vld [vmem:[%s5803 + $0x3c8] sm:$0xff]
    %v5926 = vld [vmem:[%s5803 + $0x3d0] sm:$0xff]
    %v5927 = vld [vmem:[%s5803 + $0x3d8] sm:$0xff]
    %v5928 = vld [vmem:[%s5803 + $0x3e0] sm:$0xff]
    %v5929 = vld [vmem:[%s5803 + $0x3e8] sm:$0xff]
    %v5930 = vld [vmem:[%s5803 + $0x3f0] sm:$0xff]
    %v5931 = vld [vmem:[%s5803 + $0x3f8] sm:$0xff]
    %v6060 = vunpack.c.l.b16 %v5804
    %v6061 = vunpack.c.h.b16 %v5804
    %v6062 = vunpack.c.l.b16 %v5805
    %v6063 = vunpack.c.h.b16 %v5805
    %v6064 = vunpack.c.l.b16 %v5806
    %v6065 = vunpack.c.h.b16 %v5806
    %v6066 = vunpack.c.l.b16 %v5807
    %v6067 = vunpack.c.h.b16 %v5807
    %v6068 = vunpack.c.l.b16 %v5808
    %v6069 = vunpack.c.h.b16 %v5808
    %v6070 = vunpack.c.l.b16 %v5809
    %v6071 = vunpack.c.h.b16 %v5809
    %v6072 = vunpack.c.l.b16 %v5810
    %v6073 = vunpack.c.h.b16 %v5810
    %v6074 = vunpack.c.l.b16 %v5811
    %v6075 = vunpack.c.h.b16 %v5811
    %v6076 = vunpack.c.l.b16 %v5812
    %v6077 = vunpack.c.h.b16 %v5812
    %v6078 = vunpack.c.l.b16 %v5813
    %v6079 = vunpack.c.h.b16 %v5813
    %v6080 = vunpack.c.l.b16 %v5814
    %v6081 = vunpack.c.h.b16 %v5814
    %v6082 = vunpack.c.l.b16 %v5815
    %v6083 = vunpack.c.h.b16 %v5815
    %v6084 = vunpack.c.l.b16 %v5816
    %v6085 = vunpack.c.h.b16 %v5816
    %v6086 = vunpack.c.l.b16 %v5817
    %v6087 = vunpack.c.h.b16 %v5817
    %v6088 = vunpack.c.l.b16 %v5818
    %v6089 = vunpack.c.h.b16 %v5818
    %v6090 = vunpack.c.l.b16 %v5819
    %v6091 = vunpack.c.h.b16 %v5819
    %v6092 = vunpack.c.l.b16 %v5820
    %v6093 = vunpack.c.h.b16 %v5820
    %v6094 = vunpack.c.l.b16 %v5821
    %v6095 = vunpack.c.h.b16 %v5821
    %v6096 = vunpack.c.l.b16 %v5822
    %v6097 = vunpack.c.h.b16 %v5822
    %v6098 = vunpack.c.l.b16 %v5823
    %v6099 = vunpack.c.h.b16 %v5823
    %v6100 = vunpack.c.l.b16 %v5824
    %v6101 = vunpack.c.h.b16 %v5824
    %v6102 = vunpack.c.l.b16 %v5825
    %v6103 = vunpack.c.h.b16 %v5825
    %v6104 = vunpack.c.l.b16 %v5826
    %v6105 = vunpack.c.h.b16 %v5826
    %v6106 = vunpack.c.l.b16 %v5827
    %v6107 = vunpack.c.h.b16 %v5827
    %v6108 = vunpack.c.l.b16 %v5828
    %v6109 = vunpack.c.h.b16 %v5828
    %v6110 = vunpack.c.l.b16 %v5829
    %v6111 = vunpack.c.h.b16 %v5829
    %v6112 = vunpack.c.l.b16 %v5830
    %v6113 = vunpack.c.h.b16 %v5830
    %v6114 = vunpack.c.l.b16 %v5831
    %v6115 = vunpack.c.h.b16 %v5831
    %v6116 = vunpack.c.l.b16 %v5832
    %v6117 = vunpack.c.h.b16 %v5832
    %v6118 = vunpack.c.l.b16 %v5833
    %v6119 = vunpack.c.h.b16 %v5833
    %v6120 = vunpack.c.l.b16 %v5834
    %v6121 = vunpack.c.h.b16 %v5834
    %v6122 = vunpack.c.l.b16 %v5835
    %v6123 = vunpack.c.h.b16 %v5835
    %v6124 = vunpack.c.l.b16 %v5836
    %v6125 = vunpack.c.h.b16 %v5836
    %v6126 = vunpack.c.l.b16 %v5837
    %v6127 = vunpack.c.h.b16 %v5837
    %v6128 = vunpack.c.l.b16 %v5838
    %v6129 = vunpack.c.h.b16 %v5838
    %v6130 = vunpack.c.l.b16 %v5839
    %v6131 = vunpack.c.h.b16 %v5839
    %v6132 = vunpack.c.l.b16 %v5840
    %v6133 = vunpack.c.h.b16 %v5840
    %v6134 = vunpack.c.l.b16 %v5841
    %v6135 = vunpack.c.h.b16 %v5841
    %v6136 = vunpack.c.l.b16 %v5842
    %v6137 = vunpack.c.h.b16 %v5842
    %v6138 = vunpack.c.l.b16 %v5843
    %v6139 = vunpack.c.h.b16 %v5843
    %v6140 = vunpack.c.l.b16 %v5844
    %v6141 = vunpack.c.h.b16 %v5844
    %v6142 = vunpack.c.l.b16 %v5845
    %v6143 = vunpack.c.h.b16 %v5845
    %v6144 = vunpack.c.l.b16 %v5846
    %v6145 = vunpack.c.h.b16 %v5846
    %v6146 = vunpack.c.l.b16 %v5847
    %v6147 = vunpack.c.h.b16 %v5847
    %v6148 = vunpack.c.l.b16 %v5848
    %v6149 = vunpack.c.h.b16 %v5848
    %v6150 = vunpack.c.l.b16 %v5849
    %v6151 = vunpack.c.h.b16 %v5849
    %v6152 = vunpack.c.l.b16 %v5850
    %v6153 = vunpack.c.h.b16 %v5850
    %v6154 = vunpack.c.l.b16 %v5851
    %v6155 = vunpack.c.h.b16 %v5851
    %v6156 = vunpack.c.l.b16 %v5852
    %v6157 = vunpack.c.h.b16 %v5852
    %v6158 = vunpack.c.l.b16 %v5853
    %v6159 = vunpack.c.h.b16 %v5853
    %v6160 = vunpack.c.l.b16 %v5854
    %v6161 = vunpack.c.h.b16 %v5854
    %v6162 = vunpack.c.l.b16 %v5855
    %v6163 = vunpack.c.h.b16 %v5855
    %v6164 = vunpack.c.l.b16 %v5856
    %v6165 = vunpack.c.h.b16 %v5856
    %v6166 = vunpack.c.l.b16 %v5857
    %v6167 = vunpack.c.h.b16 %v5857
    %v6168 = vunpack.c.l.b16 %v5858
    %v6169 = vunpack.c.h.b16 %v5858
    %v6170 = vunpack.c.l.b16 %v5859
    %v6171 = vunpack.c.h.b16 %v5859
    %v6172 = vunpack.c.l.b16 %v5860
    %v6173 = vunpack.c.h.b16 %v5860
    %v6174 = vunpack.c.l.b16 %v5861
    %v6175 = vunpack.c.h.b16 %v5861
    %v6176 = vunpack.c.l.b16 %v5862
    %v6177 = vunpack.c.h.b16 %v5862
    %v6178 = vunpack.c.l.b16 %v5863
    %v6179 = vunpack.c.h.b16 %v5863
    %v6180 = vunpack.c.l.b16 %v5864
    %v6181 = vunpack.c.h.b16 %v5864
    %v6182 = vunpack.c.l.b16 %v5865
    %v6183 = vunpack.c.h.b16 %v5865
    %v6184 = vunpack.c.l.b16 %v5866
    %v6185 = vunpack.c.h.b16 %v5866
    %v6186 = vunpack.c.l.b16 %v5867
    %v6187 = vunpack.c.h.b16 %v5867
    %v6188 = vunpack.c.l.b16 %v5868
    %v6189 = vunpack.c.h.b16 %v5868
    %v6190 = vunpack.c.l.b16 %v5869
    %v6191 = vunpack.c.h.b16 %v5869
    %v6192 = vunpack.c.l.b16 %v5870
    %v6193 = vunpack.c.h.b16 %v5870
    %v6194 = vunpack.c.l.b16 %v5871
    %v6195 = vunpack.c.h.b16 %v5871
    %v6196 = vunpack.c.l.b16 %v5872
    %v6197 = vunpack.c.h.b16 %v5872
    %v6198 = vunpack.c.l.b16 %v5873
    %v6199 = vunpack.c.h.b16 %v5873
    %v6200 = vunpack.c.l.b16 %v5874
    %v6201 = vunpack.c.h.b16 %v5874
    %v6202 = vunpack.c.l.b16 %v5875
    %v6203 = vunpack.c.h.b16 %v5875
    %v6204 = vunpack.c.l.b16 %v5876
    %v6205 = vunpack.c.h.b16 %v5876
    %v6206 = vunpack.c.l.b16 %v5877
    %v6207 = vunpack.c.h.b16 %v5877
    %v6208 = vunpack.c.l.b16 %v5878
    %v6209 = vunpack.c.h.b16 %v5878
    %v6210 = vunpack.c.l.b16 %v5879
    %v6211 = vunpack.c.h.b16 %v5879
    %v6212 = vunpack.c.l.b16 %v5880
    %v6213 = vunpack.c.h.b16 %v5880
    %v6214 = vunpack.c.l.b16 %v5881
    %v6215 = vunpack.c.h.b16 %v5881
    %v6216 = vunpack.c.l.b16 %v5882
    %v6217 = vunpack.c.h.b16 %v5882
    %v6218 = vunpack.c.l.b16 %v5883
    %v6219 = vunpack.c.h.b16 %v5883
    %v6220 = vunpack.c.l.b16 %v5884
    %v6221 = vunpack.c.h.b16 %v5884
    %v6222 = vunpack.c.l.b16 %v5885
    %v6223 = vunpack.c.h.b16 %v5885
    %v6224 = vunpack.c.l.b16 %v5886
    %v6225 = vunpack.c.h.b16 %v5886
    %v6226 = vunpack.c.l.b16 %v5887
    %v6227 = vunpack.c.h.b16 %v5887
    %v6228 = vunpack.c.l.b16 %v5888
    %v6229 = vunpack.c.h.b16 %v5888
    %v6230 = vunpack.c.l.b16 %v5889
    %v6231 = vunpack.c.h.b16 %v5889
    %v6232 = vunpack.c.l.b16 %v5890
    %v6233 = vunpack.c.h.b16 %v5890
    %v6234 = vunpack.c.l.b16 %v5891
    %v6235 = vunpack.c.h.b16 %v5891
    %v6236 = vunpack.c.l.b16 %v5892
    %v6237 = vunpack.c.h.b16 %v5892
    %v6238 = vunpack.c.l.b16 %v5893
    %v6239 = vunpack.c.h.b16 %v5893
    %v6240 = vunpack.c.l.b16 %v5894
    %v6241 = vunpack.c.h.b16 %v5894
    %v6242 = vunpack.c.l.b16 %v5895
    %v6243 = vunpack.c.h.b16 %v5895
    %v6244 = vunpack.c.l.b16 %v5896
    %v6245 = vunpack.c.h.b16 %v5896
    %v6246 = vunpack.c.l.b16 %v5897
    %v6247 = vunpack.c.h.b16 %v5897
    %v6248 = vunpack.c.l.b16 %v5898
    %v6249 = vunpack.c.h.b16 %v5898
    %v6250 = vunpack.c.l.b16 %v5899
    %v6251 = vunpack.c.h.b16 %v5899
    %v6252 = vunpack.c.l.b16 %v5900
    %v6253 = vunpack.c.h.b16 %v5900
    %v6254 = vunpack.c.l.b16 %v5901
    %v6255 = vunpack.c.h.b16 %v5901
    %v6256 = vunpack.c.l.b16 %v5902
    %v6257 = vunpack.c.h.b16 %v5902
    %v6258 = vunpack.c.l.b16 %v5903
    %v6259 = vunpack.c.h.b16 %v5903
    %v6260 = vunpack.c.l.b16 %v5904
    %v6261 = vunpack.c.h.b16 %v5904
    %v6262 = vunpack.c.l.b16 %v5905
    %v6263 = vunpack.c.h.b16 %v5905
    %v6264 = vunpack.c.l.b16 %v5906
    %v6265 = vunpack.c.h.b16 %v5906
    %v6266 = vunpack.c.l.b16 %v5907
    %v6267 = vunpack.c.h.b16 %v5907
    %v6268 = vunpack.c.l.b16 %v5908
    %v6269 = vunpack.c.h.b16 %v5908
    %v6270 = vunpack.c.l.b16 %v5909
    %v6271 = vunpack.c.h.b16 %v5909
    %v6272 = vunpack.c.l.b16 %v5910
    %v6273 = vunpack.c.h.b16 %v5910
    %v6274 = vunpack.c.l.b16 %v5911
    %v6275 = vunpack.c.h.b16 %v5911
    %v6276 = vunpack.c.l.b16 %v5912
    %v6277 = vunpack.c.h.b16 %v5912
    %v6278 = vunpack.c.l.b16 %v5913
    %v6279 = vunpack.c.h.b16 %v5913
    %v6280 = vunpack.c.l.b16 %v5914
    %v6281 = vunpack.c.h.b16 %v5914
    %v6282 = vunpack.c.l.b16 %v5915
    %v6283 = vunpack.c.h.b16 %v5915
    %v6284 = vunpack.c.l.b16 %v5916
    %v6285 = vunpack.c.h.b16 %v5916
    %v6286 = vunpack.c.l.b16 %v5917
    %v6287 = vunpack.c.h.b16 %v5917
    %v6288 = vunpack.c.l.b16 %v5918
    %v6289 = vunpack.c.h.b16 %v5918
    %v6290 = vunpack.c.l.b16 %v5919
    %v6291 = vunpack.c.h.b16 %v5919
    %v6292 = vunpack.c.l.b16 %v5920
    %v6293 = vunpack.c.h.b16 %v5920
    %v6294 = vunpack.c.l.b16 %v5921
    %v6295 = vunpack.c.h.b16 %v5921
    %v6296 = vunpack.c.l.b16 %v5922
    %v6297 = vunpack.c.h.b16 %v5922
    %v6298 = vunpack.c.l.b16 %v5923
    %v6299 = vunpack.c.h.b16 %v5923
    %v6300 = vunpack.c.l.b16 %v5924
    %v6301 = vunpack.c.h.b16 %v5924
    %v6302 = vunpack.c.l.b16 %v5925
    %v6303 = vunpack.c.h.b16 %v5925
    %v6304 = vunpack.c.l.b16 %v5926
    %v6305 = vunpack.c.h.b16 %v5926
    %v6306 = vunpack.c.l.b16 %v5927
    %v6307 = vunpack.c.h.b16 %v5927
    %v6308 = vunpack.c.l.b16 %v5928
    %v6309 = vunpack.c.h.b16 %v5928
    %v6310 = vunpack.c.l.b16 %v5929
    %v6311 = vunpack.c.h.b16 %v5929
    %v6312 = vunpack.c.l.b16 %v5930
    %v6313 = vunpack.c.h.b16 %v5930
    %v6314 = vunpack.c.l.b16 %v5931
    %v6315 = vunpack.c.h.b16 %v5931
    %v6316 = vpack.c.b16 %v6064, %v6060
    %v6317 = vpack.c.b16 %v6065, %v6061
    %v6318 = vpack.c.b16 %v6066, %v6062
    %v6319 = vpack.c.b16 %v6067, %v6063
    %v6320 = vpack.c.b16 %v6072, %v6068
    %v6321 = vpack.c.b16 %v6073, %v6069
    %v6322 = vpack.c.b16 %v6074, %v6070
    %v6323 = vpack.c.b16 %v6075, %v6071
    %v6324 = vpack.c.b16 %v6080, %v6076
    %v6325 = vpack.c.b16 %v6081, %v6077
    %v6326 = vpack.c.b16 %v6082, %v6078
    %v6327 = vpack.c.b16 %v6083, %v6079
    %v6328 = vpack.c.b16 %v6088, %v6084
    %v6329 = vpack.c.b16 %v6089, %v6085
    %v6330 = vpack.c.b16 %v6090, %v6086
    %v6331 = vpack.c.b16 %v6091, %v6087
    %v6332 = vpack.c.b16 %v6096, %v6092
    %v6333 = vpack.c.b16 %v6097, %v6093
    %v6334 = vpack.c.b16 %v6098, %v6094
    %v6335 = vpack.c.b16 %v6099, %v6095
    %v6336 = vpack.c.b16 %v6104, %v6100
    %v6337 = vpack.c.b16 %v6105, %v6101
    %v6338 = vpack.c.b16 %v6106, %v6102
    %v6339 = vpack.c.b16 %v6107, %v6103
    %v6340 = vpack.c.b16 %v6112, %v6108
    %v6341 = vpack.c.b16 %v6113, %v6109
    %v6342 = vpack.c.b16 %v6114, %v6110
    %v6343 = vpack.c.b16 %v6115, %v6111
    %v6344 = vpack.c.b16 %v6120, %v6116
    %v6345 = vpack.c.b16 %v6121, %v6117
    %v6346 = vpack.c.b16 %v6122, %v6118
    %v6347 = vpack.c.b16 %v6123, %v6119
    %v6348 = vpack.c.b16 %v6128, %v6124
    %v6349 = vpack.c.b16 %v6129, %v6125
    %v6350 = vpack.c.b16 %v6130, %v6126
    %v6351 = vpack.c.b16 %v6131, %v6127
    %v6352 = vpack.c.b16 %v6136, %v6132
    %v6353 = vpack.c.b16 %v6137, %v6133
    %v6354 = vpack.c.b16 %v6138, %v6134
    %v6355 = vpack.c.b16 %v6139, %v6135
    %v6356 = vpack.c.b16 %v6144, %v6140
    %v6357 = vpack.c.b16 %v6145, %v6141
    %v6358 = vpack.c.b16 %v6146, %v6142
    %v6359 = vpack.c.b16 %v6147, %v6143
    %v6360 = vpack.c.b16 %v6152, %v6148
    %v6361 = vpack.c.b16 %v6153, %v6149
    %v6362 = vpack.c.b16 %v6154, %v6150
    %v6363 = vpack.c.b16 %v6155, %v6151
    %v6364 = vpack.c.b16 %v6160, %v6156
    %v6365 = vpack.c.b16 %v6161, %v6157
    %v6366 = vpack.c.b16 %v6162, %v6158
    %v6367 = vpack.c.b16 %v6163, %v6159
    %v6368 = vpack.c.b16 %v6168, %v6164
    %v6369 = vpack.c.b16 %v6169, %v6165
    %v6370 = vpack.c.b16 %v6170, %v6166
    %v6371 = vpack.c.b16 %v6171, %v6167
    %v6372 = vpack.c.b16 %v6176, %v6172
    %v6373 = vpack.c.b16 %v6177, %v6173
    %v6374 = vpack.c.b16 %v6178, %v6174
    %v6375 = vpack.c.b16 %v6179, %v6175
    %v6376 = vpack.c.b16 %v6184, %v6180
    %v6377 = vpack.c.b16 %v6185, %v6181
    %v6378 = vpack.c.b16 %v6186, %v6182
    %v6379 = vpack.c.b16 %v6187, %v6183
    %v6380 = vpack.c.b16 %v6192, %v6188
    %v6381 = vpack.c.b16 %v6193, %v6189
    %v6382 = vpack.c.b16 %v6194, %v6190
    %v6383 = vpack.c.b16 %v6195, %v6191
    %v6384 = vpack.c.b16 %v6200, %v6196
    %v6385 = vpack.c.b16 %v6201, %v6197
    %v6386 = vpack.c.b16 %v6202, %v6198
    %v6387 = vpack.c.b16 %v6203, %v6199
    %v6388 = vpack.c.b16 %v6208, %v6204
    %v6389 = vpack.c.b16 %v6209, %v6205
    %v6390 = vpack.c.b16 %v6210, %v6206
    %v6391 = vpack.c.b16 %v6211, %v6207
    %v6392 = vpack.c.b16 %v6216, %v6212
    %v6393 = vpack.c.b16 %v6217, %v6213
    %v6394 = vpack.c.b16 %v6218, %v6214
    %v6395 = vpack.c.b16 %v6219, %v6215
    %v6396 = vpack.c.b16 %v6224, %v6220
    %v6397 = vpack.c.b16 %v6225, %v6221
    %v6398 = vpack.c.b16 %v6226, %v6222
    %v6399 = vpack.c.b16 %v6227, %v6223
    %v6400 = vpack.c.b16 %v6232, %v6228
    %v6401 = vpack.c.b16 %v6233, %v6229
    %v6402 = vpack.c.b16 %v6234, %v6230
    %v6403 = vpack.c.b16 %v6235, %v6231
    %v6404 = vpack.c.b16 %v6240, %v6236
    %v6405 = vpack.c.b16 %v6241, %v6237
    %v6406 = vpack.c.b16 %v6242, %v6238
    %v6407 = vpack.c.b16 %v6243, %v6239
    %v6408 = vpack.c.b16 %v6248, %v6244
    %v6409 = vpack.c.b16 %v6249, %v6245
    %v6410 = vpack.c.b16 %v6250, %v6246
    %v6411 = vpack.c.b16 %v6251, %v6247
    %v6412 = vpack.c.b16 %v6256, %v6252
    %v6413 = vpack.c.b16 %v6257, %v6253
    %v6414 = vpack.c.b16 %v6258, %v6254
    %v6415 = vpack.c.b16 %v6259, %v6255
    %v6416 = vpack.c.b16 %v6264, %v6260
    %v6417 = vpack.c.b16 %v6265, %v6261
    %v6418 = vpack.c.b16 %v6266, %v6262
    %v6419 = vpack.c.b16 %v6267, %v6263
    %v6420 = vpack.c.b16 %v6272, %v6268
    %v6421 = vpack.c.b16 %v6273, %v6269
    %v6422 = vpack.c.b16 %v6274, %v6270
    %v6423 = vpack.c.b16 %v6275, %v6271
    %v6424 = vpack.c.b16 %v6280, %v6276
    %v6425 = vpack.c.b16 %v6281, %v6277
    %v6426 = vpack.c.b16 %v6282, %v6278
    %v6427 = vpack.c.b16 %v6283, %v6279
    %v6428 = vpack.c.b16 %v6288, %v6284
    %v6429 = vpack.c.b16 %v6289, %v6285
    %v6430 = vpack.c.b16 %v6290, %v6286
    %v6431 = vpack.c.b16 %v6291, %v6287
    %v6432 = vpack.c.b16 %v6296, %v6292
    %v6433 = vpack.c.b16 %v6297, %v6293
    %v6434 = vpack.c.b16 %v6298, %v6294
    %v6435 = vpack.c.b16 %v6299, %v6295
    %v6436 = vpack.c.b16 %v6304, %v6300
    %v6437 = vpack.c.b16 %v6305, %v6301
    %v6438 = vpack.c.b16 %v6306, %v6302
    %v6439 = vpack.c.b16 %v6307, %v6303
    %v6440 = vpack.c.b16 %v6312, %v6308
    %v6441 = vpack.c.b16 %v6313, %v6309
    %v6442 = vpack.c.b16 %v6314, %v6310
    %v6443 = vpack.c.b16 %v6315, %v6311
    %6572 = vmatprep.subr.bf16.mxu0 %v6317
    %6573 = vmatpush1.bf16.msra.mxu0 %v6316
    %6574 = vmatprep.subr.bf16.mxu0 %v6321
    %6575 = vmatpush1.bf16.msra.mxu0 %v6320
    %6576 = vmatprep.subr.bf16.mxu0 %v6325
    %6577 = vmatpush1.bf16.msra.mxu0 %v6324
    %6578 = vmatprep.subr.bf16.mxu0 %v6329
    %6579 = vmatpush1.bf16.msra.mxu0 %v6328
    %6580 = vmatprep.subr.bf16.mxu0 %v6333
    %6581 = vmatpush1.bf16.msra.mxu0 %v6332
    %6582 = vmatprep.subr.bf16.mxu0 %v6337
    %6583 = vmatpush1.bf16.msra.mxu0 %v6336
    %6584 = vmatprep.subr.bf16.mxu0 %v6341
    %6585 = vmatpush1.bf16.msra.mxu0 %v6340
    %6586 = vmatprep.subr.bf16.mxu0 %v6345
    %6587 = vmatpush1.bf16.msra.mxu0 %v6344
    %6588 = vmatprep.subr.bf16.mxu0 %v6349
    %6589 = vmatpush1.bf16.msra.mxu0 %v6348
    %6590 = vmatprep.subr.bf16.mxu0 %v6353
    %6591 = vmatpush1.bf16.msra.mxu0 %v6352
    %6592 = vmatprep.subr.bf16.mxu0 %v6357
    %6593 = vmatpush1.bf16.msra.mxu0 %v6356
    %6594 = vmatprep.subr.bf16.mxu0 %v6361
    %6595 = vmatpush1.bf16.msra.mxu0 %v6360
    %6596 = vmatprep.subr.bf16.mxu0 %v6365
    %6597 = vmatpush1.bf16.msra.mxu0 %v6364
    %6598 = vmatprep.subr.bf16.mxu0 %v6369
    %6599 = vmatpush1.bf16.msra.mxu0 %v6368
    %6600 = vmatprep.subr.bf16.mxu0 %v6373
    %6601 = vmatpush1.bf16.msra.mxu0 %v6372
    %6602 = vmatprep.subr.bf16.mxu0 %v6377
    %6603 = vmatpush1.bf16.msra.mxu0 %v6376
    %6604 = vmatprep.mubr.bf16.mxu0 %v4687
    %6605 = vmatmul.mubr.bf16.gmra.mrb[0].mxu0 %v4686
    %v6606 = vpop.f32.mrb[0].mxu0
    %v6607 = vadd.f32 0.0, %v6606
    %v6608 = vpop.f32.mrb[0].mxu0
    %v6609 = vadd.f32 0.0, %v6608
    %v6610 = vpop.f32.mrb[0].mxu0
    %v6611 = vadd.f32 0.0, %v6610
    %v6612 = vpop.f32.mrb[0].mxu0
    %v6613 = vadd.f32 0.0, %v6612
    %6614 = vmatprep.mubr.bf16.mxu0 %v4691
    %6615 = vmatmul.mubr.bf16.gmra.mrb[0].mxu0 %v4690
    %v6616 = vpop.f32.mrb[0].mxu0
    %v6617 = vadd.f32 0.0, %v6616
    %v6618 = vpop.f32.mrb[0].mxu0
    %v6619 = vadd.f32 0.0, %v6618
    %v6620 = vpop.f32.mrb[0].mxu0
    %v6621 = vadd.f32 0.0, %v6620
    %v6622 = vpop.f32.mrb[0].mxu0
    %v6623 = vadd.f32 0.0, %v6622
    %6624 = vdwg.mxu0
    %6625 = vmatprep.subr.bf16.mxu0 %v6381
    %6626 = vmatpush1.bf16.msra.mxu0 %v6380
    %6627 = vmatprep.subr.bf16.mxu0 %v6385
    %6628 = vmatpush1.bf16.msra.mxu0 %v6384
    %6629 = vmatprep.subr.bf16.mxu0 %v6389
    %6630 = vmatpush1.bf16.msra.mxu0 %v6388
    %6631 = vmatprep.subr.bf16.mxu0 %v6393
    %6632 = vmatpush1.bf16.msra.mxu0 %v6392
    %6633 = vmatprep.subr.bf16.mxu0 %v6397
    %6634 = vmatpush1.bf16.msra.mxu0 %v6396
    %6635 = vmatprep.subr.bf16.mxu0 %v6401
    %6636 = vmatpush1.bf16.msra.mxu0 %v6400
    %6637 = vmatprep.subr.bf16.mxu0 %v6405
    %6638 = vmatpush1.bf16.msra.mxu0 %v6404
    %6639 = vmatprep.subr.bf16.mxu0 %v6409
    %6640 = vmatpush1.bf16.msra.mxu0 %v6408
    %6641 = vmatprep.subr.bf16.mxu0 %v6413
    %6642 = vmatpush1.bf16.msra.mxu0 %v6412
    %6643 = vmatprep.subr.bf16.mxu0 %v6417
    %6644 = vmatpush1.bf16.msra.mxu0 %v6416
    %6645 = vmatprep.subr.bf16.mxu0 %v6421
    %6646 = vmatpush1.bf16.msra.mxu0 %v6420
    %6647 = vmatprep.subr.bf16.mxu0 %v6425
    %6648 = vmatpush1.bf16.msra.mxu0 %v6424
    %6649 = vmatprep.subr.bf16.mxu0 %v6429
    %6650 = vmatpush1.bf16.msra.mxu0 %v6428
    %6651 = vmatprep.subr.bf16.mxu0 %v6433
    %6652 = vmatpush1.bf16.msra.mxu0 %v6432
    %6653 = vmatprep.subr.bf16.mxu0 %v6437
    %6654 = vmatpush1.bf16.msra.mxu0 %v6436
    %6655 = vmatprep.subr.bf16.mxu0 %v6441
    %6656 = vmatpush1.bf16.msra.mxu0 %v6440
    %6657 = vmatprep.mubr.bf16.mxu0 %v4689
    %6658 = vmatmul.mubr.bf16.gmra.mrb[0].mxu0 %v4688
    %v6659 = vpop.f32.mrb[0].mxu0
    %v6660 = vadd.f32 %v6607, %v6659
    %v6661 = vpop.f32.mrb[0].mxu0
    %v6662 = vadd.f32 %v6609, %v6661
    %v6663 = vpop.f32.mrb[0].mxu0
    %v6664 = vadd.f32 %v6611, %v6663
    %v6665 = vpop.f32.mrb[0].mxu0
    %v6666 = vadd.f32 %v6613, %v6665
    %6667 = vmatprep.mubr.bf16.mxu0 %v4693
    %6668 = vmatmul.mubr.bf16.gmra.mrb[0].mxu0 %v4692
    %v6669 = vpop.f32.mrb[0].mxu0
    %v6670 = vadd.f32 %v6617, %v6669
    %v6671 = vpop.f32.mrb[0].mxu0
    %v6672 = vadd.f32 %v6619, %v6671
    %v6673 = vpop.f32.mrb[0].mxu0
    %v6674 = vadd.f32 %v6621, %v6673
    %v6675 = vpop.f32.mrb[0].mxu0
    %v6676 = vadd.f32 %v6623, %v6675
    %6677 = vdwg.mxu0
    %6678 = vmatprep.subr.bf16.mxu0 %v6319
    %6679 = vmatpush1.bf16.msra.mxu0 %v6318
    %6680 = vmatprep.subr.bf16.mxu0 %v6323
    %6681 = vmatpush1.bf16.msra.mxu0 %v6322
    %6682 = vmatprep.subr.bf16.mxu0 %v6327
    %6683 = vmatpush1.bf16.msra.mxu0 %v6326
    %6684 = vmatprep.subr.bf16.mxu0 %v6331
    %6685 = vmatpush1.bf16.msra.mxu0 %v6330
    %6686 = vmatprep.subr.bf16.mxu0 %v6335
    %6687 = vmatpush1.bf16.msra.mxu0 %v6334
    %6688 = vmatprep.subr.bf16.mxu0 %v6339
    %6689 = vmatpush1.bf16.msra.mxu0 %v6338
    %6690 = vmatprep.subr.bf16.mxu0 %v6343
    %6691 = vmatpush1.bf16.msra.mxu0 %v6342
    %6692 = vmatprep.subr.bf16.mxu0 %v6347
    %6693 = vmatpush1.bf16.msra.mxu0 %v6346
    %6694 = vmatprep.subr.bf16.mxu0 %v6351
    %6695 = vmatpush1.bf16.msra.mxu0 %v6350
    %6696 = vmatprep.subr.bf16.mxu0 %v6355
    %6697 = vmatpush1.bf16.msra.mxu0 %v6354
    %6698 = vmatprep.subr.bf16.mxu0 %v6359
    %6699 = vmatpush1.bf16.msra.mxu0 %v6358
    %6700 = vmatprep.subr.bf16.mxu0 %v6363
    %6701 = vmatpush1.bf16.msra.mxu0 %v6362
    %6702 = vmatprep.subr.bf16.mxu0 %v6367
    %6703 = vmatpush1.bf16.msra.mxu0 %v6366
    %6704 = vmatprep.subr.bf16.mxu0 %v6371
    %6705 = vmatpush1.bf16.msra.mxu0 %v6370
    %6706 = vmatprep.subr.bf16.mxu0 %v6375
    %6707 = vmatpush1.bf16.msra.mxu0 %v6374
    %6708 = vmatprep.subr.bf16.mxu0 %v6379
    %6709 = vmatpush1.bf16.msra.mxu0 %v6378
    %6710 = vmatprep.mubr.bf16.mxu0 %v4687
    %6711 = vmatmul.mubr.bf16.gmra.mrb[0].mxu0 %v4686
    %v6712 = vpop.f32.mrb[0].mxu0
    %v6713 = vadd.f32 0.0, %v6712
    %v6714 = vpop.f32.mrb[0].mxu0
    %v6715 = vadd.f32 0.0, %v6714
    %v6716 = vpop.f32.mrb[0].mxu0
    %v6717 = vadd.f32 0.0, %v6716
    %v6718 = vpop.f32.mrb[0].mxu0
    %v6719 = vadd.f32 0.0, %v6718
    %6720 = vmatprep.mubr.bf16.mxu0 %v4691
    %6721 = vmatmul.mubr.bf16.gmra.mrb[0].mxu0 %v4690
    %v6722 = vpop.f32.mrb[0].mxu0
    %v6723 = vadd.f32 0.0, %v6722
    %v6724 = vpop.f32.mrb[0].mxu0
    %v6725 = vadd.f32 0.0, %v6724
    %v6726 = vpop.f32.mrb[0].mxu0
    %v6727 = vadd.f32 0.0, %v6726
    %v6728 = vpop.f32.mrb[0].mxu0
    %v6729 = vadd.f32 0.0, %v6728
    %6730 = vdwg.mxu0
    %6731 = vmatprep.subr.bf16.mxu0 %v6383
    %6732 = vmatpush1.bf16.msra.mxu0 %v6382
    %6733 = vmatprep.subr.bf16.mxu0 %v6387
    %6734 = vmatpush1.bf16.msra.mxu0 %v6386
    %6735 = vmatprep.subr.bf16.mxu0 %v6391
    %6736 = vmatpush1.bf16.msra.mxu0 %v6390
    %6737 = vmatprep.subr.bf16.mxu0 %v6395
    %6738 = vmatpush1.bf16.msra.mxu0 %v6394
    %6739 = vmatprep.subr.bf16.mxu0 %v6399
    %6740 = vmatpush1.bf16.msra.mxu0 %v6398
    %6741 = vmatprep.subr.bf16.mxu0 %v6403
    %6742 = vmatpush1.bf16.msra.mxu0 %v6402
    %6743 = vmatprep.subr.bf16.mxu0 %v6407
    %6744 = vmatpush1.bf16.msra.mxu0 %v6406
    %6745 = vmatprep.subr.bf16.mxu0 %v6411
    %6746 = vmatpush1.bf16.msra.mxu0 %v6410
    %6747 = vmatprep.subr.bf16.mxu0 %v6415
    %6748 = vmatpush1.bf16.msra.mxu0 %v6414
    %6749 = vmatprep.subr.bf16.mxu0 %v6419
    %6750 = vmatpush1.bf16.msra.mxu0 %v6418
    %6751 = vmatprep.subr.bf16.mxu0 %v6423
    %6752 = vmatpush1.bf16.msra.mxu0 %v6422
    %6753 = vmatprep.subr.bf16.mxu0 %v6427
    %6754 = vmatpush1.bf16.msra.mxu0 %v6426
    %6755 = vmatprep.subr.bf16.mxu0 %v6431
    %6756 = vmatpush1.bf16.msra.mxu0 %v6430
    %6757 = vmatprep.subr.bf16.mxu0 %v6435
    %6758 = vmatpush1.bf16.msra.mxu0 %v6434
    %6759 = vmatprep.subr.bf16.mxu0 %v6439
    %6760 = vmatpush1.bf16.msra.mxu0 %v6438
    %6761 = vmatprep.subr.bf16.mxu0 %v6443
    %6762 = vmatpush1.bf16.msra.mxu0 %v6442
    %6763 = vmatprep.mubr.bf16.mxu0 %v4689
    %6764 = vmatmul.mubr.bf16.gmra.mrb[0].mxu0 %v4688
    %v6765 = vpop.f32.mrb[0].mxu0
    %v6766 = vadd.f32 %v6713, %v6765
    %v6767 = vpop.f32.mrb[0].mxu0
    %v6768 = vadd.f32 %v6715, %v6767
    %v6769 = vpop.f32.mrb[0].mxu0
    %v6770 = vadd.f32 %v6717, %v6769
    %v6771 = vpop.f32.mrb[0].mxu0
    %v6772 = vadd.f32 %v6719, %v6771
    %6773 = vmatprep.mubr.bf16.mxu0 %v4693
    %6774 = vmatmul.mubr.bf16.gmra.mrb[0].mxu0 %v4692
    %v6775 = vpop.f32.mrb[0].mxu0
    %v6776 = vadd.f32 %v6723, %v6775
    %v6777 = vpop.f32.mrb[0].mxu0
    %v6778 = vadd.f32 %v6725, %v6777
    %v6779 = vpop.f32.mrb[0].mxu0
    %v6780 = vadd.f32 %v6727, %v6779
    %v6781 = vpop.f32.mrb[0].mxu0
    %v6782 = vadd.f32 %v6729, %v6781
    %6783 = vdwg.mxu0
    %v6784 = vmul.f32 %v436, %v5679
    %v6785 = vmul.f32 %v437, %v5681
    %v6786 = vmul.f32 %v438, %v5785
    %v6787 = vmul.f32 %v439, %v5787
    %v6788 = vmul.f32 %v440, %v5683
    %v6789 = vmul.f32 %v441, %v5685
    %v6790 = vmul.f32 %v442, %v5789
    %v6791 = vmul.f32 %v443, %v5791
    %v6792 = vmul.f32 %v444, %v5689
    %v6793 = vmul.f32 %v445, %v5691
    %v6794 = vmul.f32 %v446, %v5795
    %v6795 = vmul.f32 %v447, %v5797
    %v6796 = vmul.f32 %v448, %v5693
    %v6797 = vmul.f32 %v449, %v5695
    %v6798 = vmul.f32 %v450, %v5799
    %v6799 = vmul.f32 %v451, %v5801
    %v6928 = vunpack.c.l.b16 %v4695
    %v6929 = vunpack.c.h.b16 %v4695
    %v6930 = vunpack.c.l.b16 %v4696
    %v6931 = vunpack.c.h.b16 %v4696
    %v6932 = vunpack.c.l.b16 %v4697
    %v6933 = vunpack.c.h.b16 %v4697
    %v6934 = vunpack.c.l.b16 %v4698
    %v6935 = vunpack.c.h.b16 %v4698
    %v6936 = vunpack.c.l.b16 %v4699
    %v6937 = vunpack.c.h.b16 %v4699
    %v6938 = vunpack.c.l.b16 %v4700
    %v6939 = vunpack.c.h.b16 %v4700
    %v6940 = vunpack.c.l.b16 %v4701
    %v6941 = vunpack.c.h.b16 %v4701
    %v6942 = vunpack.c.l.b16 %v4702
    %v6943 = vunpack.c.h.b16 %v4702
    %v6944 = vunpack.c.l.b16 %v4703
    %v6945 = vunpack.c.h.b16 %v4703
    %v6946 = vunpack.c.l.b16 %v4704
    %v6947 = vunpack.c.h.b16 %v4704
    %v6948 = vunpack.c.l.b16 %v4705
    %v6949 = vunpack.c.h.b16 %v4705
    %v6950 = vunpack.c.l.b16 %v4706
    %v6951 = vunpack.c.h.b16 %v4706
    %v6952 = vunpack.c.l.b16 %v4707
    %v6953 = vunpack.c.h.b16 %v4707
    %v6954 = vunpack.c.l.b16 %v4708
    %v6955 = vunpack.c.h.b16 %v4708
    %v6956 = vunpack.c.l.b16 %v4709
    %v6957 = vunpack.c.h.b16 %v4709
    %v6958 = vunpack.c.l.b16 %v4710
    %v6959 = vunpack.c.h.b16 %v4710
    %v6960 = vunpack.c.l.b16 %v4711
    %v6961 = vunpack.c.h.b16 %v4711
    %v6962 = vunpack.c.l.b16 %v4712
    %v6963 = vunpack.c.h.b16 %v4712
    %v6964 = vunpack.c.l.b16 %v4713
    %v6965 = vunpack.c.h.b16 %v4713
    %v6966 = vunpack.c.l.b16 %v4714
    %v6967 = vunpack.c.h.b16 %v4714
    %v6968 = vunpack.c.l.b16 %v4715
    %v6969 = vunpack.c.h.b16 %v4715
    %v6970 = vunpack.c.l.b16 %v4716
    %v6971 = vunpack.c.h.b16 %v4716
    %v6972 = vunpack.c.l.b16 %v4717
    %v6973 = vunpack.c.h.b16 %v4717
    %v6974 = vunpack.c.l.b16 %v4718
    %v6975 = vunpack.c.h.b16 %v4718
    %v6976 = vunpack.c.l.b16 %v4719
    %v6977 = vunpack.c.h.b16 %v4719
    %v6978 = vunpack.c.l.b16 %v4720
    %v6979 = vunpack.c.h.b16 %v4720
    %v6980 = vunpack.c.l.b16 %v4721
    %v6981 = vunpack.c.h.b16 %v4721
    %v6982 = vunpack.c.l.b16 %v4722
    %v6983 = vunpack.c.h.b16 %v4722
    %v6984 = vunpack.c.l.b16 %v4723
    %v6985 = vunpack.c.h.b16 %v4723
    %v6986 = vunpack.c.l.b16 %v4724
    %v6987 = vunpack.c.h.b16 %v4724
    %v6988 = vunpack.c.l.b16 %v4725
    %v6989 = vunpack.c.h.b16 %v4725
    %v6990 = vunpack.c.l.b16 %v4726
    %v6991 = vunpack.c.h.b16 %v4726
    %v6992 = vunpack.c.l.b16 %v4727
    %v6993 = vunpack.c.h.b16 %v4727
    %v6994 = vunpack.c.l.b16 %v4728
    %v6995 = vunpack.c.h.b16 %v4728
    %v6996 = vunpack.c.l.b16 %v4729
    %v6997 = vunpack.c.h.b16 %v4729
    %v6998 = vunpack.c.l.b16 %v4730
    %v6999 = vunpack.c.h.b16 %v4730
    %v7000 = vunpack.c.l.b16 %v4731
    %v7001 = vunpack.c.h.b16 %v4731
    %v7002 = vunpack.c.l.b16 %v4732
    %v7003 = vunpack.c.h.b16 %v4732
    %v7004 = vunpack.c.l.b16 %v4733
    %v7005 = vunpack.c.h.b16 %v4733
    %v7006 = vunpack.c.l.b16 %v4734
    %v7007 = vunpack.c.h.b16 %v4734
    %v7008 = vunpack.c.l.b16 %v4735
    %v7009 = vunpack.c.h.b16 %v4735
    %v7010 = vunpack.c.l.b16 %v4736
    %v7011 = vunpack.c.h.b16 %v4736
    %v7012 = vunpack.c.l.b16 %v4737
    %v7013 = vunpack.c.h.b16 %v4737
    %v7014 = vunpack.c.l.b16 %v4738
    %v7015 = vunpack.c.h.b16 %v4738
    %v7016 = vunpack.c.l.b16 %v4739
    %v7017 = vunpack.c.h.b16 %v4739
    %v7018 = vunpack.c.l.b16 %v4740
    %v7019 = vunpack.c.h.b16 %v4740
    %v7020 = vunpack.c.l.b16 %v4741
    %v7021 = vunpack.c.h.b16 %v4741
    %v7022 = vunpack.c.l.b16 %v4742
    %v7023 = vunpack.c.h.b16 %v4742
    %v7024 = vunpack.c.l.b16 %v4743
    %v7025 = vunpack.c.h.b16 %v4743
    %v7026 = vunpack.c.l.b16 %v4744
    %v7027 = vunpack.c.h.b16 %v4744
    %v7028 = vunpack.c.l.b16 %v4745
    %v7029 = vunpack.c.h.b16 %v4745
    %v7030 = vunpack.c.l.b16 %v4746
    %v7031 = vunpack.c.h.b16 %v4746
    %v7032 = vunpack.c.l.b16 %v4747
    %v7033 = vunpack.c.h.b16 %v4747
    %v7034 = vunpack.c.l.b16 %v4748
    %v7035 = vunpack.c.h.b16 %v4748
    %v7036 = vunpack.c.l.b16 %v4749
    %v7037 = vunpack.c.h.b16 %v4749
    %v7038 = vunpack.c.l.b16 %v4750
    %v7039 = vunpack.c.h.b16 %v4750
    %v7040 = vunpack.c.l.b16 %v4751
    %v7041 = vunpack.c.h.b16 %v4751
    %v7042 = vunpack.c.l.b16 %v4752
    %v7043 = vunpack.c.h.b16 %v4752
    %v7044 = vunpack.c.l.b16 %v4753
    %v7045 = vunpack.c.h.b16 %v4753
    %v7046 = vunpack.c.l.b16 %v4754
    %v7047 = vunpack.c.h.b16 %v4754
    %v7048 = vunpack.c.l.b16 %v4755
    %v7049 = vunpack.c.h.b16 %v4755
    %v7050 = vunpack.c.l.b16 %v4756
    %v7051 = vunpack.c.h.b16 %v4756
    %v7052 = vunpack.c.l.b16 %v4757
    %v7053 = vunpack.c.h.b16 %v4757
    %v7054 = vunpack.c.l.b16 %v4758
    %v7055 = vunpack.c.h.b16 %v4758
    %v7056 = vunpack.c.l.b16 %v4759
    %v7057 = vunpack.c.h.b16 %v4759
    %v7058 = vunpack.c.l.b16 %v4760
    %v7059 = vunpack.c.h.b16 %v4760
    %v7060 = vunpack.c.l.b16 %v4761
    %v7061 = vunpack.c.h.b16 %v4761
    %v7062 = vunpack.c.l.b16 %v4762
    %v7063 = vunpack.c.h.b16 %v4762
    %v7064 = vunpack.c.l.b16 %v4763
    %v7065 = vunpack.c.h.b16 %v4763
    %v7066 = vunpack.c.l.b16 %v4764
    %v7067 = vunpack.c.h.b16 %v4764
    %v7068 = vunpack.c.l.b16 %v4765
    %v7069 = vunpack.c.h.b16 %v4765
    %v7070 = vunpack.c.l.b16 %v4766
    %v7071 = vunpack.c.h.b16 %v4766
    %v7072 = vunpack.c.l.b16 %v4767
    %v7073 = vunpack.c.h.b16 %v4767
    %v7074 = vunpack.c.l.b16 %v4768
    %v7075 = vunpack.c.h.b16 %v4768
    %v7076 = vunpack.c.l.b16 %v4769
    %v7077 = vunpack.c.h.b16 %v4769
    %v7078 = vunpack.c.l.b16 %v4770
    %v7079 = vunpack.c.h.b16 %v4770
    %v7080 = vunpack.c.l.b16 %v4771
    %v7081 = vunpack.c.h.b16 %v4771
    %v7082 = vunpack.c.l.b16 %v4772
    %v7083 = vunpack.c.h.b16 %v4772
    %v7084 = vunpack.c.l.b16 %v4773
    %v7085 = vunpack.c.h.b16 %v4773
    %v7086 = vunpack.c.l.b16 %v4774
    %v7087 = vunpack.c.h.b16 %v4774
    %v7088 = vunpack.c.l.b16 %v4775
    %v7089 = vunpack.c.h.b16 %v4775
    %v7090 = vunpack.c.l.b16 %v4776
    %v7091 = vunpack.c.h.b16 %v4776
    %v7092 = vunpack.c.l.b16 %v4777
    %v7093 = vunpack.c.h.b16 %v4777
    %v7094 = vunpack.c.l.b16 %v4778
    %v7095 = vunpack.c.h.b16 %v4778
    %v7096 = vunpack.c.l.b16 %v4779
    %v7097 = vunpack.c.h.b16 %v4779
    %v7098 = vunpack.c.l.b16 %v4780
    %v7099 = vunpack.c.h.b16 %v4780
    %v7100 = vunpack.c.l.b16 %v4781
    %v7101 = vunpack.c.h.b16 %v4781
    %v7102 = vunpack.c.l.b16 %v4782
    %v7103 = vunpack.c.h.b16 %v4782
    %v7104 = vunpack.c.l.b16 %v4783
    %v7105 = vunpack.c.h.b16 %v4783
    %v7106 = vunpack.c.l.b16 %v4784
    %v7107 = vunpack.c.h.b16 %v4784
    %v7108 = vunpack.c.l.b16 %v4785
    %v7109 = vunpack.c.h.b16 %v4785
    %v7110 = vunpack.c.l.b16 %v4786
    %v7111 = vunpack.c.h.b16 %v4786
    %v7112 = vunpack.c.l.b16 %v4787
    %v7113 = vunpack.c.h.b16 %v4787
    %v7114 = vunpack.c.l.b16 %v4788
    %v7115 = vunpack.c.h.b16 %v4788
    %v7116 = vunpack.c.l.b16 %v4789
    %v7117 = vunpack.c.h.b16 %v4789
    %v7118 = vunpack.c.l.b16 %v4790
    %v7119 = vunpack.c.h.b16 %v4790
    %v7120 = vunpack.c.l.b16 %v4791
    %v7121 = vunpack.c.h.b16 %v4791
    %v7122 = vunpack.c.l.b16 %v4792
    %v7123 = vunpack.c.h.b16 %v4792
    %v7124 = vunpack.c.l.b16 %v4793
    %v7125 = vunpack.c.h.b16 %v4793
    %v7126 = vunpack.c.l.b16 %v4794
    %v7127 = vunpack.c.h.b16 %v4794
    %v7128 = vunpack.c.l.b16 %v4795
    %v7129 = vunpack.c.h.b16 %v4795
    %v7130 = vunpack.c.l.b16 %v4796
    %v7131 = vunpack.c.h.b16 %v4796
    %v7132 = vunpack.c.l.b16 %v4797
    %v7133 = vunpack.c.h.b16 %v4797
    %v7134 = vunpack.c.l.b16 %v4798
    %v7135 = vunpack.c.h.b16 %v4798
    %v7136 = vunpack.c.l.b16 %v4799
    %v7137 = vunpack.c.h.b16 %v4799
    %v7138 = vunpack.c.l.b16 %v4800
    %v7139 = vunpack.c.h.b16 %v4800
    %v7140 = vunpack.c.l.b16 %v4801
    %v7141 = vunpack.c.h.b16 %v4801
    %v7142 = vunpack.c.l.b16 %v4802
    %v7143 = vunpack.c.h.b16 %v4802
    %v7144 = vunpack.c.l.b16 %v4803
    %v7145 = vunpack.c.h.b16 %v4803
    %v7146 = vunpack.c.l.b16 %v4804
    %v7147 = vunpack.c.h.b16 %v4804
    %v7148 = vunpack.c.l.b16 %v4805
    %v7149 = vunpack.c.h.b16 %v4805
    %v7150 = vunpack.c.l.b16 %v4806
    %v7151 = vunpack.c.h.b16 %v4806
    %v7152 = vunpack.c.l.b16 %v4807
    %v7153 = vunpack.c.h.b16 %v4807
    %v7154 = vunpack.c.l.b16 %v4808
    %v7155 = vunpack.c.h.b16 %v4808
    %v7156 = vunpack.c.l.b16 %v4809
    %v7157 = vunpack.c.h.b16 %v4809
    %v7158 = vunpack.c.l.b16 %v4810
    %v7159 = vunpack.c.h.b16 %v4810
    %v7160 = vunpack.c.l.b16 %v4811
    %v7161 = vunpack.c.h.b16 %v4811
    %v7162 = vunpack.c.l.b16 %v4812
    %v7163 = vunpack.c.h.b16 %v4812
    %v7164 = vunpack.c.l.b16 %v4813
    %v7165 = vunpack.c.h.b16 %v4813
    %v7166 = vunpack.c.l.b16 %v4814
    %v7167 = vunpack.c.h.b16 %v4814
    %v7168 = vunpack.c.l.b16 %v4815
    %v7169 = vunpack.c.h.b16 %v4815
    %v7170 = vunpack.c.l.b16 %v4816
    %v7171 = vunpack.c.h.b16 %v4816
    %v7172 = vunpack.c.l.b16 %v4817
    %v7173 = vunpack.c.h.b16 %v4817
    %v7174 = vunpack.c.l.b16 %v4818
    %v7175 = vunpack.c.h.b16 %v4818
    %v7176 = vunpack.c.l.b16 %v4819
    %v7177 = vunpack.c.h.b16 %v4819
    %v7178 = vunpack.c.l.b16 %v4820
    %v7179 = vunpack.c.h.b16 %v4820
    %v7180 = vunpack.c.l.b16 %v4821
    %v7181 = vunpack.c.h.b16 %v4821
    %v7182 = vunpack.c.l.b16 %v4822
    %v7183 = vunpack.c.h.b16 %v4822
    %v7184 = vpack.c.b16 %v6932, %v6928
    %v7185 = vpack.c.b16 %v6933, %v6929
    %v7186 = vpack.c.b16 %v6934, %v6930
    %v7187 = vpack.c.b16 %v6935, %v6931
    %v7188 = vpack.c.b16 %v6940, %v6936
    %v7189 = vpack.c.b16 %v6941, %v6937
    %v7190 = vpack.c.b16 %v6942, %v6938
    %v7191 = vpack.c.b16 %v6943, %v6939
    %v7192 = vpack.c.b16 %v6948, %v6944
    %v7193 = vpack.c.b16 %v6949, %v6945
    %v7194 = vpack.c.b16 %v6950, %v6946
    %v7195 = vpack.c.b16 %v6951, %v6947
    %v7196 = vpack.c.b16 %v6956, %v6952
    %v7197 = vpack.c.b16 %v6957, %v6953
    %v7198 = vpack.c.b16 %v6958, %v6954
    %v7199 = vpack.c.b16 %v6959, %v6955
    %v7200 = vpack.c.b16 %v6964, %v6960
    %v7201 = vpack.c.b16 %v6965, %v6961
    %v7202 = vpack.c.b16 %v6966, %v6962
    %v7203 = vpack.c.b16 %v6967, %v6963
    %v7204 = vpack.c.b16 %v6972, %v6968
    %v7205 = vpack.c.b16 %v6973, %v6969
    %v7206 = vpack.c.b16 %v6974, %v6970
    %v7207 = vpack.c.b16 %v6975, %v6971
    %v7208 = vpack.c.b16 %v6980, %v6976
    %v7209 = vpack.c.b16 %v6981, %v6977
    %v7210 = vpack.c.b16 %v6982, %v6978
    %v7211 = vpack.c.b16 %v6983, %v6979
    %v7212 = vpack.c.b16 %v6988, %v6984
    %v7213 = vpack.c.b16 %v6989, %v6985
    %v7214 = vpack.c.b16 %v6990, %v6986
    %v7215 = vpack.c.b16 %v6991, %v6987
    %v7216 = vpack.c.b16 %v6996, %v6992
    %v7217 = vpack.c.b16 %v6997, %v6993
    %v7218 = vpack.c.b16 %v6998, %v6994
    %v7219 = vpack.c.b16 %v6999, %v6995
    %v7220 = vpack.c.b16 %v7004, %v7000
    %v7221 = vpack.c.b16 %v7005, %v7001
    %v7222 = vpack.c.b16 %v7006, %v7002
    %v7223 = vpack.c.b16 %v7007, %v7003
    %v7224 = vpack.c.b16 %v7012, %v7008
    %v7225 = vpack.c.b16 %v7013, %v7009
    %v7226 = vpack.c.b16 %v7014, %v7010
    %v7227 = vpack.c.b16 %v7015, %v7011
    %v7228 = vpack.c.b16 %v7020, %v7016
    %v7229 = vpack.c.b16 %v7021, %v7017
    %v7230 = vpack.c.b16 %v7022, %v7018
    %v7231 = vpack.c.b16 %v7023, %v7019
    %v7232 = vpack.c.b16 %v7028, %v7024
    %v7233 = vpack.c.b16 %v7029, %v7025
    %v7234 = vpack.c.b16 %v7030, %v7026
    %v7235 = vpack.c.b16 %v7031, %v7027
    %v7236 = vpack.c.b16 %v7036, %v7032
    %v7237 = vpack.c.b16 %v7037, %v7033
    %v7238 = vpack.c.b16 %v7038, %v7034
    %v7239 = vpack.c.b16 %v7039, %v7035
    %v7240 = vpack.c.b16 %v7044, %v7040
    %v7241 = vpack.c.b16 %v7045, %v7041
    %v7242 = vpack.c.b16 %v7046, %v7042
    %v7243 = vpack.c.b16 %v7047, %v7043
    %v7244 = vpack.c.b16 %v7052, %v7048
    %v7245 = vpack.c.b16 %v7053, %v7049
    %v7246 = vpack.c.b16 %v7054, %v7050
    %v7247 = vpack.c.b16 %v7055, %v7051
    %v7248 = vpack.c.b16 %v7060, %v7056
    %v7249 = vpack.c.b16 %v7061, %v7057
    %v7250 = vpack.c.b16 %v7062, %v7058
    %v7251 = vpack.c.b16 %v7063, %v7059
    %v7252 = vpack.c.b16 %v7068, %v7064
    %v7253 = vpack.c.b16 %v7069, %v7065
    %v7254 = vpack.c.b16 %v7070, %v7066
    %v7255 = vpack.c.b16 %v7071, %v7067
    %v7256 = vpack.c.b16 %v7076, %v7072
    %v7257 = vpack.c.b16 %v7077, %v7073
    %v7258 = vpack.c.b16 %v7078, %v7074
    %v7259 = vpack.c.b16 %v7079, %v7075
    %v7260 = vpack.c.b16 %v7084, %v7080
    %v7261 = vpack.c.b16 %v7085, %v7081
    %v7262 = vpack.c.b16 %v7086, %v7082
    %v7263 = vpack.c.b16 %v7087, %v7083
    %v7264 = vpack.c.b16 %v7092, %v7088
    %v7265 = vpack.c.b16 %v7093, %v7089
    %v7266 = vpack.c.b16 %v7094, %v7090
    %v7267 = vpack.c.b16 %v7095, %v7091
    %v7268 = vpack.c.b16 %v7100, %v7096
    %v7269 = vpack.c.b16 %v7101, %v7097
    %v7270 = vpack.c.b16 %v7102, %v7098
    %v7271 = vpack.c.b16 %v7103, %v7099
    %v7272 = vpack.c.b16 %v7108, %v7104
    %v7273 = vpack.c.b16 %v7109, %v7105
    %v7274 = vpack.c.b16 %v7110, %v7106
    %v7275 = vpack.c.b16 %v7111, %v7107
    %v7276 = vpack.c.b16 %v7116, %v7112
    %v7277 = vpack.c.b16 %v7117, %v7113
    %v7278 = vpack.c.b16 %v7118, %v7114
    %v7279 = vpack.c.b16 %v7119, %v7115
    %v7280 = vpack.c.b16 %v7124, %v7120
    %v7281 = vpack.c.b16 %v7125, %v7121
    %v7282 = vpack.c.b16 %v7126, %v7122
    %v7283 = vpack.c.b16 %v7127, %v7123
    %v7284 = vpack.c.b16 %v7132, %v7128
    %v7285 = vpack.c.b16 %v7133, %v7129
    %v7286 = vpack.c.b16 %v7134, %v7130
    %v7287 = vpack.c.b16 %v7135, %v7131
    %v7288 = vpack.c.b16 %v7140, %v7136
    %v7289 = vpack.c.b16 %v7141, %v7137
    %v7290 = vpack.c.b16 %v7142, %v7138
    %v7291 = vpack.c.b16 %v7143, %v7139
    %v7292 = vpack.c.b16 %v7148, %v7144
    %v7293 = vpack.c.b16 %v7149, %v7145
    %v7294 = vpack.c.b16 %v7150, %v7146
    %v7295 = vpack.c.b16 %v7151, %v7147
    %v7296 = vpack.c.b16 %v7156, %v7152
    %v7297 = vpack.c.b16 %v7157, %v7153
    %v7298 = vpack.c.b16 %v7158, %v7154
    %v7299 = vpack.c.b16 %v7159, %v7155
    %v7300 = vpack.c.b16 %v7164, %v7160
    %v7301 = vpack.c.b16 %v7165, %v7161
    %v7302 = vpack.c.b16 %v7166, %v7162
    %v7303 = vpack.c.b16 %v7167, %v7163
    %v7304 = vpack.c.b16 %v7172, %v7168
    %v7305 = vpack.c.b16 %v7173, %v7169
    %v7306 = vpack.c.b16 %v7174, %v7170
    %v7307 = vpack.c.b16 %v7175, %v7171
    %v7308 = vpack.c.b16 %v7180, %v7176
    %v7309 = vpack.c.b16 %v7181, %v7177
    %v7310 = vpack.c.b16 %v7182, %v7178
    %v7311 = vpack.c.b16 %v7183, %v7179
    %7440 = vmatprep.subr.bf16.mxu0 %v7185
    %7441 = vmatpush1.bf16.msra.mxu0 %v7184
    %7442 = vmatprep.subr.bf16.mxu0 %v7189
    %7443 = vmatpush1.bf16.msra.mxu0 %v7188
    %7444 = vmatprep.subr.bf16.mxu0 %v7193
    %7445 = vmatpush1.bf16.msra.mxu0 %v7192
    %7446 = vmatprep.subr.bf16.mxu0 %v7197
    %7447 = vmatpush1.bf16.msra.mxu0 %v7196
    %7448 = vmatprep.subr.bf16.mxu0 %v7201
    %7449 = vmatpush1.bf16.msra.mxu0 %v7200
    %7450 = vmatprep.subr.bf16.mxu0 %v7205
    %7451 = vmatpush1.bf16.msra.mxu0 %v7204
    %7452 = vmatprep.subr.bf16.mxu0 %v7209
    %7453 = vmatpush1.bf16.msra.mxu0 %v7208
    %7454 = vmatprep.subr.bf16.mxu0 %v7213
    %7455 = vmatpush1.bf16.msra.mxu0 %v7212
    %7456 = vmatprep.subr.bf16.mxu0 %v7217
    %7457 = vmatpush1.bf16.msra.mxu0 %v7216
    %7458 = vmatprep.subr.bf16.mxu0 %v7221
    %7459 = vmatpush1.bf16.msra.mxu0 %v7220
    %7460 = vmatprep.subr.bf16.mxu0 %v7225
    %7461 = vmatpush1.bf16.msra.mxu0 %v7224
    %7462 = vmatprep.subr.bf16.mxu0 %v7229
    %7463 = vmatpush1.bf16.msra.mxu0 %v7228
    %7464 = vmatprep.subr.bf16.mxu0 %v7233
    %7465 = vmatpush1.bf16.msra.mxu0 %v7232
    %7466 = vmatprep.subr.bf16.mxu0 %v7237
    %7467 = vmatpush1.bf16.msra.mxu0 %v7236
    %7468 = vmatprep.subr.bf16.mxu0 %v7241
    %7469 = vmatpush1.bf16.msra.mxu0 %v7240
    %7470 = vmatprep.subr.bf16.mxu0 %v7245
    %7471 = vmatpush1.bf16.msra.mxu0 %v7244
    %7472 = vmatprep.mubr.bf16.mxu0 %v4551
    %7473 = vmatmul.mubr.bf16.gmra.mrb[0].mxu0 %v4550
    %v7474 = vpop.f32.mrb[0].mxu0
    %v7475 = vadd.f32 %v6784, %v7474
    %v7476 = vpop.f32.mrb[0].mxu0
    %v7477 = vadd.f32 %v6785, %v7476
    %v7478 = vpop.f32.mrb[0].mxu0
    %v7479 = vadd.f32 %v6788, %v7478
    %v7480 = vpop.f32.mrb[0].mxu0
    %v7481 = vadd.f32 %v6789, %v7480
    %7482 = vmatprep.mubr.bf16.mxu0 %v4555
    %7483 = vmatmul.mubr.bf16.gmra.mrb[0].mxu0 %v4554
    %v7484 = vpop.f32.mrb[0].mxu0
    %v7485 = vadd.f32 %v6792, %v7484
    %v7486 = vpop.f32.mrb[0].mxu0
    %v7487 = vadd.f32 %v6793, %v7486
    %v7488 = vpop.f32.mrb[0].mxu0
    %v7489 = vadd.f32 %v6796, %v7488
    %v7490 = vpop.f32.mrb[0].mxu0
    %v7491 = vadd.f32 %v6797, %v7490
    %7492 = vdwg.mxu0
    %7493 = vmatprep.subr.bf16.mxu0 %v7249
    %7494 = vmatpush1.bf16.msra.mxu0 %v7248
    %7495 = vmatprep.subr.bf16.mxu0 %v7253
    %7496 = vmatpush1.bf16.msra.mxu0 %v7252
    %7497 = vmatprep.subr.bf16.mxu0 %v7257
    %7498 = vmatpush1.bf16.msra.mxu0 %v7256
    %7499 = vmatprep.subr.bf16.mxu0 %v7261
    %7500 = vmatpush1.bf16.msra.mxu0 %v7260
    %7501 = vmatprep.subr.bf16.mxu0 %v7265
    %7502 = vmatpush1.bf16.msra.mxu0 %v7264
    %7503 = vmatprep.subr.bf16.mxu0 %v7269
    %7504 = vmatpush1.bf16.msra.mxu0 %v7268
    %7505 = vmatprep.subr.bf16.mxu0 %v7273
    %7506 = vmatpush1.bf16.msra.mxu0 %v7272
    %7507 = vmatprep.subr.bf16.mxu0 %v7277
    %7508 = vmatpush1.bf16.msra.mxu0 %v7276
    %7509 = vmatprep.subr.bf16.mxu0 %v7281
    %7510 = vmatpush1.bf16.msra.mxu0 %v7280
    %7511 = vmatprep.subr.bf16.mxu0 %v7285
    %7512 = vmatpush1.bf16.msra.mxu0 %v7284
    %7513 = vmatprep.subr.bf16.mxu0 %v7289
    %7514 = vmatpush1.bf16.msra.mxu0 %v7288
    %7515 = vmatprep.subr.bf16.mxu0 %v7293
    %7516 = vmatpush1.bf16.msra.mxu0 %v7292
    %7517 = vmatprep.subr.bf16.mxu0 %v7297
    %7518 = vmatpush1.bf16.msra.mxu0 %v7296
    %7519 = vmatprep.subr.bf16.mxu0 %v7301
    %7520 = vmatpush1.bf16.msra.mxu0 %v7300
    %7521 = vmatprep.subr.bf16.mxu0 %v7305
    %7522 = vmatpush1.bf16.msra.mxu0 %v7304
    %7523 = vmatprep.subr.bf16.mxu0 %v7309
    %7524 = vmatpush1.bf16.msra.mxu0 %v7308
    %7525 = vmatprep.mubr.bf16.mxu0 %v4553
    %7526 = vmatmul.mubr.bf16.gmra.mrb[0].mxu0 %v4552
    %v7527 = vpop.f32.mrb[0].mxu0
    %v7528 = vadd.f32 %v7475, %v7527
    %v7529 = vpop.f32.mrb[0].mxu0
    %v7530 = vadd.f32 %v7477, %v7529
    %v7531 = vpop.f32.mrb[0].mxu0
    %v7532 = vadd.f32 %v7479, %v7531
    %v7533 = vpop.f32.mrb[0].mxu0
    %v7534 = vadd.f32 %v7481, %v7533
    %7535 = vmatprep.mubr.bf16.mxu0 %v4557
    %7536 = vmatmul.mubr.bf16.gmra.mrb[0].mxu0 %v4556
    %v7537 = vpop.f32.mrb[0].mxu0
    %v7538 = vadd.f32 %v7485, %v7537
    %v7539 = vpop.f32.mrb[0].mxu0
    %v7540 = vadd.f32 %v7487, %v7539
    %v7541 = vpop.f32.mrb[0].mxu0
    %v7542 = vadd.f32 %v7489, %v7541
    %v7543 = vpop.f32.mrb[0].mxu0
    %v7544 = vadd.f32 %v7491, %v7543
    %7545 = vdwg.mxu0
    %7546 = vmatprep.subr.bf16.mxu0 %v7187
    %7547 = vmatpush1.bf16.msra.mxu0 %v7186
    %7548 = vmatprep.subr.bf16.mxu0 %v7191
    %7549 = vmatpush1.bf16.msra.mxu0 %v7190
    %7550 = vmatprep.subr.bf16.mxu0 %v7195
    %7551 = vmatpush1.bf16.msra.mxu0 %v7194
    %7552 = vmatprep.subr.bf16.mxu0 %v7199
    %7553 = vmatpush1.bf16.msra.mxu0 %v7198
    %7554 = vmatprep.subr.bf16.mxu0 %v7203
    %7555 = vmatpush1.bf16.msra.mxu0 %v7202
    %7556 = vmatprep.subr.bf16.mxu0 %v7207
    %7557 = vmatpush1.bf16.msra.mxu0 %v7206
    %7558 = vmatprep.subr.bf16.mxu0 %v7211
    %7559 = vmatpush1.bf16.msra.mxu0 %v7210
    %7560 = vmatprep.subr.bf16.mxu0 %v7215
    %7561 = vmatpush1.bf16.msra.mxu0 %v7214
    %7562 = vmatprep.subr.bf16.mxu0 %v7219
    %7563 = vmatpush1.bf16.msra.mxu0 %v7218
    %7564 = vmatprep.subr.bf16.mxu0 %v7223
    %7565 = vmatpush1.bf16.msra.mxu0 %v7222
    %7566 = vmatprep.subr.bf16.mxu0 %v7227
    %7567 = vmatpush1.bf16.msra.mxu0 %v7226
    %7568 = vmatprep.subr.bf16.mxu0 %v7231
    %7569 = vmatpush1.bf16.msra.mxu0 %v7230
    %7570 = vmatprep.subr.bf16.mxu0 %v7235
    %7571 = vmatpush1.bf16.msra.mxu0 %v7234
    %7572 = vmatprep.subr.bf16.mxu0 %v7239
    %7573 = vmatpush1.bf16.msra.mxu0 %v7238
    %7574 = vmatprep.subr.bf16.mxu0 %v7243
    %7575 = vmatpush1.bf16.msra.mxu0 %v7242
    %7576 = vmatprep.subr.bf16.mxu0 %v7247
    %7577 = vmatpush1.bf16.msra.mxu0 %v7246
    %7578 = vmatprep.mubr.bf16.mxu0 %v4551
    %7579 = vmatmul.mubr.bf16.gmra.mrb[0].mxu0 %v4550
    %v7580 = vpop.f32.mrb[0].mxu0
    %v7581 = vadd.f32 %v6786, %v7580
    %v7582 = vpop.f32.mrb[0].mxu0
    %v7583 = vadd.f32 %v6787, %v7582
    %v7584 = vpop.f32.mrb[0].mxu0
    %v7585 = vadd.f32 %v6790, %v7584
    %v7586 = vpop.f32.mrb[0].mxu0
    %v7587 = vadd.f32 %v6791, %v7586
    %7588 = vmatprep.mubr.bf16.mxu0 %v4555
    %7589 = vmatmul.mubr.bf16.gmra.mrb[0].mxu0 %v4554
    %v7590 = vpop.f32.mrb[0].mxu0
    %v7591 = vadd.f32 %v6794, %v7590
    %v7592 = vpop.f32.mrb[0].mxu0
    %v7593 = vadd.f32 %v6795, %v7592
    %v7594 = vpop.f32.mrb[0].mxu0
    %v7595 = vadd.f32 %v6798, %v7594
    %v7596 = vpop.f32.mrb[0].mxu0
    %v7597 = vadd.f32 %v6799, %v7596
    %7598 = vdwg.mxu0
    %7599 = vmatprep.subr.bf16.mxu0 %v7251
    %7600 = vmatpush1.bf16.msra.mxu0 %v7250
    %7601 = vmatprep.subr.bf16.mxu0 %v7255
    %7602 = vmatpush1.bf16.msra.mxu0 %v7254
    %7603 = vmatprep.subr.bf16.mxu0 %v7259
    %7604 = vmatpush1.bf16.msra.mxu0 %v7258
    %7605 = vmatprep.subr.bf16.mxu0 %v7263
    %7606 = vmatpush1.bf16.msra.mxu0 %v7262
    %7607 = vmatprep.subr.bf16.mxu0 %v7267
    %7608 = vmatpush1.bf16.msra.mxu0 %v7266
    %7609 = vmatprep.subr.bf16.mxu0 %v7271
    %7610 = vmatpush1.bf16.msra.mxu0 %v7270
    %7611 = vmatprep.subr.bf16.mxu0 %v7275
    %7612 = vmatpush1.bf16.msra.mxu0 %v7274
    %7613 = vmatprep.subr.bf16.mxu0 %v7279
    %7614 = vmatpush1.bf16.msra.mxu0 %v7278
    %7615 = vmatprep.subr.bf16.mxu0 %v7283
    %7616 = vmatpush1.bf16.msra.mxu0 %v7282
    %7617 = vmatprep.subr.bf16.mxu0 %v7287
    %7618 = vmatpush1.bf16.msra.mxu0 %v7286
    %7619 = vmatprep.subr.bf16.mxu0 %v7291
    %7620 = vmatpush1.bf16.msra.mxu0 %v7290
    %7621 = vmatprep.subr.bf16.mxu0 %v7295
    %7622 = vmatpush1.bf16.msra.mxu0 %v7294
    %7623 = vmatprep.subr.bf16.mxu0 %v7299
    %7624 = vmatpush1.bf16.msra.mxu0 %v7298
    %7625 = vmatprep.subr.bf16.mxu0 %v7303
    %7626 = vmatpush1.bf16.msra.mxu0 %v7302
    %7627 = vmatprep.subr.bf16.mxu0 %v7307
    %7628 = vmatpush1.bf16.msra.mxu0 %v7306
    %7629 = vmatprep.subr.bf16.mxu0 %v7311
    %7630 = vmatpush1.bf16.msra.mxu0 %v7310
    %7631 = vmatprep.mubr.bf16.mxu0 %v4553
    %7632 = vmatmul.mubr.bf16.gmra.mrb[0].mxu0 %v4552
    %v7633 = vpop.f32.mrb[0].mxu0
    %v7634 = vadd.f32 %v7581, %v7633
    %v7635 = vpop.f32.mrb[0].mxu0
    %v7636 = vadd.f32 %v7583, %v7635
    %v7637 = vpop.f32.mrb[0].mxu0
    %v7638 = vadd.f32 %v7585, %v7637
    %v7639 = vpop.f32.mrb[0].mxu0
    %v7640 = vadd.f32 %v7587, %v7639
    %7641 = vmatprep.mubr.bf16.mxu0 %v4557
    %7642 = vmatmul.mubr.bf16.gmra.mrb[0].mxu0 %v4556
    %v7643 = vpop.f32.mrb[0].mxu0
    %v7644 = vadd.f32 %v7591, %v7643
    %v7645 = vpop.f32.mrb[0].mxu0
    %v7646 = vadd.f32 %v7593, %v7645
    %v7647 = vpop.f32.mrb[0].mxu0
    %v7648 = vadd.f32 %v7595, %v7647
    %v7649 = vpop.f32.mrb[0].mxu0
    %v7650 = vadd.f32 %v7597, %v7649
    %7651 = vdwg.mxu0
    %v7652 = vmul.f32 %v452, %v6660
    %v7653 = vmul.f32 %v453, %v6662
    %v7654 = vmul.f32 %v454, %v6766
    %v7655 = vmul.f32 %v455, %v6768
    %v7656 = vmul.f32 %v456, %v6664
    %v7657 = vmul.f32 %v457, %v6666
    %v7658 = vmul.f32 %v458, %v6770
    %v7659 = vmul.f32 %v459, %v6772
    %v7660 = vmul.f32 %v460, %v6670
    %v7661 = vmul.f32 %v461, %v6672
    %v7662 = vmul.f32 %v462, %v6776
    %v7663 = vmul.f32 %v463, %v6778
    %v7664 = vmul.f32 %v464, %v6674
    %v7665 = vmul.f32 %v465, %v6676
    %v7666 = vmul.f32 %v466, %v6780
    %v7667 = vmul.f32 %v467, %v6782
    %v7668 = vadd.f32 %v7528, %v7652
    %v7669 = vadd.f32 %v7530, %v7653
    %v7670 = vadd.f32 %v7634, %v7654
    %v7671 = vadd.f32 %v7636, %v7655
    %v7672 = vadd.f32 %v7532, %v7656
    %v7673 = vadd.f32 %v7534, %v7657
    %v7674 = vadd.f32 %v7638, %v7658
    %v7675 = vadd.f32 %v7640, %v7659
    %v7676 = vadd.f32 %v7538, %v7660
    %v7677 = vadd.f32 %v7540, %v7661
    %v7678 = vadd.f32 %v7644, %v7662
    %v7679 = vadd.f32 %v7646, %v7663
    %v7680 = vadd.f32 %v7542, %v7664
    %v7681 = vadd.f32 %v7544, %v7665
    %v7682 = vadd.f32 %v7648, %v7666
    %v7683 = vadd.f32 %v7650, %v7667
    %v7684 = vld [vmem:[#allocation16] sm:$0xf]
    %v7685 = vld [vmem:[#allocation17] sm:$0xf]
    %7686 = vmatprep.subr.mxu0 %v181
    %7687 = vmatpush1.msra.mxu0 %v180
    %7688 = vmatprep.subr.mxu0 %v185
    %7689 = vmatpush1.msra.mxu0 %v184
    %7690 = vmatprep.subr.mxu0 %v189
    %7691 = vmatpush1.msra.mxu0 %v188
    %7692 = vmatprep.subr.mxu0 %v193
    %7693 = vmatpush1.msra.mxu0 %v192
    %7694 = vmatprep.subr.mxu0 %v197
    %7695 = vmatpush1.msra.mxu0 %v196
    %7696 = vmatprep.subr.mxu0 %v201
    %7697 = vmatpush1.msra.mxu0 %v200
    %7698 = vmatprep.subr.mxu0 %v205
    %7699 = vmatpush1.msra.mxu0 %v204
    %7700 = vmatprep.subr.mxu0 %v209
    %7701 = vmatpush1.msra.mxu0 %v208
    %7702 = vmatprep.subr.mxu0 %v213
    %7703 = vmatpush1.msra.mxu0 %v212
    %7704 = vmatprep.subr.mxu0 %v217
    %7705 = vmatpush1.msra.mxu0 %v216
    %7706 = vmatprep.subr.mxu0 %v221
    %7707 = vmatpush1.msra.mxu0 %v220
    %7708 = vmatprep.subr.mxu0 %v225
    %7709 = vmatpush1.msra.mxu0 %v224
    %7710 = vmatprep.subr.mxu0 %v229
    %7711 = vmatpush1.msra.mxu0 %v228
    %7712 = vmatprep.subr.mxu0 %v233
    %7713 = vmatpush1.msra.mxu0 %v232
    %7714 = vmatprep.subr.mxu0 %v237
    %7715 = vmatpush1.msra.mxu0 %v236
    %7716 = vmatprep.subr.mxu0 %v241
    %7717 = vmatpush1.msra.mxu0 %v240
    %7718 = vmatprep.subr.mxu0 %v245
    %7719 = vmatpush1.msra.mxu0 %v244
    %7720 = vmatprep.subr.mxu0 %v249
    %7721 = vmatpush1.msra.mxu0 %v248
    %7722 = vmatprep.subr.mxu0 %v253
    %7723 = vmatpush1.msra.mxu0 %v252
    %7724 = vmatprep.subr.mxu0 %v257
    %7725 = vmatpush1.msra.mxu0 %v256
    %7726 = vmatprep.subr.mxu0 %v261
    %7727 = vmatpush1.msra.mxu0 %v260
    %7728 = vmatprep.subr.mxu0 %v265
    %7729 = vmatpush1.msra.mxu0 %v264
    %7730 = vmatprep.subr.mxu0 %v269
    %7731 = vmatpush1.msra.mxu0 %v268
    %7732 = vmatprep.subr.mxu0 %v273
    %7733 = vmatpush1.msra.mxu0 %v272
    %7734 = vmatprep.subr.mxu0 %v277
    %7735 = vmatpush1.msra.mxu0 %v276
    %7736 = vmatprep.subr.mxu0 %v281
    %7737 = vmatpush1.msra.mxu0 %v280
    %7738 = vmatprep.subr.mxu0 %v285
    %7739 = vmatpush1.msra.mxu0 %v284
    %7740 = vmatprep.subr.mxu0 %v289
    %7741 = vmatpush1.msra.mxu0 %v288
    %7742 = vmatprep.subr.mxu0 %v293
    %7743 = vmatpush1.msra.mxu0 %v292
    %7744 = vmatprep.subr.mxu0 %v297
    %7745 = vmatpush1.msra.mxu0 %v296
    %7746 = vmatprep.subr.mxu0 %v301
    %7747 = vmatpush1.msra.mxu0 %v300
    %7748 = vmatprep.subr.mxu0 %v305
    %7749 = vmatpush1.msra.mxu0 %v304
    %7750 = vmatprep.mubr.f32.mxu0 %v7669
    %7751 = vmatmul.mubr.f32.gmra.mrb[0].mxu0 %v7668
    %v7752 = vpop.f32.mrb[0].mxu0
    %v7753 = vadd.f32 0.0, %v7752
    %v7754 = vpop.f32.mrb[0].mxu0
    %v7755 = vadd.f32 0.0, %v7754
    %7756 = vmatprep.mubr.f32.mxu0 %v7673
    %7757 = vmatmul.mubr.f32.gmra.mrb[0].mxu0 %v7672
    %v7758 = vpop.f32.mrb[0].mxu0
    %v7759 = vadd.f32 0.0, %v7758
    %v7760 = vpop.f32.mrb[0].mxu0
    %v7761 = vadd.f32 0.0, %v7760
    %7762 = vmatprep.mubr.f32.mxu0 %v7677
    %7763 = vmatmul.mubr.f32.gmra.mrb[0].mxu0 %v7676
    %v7764 = vpop.f32.mrb[0].mxu0
    %v7765 = vadd.f32 0.0, %v7764
    %v7766 = vpop.f32.mrb[0].mxu0
    %v7767 = vadd.f32 0.0, %v7766
    %7768 = vmatprep.mubr.f32.mxu0 %v7681
    %7769 = vmatmul.mubr.f32.gmra.mrb[0].mxu0 %v7680
    %v7770 = vpop.f32.mrb[0].mxu0
    %v7771 = vadd.f32 0.0, %v7770
    %v7772 = vpop.f32.mrb[0].mxu0
    %v7773 = vadd.f32 0.0, %v7772
    %7774 = vdwg.mxu0
    %7775 = vmatprep.subr.mxu0 %v309
    %7776 = vmatpush1.msra.mxu0 %v308
    %7777 = vmatprep.subr.mxu0 %v313
    %7778 = vmatpush1.msra.mxu0 %v312
    %7779 = vmatprep.subr.mxu0 %v317
    %7780 = vmatpush1.msra.mxu0 %v316
    %7781 = vmatprep.subr.mxu0 %v321
    %7782 = vmatpush1.msra.mxu0 %v320
    %7783 = vmatprep.subr.mxu0 %v325
    %7784 = vmatpush1.msra.mxu0 %v324
    %7785 = vmatprep.subr.mxu0 %v329
    %7786 = vmatpush1.msra.mxu0 %v328
    %7787 = vmatprep.subr.mxu0 %v333
    %7788 = vmatpush1.msra.mxu0 %v332
    %7789 = vmatprep.subr.mxu0 %v337
    %7790 = vmatpush1.msra.mxu0 %v336
    %7791 = vmatprep.subr.mxu0 %v341
    %7792 = vmatpush1.msra.mxu0 %v340
    %7793 = vmatprep.subr.mxu0 %v345
    %7794 = vmatpush1.msra.mxu0 %v344
    %7795 = vmatprep.subr.mxu0 %v349
    %7796 = vmatpush1.msra.mxu0 %v348
    %7797 = vmatprep.subr.mxu0 %v353
    %7798 = vmatpush1.msra.mxu0 %v352
    %7799 = vmatprep.subr.mxu0 %v357
    %7800 = vmatpush1.msra.mxu0 %v356
    %7801 = vmatprep.subr.mxu0 %v361
    %7802 = vmatpush1.msra.mxu0 %v360
    %7803 = vmatprep.subr.mxu0 %v365
    %7804 = vmatpush1.msra.mxu0 %v364
    %7805 = vmatprep.subr.mxu0 %v369
    %7806 = vmatpush1.msra.mxu0 %v368
    %7807 = vmatprep.subr.mxu0 %v373
    %7808 = vmatpush1.msra.mxu0 %v372
    %7809 = vmatprep.subr.mxu0 %v377
    %7810 = vmatpush1.msra.mxu0 %v376
    %7811 = vmatprep.subr.mxu0 %v381
    %7812 = vmatpush1.msra.mxu0 %v380
    %7813 = vmatprep.subr.mxu0 %v385
    %7814 = vmatpush1.msra.mxu0 %v384
    %7815 = vmatprep.subr.mxu0 %v389
    %7816 = vmatpush1.msra.mxu0 %v388
    %7817 = vmatprep.subr.mxu0 %v393
    %7818 = vmatpush1.msra.mxu0 %v392
    %7819 = vmatprep.subr.mxu0 %v397
    %7820 = vmatpush1.msra.mxu0 %v396
    %7821 = vmatprep.subr.mxu0 %v401
    %7822 = vmatpush1.msra.mxu0 %v400
    %7823 = vmatprep.subr.mxu0 %v405
    %7824 = vmatpush1.msra.mxu0 %v404
    %7825 = vmatprep.subr.mxu0 %v409
    %7826 = vmatpush1.msra.mxu0 %v408
    %7827 = vmatprep.subr.mxu0 %v413
    %7828 = vmatpush1.msra.mxu0 %v412
    %7829 = vmatprep.subr.mxu0 %v417
    %7830 = vmatpush1.msra.mxu0 %v416
    %7831 = vmatprep.subr.mxu0 %v421
    %7832 = vmatpush1.msra.mxu0 %v420
    %7833 = vmatprep.subr.mxu0 %v425
    %7834 = vmatpush1.msra.mxu0 %v424
    %7835 = vmatprep.subr.mxu0 %v429
    %7836 = vmatpush1.msra.mxu0 %v428
    %7837 = vmatprep.subr.mxu0 %v433
    %7838 = vmatpush1.msra.mxu0 %v432
    %7839 = vmatprep.mubr.f32.mxu0 %v7671
    %7840 = vmatmul.mubr.f32.gmra.mrb[0].mxu0 %v7670
    %v7841 = vpop.f32.mrb[0].mxu0
    %v7842 = vadd.f32 %v7753, %v7841
    %v7843 = vpop.f32.mrb[0].mxu0
    %v7844 = vadd.f32 %v7755, %v7843
    %7845 = vmatprep.mubr.f32.mxu0 %v7675
    %7846 = vmatmul.mubr.f32.gmra.mrb[0].mxu0 %v7674
    %v7847 = vpop.f32.mrb[0].mxu0
    %v7848 = vadd.f32 %v7759, %v7847
    %v7849 = vpop.f32.mrb[0].mxu0
    %v7850 = vadd.f32 %v7761, %v7849
    %7851 = vmatprep.mubr.f32.mxu0 %v7679
    %7852 = vmatmul.mubr.f32.gmra.mrb[0].mxu0 %v7678
    %v7853 = vpop.f32.mrb[0].mxu0
    %v7854 = vadd.f32 %v7765, %v7853
    %v7855 = vpop.f32.mrb[0].mxu0
    %v7856 = vadd.f32 %v7767, %v7855
    %7857 = vmatprep.mubr.f32.mxu0 %v7683
    %7858 = vmatmul.mubr.f32.gmra.mrb[0].mxu0 %v7682
    %v7859 = vpop.f32.mrb[0].mxu0
    %v7860 = vadd.f32 %v7771, %v7859
    %v7861 = vpop.f32.mrb[0].mxu0
    %v7862 = vadd.f32 %v7773, %v7861
    %7863 = vdwg.mxu0
    %7864 = vmatprep.subr.mxu0 %v183
    %7865 = vmatpush1.msra.mxu0 %v182
    %7866 = vmatprep.subr.mxu0 %v187
    %7867 = vmatpush1.msra.mxu0 %v186
    %7868 = vmatprep.subr.mxu0 %v191
    %7869 = vmatpush1.msra.mxu0 %v190
    %7870 = vmatprep.subr.mxu0 %v195
    %7871 = vmatpush1.msra.mxu0 %v194
    %7872 = vmatprep.subr.mxu0 %v199
    %7873 = vmatpush1.msra.mxu0 %v198
    %7874 = vmatprep.subr.mxu0 %v203
    %7875 = vmatpush1.msra.mxu0 %v202
    %7876 = vmatprep.subr.mxu0 %v207
    %7877 = vmatpush1.msra.mxu0 %v206
    %7878 = vmatprep.subr.mxu0 %v211
    %7879 = vmatpush1.msra.mxu0 %v210
    %7880 = vmatprep.subr.mxu0 %v215
    %7881 = vmatpush1.msra.mxu0 %v214
    %7882 = vmatprep.subr.mxu0 %v219
    %7883 = vmatpush1.msra.mxu0 %v218
    %7884 = vmatprep.subr.mxu0 %v223
    %7885 = vmatpush1.msra.mxu0 %v222
    %7886 = vmatprep.subr.mxu0 %v227
    %7887 = vmatpush1.msra.mxu0 %v226
    %7888 = vmatprep.subr.mxu0 %v231
    %7889 = vmatpush1.msra.mxu0 %v230
    %7890 = vmatprep.subr.mxu0 %v235
    %7891 = vmatpush1.msra.mxu0 %v234
    %7892 = vmatprep.subr.mxu0 %v239
    %7893 = vmatpush1.msra.mxu0 %v238
    %7894 = vmatprep.subr.mxu0 %v243
    %7895 = vmatpush1.msra.mxu0 %v242
    %7896 = vmatprep.subr.mxu0 %v247
    %7897 = vmatpush1.msra.mxu0 %v246
    %7898 = vmatprep.subr.mxu0 %v251
    %7899 = vmatpush1.msra.mxu0 %v250
    %7900 = vmatprep.subr.mxu0 %v255
    %7901 = vmatpush1.msra.mxu0 %v254
    %7902 = vmatprep.subr.mxu0 %v259
    %7903 = vmatpush1.msra.mxu0 %v258
    %7904 = vmatprep.subr.mxu0 %v263
    %7905 = vmatpush1.msra.mxu0 %v262
    %7906 = vmatprep.subr.mxu0 %v267
    %7907 = vmatpush1.msra.mxu0 %v266
    %7908 = vmatprep.subr.mxu0 %v271
    %7909 = vmatpush1.msra.mxu0 %v270
    %7910 = vmatprep.subr.mxu0 %v275
    %7911 = vmatpush1.msra.mxu0 %v274
    %7912 = vmatprep.subr.mxu0 %v279
    %7913 = vmatpush1.msra.mxu0 %v278
    %7914 = vmatprep.subr.mxu0 %v283
    %7915 = vmatpush1.msra.mxu0 %v282
    %7916 = vmatprep.subr.mxu0 %v287
    %7917 = vmatpush1.msra.mxu0 %v286
    %7918 = vmatprep.subr.mxu0 %v291
    %7919 = vmatpush1.msra.mxu0 %v290
    %7920 = vmatprep.subr.mxu0 %v295
    %7921 = vmatpush1.msra.mxu0 %v294
    %7922 = vmatprep.subr.mxu0 %v299
    %7923 = vmatpush1.msra.mxu0 %v298
    %7924 = vmatprep.subr.mxu0 %v303
    %7925 = vmatpush1.msra.mxu0 %v302
    %7926 = vmatprep.subr.mxu0 %v307
    %7927 = vmatpush1.msra.mxu0 %v306
    %7928 = vmatprep.mubr.f32.mxu0 %v7669
    %7929 = vmatmul.mubr.f32.gmra.mrb[0].mxu0 %v7668
    %v7930 = vpop.f32.mrb[0].mxu0
    %v7931 = vadd.f32 0.0, %v7930
    %v7932 = vpop.f32.mrb[0].mxu0
    %v7933 = vadd.f32 0.0, %v7932
    %7934 = vmatprep.mubr.f32.mxu0 %v7673
    %7935 = vmatmul.mubr.f32.gmra.mrb[0].mxu0 %v7672
    %v7936 = vpop.f32.mrb[0].mxu0
    %v7937 = vadd.f32 0.0, %v7936
    %v7938 = vpop.f32.mrb[0].mxu0
    %v7939 = vadd.f32 0.0, %v7938
    %7940 = vmatprep.mubr.f32.mxu0 %v7677
    %7941 = vmatmul.mubr.f32.gmra.mrb[0].mxu0 %v7676
    %v7942 = vpop.f32.mrb[0].mxu0
    %v7943 = vadd.f32 0.0, %v7942
    %v7944 = vpop.f32.mrb[0].mxu0
    %v7945 = vadd.f32 0.0, %v7944
    %7946 = vmatprep.mubr.f32.mxu0 %v7681
    %7947 = vmatmul.mubr.f32.gmra.mrb[0].mxu0 %v7680
    %v7948 = vpop.f32.mrb[0].mxu0
    %v7949 = vadd.f32 0.0, %v7948
    %v7950 = vpop.f32.mrb[0].mxu0
    %v7951 = vadd.f32 0.0, %v7950
    %7952 = vdwg.mxu0
    %7953 = vmatprep.subr.mxu0 %v311
    %7954 = vmatpush1.msra.mxu0 %v310
    %7955 = vmatprep.subr.mxu0 %v315
    %7956 = vmatpush1.msra.mxu0 %v314
    %7957 = vmatprep.subr.mxu0 %v319
    %7958 = vmatpush1.msra.mxu0 %v318
    %7959 = vmatprep.subr.mxu0 %v323
    %7960 = vmatpush1.msra.mxu0 %v322
    %7961 = vmatprep.subr.mxu0 %v327
    %7962 = vmatpush1.msra.mxu0 %v326
    %7963 = vmatprep.subr.mxu0 %v331
    %7964 = vmatpush1.msra.mxu0 %v330
    %7965 = vmatprep.subr.mxu0 %v335
    %7966 = vmatpush1.msra.mxu0 %v334
    %7967 = vmatprep.subr.mxu0 %v339
    %7968 = vmatpush1.msra.mxu0 %v338
    %7969 = vmatprep.subr.mxu0 %v343
    %7970 = vmatpush1.msra.mxu0 %v342
    %7971 = vmatprep.subr.mxu0 %v347
    %7972 = vmatpush1.msra.mxu0 %v346
    %7973 = vmatprep.subr.mxu0 %v351
    %7974 = vmatpush1.msra.mxu0 %v350
    %7975 = vmatprep.subr.mxu0 %v355
    %7976 = vmatpush1.msra.mxu0 %v354
    %7977 = vmatprep.subr.mxu0 %v359
    %7978 = vmatpush1.msra.mxu0 %v358
    %7979 = vmatprep.subr.mxu0 %v363
    %7980 = vmatpush1.msra.mxu0 %v362
    %7981 = vmatprep.subr.mxu0 %v367
    %7982 = vmatpush1.msra.mxu0 %v366
    %7983 = vmatprep.subr.mxu0 %v371
    %7984 = vmatpush1.msra.mxu0 %v370
    %7985 = vmatprep.subr.mxu0 %v375
    %7986 = vmatpush1.msra.mxu0 %v374
    %7987 = vmatprep.subr.mxu0 %v379
    %7988 = vmatpush1.msra.mxu0 %v378
    %7989 = vmatprep.subr.mxu0 %v383
    %7990 = vmatpush1.msra.mxu0 %v382
    %7991 = vmatprep.subr.mxu0 %v387
    %7992 = vmatpush1.msra.mxu0 %v386
    %7993 = vmatprep.subr.mxu0 %v391
    %7994 = vmatpush1.msra.mxu0 %v390
    %7995 = vmatprep.subr.mxu0 %v395
    %7996 = vmatpush1.msra.mxu0 %v394
    %7997 = vmatprep.subr.mxu0 %v399
    %7998 = vmatpush1.msra.mxu0 %v398
    %7999 = vmatprep.subr.mxu0 %v403
    %8000 = vmatpush1.msra.mxu0 %v402
    %8001 = vmatprep.subr.mxu0 %v407
    %8002 = vmatpush1.msra.mxu0 %v406
    %8003 = vmatprep.subr.mxu0 %v411
    %8004 = vmatpush1.msra.mxu0 %v410
    %8005 = vmatprep.subr.mxu0 %v415
    %8006 = vmatpush1.msra.mxu0 %v414
    %8007 = vmatprep.subr.mxu0 %v419
    %8008 = vmatpush1.msra.mxu0 %v418
    %8009 = vmatprep.subr.mxu0 %v423
    %8010 = vmatpush1.msra.mxu0 %v422
    %8011 = vmatprep.subr.mxu0 %v427
    %8012 = vmatpush1.msra.mxu0 %v426
    %8013 = vmatprep.subr.mxu0 %v431
    %8014 = vmatpush1.msra.mxu0 %v430
    %8015 = vmatprep.subr.mxu0 %v435
    %8016 = vmatpush1.msra.mxu0 %v434
    %8017 = vmatprep.mubr.f32.mxu0 %v7671
    %8018 = vmatmul.mubr.f32.gmra.mrb[0].mxu0 %v7670
    %v8019 = vpop.f32.mrb[0].mxu0
    %v8020 = vadd.f32 %v7931, %v8019
    %v8021 = vpop.f32.mrb[0].mxu0
    %v8022 = vadd.f32 %v7933, %v8021
    %8023 = vmatprep.mubr.f32.mxu0 %v7675
    %8024 = vmatmul.mubr.f32.gmra.mrb[0].mxu0 %v7674
    %v8025 = vpop.f32.mrb[0].mxu0
    %v8026 = vadd.f32 %v7937, %v8025
    %v8027 = vpop.f32.mrb[0].mxu0
    %v8028 = vadd.f32 %v7939, %v8027
    %8029 = vmatprep.mubr.f32.mxu0 %v7679
    %8030 = vmatmul.mubr.f32.gmra.mrb[0].mxu0 %v7678
    %v8031 = vpop.f32.mrb[0].mxu0
    %v8032 = vadd.f32 %v7943, %v8031
    %v8033 = vpop.f32.mrb[0].mxu0
    %v8034 = vadd.f32 %v7945, %v8033
    %8035 = vmatprep.mubr.f32.mxu0 %v7683
    %8036 = vmatmul.mubr.f32.gmra.mrb[0].mxu0 %v7682
    %v8037 = vpop.f32.mrb[0].mxu0
    %v8038 = vadd.f32 %v7949, %v8037
    %v8039 = vpop.f32.mrb[0].mxu0
    %v8040 = vadd.f32 %v7951, %v8039
    %8041 = vdwg.mxu0
    %v8042 = vadd.f32 %v7842, %v7848
    %v8043 = vadd.f32 %v8042, %v7854
    %v8044 = vadd.f32 %v8043, %v7860
    %v8045 = vrot.slane %v8044, 4
    %v8046 = vadd.f32 %v8044, %v8045
    %v8047 = vrot.slane %v8046, 2
    %v8048 = vadd.f32 %v8046, %v8047
    %v8049 = vrot.slane %v8048, 1
    %v8050 = vadd.f32 %v8048, %v8049
    %v8051 = vadd.f32 %v7844, %v7850
    %v8052 = vadd.f32 %v8051, %v7856
    %v8053 = vadd.f32 %v8052, %v7862
    %v8054 = vrot.slane %v8053, 4
    %v8055 = vadd.f32 %v8053, %v8054
    %v8056 = vrot.slane %v8055, 2
    %v8057 = vadd.f32 %v8055, %v8056
    %v8058 = vrot.slane %v8057, 1
    %v8059 = vadd.f32 %v8057, %v8058
    %v8060 = vadd.f32 %v8020, %v8026
    %v8061 = vadd.f32 %v8060, %v8032
    %v8062 = vadd.f32 %v8061, %v8038
    %v8063 = vrot.slane %v8062, 4
    %v8064 = vadd.f32 %v8062, %v8063
    %v8065 = vrot.slane %v8064, 2
    %v8066 = vadd.f32 %v8064, %v8065
    %v8067 = vrot.slane %v8066, 1
    %v8068 = vadd.f32 %v8066, %v8067
    %v8069 = vadd.f32 %v8022, %v8028
    %v8070 = vadd.f32 %v8069, %v8034
    %v8071 = vadd.f32 %v8070, %v8040
    %v8072 = vrot.slane %v8071, 4
    %v8073 = vadd.f32 %v8071, %v8072
    %v8074 = vrot.slane %v8073, 2
    %v8075 = vadd.f32 %v8073, %v8074
    %v8076 = vrot.slane %v8075, 1
    %v8077 = vadd.f32 %v8075, %v8076
    %v8078 = vsub.f32 %v7668, %v8050
    %v8079 = vsub.f32 %v7669, %v8059
    %v8080 = vsub.f32 %v7670, %v8068
    %v8081 = vsub.f32 %v7671, %v8077
    %v8082 = vsub.f32 %v7672, %v8050
    %v8083 = vsub.f32 %v7673, %v8059
    %v8084 = vsub.f32 %v7674, %v8068
    %v8085 = vsub.f32 %v7675, %v8077
    %v8086 = vsub.f32 %v7676, %v8050
    %v8087 = vsub.f32 %v7677, %v8059
    %v8088 = vsub.f32 %v7678, %v8068
    %v8089 = vsub.f32 %v7679, %v8077
    %v8090 = vsub.f32 %v7680, %v8050
    %v8091 = vsub.f32 %v7681, %v8059
    %v8092 = vsub.f32 %v7682, %v8068
    %v8093 = vsub.f32 %v7683, %v8077
    %v8094 = vmul.f32 %v8078, %v8078
    %v8095 = vmul.f32 %v8079, %v8079
    %v8096 = vmul.f32 %v8080, %v8080
    %v8097 = vmul.f32 %v8081, %v8081
    %v8098 = vmul.f32 %v8082, %v8082
    %v8099 = vmul.f32 %v8083, %v8083
    %v8100 = vmul.f32 %v8084, %v8084
    %v8101 = vmul.f32 %v8085, %v8085
    %v8102 = vmul.f32 %v8086, %v8086
    %v8103 = vmul.f32 %v8087, %v8087
    %v8104 = vmul.f32 %v8088, %v8088
    %v8105 = vmul.f32 %v8089, %v8089
    %v8106 = vmul.f32 %v8090, %v8090
    %v8107 = vmul.f32 %v8091, %v8091
    %v8108 = vmul.f32 %v8092, %v8092
    %v8109 = vmul.f32 %v8093, %v8093
    %8110 = vmatprep.subr.mxu0 %v181
    %8111 = vmatpush1.msra.mxu0 %v180
    %8112 = vmatprep.subr.mxu0 %v185
    %8113 = vmatpush1.msra.mxu0 %v184
    %8114 = vmatprep.subr.mxu0 %v189
    %8115 = vmatpush1.msra.mxu0 %v188
    %8116 = vmatprep.subr.mxu0 %v193
    %8117 = vmatpush1.msra.mxu0 %v192
    %8118 = vmatprep.subr.mxu0 %v197
    %8119 = vmatpush1.msra.mxu0 %v196
    %8120 = vmatprep.subr.mxu0 %v201
    %8121 = vmatpush1.msra.mxu0 %v200
    %8122 = vmatprep.subr.mxu0 %v205
    %8123 = vmatpush1.msra.mxu0 %v204
    %8124 = vmatprep.subr.mxu0 %v209
    %8125 = vmatpush1.msra.mxu0 %v208
    %8126 = vmatprep.subr.mxu0 %v213
    %8127 = vmatpush1.msra.mxu0 %v212
    %8128 = vmatprep.subr.mxu0 %v217
    %8129 = vmatpush1.msra.mxu0 %v216
    %8130 = vmatprep.subr.mxu0 %v221
    %8131 = vmatpush1.msra.mxu0 %v220
    %8132 = vmatprep.subr.mxu0 %v225
    %8133 = vmatpush1.msra.mxu0 %v224
    %8134 = vmatprep.subr.mxu0 %v229
    %8135 = vmatpush1.msra.mxu0 %v228
    %8136 = vmatprep.subr.mxu0 %v233
    %8137 = vmatpush1.msra.mxu0 %v232
    %8138 = vmatprep.subr.mxu0 %v237
    %8139 = vmatpush1.msra.mxu0 %v236
    %8140 = vmatprep.subr.mxu0 %v241
    %8141 = vmatpush1.msra.mxu0 %v240
    %8142 = vmatprep.subr.mxu0 %v245
    %8143 = vmatpush1.msra.mxu0 %v244
    %8144 = vmatprep.subr.mxu0 %v249
    %8145 = vmatpush1.msra.mxu0 %v248
    %8146 = vmatprep.subr.mxu0 %v253
    %8147 = vmatpush1.msra.mxu0 %v252
    %8148 = vmatprep.subr.mxu0 %v257
    %8149 = vmatpush1.msra.mxu0 %v256
    %8150 = vmatprep.subr.mxu0 %v261
    %8151 = vmatpush1.msra.mxu0 %v260
    %8152 = vmatprep.subr.mxu0 %v265
    %8153 = vmatpush1.msra.mxu0 %v264
    %8154 = vmatprep.subr.mxu0 %v269
    %8155 = vmatpush1.msra.mxu0 %v268
    %8156 = vmatprep.subr.mxu0 %v273
    %8157 = vmatpush1.msra.mxu0 %v272
    %8158 = vmatprep.subr.mxu0 %v277
    %8159 = vmatpush1.msra.mxu0 %v276
    %8160 = vmatprep.subr.mxu0 %v281
    %8161 = vmatpush1.msra.mxu0 %v280
    %8162 = vmatprep.subr.mxu0 %v285
    %8163 = vmatpush1.msra.mxu0 %v284
    %8164 = vmatprep.subr.mxu0 %v289
    %8165 = vmatpush1.msra.mxu0 %v288
    %8166 = vmatprep.subr.mxu0 %v293
    %8167 = vmatpush1.msra.mxu0 %v292
    %8168 = vmatprep.subr.mxu0 %v297
    %8169 = vmatpush1.msra.mxu0 %v296
    %8170 = vmatprep.subr.mxu0 %v301
    %8171 = vmatpush1.msra.mxu0 %v300
    %8172 = vmatprep.subr.mxu0 %v305
    %8173 = vmatpush1.msra.mxu0 %v304
    %8174 = vmatprep.mubr.f32.mxu0 %v8095
    %8175 = vmatmul.mubr.f32.gmra.mrb[0].mxu0 %v8094
    %v8176 = vpop.f32.mrb[0].mxu0
    %v8177 = vadd.f32 0.0, %v8176
    %v8178 = vpop.f32.mrb[0].mxu0
    %v8179 = vadd.f32 0.0, %v8178
    %8180 = vmatprep.mubr.f32.mxu0 %v8099
    %8181 = vmatmul.mubr.f32.gmra.mrb[0].mxu0 %v8098
    %v8182 = vpop.f32.mrb[0].mxu0
    %v8183 = vadd.f32 0.0, %v8182
    %v8184 = vpop.f32.mrb[0].mxu0
    %v8185 = vadd.f32 0.0, %v8184
    %8186 = vmatprep.mubr.f32.mxu0 %v8103
    %8187 = vmatmul.mubr.f32.gmra.mrb[0].mxu0 %v8102
    %v8188 = vpop.f32.mrb[0].mxu0
    %v8189 = vadd.f32 0.0, %v8188
    %v8190 = vpop.f32.mrb[0].mxu0
    %v8191 = vadd.f32 0.0, %v8190
    %8192 = vmatprep.mubr.f32.mxu0 %v8107
    %8193 = vmatmul.mubr.f32.gmra.mrb[0].mxu0 %v8106
    %v8194 = vpop.f32.mrb[0].mxu0
    %v8195 = vadd.f32 0.0, %v8194
    %v8196 = vpop.f32.mrb[0].mxu0
    %v8197 = vadd.f32 0.0, %v8196
    %8198 = vdwg.mxu0
    %8199 = vmatprep.subr.mxu0 %v309
    %8200 = vmatpush1.msra.mxu0 %v308
    %8201 = vmatprep.subr.mxu0 %v313
    %8202 = vmatpush1.msra.mxu0 %v312
    %8203 = vmatprep.subr.mxu0 %v317
    %8204 = vmatpush1.msra.mxu0 %v316
    %8205 = vmatprep.subr.mxu0 %v321
    %8206 = vmatpush1.msra.mxu0 %v320
    %8207 = vmatprep.subr.mxu0 %v325
    %8208 = vmatpush1.msra.mxu0 %v324
    %8209 = vmatprep.subr.mxu0 %v329
    %8210 = vmatpush1.msra.mxu0 %v328
    %8211 = vmatprep.subr.mxu0 %v333
    %8212 = vmatpush1.msra.mxu0 %v332
    %8213 = vmatprep.subr.mxu0 %v337
    %8214 = vmatpush1.msra.mxu0 %v336
    %8215 = vmatprep.subr.mxu0 %v341
    %8216 = vmatpush1.msra.mxu0 %v340
    %8217 = vmatprep.subr.mxu0 %v345
    %8218 = vmatpush1.msra.mxu0 %v344
    %8219 = vmatprep.subr.mxu0 %v349
    %8220 = vmatpush1.msra.mxu0 %v348
    %8221 = vmatprep.subr.mxu0 %v353
    %8222 = vmatpush1.msra.mxu0 %v352
    %8223 = vmatprep.subr.mxu0 %v357
    %8224 = vmatpush1.msra.mxu0 %v356
    %8225 = vmatprep.subr.mxu0 %v361
    %8226 = vmatpush1.msra.mxu0 %v360
    %8227 = vmatprep.subr.mxu0 %v365
    %8228 = vmatpush1.msra.mxu0 %v364
    %8229 = vmatprep.subr.mxu0 %v369
    %8230 = vmatpush1.msra.mxu0 %v368
    %8231 = vmatprep.subr.mxu0 %v373
    %8232 = vmatpush1.msra.mxu0 %v372
    %8233 = vmatprep.subr.mxu0 %v377
    %8234 = vmatpush1.msra.mxu0 %v376
    %8235 = vmatprep.subr.mxu0 %v381
    %8236 = vmatpush1.msra.mxu0 %v380
    %8237 = vmatprep.subr.mxu0 %v385
    %8238 = vmatpush1.msra.mxu0 %v384
    %8239 = vmatprep.subr.mxu0 %v389
    %8240 = vmatpush1.msra.mxu0 %v388
    %8241 = vmatprep.subr.mxu0 %v393
    %8242 = vmatpush1.msra.mxu0 %v392
    %8243 = vmatprep.subr.mxu0 %v397
    %8244 = vmatpush1.msra.mxu0 %v396
    %8245 = vmatprep.subr.mxu0 %v401
    %8246 = vmatpush1.msra.mxu0 %v400
    %8247 = vmatprep.subr.mxu0 %v405
    %8248 = vmatpush1.msra.mxu0 %v404
    %8249 = vmatprep.subr.mxu0 %v409
    %8250 = vmatpush1.msra.mxu0 %v408
    %8251 = vmatprep.subr.mxu0 %v413
    %8252 = vmatpush1.msra.mxu0 %v412
    %8253 = vmatprep.subr.mxu0 %v417
    %8254 = vmatpush1.msra.mxu0 %v416
    %8255 = vmatprep.subr.mxu0 %v421
    %8256 = vmatpush1.msra.mxu0 %v420
    %8257 = vmatprep.subr.mxu0 %v425
    %8258 = vmatpush1.msra.mxu0 %v424
    %8259 = vmatprep.subr.mxu0 %v429
    %8260 = vmatpush1.msra.mxu0 %v428
    %8261 = vmatprep.subr.mxu0 %v433
    %8262 = vmatpush1.msra.mxu0 %v432
    %8263 = vmatprep.mubr.f32.mxu0 %v8097
    %8264 = vmatmul.mubr.f32.gmra.mrb[0].mxu0 %v8096
    %v8265 = vpop.f32.mrb[0].mxu0
    %v8266 = vadd.f32 %v8177, %v8265
    %v8267 = vpop.f32.mrb[0].mxu0
    %v8268 = vadd.f32 %v8179, %v8267
    %8269 = vmatprep.mubr.f32.mxu0 %v8101
    %8270 = vmatmul.mubr.f32.gmra.mrb[0].mxu0 %v8100
    %v8271 = vpop.f32.mrb[0].mxu0
    %v8272 = vadd.f32 %v8183, %v8271
    %v8273 = vpop.f32.mrb[0].mxu0
    %v8274 = vadd.f32 %v8185, %v8273
    %8275 = vmatprep.mubr.f32.mxu0 %v8105
    %8276 = vmatmul.mubr.f32.gmra.mrb[0].mxu0 %v8104
    %v8277 = vpop.f32.mrb[0].mxu0
    %v8278 = vadd.f32 %v8189, %v8277
    %v8279 = vpop.f32.mrb[0].mxu0
    %v8280 = vadd.f32 %v8191, %v8279
    %8281 = vmatprep.mubr.f32.mxu0 %v8109
    %8282 = vmatmul.mubr.f32.gmra.mrb[0].mxu0 %v8108
    %v8283 = vpop.f32.mrb[0].mxu0
    %v8284 = vadd.f32 %v8195, %v8283
    %v8285 = vpop.f32.mrb[0].mxu0
    %v8286 = vadd.f32 %v8197, %v8285
    %8287 = vdwg.mxu0
    %8288 = vmatprep.subr.mxu0 %v183
    %8289 = vmatpush1.msra.mxu0 %v182
    %8290 = vmatprep.subr.mxu0 %v187
    %8291 = vmatpush1.msra.mxu0 %v186
    %8292 = vmatprep.subr.mxu0 %v191
    %8293 = vmatpush1.msra.mxu0 %v190
    %8294 = vmatprep.subr.mxu0 %v195
    %8295 = vmatpush1.msra.mxu0 %v194
    %8296 = vmatprep.subr.mxu0 %v199
    %8297 = vmatpush1.msra.mxu0 %v198
    %8298 = vmatprep.subr.mxu0 %v203
    %8299 = vmatpush1.msra.mxu0 %v202
    %8300 = vmatprep.subr.mxu0 %v207
    %8301 = vmatpush1.msra.mxu0 %v206
    %8302 = vmatprep.subr.mxu0 %v211
    %8303 = vmatpush1.msra.mxu0 %v210
    %8304 = vmatprep.subr.mxu0 %v215
    %8305 = vmatpush1.msra.mxu0 %v214
    %8306 = vmatprep.subr.mxu0 %v219
    %8307 = vmatpush1.msra.mxu0 %v218
    %8308 = vmatprep.subr.mxu0 %v223
    %8309 = vmatpush1.msra.mxu0 %v222
    %8310 = vmatprep.subr.mxu0 %v227
    %8311 = vmatpush1.msra.mxu0 %v226
    %8312 = vmatprep.subr.mxu0 %v231
    %8313 = vmatpush1.msra.mxu0 %v230
    %8314 = vmatprep.subr.mxu0 %v235
    %8315 = vmatpush1.msra.mxu0 %v234
    %8316 = vmatprep.subr.mxu0 %v239
    %8317 = vmatpush1.msra.mxu0 %v238
    %8318 = vmatprep.subr.mxu0 %v243
    %8319 = vmatpush1.msra.mxu0 %v242
    %8320 = vmatprep.subr.mxu0 %v247
    %8321 = vmatpush1.msra.mxu0 %v246
    %8322 = vmatprep.subr.mxu0 %v251
    %8323 = vmatpush1.msra.mxu0 %v250
    %8324 = vmatprep.subr.mxu0 %v255
    %8325 = vmatpush1.msra.mxu0 %v254
    %8326 = vmatprep.subr.mxu0 %v259
    %8327 = vmatpush1.msra.mxu0 %v258
    %8328 = vmatprep.subr.mxu0 %v263
    %8329 = vmatpush1.msra.mxu0 %v262
    %8330 = vmatprep.subr.mxu0 %v267
    %8331 = vmatpush1.msra.mxu0 %v266
    %8332 = vmatprep.subr.mxu0 %v271
    %8333 = vmatpush1.msra.mxu0 %v270
    %8334 = vmatprep.subr.mxu0 %v275
    %8335 = vmatpush1.msra.mxu0 %v274
    %8336 = vmatprep.subr.mxu0 %v279
    %8337 = vmatpush1.msra.mxu0 %v278
    %8338 = vmatprep.subr.mxu0 %v283
    %8339 = vmatpush1.msra.mxu0 %v282
    %8340 = vmatprep.subr.mxu0 %v287
    %8341 = vmatpush1.msra.mxu0 %v286
    %8342 = vmatprep.subr.mxu0 %v291
    %8343 = vmatpush1.msra.mxu0 %v290
    %8344 = vmatprep.subr.mxu0 %v295
    %8345 = vmatpush1.msra.mxu0 %v294
    %8346 = vmatprep.subr.mxu0 %v299
    %8347 = vmatpush1.msra.mxu0 %v298
    %8348 = vmatprep.subr.mxu0 %v303
    %8349 = vmatpush1.msra.mxu0 %v302
    %8350 = vmatprep.subr.mxu0 %v307
    %8351 = vmatpush1.msra.mxu0 %v306
    %8352 = vmatprep.mubr.f32.mxu0 %v8095
    %8353 = vmatmul.mubr.f32.gmra.mrb[0].mxu0 %v8094
    %v8354 = vpop.f32.mrb[0].mxu0
    %v8355 = vadd.f32 0.0, %v8354
    %v8356 = vpop.f32.mrb[0].mxu0
    %v8357 = vadd.f32 0.0, %v8356
    %8358 = vmatprep.mubr.f32.mxu0 %v8099
    %8359 = vmatmul.mubr.f32.gmra.mrb[0].mxu0 %v8098
    %v8360 = vpop.f32.mrb[0].mxu0
    %v8361 = vadd.f32 0.0, %v8360
    %v8362 = vpop.f32.mrb[0].mxu0
    %v8363 = vadd.f32 0.0, %v8362
    %8364 = vmatprep.mubr.f32.mxu0 %v8103
    %8365 = vmatmul.mubr.f32.gmra.mrb[0].mxu0 %v8102
    %v8366 = vpop.f32.mrb[0].mxu0
    %v8367 = vadd.f32 0.0, %v8366
    %v8368 = vpop.f32.mrb[0].mxu0
    %v8369 = vadd.f32 0.0, %v8368
    %8370 = vmatprep.mubr.f32.mxu0 %v8107
    %8371 = vmatmul.mubr.f32.gmra.mrb[0].mxu0 %v8106
    %v8372 = vpop.f32.mrb[0].mxu0
    %v8373 = vadd.f32 0.0, %v8372
    %v8374 = vpop.f32.mrb[0].mxu0
    %v8375 = vadd.f32 0.0, %v8374
    %8376 = vdwg.mxu0
    %8377 = vmatprep.subr.mxu0 %v311
    %8378 = vmatpush1.msra.mxu0 %v310
    %8379 = vmatprep.subr.mxu0 %v315
    %8380 = vmatpush1.msra.mxu0 %v314
    %8381 = vmatprep.subr.mxu0 %v319
    %8382 = vmatpush1.msra.mxu0 %v318
    %8383 = vmatprep.subr.mxu0 %v323
    %8384 = vmatpush1.msra.mxu0 %v322
    %8385 = vmatprep.subr.mxu0 %v327
    %8386 = vmatpush1.msra.mxu0 %v326
    %8387 = vmatprep.subr.mxu0 %v331
    %8388 = vmatpush1.msra.mxu0 %v330
    %8389 = vmatprep.subr.mxu0 %v335
    %8390 = vmatpush1.msra.mxu0 %v334
    %8391 = vmatprep.subr.mxu0 %v339
    %8392 = vmatpush1.msra.mxu0 %v338
    %8393 = vmatprep.subr.mxu0 %v343
    %8394 = vmatpush1.msra.mxu0 %v342
    %8395 = vmatprep.subr.mxu0 %v347
    %8396 = vmatpush1.msra.mxu0 %v346
    %8397 = vmatprep.subr.mxu0 %v351
    %8398 = vmatpush1.msra.mxu0 %v350
    %8399 = vmatprep.subr.mxu0 %v355
    %8400 = vmatpush1.msra.mxu0 %v354
    %8401 = vmatprep.subr.mxu0 %v359
    %8402 = vmatpush1.msra.mxu0 %v358
    %8403 = vmatprep.subr.mxu0 %v363
    %8404 = vmatpush1.msra.mxu0 %v362
    %8405 = vmatprep.subr.mxu0 %v367
    %8406 = vmatpush1.msra.mxu0 %v366
    %8407 = vmatprep.subr.mxu0 %v371
    %8408 = vmatpush1.msra.mxu0 %v370
    %8409 = vmatprep.subr.mxu0 %v375
    %8410 = vmatpush1.msra.mxu0 %v374
    %8411 = vmatprep.subr.mxu0 %v379
    %8412 = vmatpush1.msra.mxu0 %v378
    %8413 = vmatprep.subr.mxu0 %v383
    %8414 = vmatpush1.msra.mxu0 %v382
    %8415 = vmatprep.subr.mxu0 %v387
    %8416 = vmatpush1.msra.mxu0 %v386
    %8417 = vmatprep.subr.mxu0 %v391
    %8418 = vmatpush1.msra.mxu0 %v390
    %8419 = vmatprep.subr.mxu0 %v395
    %8420 = vmatpush1.msra.mxu0 %v394
    %8421 = vmatprep.subr.mxu0 %v399
    %8422 = vmatpush1.msra.mxu0 %v398
    %8423 = vmatprep.subr.mxu0 %v403
    %8424 = vmatpush1.msra.mxu0 %v402
    %8425 = vmatprep.subr.mxu0 %v407
    %8426 = vmatpush1.msra.mxu0 %v406
    %8427 = vmatprep.subr.mxu0 %v411
    %8428 = vmatpush1.msra.mxu0 %v410
    %8429 = vmatprep.subr.mxu0 %v415
    %8430 = vmatpush1.msra.mxu0 %v414
    %8431 = vmatprep.subr.mxu0 %v419
    %8432 = vmatpush1.msra.mxu0 %v418
    %8433 = vmatprep.subr.mxu0 %v423
    %8434 = vmatpush1.msra.mxu0 %v422
    %8435 = vmatprep.subr.mxu0 %v427
    %8436 = vmatpush1.msra.mxu0 %v426
    %8437 = vmatprep.subr.mxu0 %v431
    %8438 = vmatpush1.msra.mxu0 %v430
    %8439 = vmatprep.subr.mxu0 %v435
    %8440 = vmatpush1.msra.mxu0 %v434
    %8441 = vmatprep.mubr.f32.mxu0 %v8097
    %8442 = vmatmul.mubr.f32.gmra.mrb[0].mxu0 %v8096
    %v8443 = vpop.f32.mrb[0].mxu0
    %v8444 = vadd.f32 %v8355, %v8443
    %v8445 = vpop.f32.mrb[0].mxu0
    %v8446 = vadd.f32 %v8357, %v8445
    %8447 = vmatprep.mubr.f32.mxu0 %v8101
    %8448 = vmatmul.mubr.f32.gmra.mrb[0].mxu0 %v8100
    %v8449 = vpop.f32.mrb[0].mxu0
    %v8450 = vadd.f32 %v8361, %v8449
    %v8451 = vpop.f32.mrb[0].mxu0
    %v8452 = vadd.f32 %v8363, %v8451
    %8453 = vmatprep.mubr.f32.mxu0 %v8105
    %8454 = vmatmul.mubr.f32.gmra.mrb[0].mxu0 %v8104
    %v8455 = vpop.f32.mrb[0].mxu0
    %v8456 = vadd.f32 %v8367, %v8455
    %v8457 = vpop.f32.mrb[0].mxu0
    %v8458 = vadd.f32 %v8369, %v8457
    %8459 = vmatprep.mubr.f32.mxu0 %v8109
    %8460 = vmatmul.mubr.f32.gmra.mrb[0].mxu0 %v8108
    %v8461 = vpop.f32.mrb[0].mxu0
    %v8462 = vadd.f32 %v8373, %v8461
    %v8463 = vpop.f32.mrb[0].mxu0
    %v8464 = vadd.f32 %v8375, %v8463
    %8465 = vdwg.mxu0
    %v8466 = vadd.f32 %v8266, %v8272
    %v8467 = vadd.f32 %v8466, %v8278
    %v8468 = vadd.f32 %v8467, %v8284
    %v8469 = vrot.slane %v8468, 4
    %v8470 = vadd.f32 %v8468, %v8469
    %v8471 = vrot.slane %v8470, 2
    %v8472 = vadd.f32 %v8470, %v8471
    %v8473 = vrot.slane %v8472, 1
    %v8474 = vadd.f32 %v8472, %v8473
    %v8475 = vadd.f32 %v8268, %v8274
    %v8476 = vadd.f32 %v8475, %v8280
    %v8477 = vadd.f32 %v8476, %v8286
    %v8478 = vrot.slane %v8477, 4
    %v8479 = vadd.f32 %v8477, %v8478
    %v8480 = vrot.slane %v8479, 2
    %v8481 = vadd.f32 %v8479, %v8480
    %v8482 = vrot.slane %v8481, 1
    %v8483 = vadd.f32 %v8481, %v8482
    %v8484 = vadd.f32 %v8444, %v8450
    %v8485 = vadd.f32 %v8484, %v8456
    %v8486 = vadd.f32 %v8485, %v8462
    %v8487 = vrot.slane %v8486, 4
    %v8488 = vadd.f32 %v8486, %v8487
    %v8489 = vrot.slane %v8488, 2
    %v8490 = vadd.f32 %v8488, %v8489
    %v8491 = vrot.slane %v8490, 1
    %v8492 = vadd.f32 %v8490, %v8491
    %v8493 = vadd.f32 %v8446, %v8452
    %v8494 = vadd.f32 %v8493, %v8458
    %v8495 = vadd.f32 %v8494, %v8464
    %v8496 = vrot.slane %v8495, 4
    %v8497 = vadd.f32 %v8495, %v8496
    %v8498 = vrot.slane %v8497, 2
    %v8499 = vadd.f32 %v8497, %v8498
    %v8500 = vrot.slane %v8499, 1
    %v8501 = vadd.f32 %v8499, %v8500
    %v8502 = vadd.f32 %v8474, 1e-05
    %v8503 = vadd.f32 %v8483, 1e-05
    %v8504 = vadd.f32 %v8492, 1e-05
    %v8505 = vadd.f32 %v8501, 1e-05
    %v8506 = vrsqrt.pop %v8502
    %v8507 = vrsqrt.pop %v8503
    %v8508 = vrsqrt.pop %v8504
    %v8509 = vrsqrt.pop %v8505
    %v8514 = vcombine.low %v8506, %v8507
    %v8515 = vcombine.low %v8508, %v8509
    %v8517 = vunpack.c.l.s4 1966171168
    %v8518 = vunpack.c.0.s8 %v8517
    %v8519 = vlaneseq
    %v8520 = vshrl.u32 %v8519, 7
    %v8521 = vsub.s32 %v8518, %v8520
    %v8522 = vrot.slane %v8514, %v8521
    %v8524 = vunpack.c.l.s4 1966171168
    %v8525 = vunpack.c.0.s8 %v8524
    %v8526 = vlaneseq
    %v8527 = vshrl.u32 %v8526, 7
    %v8528 = vsub.s32 %v8525, %v8527
    %v8529 = vrot.slane %v8515, %v8528
    %v8530 = vcombine.low %v8522, %v8529
    %v8532 = vunpack.c.l.s4 1966171168
    %v8533 = vunpack.c.0.s8 %v8532
    %v8534 = vlaneseq
    %v8535 = vshrl.u32 %v8534, 7
    %v8536 = vsub.s32 %v8533, %v8535
    %v8537 = vrot.slane %v8530, %v8536
    %v8539 = vmul.f32 %v7684, %v8537
    %v8541 = vlaneseq
    %v8542 = vshrl.u32 %v8541, 7
    %v8543 = vsub.s32 0, %v8542
    %v8544 = vrot.slane %v8539, %v8543
    %v8545 = vlaneseq
    %v8546 = vshrl.u32 %v8545, 7
    %v8547 = vsub.s32 1, %v8546
    %v8548 = vrot.slane %v8539, %v8547
    %v8549 = vlaneseq
    %v8550 = vshrl.u32 %v8549, 7
    %v8551 = vsub.s32 2, %v8550
    %v8552 = vrot.slane %v8539, %v8551
    %v8553 = vlaneseq
    %v8554 = vshrl.u32 %v8553, 7
    %v8555 = vsub.s32 3, %v8554
    %v8556 = vrot.slane %v8539, %v8555
    %v8561 = vmul.f32 %v8078, %v8544
    %v8562 = vmul.f32 %v8079, %v8548
    %v8563 = vmul.f32 %v8080, %v8552
    %v8564 = vmul.f32 %v8081, %v8556
    %v8565 = vmul.f32 %v8082, %v8544
    %v8566 = vmul.f32 %v8083, %v8548
    %v8567 = vmul.f32 %v8084, %v8552
    %v8568 = vmul.f32 %v8085, %v8556
    %v8569 = vmul.f32 %v8086, %v8544
    %v8570 = vmul.f32 %v8087, %v8548
    %v8571 = vmul.f32 %v8088, %v8552
    %v8572 = vmul.f32 %v8089, %v8556
    %v8573 = vmul.f32 %v8090, %v8544
    %v8574 = vmul.f32 %v8091, %v8548
    %v8575 = vmul.f32 %v8092, %v8552
    %v8576 = vmul.f32 %v8093, %v8556
    %v8578 = vlaneseq
    %v8579 = vshrl.u32 %v8578, 7
    %v8580 = vsub.s32 0, %v8579
    %v8581 = vrot.slane %v7685, %v8580
    %v8582 = vlaneseq
    %v8583 = vshrl.u32 %v8582, 7
    %v8584 = vsub.s32 1, %v8583
    %v8585 = vrot.slane %v7685, %v8584
    %v8586 = vlaneseq
    %v8587 = vshrl.u32 %v8586, 7
    %v8588 = vsub.s32 2, %v8587
    %v8589 = vrot.slane %v7685, %v8588
    %v8590 = vlaneseq
    %v8591 = vshrl.u32 %v8590, 7
    %v8592 = vsub.s32 3, %v8591
    %v8593 = vrot.slane %v7685, %v8592
    %v8598 = vadd.f32 %v8561, %v8581
    %v8599 = vadd.f32 %v8562, %v8585
    %v8600 = vadd.f32 %v8563, %v8589
    %v8601 = vadd.f32 %v8564, %v8593
    %v8602 = vadd.f32 %v8565, %v8581
    %v8603 = vadd.f32 %v8566, %v8585
    %v8604 = vadd.f32 %v8567, %v8589
    %v8605 = vadd.f32 %v8568, %v8593
    %v8606 = vadd.f32 %v8569, %v8581
    %v8607 = vadd.f32 %v8570, %v8585
    %v8608 = vadd.f32 %v8571, %v8589
    %v8609 = vadd.f32 %v8572, %v8593
    %v8610 = vadd.f32 %v8573, %v8581
    %v8611 = vadd.f32 %v8574, %v8585
    %v8612 = vadd.f32 %v8575, %v8589
    %v8613 = vadd.f32 %v8576, %v8593
    %v8614 = vadd.f32 %v8598, %v164
    %v8615 = vadd.f32 %v8599, %v165
    %v8616 = vadd.f32 %v8600, %v166
    %v8617 = vadd.f32 %v8601, %v167
    %v8618 = vadd.f32 %v8602, %v168
    %v8619 = vadd.f32 %v8603, %v169
    %v8620 = vadd.f32 %v8604, %v170
    %v8621 = vadd.f32 %v8605, %v171
    %v8622 = vadd.f32 %v8606, %v172
    %v8623 = vadd.f32 %v8607, %v173
    %v8624 = vadd.f32 %v8608, %v174
    %v8625 = vadd.f32 %v8609, %v175
    %v8626 = vadd.f32 %v8610, %v176
    %v8627 = vadd.f32 %v8611, %v177
    %v8628 = vadd.f32 %v8612, %v178
    %v8629 = vadd.f32 %v8613, %v179
    %v8630 = vmax.f32 %v8614, 0.0
    %v8631 = vmax.f32 %v8615, 0.0
    %v8632 = vmax.f32 %v8616, 0.0
    %v8633 = vmax.f32 %v8617, 0.0
    %v8634 = vmax.f32 %v8618, 0.0
    %v8635 = vmax.f32 %v8619, 0.0
    %v8636 = vmax.f32 %v8620, 0.0
    %v8637 = vmax.f32 %v8621, 0.0
    %v8638 = vmax.f32 %v8622, 0.0
    %v8639 = vmax.f32 %v8623, 0.0
    %v8640 = vmax.f32 %v8624, 0.0
    %v8641 = vmax.f32 %v8625, 0.0
    %v8642 = vmax.f32 %v8626, 0.0
    %v8643 = vmax.f32 %v8627, 0.0
    %v8644 = vmax.f32 %v8628, 0.0
    %v8645 = vmax.f32 %v8629, 0.0
    %8646 = vst [vmem:[#allocation19] sm:$0xff] %v8630
    %8647 = vst [vmem:[#allocation19 + $0x8] sm:$0xff] %v8631
    %8648 = vst [vmem:[#allocation19 + $0x10] sm:$0xff] %v8632
    %8649 = vst [vmem:[#allocation19 + $0x18] sm:$0xff] %v8633
    %8650 = vst [vmem:[#allocation19 + $0x20] sm:$0xff] %v8634
    %8651 = vst [vmem:[#allocation19 + $0x28] sm:$0xff] %v8635
    %8652 = vst [vmem:[#allocation19 + $0x30] sm:$0xff] %v8636
    %8653 = vst [vmem:[#allocation19 + $0x38] sm:$0xff] %v8637
    %8654 = vst [vmem:[#allocation19 + $0x40] sm:$0xff] %v8638
    %8655 = vst [vmem:[#allocation19 + $0x48] sm:$0xff] %v8639
    %8656 = vst [vmem:[#allocation19 + $0x50] sm:$0xff] %v8640
    %8657 = vst [vmem:[#allocation19 + $0x58] sm:$0xff] %v8641
    %8658 = vst [vmem:[#allocation19 + $0x60] sm:$0xff] %v8642
    %8659 = vst [vmem:[#allocation19 + $0x68] sm:$0xff] %v8643
    %8660 = vst [vmem:[#allocation19 + $0x70] sm:$0xff] %v8644
    %8661 = vst [vmem:[#allocation19 + $0x78] sm:$0xff] %v8645
    // Predicated region
    $region82: #{tpu_custom_call.1} parent=1 // pred_check
      _
    $region83: #{tpu_custom_call.1} parent=1 // pred_check_branch
      %8663 = sbr.rel (0) target = $region85
    $region84: #{tpu_custom_call.1} parent=1 // pred_region
      %s8665 = ssub.s32 2048, 2048
      %8666 = vsyncadd [#allocation4], %s8665
      %s8667 = sshll.u32 [#allocation19], 4
      %s8668 = int_to_ptr.vmem [resolvable:$true] %s8667
      %8673 = dma.vmem_to_hbm [thread:$0]  %s8668, 2048, %s10, [#allocation4], 512, 512, 32
    $region85: #{tpu_custom_call.1} parent=1 // pred_fallthru
      _
    // Predicated region
    $region86: #{tpu_custom_call.1} parent=1 // pred_check
      _
    $region87: #{tpu_custom_call.1} parent=1 // pred_check_branch
      %8675 = sbr.rel (0) target = $region89
    $region88: #{tpu_custom_call.1} parent=1 // pred_region
      %8676 = dma.done [#allocation4], 2048
    $region89: #{tpu_custom_call.1} parent=1 // pred_fallthru
      _
    %8677 = vsyncpa [#allocation3], 1
    %8678 = vsyncpa [#allocation6], 1
    %8679 = vsyncpa [#allocation9], 1
    %8680 = vsyncpa [#allocation12], 1
    %8681 = vsyncpa [#allocation15], 1
    %8682 = vsyncpa [#allocation18], 1
    %8683 = vsyncpa [#allocation4], 1

</llo_original>
